<compile_context>
chip_gen: v7x
topology: tpu7x:2x2x1
jax: 0.10.0
libtpu: 0.0.40
codegen_flags: <defaults>
</compile_context>

<pallas_src>
import numpy as np
import jax
import jax.numpy as jnp
from jax.experimental import pallas as pl
from jax.experimental.pallas import tpu as pltpu


MATMUL_DTYPE = jnp.float32   # flip to jnp.bfloat16 on v6e/v7x (f32 accumulation kept)


def _dot(a, b):
    return jnp.dot(a.astype(MATMUL_DTYPE), b.astype(MATMUL_DTYPE),
                   preferred_element_type=jnp.float32)


# ---------------------------------------------------------------------------
# Host-side (one-time) weight refolding: PyTorch layouts -> dense, GEMM-ready
# per-tap matrices (channels-last).  No width-dependent expansion.
# ---------------------------------------------------------------------------

def _fold_conv(w):
    """nn.Conv2d weight (Cout, Cin, 3, 3) -> (9*Cin, Cout); tap t = dy*3 + dx."""
    k = w.shape[2]
    return jnp.concatenate(
        [w[:, :, dy, dx].T for dy in range(k) for dx in range(k)], axis=0)


def _fold_convt_k2(w):
    """nn.ConvTranspose2d (Cin, Cout, 2, 2) -> (Cin, 4*Cout); column group
    g = 2*p + q holds the phase-(p, q) matrix."""
    return jnp.concatenate(
        [w[:, :, p, q] for p in range(2) for q in range(2)], axis=1)


def _fold_convt_k3(w):
    """nn.ConvTranspose2d (Cin, Cout, 3, 3), stride 2 -> (4*Cin, 4*Cout).

    Row blocks correspond to the four input row-offsets {0, 1, Wp, Wp+1} of the
    zero-padded flat-row input; column group g = 2*p + q is output phase (p, q).
    """
    cin, cout = w.shape[0], w.shape[1]
    z = jnp.zeros((cin, cout), w.dtype)
    tap = lambda kh, kw: w[:, :, kh, kw]
    m_off0 = jnp.concatenate([tap(2, 2), z, z, z], axis=1)                 # pd[r]
    m_off1 = jnp.concatenate([tap(2, 0), tap(2, 1), z, z], axis=1)         # pd[r+1]
    m_offw = jnp.concatenate([tap(0, 2), z, tap(1, 2), z], axis=1)         # pd[r+Wp]
    m_offw1 = jnp.concatenate([tap(0, 0), tap(0, 1), tap(1, 0), tap(1, 1)],
                              axis=1)                                      # pd[r+Wp+1]
    return jnp.concatenate([m_off0, m_off1, m_offw, m_offw1], axis=0)


def _fold_convt_k2_blockdiag(w):
    """Last ConvTranspose2d(16, 1, 2, 2): consumed straight from the
    phase-grouped slab -> (4*Cin, 4*4*Cout) block-diagonal (same (Cin, 4*Cout)
    block per input phase group; small fixed padding, not width-dependent)."""
    cin, cout = w.shape[0], w.shape[1]
    phase = jnp.concatenate(
        [w[:, :, P, Q] for P in range(2) for Q in range(2)], axis=1)  # (Cin, 4*Cout)
    out = jnp.zeros((4 * cin, 4 * 4 * cout), w.dtype)
    for g in range(4):
        out = out.at[g * cin:(g + 1) * cin,
                     g * 4 * cout:(g + 1) * 4 * cout].set(phase)
    return out


# ---------------------------------------------------------------------------
# In-kernel building blocks
# ---------------------------------------------------------------------------

def _conv9(p_ref, w_ref, b_ref, *, cin, wp, lo):
    """3x3 'same' conv on a zero-padded flat-row buffer: 9 contiguous
    row-shifted slices, each a dense (lo, cin) x (cin, cout) GEMM
    (VPU broadcast-MAC when cin == 1)."""
    acc = None
    for t in range(9):
        dy, dx = divmod(t, 3)
        lhs = p_ref[dy * wp + dx: dy * wp + dx + lo, :]
        wt = w_ref[t * cin:(t + 1) * cin, :]
        y = lhs * wt if cin == 1 else _dot(lhs, wt)
        acc = y if acc is None else acc + y
    return acc + b_ref[...]


def _pool2x2(y, wp, tmp_ref, *, relu):
    """2x2/2 max-pool of a flat-row conv result: two shifted maxima, optional
    ReLU, one wide store (decimation happens at the caller via stride-2 reads)."""
    n = y.shape[0]
    v = jnp.maximum(y[:n - wp, :], y[wp:, :])
    h = jnp.maximum(v[:v.shape[0] - 1, :], v[1:, :])
    if relu:
        h = jnp.maximum(h, 0.0)
    tmp_ref[...] = h


# ---------------------------------------------------------------------------
# Fused autoencoder kernel + wrapper
# ---------------------------------------------------------------------------

def build_cae1(params, h0, w0):
    assert h0 % 8 == 0 and w0 % 8 == 0, "needs three rounds of 2x2 pooling"
    c1, c2, c3 = 16, 32, 64

    # encoder geometry: stage s consumes an (H[s], W[s]) image, padded width WP[s]
    H = (h0, h0 // 2, h0 // 4)
    W = (w0, w0 // 2, w0 // 4)
    WP = tuple(w + 2 for w in W)
    LO = tuple((h - 1) * wp + w for h, w, wp in zip(H, W, WP))
    PADR0 = (h0 + 2) * WP[0]                      # flattened padded input rows

    # decoder geometry
    H3, W3 = h0 // 8, w0 // 8                     # bottleneck spatial
    HD1, WD1 = 2 * H3, 2 * W3                     # ConvT1 output (= ConvT2 input)
    WPD = WD1 + 2                                 # padded width of ConvT2's input
    RD2 = HD1 * WPD + WD1 + 1                     # rows of the phase-grouped slab
    NCOL = 4 * 4 * params["wd3"].shape[1]         # 4 d2-phases x 4 d3-phases x Cout
    HOUT, WOUT = 4 * HD1 + 4, 4 * WD1 + 2         # (20, 18) for a 16x16 input

    folded = (
        _fold_conv(params["w1"]), params["b1"][None, :],
        _fold_conv(params["w2"]), params["b2"][None, :],
        _fold_conv(params["w3"]), params["b3"][None, :],
        _fold_convt_k2(params["wd1"]), jnp.tile(params["bd1"], 4)[None, :],
        _fold_convt_k3(params["wd2"]), jnp.tile(params["bd2"], 4)[None, :],
        _fold_convt_k2_blockdiag(params["wd3"]),
        jnp.tile(params["bd3"], NCOL)[None, :],
    )

    scratch = [
        pltpu.VMEM(((H[1] + 2) * WP[1], c1), jnp.float32),   # p2 : conv2 padded input
        pltpu.VMEM(((H[2] + 2) * WP[2], c2), jnp.float32),   # p3 : conv3 padded input
        pltpu.VMEM(((HD1 + 2) * WPD, c2), jnp.float32),      # pd2: ConvT2 padded input
        pltpu.VMEM((H3 * W3, c3), jnp.float32),              # zb : bottleneck
        pltpu.VMEM((LO[0] - WP[0] - 1, c1), jnp.float32),    # t1 : pool-1 staging
        pltpu.VMEM((LO[1] - WP[1] - 1, c2), jnp.float32),    # t2 : pool-2 staging
        pltpu.VMEM((LO[2] - WP[2] - 1, c3), jnp.float32),    # t3 : pool-3 staging
    ]

    def kernel(xp, w1r, b1r, w2r, b2r, w3r, b3r,
               wd1r, bd1r, wd2r, bd2r, wd3r, bd3r,
               out_ref, p2, p3, pd2, zb, t1, t2, t3):
        # Zero the small padded buffers (borders must stay zero; interiors are
        # fully rewritten below).  Whole-buffer wide stores, redone per step so
        # the kernel is correct even if the "parallel" axis is sharded across
        # TensorCores with per-core scratch.
        p2[...] = jnp.zeros_like(p2)
        p3[...] = jnp.zeros_like(p3)
        pd2[...] = jnp.zeros_like(pd2)

        # ------------------------------ encoder ------------------------------
        # stage 1: Conv2d(1, 16, 3, pad=1) -> MaxPool2x2 -> ReLU
        y = _conv9(xp, w1r, b1r, cin=1, wp=WP[0], lo=LO[0])
        _pool2x2(y, WP[0], t1, relu=True)
        for yq in range(H[1]):
            row0 = (yq + 1) * WP[1] + 1
            p2[row0:row0 + W[1], :] = t1[pl.ds(2 * yq * WP[0], W[1], 2), :]

        # stage 2: Conv2d(16, 32, 3, pad=1) -> MaxPool2x2 -> ReLU
        y = _conv9(p2, w2r, b2r, cin=c1, wp=WP[1], lo=LO[1])
        _pool2x2(y, WP[1], t2, relu=True)
        for yq in range(H[2]):
            row0 = (yq + 1) * WP[2] + 1
            p3[row0:row0 + W[2], :] = t2[pl.ds(2 * yq * WP[1], W[2], 2), :]

        # stage 3: Conv2d(32, 64, 3, pad=1) -> MaxPool2x2 (no ReLU)
        y = _conv9(p3, w3r, b3r, cin=c2, wp=WP[2], lo=LO[2])
        _pool2x2(y, WP[2], t3, relu=False)
        for yq in range(H3):
            zb[yq * W3:(yq + 1) * W3, :] = t3[pl.ds(2 * yq * WP[2], W3, 2), :]

        # ------------------------------ decoder ------------------------------
        # ConvTranspose2d(64, 32, k=2, s=2) + ReLU: one GEMM with the 4 phase
        # weights stacked along N, then stride-2 row stores interleave the 2x2
        # phases into pd2's zero-padded interior.
        y1 = jnp.maximum(_dot(zb[...], wd1r[...]) + bd1r[...], 0.0)   # (H3*W3, 4*c2)
        for ph in range(2):
            for a in range(H3):
                yo = 2 * a + ph
                for q in range(2):
                    g = 2 * ph + q
                    pd2[pl.ds((yo + 1) * WPD + 1 + q, W3, 2), :] = (
                        y1[a * W3:(a + 1) * W3, g * c2:(g + 1) * c2])

        # ConvTranspose2d(32, 16, k=3, s=2, output_padding=(1, 0)) + ReLU:
        # 4 row-shifted slices of pd2 against phase-grouped weights; the result
        # is a (RD2, 4*16) slab whose column group g = 2p+q is output phase (p,q)
        # at flat rows r = a*WPD + b.
        acc = None
        for i, off in enumerate((0, 1, WPD, WPD + 1)):
            yk = _dot(pd2[off:off + RD2, :], wd2r[i * c2:(i + 1) * c2, :])
            acc = yk if acc is None else acc + yk
        y2 = jnp.maximum(acc + bd2r[...], 0.0)

        # ConvTranspose2d(16, 1, k=2, s=2) + ReLU: k=2, s=2 is pointwise per
        # input pixel, so it consumes the phase-grouped slab directly through a
        # small block-diagonal weight; final pixel interleave is done by the
        # host wrapper (pure index plumbing).
        out_ref[...] = jnp.maximum(_dot(y2, wd3r[...]) + bd3r[...], 0.0)

    # host-side un-shuffle: slab[r, (2p+q)*4 + 2P+Q] with r = a*WPD + b holds
    # the final pixel (4a + 2p + P, 4b + 2q + Q)
    yy = np.arange(HOUT)
    xx = np.arange(WOUT)
    r_idx = (yy[:, None] // 4) * WPD + (xx[None, :] // 4)
    c_idx = ((2 * ((yy[:, None] % 4) // 2) + (xx[None, :] % 4) // 2) * 4
             + 2 * (yy[:, None] % 2) + (xx[None, :] % 2))
    r_idx = jnp.asarray(r_idx, jnp.int32)
    c_idx = jnp.asarray(c_idx, jnp.int32)

    in_specs = [pl.BlockSpec((None, PADR0, 1), lambda i: (i, 0, 0))]
    for arr in folded:
        in_specs.append(pl.BlockSpec(arr.shape, lambda i, nd=arr.ndim: (0,) * nd))

    def fwd(x_nchw):
        n = x_nchw.shape[0]
        assert x_nchw.shape[1] == 1
        x = x_nchw.reshape(n, h0, w0)
        xpad = jnp.pad(x, ((0, 0), (1, 1), (1, 1))).reshape(n, PADR0, 1)
        slab = pl.pallas_call(
            kernel,
            out_shape=jax.ShapeDtypeStruct((n, RD2, NCOL), jnp.float32),
            grid=(n,),
            in_specs=in_specs,
            out_specs=pl.BlockSpec((None, RD2, NCOL), lambda i: (i, 0, 0)),
            scratch_shapes=scratch,
            compiler_params=pltpu.CompilerParams(
                dimension_semantics=("parallel",),
                vmem_limit_bytes=32 * 1024 * 1024),
        )(xpad, *folded)
        out = slab[:, r_idx, c_idx]                   # (n, HOUT, WOUT)
        return out.reshape(n, 1, HOUT, WOUT)

    return jax.jit(fwd)


# ---------------------------------------------------------------------------
# Plain-JAX reference (independent transcription of the PyTorch module)
# ---------------------------------------------------------------------------

def reference_forward(x, p):
    def conv(y, w, b):
        out = jax.lax.conv_general_dilated(
            y, w, window_strides=(1, 1), padding=((1, 1), (1, 1)),
            dimension_numbers=("NCHW", "OIHW", "NCHW"))
        return out + b[None, :, None, None]

    def pool(y):
        n, c, h, w = y.shape
        return y.reshape(n, c, h // 2, 2, w // 2, 2).max(axis=(3, 5))

    def conv_t(y, w, b, k, s, out_pad):
        n, cin, h, ww = y.shape
        cout = w.shape[1]
        ho = (h - 1) * s + k + out_pad[0]
        wo = (ww - 1) * s + k + out_pad[1]
        out = jnp.zeros((n, cout, ho, wo), y.dtype)
        for kh in range(k):
            for kw in range(k):
                contrib = jnp.einsum("nchw,cd->ndhw", y, w[:, :, kh, kw])
                out = out.at[:, :, kh:kh + (h - 1) * s + 1:s,
                             kw:kw + (ww - 1) * s + 1:s].add(contrib)
        return out + b[None, :, None, None]

    y = jax.nn.relu(pool(conv(x, p["w1"], p["b1"])))
    y = jax.nn.relu(pool(conv(y, p["w2"], p["b2"])))
    y = pool(conv(y, p["w3"], p["b3"]))
    y = jax.nn.relu(conv_t(y, p["wd1"], p["bd1"], 2, 2, (0, 0)))
    y = jax.nn.relu(conv_t(y, p["wd2"], p["bd2"], 3, 2, (1, 0)))
    y = jax.nn.relu(conv_t(y, p["wd3"], p["bd3"], 2, 2, (0, 0)))
    return y


# ---------------------------------------------------------------------------
# Main
# ---------------------------------------------------------------------------

if __name__ == "__main__":
    N, H0, W0 = 2, 16, 16
    key = jax.random.PRNGKey(0)
    ks = jax.random.split(key, 13)
    params = {
        # PyTorch layouts: Conv2d (Cout,Cin,k,k); ConvTranspose2d (Cin,Cout,k,k)
        "w1":  jax.random.normal(ks[0], (16, 1, 3, 3), jnp.float32) * 0.30,
        "b1":  jax.random.normal(ks[1], (16,), jnp.float32) * 0.10,
        "w2":  jax.random.normal(ks[2], (32, 16, 3, 3), jnp.float32) * 0.10,
        "b2":  jax.random.normal(ks[3], (32,), jnp.float32) * 0.10,
        "w3":  jax.random.normal(ks[4], (64, 32, 3, 3), jnp.float32) * 0.06,
        "b3":  jax.random.normal(ks[5], (64,), jnp.float32) * 0.05,
        "wd1": jax.random.normal(ks[6], (64, 32, 2, 2), jnp.float32) * 0.08,
        "bd1": jax.random.normal(ks[7], (32,), jnp.float32) * 0.05,
        "wd2": jax.random.normal(ks[8], (32, 16, 3, 3), jnp.float32) * 0.10,
        "bd2": jax.random.normal(ks[9], (16,), jnp.float32) * 0.05,
        "wd3": jax.random.normal(ks[10], (16, 1, 2, 2), jnp.float32) * 0.25,
        "bd3": jax.random.normal(ks[11], (1,), jnp.float32) * 0.05,
    }
    x = jax.random.normal(ks[12], (N, 1, H0, W0), jnp.float32)   # NCHW like PyTorch

    fwd = build_cae1(params, H0, W0)
    out = fwd(x)
    out = jax.block_until_ready(out)

    ref = reference_forward(x, params)
    assert out.shape == ref.shape == (N, 1, 20, 18), (out.shape, ref.shape)
    err = float(jnp.max(jnp.abs(out - ref)))
    scale = float(jnp.max(jnp.abs(ref))) + 1e-6
    assert err / scale < 1e-2, (err, scale)

    print("KERNEL_OK")
</pallas_src>

<mosaic_0001>
module attributes {stable_mosaic.version = 11 : i64} {
  func.func @kernel(%arg0: i32, %arg1: memref<1x324x1xf32, #tpu.memory_space<vmem>>, %arg2: memref<9x16xf32, #tpu.memory_space<vmem>>, %arg3: memref<1x16xf32, #tpu.memory_space<vmem>>, %arg4: memref<144x32xf32, #tpu.memory_space<vmem>>, %arg5: memref<1x32xf32, #tpu.memory_space<vmem>>, %arg6: memref<288x64xf32, #tpu.memory_space<vmem>>, %arg7: memref<1x64xf32, #tpu.memory_space<vmem>>, %arg8: memref<64x128xf32, #tpu.memory_space<vmem>>, %arg9: memref<1x128xf32, #tpu.memory_space<vmem>>, %arg10: memref<128x64xf32, #tpu.memory_space<vmem>>, %arg11: memref<1x64xf32, #tpu.memory_space<vmem>>, %arg12: memref<64x16xf32, #tpu.memory_space<vmem>>, %arg13: memref<1x16xf32, #tpu.memory_space<vmem>>, %arg14: memref<1x29x16xf32, #tpu.memory_space<vmem>>, %arg15: memref<100x16xf32, #tpu.memory_space<vmem>>, %arg16: memref<36x32xf32, #tpu.memory_space<vmem>>, %arg17: memref<36x32xf32, #tpu.memory_space<vmem>>, %arg18: memref<4x64xf32, #tpu.memory_space<vmem>>, %arg19: memref<267x16xf32, #tpu.memory_space<vmem>>, %arg20: memref<67x32xf32, #tpu.memory_space<vmem>>, %arg21: memref<15x64xf32, #tpu.memory_space<vmem>>) attributes {dimension_semantics = [#tpu.dimension_semantics<parallel>], iteration_bounds = array<i64: 2>, scalar_prefetch = 0 : i64, scratch_operands = 7 : i64, tpu.core_type = #tpu.core_type<tc>, window_params = [{transform_indices = @transform_0, window_bounds = array<i64: 1, 324, 1>}, {pipeline_mode = #tpu.pipeline_mode<synchronous>, transform_indices = @transform_1, window_bounds = array<i64: 9, 16>}, {pipeline_mode = #tpu.pipeline_mode<synchronous>, transform_indices = @transform_2, window_bounds = array<i64: 1, 16>}, {pipeline_mode = #tpu.pipeline_mode<synchronous>, transform_indices = @transform_3, window_bounds = array<i64: 144, 32>}, {pipeline_mode = #tpu.pipeline_mode<synchronous>, transform_indices = @transform_4, window_bounds = array<i64: 1, 32>}, {pipeline_mode = #tpu.pipeline_mode<synchronous>, transform_indices = @transform_5, window_bounds = array<i64: 288, 64>}, {pipeline_mode = #tpu.pipeline_mode<synchronous>, transform_indices = @transform_6, window_bounds = array<i64: 1, 64>}, {pipeline_mode = #tpu.pipeline_mode<synchronous>, transform_indices = @transform_7, window_bounds = array<i64: 64, 128>}, {pipeline_mode = #tpu.pipeline_mode<synchronous>, transform_indices = @transform_8, window_bounds = array<i64: 1, 128>}, {pipeline_mode = #tpu.pipeline_mode<synchronous>, transform_indices = @transform_9, window_bounds = array<i64: 128, 64>}, {pipeline_mode = #tpu.pipeline_mode<synchronous>, transform_indices = @transform_10, window_bounds = array<i64: 1, 64>}, {pipeline_mode = #tpu.pipeline_mode<synchronous>, transform_indices = @transform_11, window_bounds = array<i64: 64, 16>}, {pipeline_mode = #tpu.pipeline_mode<synchronous>, transform_indices = @transform_12, window_bounds = array<i64: 1, 16>}, {transform_indices = @transform_13, window_bounds = array<i64: 1, 29, 16>}]} {
    %cst = arith.constant 0.000000e+00 : f32
    %0 = vector.broadcast %cst : f32 to vector<100x16xf32>
    %c0 = arith.constant 0 : index
    %c0_0 = arith.constant 0 : index
    %1 = vector.load %arg15[%c0, %c0_0] : memref<100x16xf32, #tpu.memory_space<vmem>>, vector<100x16xf32>
    tpu.vector_store %arg15[%c0, %c0_0], %0 {strides = array<i32>} : memref<100x16xf32, #tpu.memory_space<vmem>>, vector<100x16xf32>,
    %cst_1 = arith.constant 0.000000e+00 : f32
    %2 = vector.broadcast %cst_1 : f32 to vector<36x32xf32>
    %c0_2 = arith.constant 0 : index
    %c0_3 = arith.constant 0 : index
    %3 = vector.load %arg16[%c0_2, %c0_3] : memref<36x32xf32, #tpu.memory_space<vmem>>, vector<36x32xf32>
    tpu.vector_store %arg16[%c0_2, %c0_3], %2 {strides = array<i32>} : memref<36x32xf32, #tpu.memory_space<vmem>>, vector<36x32xf32>,
    %cst_4 = arith.constant 0.000000e+00 : f32
    %4 = vector.broadcast %cst_4 : f32 to vector<36x32xf32>
    %c0_5 = arith.constant 0 : index
    %c0_6 = arith.constant 0 : index
    %5 = vector.load %arg17[%c0_5, %c0_6] : memref<36x32xf32, #tpu.memory_space<vmem>>, vector<36x32xf32>
    tpu.vector_store %arg17[%c0_5, %c0_6], %4 {strides = array<i32>} : memref<36x32xf32, #tpu.memory_space<vmem>>, vector<36x32xf32>,
    %c0_7 = arith.constant 0 : index
    %c0_8 = arith.constant 0 : index
    %c0_9 = arith.constant 0 : index
    %6 = vector.load %arg1[%c0_7, %c0_8, %c0_9] : memref<1x324x1xf32, #tpu.memory_space<vmem>>, vector<1x286x1xf32>
    %7 = vector.shape_cast %6 : vector<1x286x1xf32> to vector<286x1xf32>
    %c0_10 = arith.constant 0 : index
    %c0_11 = arith.constant 0 : index
    %8 = vector.load %arg2[%c0_10, %c0_11] : memref<9x16xf32, #tpu.memory_space<vmem>>, vector<1x16xf32>
    %9 = vector.broadcast %7 : vector<286x1xf32> to vector<286x16xf32>
    %10 = vector.broadcast %8 : vector<1x16xf32> to vector<286x16xf32>
    %11 = arith.mulf %9, %10 : vector<286x16xf32>
    %c0_12 = arith.constant 0 : index
    %c1 = arith.constant 1 : index
    %c0_13 = arith.constant 0 : index
    %12 = vector.load %arg1[%c0_12, %c1, %c0_13] : memref<1x324x1xf32, #tpu.memory_space<vmem>>, vector<1x286x1xf32>
    %13 = vector.shape_cast %12 : vector<1x286x1xf32> to vector<286x1xf32>
    %c1_14 = arith.constant 1 : index
    %c0_15 = arith.constant 0 : index
    %14 = vector.load %arg2[%c1_14, %c0_15] : memref<9x16xf32, #tpu.memory_space<vmem>>, vector<1x16xf32>
    %15 = vector.broadcast %13 : vector<286x1xf32> to vector<286x16xf32>
    %16 = vector.broadcast %14 : vector<1x16xf32> to vector<286x16xf32>
    %17 = arith.mulf %15, %16 : vector<286x16xf32>
    %18 = arith.addf %11, %17 : vector<286x16xf32>
    %c0_16 = arith.constant 0 : index
    %c2 = arith.constant 2 : index
    %c0_17 = arith.constant 0 : index
    %19 = vector.load %arg1[%c0_16, %c2, %c0_17] : memref<1x324x1xf32, #tpu.memory_space<vmem>>, vector<1x286x1xf32>
    %20 = vector.shape_cast %19 : vector<1x286x1xf32> to vector<286x1xf32>
    %c2_18 = arith.constant 2 : index
    %c0_19 = arith.constant 0 : index
    %21 = vector.load %arg2[%c2_18, %c0_19] : memref<9x16xf32, #tpu.memory_space<vmem>>, vector<1x16xf32>
    %22 = vector.broadcast %20 : vector<286x1xf32> to vector<286x16xf32>
    %23 = vector.broadcast %21 : vector<1x16xf32> to vector<286x16xf32>
    %24 = arith.mulf %22, %23 : vector<286x16xf32>
    %25 = arith.addf %18, %24 : vector<286x16xf32>
    %c0_20 = arith.constant 0 : index
    %c18 = arith.constant 18 : index
    %c0_21 = arith.constant 0 : index
    %26 = vector.load %arg1[%c0_20, %c18, %c0_21] : memref<1x324x1xf32, #tpu.memory_space<vmem>>, vector<1x286x1xf32>
    %27 = vector.shape_cast %26 : vector<1x286x1xf32> to vector<286x1xf32>
    %c3 = arith.constant 3 : index
    %c0_22 = arith.constant 0 : index
    %28 = vector.load %arg2[%c3, %c0_22] : memref<9x16xf32, #tpu.memory_space<vmem>>, vector<1x16xf32>
    %29 = vector.broadcast %27 : vector<286x1xf32> to vector<286x16xf32>
    %30 = vector.broadcast %28 : vector<1x16xf32> to vector<286x16xf32>
    %31 = arith.mulf %29, %30 : vector<286x16xf32>
    %32 = arith.addf %25, %31 : vector<286x16xf32>
    %c0_23 = arith.constant 0 : index
    %c19 = arith.constant 19 : index
    %c0_24 = arith.constant 0 : index
    %33 = vector.load %arg1[%c0_23, %c19, %c0_24] : memref<1x324x1xf32, #tpu.memory_space<vmem>>, vector<1x286x1xf32>
    %34 = vector.shape_cast %33 : vector<1x286x1xf32> to vector<286x1xf32>
    %c4 = arith.constant 4 : index
    %c0_25 = arith.constant 0 : index
    %35 = vector.load %arg2[%c4, %c0_25] : memref<9x16xf32, #tpu.memory_space<vmem>>, vector<1x16xf32>
    %36 = vector.broadcast %34 : vector<286x1xf32> to vector<286x16xf32>
    %37 = vector.broadcast %35 : vector<1x16xf32> to vector<286x16xf32>
    %38 = arith.mulf %36, %37 : vector<286x16xf32>
    %39 = arith.addf %32, %38 : vector<286x16xf32>
    %c0_26 = arith.constant 0 : index
    %c20 = arith.constant 20 : index
    %c0_27 = arith.constant 0 : index
    %40 = vector.load %arg1[%c0_26, %c20, %c0_27] : memref<1x324x1xf32, #tpu.memory_space<vmem>>, vector<1x286x1xf32>
    %41 = vector.shape_cast %40 : vector<1x286x1xf32> to vector<286x1xf32>
    %c5 = arith.constant 5 : index
    %c0_28 = arith.constant 0 : index
    %42 = vector.load %arg2[%c5, %c0_28] : memref<9x16xf32, #tpu.memory_space<vmem>>, vector<1x16xf32>
    %43 = vector.broadcast %41 : vector<286x1xf32> to vector<286x16xf32>
    %44 = vector.broadcast %42 : vector<1x16xf32> to vector<286x16xf32>
    %45 = arith.mulf %43, %44 : vector<286x16xf32>
    %46 = arith.addf %39, %45 : vector<286x16xf32>
    %c0_29 = arith.constant 0 : index
    %c36 = arith.constant 36 : index
    %c0_30 = arith.constant 0 : index
    %47 = vector.load %arg1[%c0_29, %c36, %c0_30] : memref<1x324x1xf32, #tpu.memory_space<vmem>>, vector<1x286x1xf32>
    %48 = vector.shape_cast %47 : vector<1x286x1xf32> to vector<286x1xf32>
    %c6 = arith.constant 6 : index
    %c0_31 = arith.constant 0 : index
    %49 = vector.load %arg2[%c6, %c0_31] : memref<9x16xf32, #tpu.memory_space<vmem>>, vector<1x16xf32>
    %50 = vector.broadcast %48 : vector<286x1xf32> to vector<286x16xf32>
    %51 = vector.broadcast %49 : vector<1x16xf32> to vector<286x16xf32>
    %52 = arith.mulf %50, %51 : vector<286x16xf32>
    %53 = arith.addf %46, %52 : vector<286x16xf32>
    %c0_32 = arith.constant 0 : index
    %c37 = arith.constant 37 : index
    %c0_33 = arith.constant 0 : index
    %54 = vector.load %arg1[%c0_32, %c37, %c0_33] : memref<1x324x1xf32, #tpu.memory_space<vmem>>, vector<1x286x1xf32>
    %55 = vector.shape_cast %54 : vector<1x286x1xf32> to vector<286x1xf32>
    %c7 = arith.constant 7 : index
    %c0_34 = arith.constant 0 : index
    %56 = vector.load %arg2[%c7, %c0_34] : memref<9x16xf32, #tpu.memory_space<vmem>>, vector<1x16xf32>
    %57 = vector.broadcast %55 : vector<286x1xf32> to vector<286x16xf32>
    %58 = vector.broadcast %56 : vector<1x16xf32> to vector<286x16xf32>
    %59 = arith.mulf %57, %58 : vector<286x16xf32>
    %60 = arith.addf %53, %59 : vector<286x16xf32>
    %c0_35 = arith.constant 0 : index
    %c38 = arith.constant 38 : index
    %c0_36 = arith.constant 0 : index
    %61 = vector.load %arg1[%c0_35, %c38, %c0_36] : memref<1x324x1xf32, #tpu.memory_space<vmem>>, vector<1x286x1xf32>
    %62 = vector.shape_cast %61 : vector<1x286x1xf32> to vector<286x1xf32>
    %c8 = arith.constant 8 : index
    %c0_37 = arith.constant 0 : index
    %63 = vector.load %arg2[%c8, %c0_37] : memref<9x16xf32, #tpu.memory_space<vmem>>, vector<1x16xf32>
    %64 = vector.broadcast %62 : vector<286x1xf32> to vector<286x16xf32>
    %65 = vector.broadcast %63 : vector<1x16xf32> to vector<286x16xf32>
    %66 = arith.mulf %64, %65 : vector<286x16xf32>
    %67 = arith.addf %60, %66 : vector<286x16xf32>
    %c0_38 = arith.constant 0 : index
    %c0_39 = arith.constant 0 : index
    %68 = vector.load %arg3[%c0_38, %c0_39] : memref<1x16xf32, #tpu.memory_space<vmem>>, vector<1x16xf32>
    %69 = vector.broadcast %68 : vector<1x16xf32> to vector<286x16xf32>
    %70 = arith.addf %67, %69 : vector<286x16xf32>
    %71 = vector.extract_strided_slice %70 {offsets = [0, 0], sizes = [268, 16], strides = [1, 1]} : vector<286x16xf32> to vector<268x16xf32>
    %72 = vector.extract_strided_slice %70 {offsets = [18, 0], sizes = [268, 16], strides = [1, 1]} : vector<286x16xf32> to vector<268x16xf32>
    %73 = arith.maximumf %71, %72 : vector<268x16xf32>
    %74 = vector.extract_strided_slice %73 {offsets = [0, 0], sizes = [267, 16], strides = [1, 1]} : vector<268x16xf32> to vector<267x16xf32>
    %75 = vector.extract_strided_slice %73 {offsets = [1, 0], sizes = [267, 16], strides = [1, 1]} : vector<268x16xf32> to vector<267x16xf32>
    %76 = arith.maximumf %74, %75 : vector<267x16xf32>
    %cst_40 = arith.constant 0.000000e+00 : f32
    %77 = vector.broadcast %cst_40 : f32 to vector<267x16xf32>
    %78 = arith.maximumf %76, %77 : vector<267x16xf32>
    %c0_41 = arith.constant 0 : index
    %c0_42 = arith.constant 0 : index
    %79 = vector.load %arg19[%c0_41, %c0_42] : memref<267x16xf32, #tpu.memory_space<vmem>>, vector<267x16xf32>
    tpu.vector_store %arg19[%c0_41, %c0_42], %78 {strides = array<i32>} : memref<267x16xf32, #tpu.memory_space<vmem>>, vector<267x16xf32>,
    %c0_43 = arith.constant 0 : index
    %c0_44 = arith.constant 0 : index
    %80 = tpu.strided_load %arg19[%c0_43, %c0_44] {strides = array<i32: 2, 1>} : memref<267x16xf32, #tpu.memory_space<vmem>>, vector<8x16xf32>
    %c11 = arith.constant 11 : index
    %c0_45 = arith.constant 0 : index
    %81 = vector.load %arg15[%c11, %c0_45] : memref<100x16xf32, #tpu.memory_space<vmem>>, vector<8x16xf32>
    tpu.vector_store %arg15[%c11, %c0_45], %80 {strides = array<i32>} : memref<100x16xf32, #tpu.memory_space<vmem>>, vector<8x16xf32>,
    %c36_46 = arith.constant 36 : index
    %c0_47 = arith.constant 0 : index
    %82 = tpu.strided_load %arg19[%c36_46, %c0_47] {strides = array<i32: 2, 1>} : memref<267x16xf32, #tpu.memory_space<vmem>>, vector<8x16xf32>
    %c21 = arith.constant 21 : index
    %c0_48 = arith.constant 0 : index
    %83 = vector.load %arg15[%c21, %c0_48] : memref<100x16xf32, #tpu.memory_space<vmem>>, vector<8x16xf32>
    tpu.vector_store %arg15[%c21, %c0_48], %82 {strides = array<i32>} : memref<100x16xf32, #tpu.memory_space<vmem>>, vector<8x16xf32>,
    %c72 = arith.constant 72 : index
    %c0_49 = arith.constant 0 : index
    %84 = tpu.strided_load %arg19[%c72, %c0_49] {strides = array<i32: 2, 1>} : memref<267x16xf32, #tpu.memory_space<vmem>>, vector<8x16xf32>
    %c31 = arith.constant 31 : index
    %c0_50 = arith.constant 0 : index
    %85 = vector.load %arg15[%c31, %c0_50] : memref<100x16xf32, #tpu.memory_space<vmem>>, vector<8x16xf32>
    tpu.vector_store %arg15[%c31, %c0_50], %84 {strides = array<i32>} : memref<100x16xf32, #tpu.memory_space<vmem>>, vector<8x16xf32>,
    %c108 = arith.constant 108 : index
    %c0_51 = arith.constant 0 : index
    %86 = tpu.strided_load %arg19[%c108, %c0_51] {strides = array<i32: 2, 1>} : memref<267x16xf32, #tpu.memory_space<vmem>>, vector<8x16xf32>
    %c41 = arith.constant 41 : index
    %c0_52 = arith.constant 0 : index
    %87 = vector.load %arg15[%c41, %c0_52] : memref<100x16xf32, #tpu.memory_space<vmem>>, vector<8x16xf32>
    tpu.vector_store %arg15[%c41, %c0_52], %86 {strides = array<i32>} : memref<100x16xf32, #tpu.memory_space<vmem>>, vector<8x16xf32>,
    %c144 = arith.constant 144 : index
    %c0_53 = arith.constant 0 : index
    %88 = tpu.strided_load %arg19[%c144, %c0_53] {strides = array<i32: 2, 1>} : memref<267x16xf32, #tpu.memory_space<vmem>>, vector<8x16xf32>
    %c51 = arith.constant 51 : index
    %c0_54 = arith.constant 0 : index
    %89 = vector.load %arg15[%c51, %c0_54] : memref<100x16xf32, #tpu.memory_space<vmem>>, vector<8x16xf32>
    tpu.vector_store %arg15[%c51, %c0_54], %88 {strides = array<i32>} : memref<100x16xf32, #tpu.memory_space<vmem>>, vector<8x16xf32>,
    %c180 = arith.constant 180 : index
    %c0_55 = arith.constant 0 : index
    %90 = tpu.strided_load %arg19[%c180, %c0_55] {strides = array<i32: 2, 1>} : memref<267x16xf32, #tpu.memory_space<vmem>>, vector<8x16xf32>
    %c61 = arith.constant 61 : index
    %c0_56 = arith.constant 0 : index
    %91 = vector.load %arg15[%c61, %c0_56] : memref<100x16xf32, #tpu.memory_space<vmem>>, vector<8x16xf32>
    tpu.vector_store %arg15[%c61, %c0_56], %90 {strides = array<i32>} : memref<100x16xf32, #tpu.memory_space<vmem>>, vector<8x16xf32>,
    %c216 = arith.constant 216 : index
    %c0_57 = arith.constant 0 : index
    %92 = tpu.strided_load %arg19[%c216, %c0_57] {strides = array<i32: 2, 1>} : memref<267x16xf32, #tpu.memory_space<vmem>>, vector<8x16xf32>
    %c71 = arith.constant 71 : index
    %c0_58 = arith.constant 0 : index
    %93 = vector.load %arg15[%c71, %c0_58] : memref<100x16xf32, #tpu.memory_space<vmem>>, vector<8x16xf32>
    tpu.vector_store %arg15[%c71, %c0_58], %92 {strides = array<i32>} : memref<100x16xf32, #tpu.memory_space<vmem>>, vector<8x16xf32>,
    %c252 = arith.constant 252 : index
    %c0_59 = arith.constant 0 : index
    %94 = tpu.strided_load %arg19[%c252, %c0_59] {strides = array<i32: 2, 1>} : memref<267x16xf32, #tpu.memory_space<vmem>>, vector<8x16xf32>
    %c81 = arith.constant 81 : index
    %c0_60 = arith.constant 0 : index
    %95 = vector.load %arg15[%c81, %c0_60] : memref<100x16xf32, #tpu.memory_space<vmem>>, vector<8x16xf32>
    tpu.vector_store %arg15[%c81, %c0_60], %94 {strides = array<i32>} : memref<100x16xf32, #tpu.memory_space<vmem>>, vector<8x16xf32>,
    %c0_61 = arith.constant 0 : index
    %c0_62 = arith.constant 0 : index
    %96 = vector.load %arg15[%c0_61, %c0_62] : memref<100x16xf32, #tpu.memory_space<vmem>>, vector<78x16xf32>
    %c0_63 = arith.constant 0 : index
    %c0_64 = arith.constant 0 : index
    %97 = vector.load %arg4[%c0_63, %c0_64] : memref<144x32xf32, #tpu.memory_space<vmem>>, vector<16x32xf32>
    %cst_65 = arith.constant dense<0.000000e+00> : vector<78x32xf32>
    %98 = tpu.matmul %96, %97, %cst_65 {dimension_numbers = #tpu.dot_dimension_numbers<[1], [0], [0], [1], [0, 0, 1, 1], [], []>} : vector<78x16xf32>, vector<16x32xf32>, vector<78x32xf32> -> vector<78x32xf32>
    %c1_66 = arith.constant 1 : index
    %c0_67 = arith.constant 0 : index
    %99 = vector.load %arg15[%c1_66, %c0_67] : memref<100x16xf32, #tpu.memory_space<vmem>>, vector<78x16xf32>
    %c16 = arith.constant 16 : index
    %c0_68 = arith.constant 0 : index
    %100 = vector.load %arg4[%c16, %c0_68] : memref<144x32xf32, #tpu.memory_space<vmem>>, vector<16x32xf32>
    %cst_69 = arith.constant dense<0.000000e+00> : vector<78x32xf32>
    %101 = tpu.matmul %99, %100, %cst_69 {dimension_numbers = #tpu.dot_dimension_numbers<[1], [0], [0], [1], [0, 0, 1, 1], [], []>} : vector<78x16xf32>, vector<16x32xf32>, vector<78x32xf32> -> vector<78x32xf32>
    %102 = arith.addf %98, %101 : vector<78x32xf32>
    %c2_70 = arith.constant 2 : index
    %c0_71 = arith.constant 0 : index
    %103 = vector.load %arg15[%c2_70, %c0_71] : memref<100x16xf32, #tpu.memory_space<vmem>>, vector<78x16xf32>
    %c32 = arith.constant 32 : index
    %c0_72 = arith.constant 0 : index
    %104 = vector.load %arg4[%c32, %c0_72] : memref<144x32xf32, #tpu.memory_space<vmem>>, vector<16x32xf32>
    %cst_73 = arith.constant dense<0.000000e+00> : vector<78x32xf32>
    %105 = tpu.matmul %103, %104, %cst_73 {dimension_numbers = #tpu.dot_dimension_numbers<[1], [0], [0], [1], [0, 0, 1, 1], [], []>} : vector<78x16xf32>, vector<16x32xf32>, vector<78x32xf32> -> vector<78x32xf32>
    %106 = arith.addf %102, %105 : vector<78x32xf32>
    %c10 = arith.constant 10 : index
    %c0_74 = arith.constant 0 : index
    %107 = vector.load %arg15[%c10, %c0_74] : memref<100x16xf32, #tpu.memory_space<vmem>>, vector<78x16xf32>
    %c48 = arith.constant 48 : index
    %c0_75 = arith.constant 0 : index
    %108 = vector.load %arg4[%c48, %c0_75] : memref<144x32xf32, #tpu.memory_space<vmem>>, vector<16x32xf32>
    %cst_76 = arith.constant dense<0.000000e+00> : vector<78x32xf32>
    %109 = tpu.matmul %107, %108, %cst_76 {dimension_numbers = #tpu.dot_dimension_numbers<[1], [0], [0], [1], [0, 0, 1, 1], [], []>} : vector<78x16xf32>, vector<16x32xf32>, vector<78x32xf32> -> vector<78x32xf32>
    %110 = arith.addf %106, %109 : vector<78x32xf32>
    %c11_77 = arith.constant 11 : index
    %c0_78 = arith.constant 0 : index
    %111 = vector.load %arg15[%c11_77, %c0_78] : memref<100x16xf32, #tpu.memory_space<vmem>>, vector<78x16xf32>
    %c64 = arith.constant 64 : index
    %c0_79 = arith.constant 0 : index
    %112 = vector.load %arg4[%c64, %c0_79] : memref<144x32xf32, #tpu.memory_space<vmem>>, vector<16x32xf32>
    %cst_80 = arith.constant dense<0.000000e+00> : vector<78x32xf32>
    %113 = tpu.matmul %111, %112, %cst_80 {dimension_numbers = #tpu.dot_dimension_numbers<[1], [0], [0], [1], [0, 0, 1, 1], [], []>} : vector<78x16xf32>, vector<16x32xf32>, vector<78x32xf32> -> vector<78x32xf32>
    %114 = arith.addf %110, %113 : vector<78x32xf32>
    %c12 = arith.constant 12 : index
    %c0_81 = arith.constant 0 : index
    %115 = vector.load %arg15[%c12, %c0_81] : memref<100x16xf32, #tpu.memory_space<vmem>>, vector<78x16xf32>
    %c80 = arith.constant 80 : index
    %c0_82 = arith.constant 0 : index
    %116 = vector.load %arg4[%c80, %c0_82] : memref<144x32xf32, #tpu.memory_space<vmem>>, vector<16x32xf32>
    %cst_83 = arith.constant dense<0.000000e+00> : vector<78x32xf32>
    %117 = tpu.matmul %115, %116, %cst_83 {dimension_numbers = #tpu.dot_dimension_numbers<[1], [0], [0], [1], [0, 0, 1, 1], [], []>} : vector<78x16xf32>, vector<16x32xf32>, vector<78x32xf32> -> vector<78x32xf32>
    %118 = arith.addf %114, %117 : vector<78x32xf32>
    %c20_84 = arith.constant 20 : index
    %c0_85 = arith.constant 0 : index
    %119 = vector.load %arg15[%c20_84, %c0_85] : memref<100x16xf32, #tpu.memory_space<vmem>>, vector<78x16xf32>
    %c96 = arith.constant 96 : index
    %c0_86 = arith.constant 0 : index
    %120 = vector.load %arg4[%c96, %c0_86] : memref<144x32xf32, #tpu.memory_space<vmem>>, vector<16x32xf32>
    %cst_87 = arith.constant dense<0.000000e+00> : vector<78x32xf32>
    %121 = tpu.matmul %119, %120, %cst_87 {dimension_numbers = #tpu.dot_dimension_numbers<[1], [0], [0], [1], [0, 0, 1, 1], [], []>} : vector<78x16xf32>, vector<16x32xf32>, vector<78x32xf32> -> vector<78x32xf32>
    %122 = arith.addf %118, %121 : vector<78x32xf32>
    %c21_88 = arith.constant 21 : index
    %c0_89 = arith.constant 0 : index
    %123 = vector.load %arg15[%c21_88, %c0_89] : memref<100x16xf32, #tpu.memory_space<vmem>>, vector<78x16xf32>
    %c112 = arith.constant 112 : index
    %c0_90 = arith.constant 0 : index
    %124 = vector.load %arg4[%c112, %c0_90] : memref<144x32xf32, #tpu.memory_space<vmem>>, vector<16x32xf32>
    %cst_91 = arith.constant dense<0.000000e+00> : vector<78x32xf32>
    %125 = tpu.matmul %123, %124, %cst_91 {dimension_numbers = #tpu.dot_dimension_numbers<[1], [0], [0], [1], [0, 0, 1, 1], [], []>} : vector<78x16xf32>, vector<16x32xf32>, vector<78x32xf32> -> vector<78x32xf32>
    %126 = arith.addf %122, %125 : vector<78x32xf32>
    %c22 = arith.constant 22 : index
    %c0_92 = arith.constant 0 : index
    %127 = vector.load %arg15[%c22, %c0_92] : memref<100x16xf32, #tpu.memory_space<vmem>>, vector<78x16xf32>
    %c128 = arith.constant 128 : index
    %c0_93 = arith.constant 0 : index
    %128 = vector.load %arg4[%c128, %c0_93] : memref<144x32xf32, #tpu.memory_space<vmem>>, vector<16x32xf32>
    %cst_94 = arith.constant dense<0.000000e+00> : vector<78x32xf32>
    %129 = tpu.matmul %127, %128, %cst_94 {dimension_numbers = #tpu.dot_dimension_numbers<[1], [0], [0], [1], [0, 0, 1, 1], [], []>} : vector<78x16xf32>, vector<16x32xf32>, vector<78x32xf32> -> vector<78x32xf32>
    %130 = arith.addf %126, %129 : vector<78x32xf32>
    %c0_95 = arith.constant 0 : index
    %c0_96 = arith.constant 0 : index
    %131 = vector.load %arg5[%c0_95, %c0_96] : memref<1x32xf32, #tpu.memory_space<vmem>>, vector<1x32xf32>
    %132 = vector.broadcast %131 : vector<1x32xf32> to vector<78x32xf32>
    %133 = arith.addf %130, %132 : vector<78x32xf32>
    %134 = vector.extract_strided_slice %133 {offsets = [0, 0], sizes = [68, 32], strides = [1, 1]} : vector<78x32xf32> to vector<68x32xf32>
    %135 = vector.extract_strided_slice %133 {offsets = [10, 0], sizes = [68, 32], strides = [1, 1]} : vector<78x32xf32> to vector<68x32xf32>
    %136 = arith.maximumf %134, %135 : vector<68x32xf32>
    %137 = vector.extract_strided_slice %136 {offsets = [0, 0], sizes = [67, 32], strides = [1, 1]} : vector<68x32xf32> to vector<67x32xf32>
    %138 = vector.extract_strided_slice %136 {offsets = [1, 0], sizes = [67, 32], strides = [1, 1]} : vector<68x32xf32> to vector<67x32xf32>
    %139 = arith.maximumf %137, %138 : vector<67x32xf32>
    %cst_97 = arith.constant 0.000000e+00 : f32
    %140 = vector.broadcast %cst_97 : f32 to vector<67x32xf32>
    %141 = arith.maximumf %139, %140 : vector<67x32xf32>
    %c0_98 = arith.constant 0 : index
    %c0_99 = arith.constant 0 : index
    %142 = vector.load %arg20[%c0_98, %c0_99] : memref<67x32xf32, #tpu.memory_space<vmem>>, vector<67x32xf32>
    tpu.vector_store %arg20[%c0_98, %c0_99], %141 {strides = array<i32>} : memref<67x32xf32, #tpu.memory_space<vmem>>, vector<67x32xf32>,
    %c0_100 = arith.constant 0 : index
    %c0_101 = arith.constant 0 : index
    %143 = tpu.strided_load %arg20[%c0_100, %c0_101] {strides = array<i32: 2, 1>} : memref<67x32xf32, #tpu.memory_space<vmem>>, vector<4x32xf32>
    %c7_102 = arith.constant 7 : index
    %c0_103 = arith.constant 0 : index
    %144 = vector.load %arg16[%c7_102, %c0_103] : memref<36x32xf32, #tpu.memory_space<vmem>>, vector<4x32xf32>
    tpu.vector_store %arg16[%c7_102, %c0_103], %143 {strides = array<i32>} : memref<36x32xf32, #tpu.memory_space<vmem>>, vector<4x32xf32>,
    %c20_104 = arith.constant 20 : index
    %c0_105 = arith.constant 0 : index
    %145 = tpu.strided_load %arg20[%c20_104, %c0_105] {strides = array<i32: 2, 1>} : memref<67x32xf32, #tpu.memory_space<vmem>>, vector<4x32xf32>
    %c13 = arith.constant 13 : index
    %c0_106 = arith.constant 0 : index
    %146 = vector.load %arg16[%c13, %c0_106] : memref<36x32xf32, #tpu.memory_space<vmem>>, vector<4x32xf32>
    tpu.vector_store %arg16[%c13, %c0_106], %145 {strides = array<i32>} : memref<36x32xf32, #tpu.memory_space<vmem>>, vector<4x32xf32>,
    %c40 = arith.constant 40 : index
    %c0_107 = arith.constant 0 : index
    %147 = tpu.strided_load %arg20[%c40, %c0_107] {strides = array<i32: 2, 1>} : memref<67x32xf32, #tpu.memory_space<vmem>>, vector<4x32xf32>
    %c19_108 = arith.constant 19 : index
    %c0_109 = arith.constant 0 : index
    %148 = vector.load %arg16[%c19_108, %c0_109] : memref<36x32xf32, #tpu.memory_space<vmem>>, vector<4x32xf32>
    tpu.vector_store %arg16[%c19_108, %c0_109], %147 {strides = array<i32>} : memref<36x32xf32, #tpu.memory_space<vmem>>, vector<4x32xf32>,
    %c60 = arith.constant 60 : index
    %c0_110 = arith.constant 0 : index
    %149 = tpu.strided_load %arg20[%c60, %c0_110] {strides = array<i32: 2, 1>} : memref<67x32xf32, #tpu.memory_space<vmem>>, vector<4x32xf32>
    %c25 = arith.constant 25 : index
    %c0_111 = arith.constant 0 : index
    %150 = vector.load %arg16[%c25, %c0_111] : memref<36x32xf32, #tpu.memory_space<vmem>>, vector<4x32xf32>
    tpu.vector_store %arg16[%c25, %c0_111], %149 {strides = array<i32>} : memref<36x32xf32, #tpu.memory_space<vmem>>, vector<4x32xf32>,
    %c0_112 = arith.constant 0 : index
    %c0_113 = arith.constant 0 : index
    %151 = vector.load %arg16[%c0_112, %c0_113] : memref<36x32xf32, #tpu.memory_space<vmem>>, vector<22x32xf32>
    %c0_114 = arith.constant 0 : index
    %c0_115 = arith.constant 0 : index
    %152 = vector.load %arg6[%c0_114, %c0_115] : memref<288x64xf32, #tpu.memory_space<vmem>>, vector<32x64xf32>
    %cst_116 = arith.constant dense<0.000000e+00> : vector<22x64xf32>
    %153 = tpu.matmul %151, %152, %cst_116 {dimension_numbers = #tpu.dot_dimension_numbers<[1], [0], [0], [1], [0, 0, 1, 1], [], []>} : vector<22x32xf32>, vector<32x64xf32>, vector<22x64xf32> -> vector<22x64xf32>
    %c1_117 = arith.constant 1 : index
    %c0_118 = arith.constant 0 : index
    %154 = vector.load %arg16[%c1_117, %c0_118] : memref<36x32xf32, #tpu.memory_space<vmem>>, vector<22x32xf32>
    %c32_119 = arith.constant 32 : index
    %c0_120 = arith.constant 0 : index
    %155 = vector.load %arg6[%c32_119, %c0_120] : memref<288x64xf32, #tpu.memory_space<vmem>>, vector<32x64xf32>
    %cst_121 = arith.constant dense<0.000000e+00> : vector<22x64xf32>
    %156 = tpu.matmul %154, %155, %cst_121 {dimension_numbers = #tpu.dot_dimension_numbers<[1], [0], [0], [1], [0, 0, 1, 1], [], []>} : vector<22x32xf32>, vector<32x64xf32>, vector<22x64xf32> -> vector<22x64xf32>
    %157 = arith.addf %153, %156 : vector<22x64xf32>
    %c2_122 = arith.constant 2 : index
    %c0_123 = arith.constant 0 : index
    %158 = vector.load %arg16[%c2_122, %c0_123] : memref<36x32xf32, #tpu.memory_space<vmem>>, vector<22x32xf32>
    %c64_124 = arith.constant 64 : index
    %c0_125 = arith.constant 0 : index
    %159 = vector.load %arg6[%c64_124, %c0_125] : memref<288x64xf32, #tpu.memory_space<vmem>>, vector<32x64xf32>
    %cst_126 = arith.constant dense<0.000000e+00> : vector<22x64xf32>
    %160 = tpu.matmul %158, %159, %cst_126 {dimension_numbers = #tpu.dot_dimension_numbers<[1], [0], [0], [1], [0, 0, 1, 1], [], []>} : vector<22x32xf32>, vector<32x64xf32>, vector<22x64xf32> -> vector<22x64xf32>
    %161 = arith.addf %157, %160 : vector<22x64xf32>
    %c6_127 = arith.constant 6 : index
    %c0_128 = arith.constant 0 : index
    %162 = vector.load %arg16[%c6_127, %c0_128] : memref<36x32xf32, #tpu.memory_space<vmem>>, vector<22x32xf32>
    %c96_129 = arith.constant 96 : index
    %c0_130 = arith.constant 0 : index
    %163 = vector.load %arg6[%c96_129, %c0_130] : memref<288x64xf32, #tpu.memory_space<vmem>>, vector<32x64xf32>
    %cst_131 = arith.constant dense<0.000000e+00> : vector<22x64xf32>
    %164 = tpu.matmul %162, %163, %cst_131 {dimension_numbers = #tpu.dot_dimension_numbers<[1], [0], [0], [1], [0, 0, 1, 1], [], []>} : vector<22x32xf32>, vector<32x64xf32>, vector<22x64xf32> -> vector<22x64xf32>
    %165 = arith.addf %161, %164 : vector<22x64xf32>
    %c7_132 = arith.constant 7 : index
    %c0_133 = arith.constant 0 : index
    %166 = vector.load %arg16[%c7_132, %c0_133] : memref<36x32xf32, #tpu.memory_space<vmem>>, vector<22x32xf32>
    %c128_134 = arith.constant 128 : index
    %c0_135 = arith.constant 0 : index
    %167 = vector.load %arg6[%c128_134, %c0_135] : memref<288x64xf32, #tpu.memory_space<vmem>>, vector<32x64xf32>
    %cst_136 = arith.constant dense<0.000000e+00> : vector<22x64xf32>
    %168 = tpu.matmul %166, %167, %cst_136 {dimension_numbers = #tpu.dot_dimension_numbers<[1], [0], [0], [1], [0, 0, 1, 1], [], []>} : vector<22x32xf32>, vector<32x64xf32>, vector<22x64xf32> -> vector<22x64xf32>
    %169 = arith.addf %165, %168 : vector<22x64xf32>
    %c8_137 = arith.constant 8 : index
    %c0_138 = arith.constant 0 : index
    %170 = vector.load %arg16[%c8_137, %c0_138] : memref<36x32xf32, #tpu.memory_space<vmem>>, vector<22x32xf32>
    %c160 = arith.constant 160 : index
    %c0_139 = arith.constant 0 : index
    %171 = vector.load %arg6[%c160, %c0_139] : memref<288x64xf32, #tpu.memory_space<vmem>>, vector<32x64xf32>
    %cst_140 = arith.constant dense<0.000000e+00> : vector<22x64xf32>
    %172 = tpu.matmul %170, %171, %cst_140 {dimension_numbers = #tpu.dot_dimension_numbers<[1], [0], [0], [1], [0, 0, 1, 1], [], []>} : vector<22x32xf32>, vector<32x64xf32>, vector<22x64xf32> -> vector<22x64xf32>
    %173 = arith.addf %169, %172 : vector<22x64xf32>
    %c12_141 = arith.constant 12 : index
    %c0_142 = arith.constant 0 : index
    %174 = vector.load %arg16[%c12_141, %c0_142] : memref<36x32xf32, #tpu.memory_space<vmem>>, vector<22x32xf32>
    %c192 = arith.constant 192 : index
    %c0_143 = arith.constant 0 : index
    %175 = vector.load %arg6[%c192, %c0_143] : memref<288x64xf32, #tpu.memory_space<vmem>>, vector<32x64xf32>
    %cst_144 = arith.constant dense<0.000000e+00> : vector<22x64xf32>
    %176 = tpu.matmul %174, %175, %cst_144 {dimension_numbers = #tpu.dot_dimension_numbers<[1], [0], [0], [1], [0, 0, 1, 1], [], []>} : vector<22x32xf32>, vector<32x64xf32>, vector<22x64xf32> -> vector<22x64xf32>
    %177 = arith.addf %173, %176 : vector<22x64xf32>
    %c13_145 = arith.constant 13 : index
    %c0_146 = arith.constant 0 : index
    %178 = vector.load %arg16[%c13_145, %c0_146] : memref<36x32xf32, #tpu.memory_space<vmem>>, vector<22x32xf32>
    %c224 = arith.constant 224 : index
    %c0_147 = arith.constant 0 : index
    %179 = vector.load %arg6[%c224, %c0_147] : memref<288x64xf32, #tpu.memory_space<vmem>>, vector<32x64xf32>
    %cst_148 = arith.constant dense<0.000000e+00> : vector<22x64xf32>
    %180 = tpu.matmul %178, %179, %cst_148 {dimension_numbers = #tpu.dot_dimension_numbers<[1], [0], [0], [1], [0, 0, 1, 1], [], []>} : vector<22x32xf32>, vector<32x64xf32>, vector<22x64xf32> -> vector<22x64xf32>
    %181 = arith.addf %177, %180 : vector<22x64xf32>
    %c14 = arith.constant 14 : index
    %c0_149 = arith.constant 0 : index
    %182 = vector.load %arg16[%c14, %c0_149] : memref<36x32xf32, #tpu.memory_space<vmem>>, vector<22x32xf32>
    %c256 = arith.constant 256 : index
    %c0_150 = arith.constant 0 : index
    %183 = vector.load %arg6[%c256, %c0_150] : memref<288x64xf32, #tpu.memory_space<vmem>>, vector<32x64xf32>
    %cst_151 = arith.constant dense<0.000000e+00> : vector<22x64xf32>
    %184 = tpu.matmul %182, %183, %cst_151 {dimension_numbers = #tpu.dot_dimension_numbers<[1], [0], [0], [1], [0, 0, 1, 1], [], []>} : vector<22x32xf32>, vector<32x64xf32>, vector<22x64xf32> -> vector<22x64xf32>
    %185 = arith.addf %181, %184 : vector<22x64xf32>
    %c0_152 = arith.constant 0 : index
    %c0_153 = arith.constant 0 : index
    %186 = vector.load %arg7[%c0_152, %c0_153] : memref<1x64xf32, #tpu.memory_space<vmem>>, vector<1x64xf32>
    %187 = vector.broadcast %186 : vector<1x64xf32> to vector<22x64xf32>
    %188 = arith.addf %185, %187 : vector<22x64xf32>
    %189 = vector.extract_strided_slice %188 {offsets = [0, 0], sizes = [16, 64], strides = [1, 1]} : vector<22x64xf32> to vector<16x64xf32>
    %190 = vector.extract_strided_slice %188 {offsets = [6, 0], sizes = [16, 64], strides = [1, 1]} : vector<22x64xf32> to vector<16x64xf32>
    %191 = arith.maximumf %189, %190 : vector<16x64xf32>
    %192 = vector.extract_strided_slice %191 {offsets = [0, 0], sizes = [15, 64], strides = [1, 1]} : vector<16x64xf32> to vector<15x64xf32>
    %193 = vector.extract_strided_slice %191 {offsets = [1, 0], sizes = [15, 64], strides = [1, 1]} : vector<16x64xf32> to vector<15x64xf32>
    %194 = arith.maximumf %192, %193 : vector<15x64xf32>
    %c0_154 = arith.constant 0 : index
    %c0_155 = arith.constant 0 : index
    %195 = vector.load %arg21[%c0_154, %c0_155] : memref<15x64xf32, #tpu.memory_space<vmem>>, vector<15x64xf32>
    tpu.vector_store %arg21[%c0_154, %c0_155], %194 {strides = array<i32>} : memref<15x64xf32, #tpu.memory_space<vmem>>, vector<15x64xf32>,
    %c0_156 = arith.constant 0 : index
    %c0_157 = arith.constant 0 : index
    %196 = tpu.strided_load %arg21[%c0_156, %c0_157] {strides = array<i32: 2, 1>} : memref<15x64xf32, #tpu.memory_space<vmem>>, vector<2x64xf32>
    %c0_158 = arith.constant 0 : index
    %c0_159 = arith.constant 0 : index
    %197 = vector.load %arg18[%c0_158, %c0_159] : memref<4x64xf32, #tpu.memory_space<vmem>>, vector<2x64xf32>
    tpu.vector_store %arg18[%c0_158, %c0_159], %196 {strides = array<i32>} : memref<4x64xf32, #tpu.memory_space<vmem>>, vector<2x64xf32>,
    %c12_160 = arith.constant 12 : index
    %c0_161 = arith.constant 0 : index
    %198 = tpu.strided_load %arg21[%c12_160, %c0_161] {strides = array<i32: 2, 1>} : memref<15x64xf32, #tpu.memory_space<vmem>>, vector<2x64xf32>
    %c2_162 = arith.constant 2 : index
    %c0_163 = arith.constant 0 : index
    %199 = vector.load %arg18[%c2_162, %c0_163] : memref<4x64xf32, #tpu.memory_space<vmem>>, vector<2x64xf32>
    tpu.vector_store %arg18[%c2_162, %c0_163], %198 {strides = array<i32>} : memref<4x64xf32, #tpu.memory_space<vmem>>, vector<2x64xf32>,
    %c0_164 = arith.constant 0 : index
    %c0_165 = arith.constant 0 : index
    %200 = vector.load %arg18[%c0_164, %c0_165] : memref<4x64xf32, #tpu.memory_space<vmem>>, vector<4x64xf32>
    %c0_166 = arith.constant 0 : index
    %c0_167 = arith.constant 0 : index
    %201 = vector.load %arg8[%c0_166, %c0_167] : memref<64x128xf32, #tpu.memory_space<vmem>>, vector<64x128xf32>
    %cst_168 = arith.constant dense<0.000000e+00> : vector<4x128xf32>
    %202 = tpu.matmul %200, %201, %cst_168 {dimension_numbers = #tpu.dot_dimension_numbers<[1], [0], [0], [1], [0, 0, 1, 1], [], []>} : vector<4x64xf32>, vector<64x128xf32>, vector<4x128xf32> -> vector<4x128xf32>
    %c0_169 = arith.constant 0 : index
    %c0_170 = arith.constant 0 : index
    %203 = vector.load %arg9[%c0_169, %c0_170] : memref<1x128xf32, #tpu.memory_space<vmem>>, vector<1x128xf32>
    %204 = vector.broadcast %203 : vector<1x128xf32> to vector<4x128xf32>
    %205 = arith.addf %202, %204 : vector<4x128xf32>
    %cst_171 = arith.constant 0.000000e+00 : f32
    %206 = vector.broadcast %cst_171 : f32 to vector<4x128xf32>
    %207 = arith.maximumf %205, %206 : vector<4x128xf32>
    %208 = vector.extract_strided_slice %207 {offsets = [0, 0], sizes = [2, 32], strides = [1, 1]} : vector<4x128xf32> to vector<2x32xf32>
    %c7_172 = arith.constant 7 : index
    %c0_173 = arith.constant 0 : index
    %209 = tpu.strided_load %arg17[%c7_172, %c0_173] {strides = array<i32: 2, 1>} : memref<36x32xf32, #tpu.memory_space<vmem>>, vector<2x32xf32>
    tpu.strided_store %arg17[%c7_172, %c0_173], %208 {strides = array<i32: 2, 1>} : memref<36x32xf32, #tpu.memory_space<vmem>>, vector<2x32xf32>
    %210 = vector.extract_strided_slice %207 {offsets = [0, 32], sizes = [2, 32], strides = [1, 1]} : vector<4x128xf32> to vector<2x32xf32>
    %c8_174 = arith.constant 8 : index
    %c0_175 = arith.constant 0 : index
    %211 = tpu.strided_load %arg17[%c8_174, %c0_175] {strides = array<i32: 2, 1>} : memref<36x32xf32, #tpu.memory_space<vmem>>, vector<2x32xf32>
    tpu.strided_store %arg17[%c8_174, %c0_175], %210 {strides = array<i32: 2, 1>} : memref<36x32xf32, #tpu.memory_space<vmem>>, vector<2x32xf32>
    %212 = vector.extract_strided_slice %207 {offsets = [2, 0], sizes = [2, 32], strides = [1, 1]} : vector<4x128xf32> to vector<2x32xf32>
    %c19_176 = arith.constant 19 : index
    %c0_177 = arith.constant 0 : index
    %213 = tpu.strided_load %arg17[%c19_176, %c0_177] {strides = array<i32: 2, 1>} : memref<36x32xf32, #tpu.memory_space<vmem>>, vector<2x32xf32>
    tpu.strided_store %arg17[%c19_176, %c0_177], %212 {strides = array<i32: 2, 1>} : memref<36x32xf32, #tpu.memory_space<vmem>>, vector<2x32xf32>
    %214 = vector.extract_strided_slice %207 {offsets = [2, 32], sizes = [2, 32], strides = [1, 1]} : vector<4x128xf32> to vector<2x32xf32>
    %c20_178 = arith.constant 20 : index
    %c0_179 = arith.constant 0 : index
    %215 = tpu.strided_load %arg17[%c20_178, %c0_179] {strides = array<i32: 2, 1>} : memref<36x32xf32, #tpu.memory_space<vmem>>, vector<2x32xf32>
    tpu.strided_store %arg17[%c20_178, %c0_179], %214 {strides = array<i32: 2, 1>} : memref<36x32xf32, #tpu.memory_space<vmem>>, vector<2x32xf32>
    %216 = vector.extract_strided_slice %207 {offsets = [0, 64], sizes = [2, 32], strides = [1, 1]} : vector<4x128xf32> to vector<2x32xf32>
    %c13_180 = arith.constant 13 : index
    %c0_181 = arith.constant 0 : index
    %217 = tpu.strided_load %arg17[%c13_180, %c0_181] {strides = array<i32: 2, 1>} : memref<36x32xf32, #tpu.memory_space<vmem>>, vector<2x32xf32>
    tpu.strided_store %arg17[%c13_180, %c0_181], %216 {strides = array<i32: 2, 1>} : memref<36x32xf32, #tpu.memory_space<vmem>>, vector<2x32xf32>
    %218 = vector.extract_strided_slice %207 {offsets = [0, 96], sizes = [2, 32], strides = [1, 1]} : vector<4x128xf32> to vector<2x32xf32>
    %c14_182 = arith.constant 14 : index
    %c0_183 = arith.constant 0 : index
    %219 = tpu.strided_load %arg17[%c14_182, %c0_183] {strides = array<i32: 2, 1>} : memref<36x32xf32, #tpu.memory_space<vmem>>, vector<2x32xf32>
    tpu.strided_store %arg17[%c14_182, %c0_183], %218 {strides = array<i32: 2, 1>} : memref<36x32xf32, #tpu.memory_space<vmem>>, vector<2x32xf32>
    %220 = vector.extract_strided_slice %207 {offsets = [2, 64], sizes = [2, 32], strides = [1, 1]} : vector<4x128xf32> to vector<2x32xf32>
    %c25_184 = arith.constant 25 : index
    %c0_185 = arith.constant 0 : index
    %221 = tpu.strided_load %arg17[%c25_184, %c0_185] {strides = array<i32: 2, 1>} : memref<36x32xf32, #tpu.memory_space<vmem>>, vector<2x32xf32>
    tpu.strided_store %arg17[%c25_184, %c0_185], %220 {strides = array<i32: 2, 1>} : memref<36x32xf32, #tpu.memory_space<vmem>>, vector<2x32xf32>
    %222 = vector.extract_strided_slice %207 {offsets = [2, 96], sizes = [2, 32], strides = [1, 1]} : vector<4x128xf32> to vector<2x32xf32>
    %c26 = arith.constant 26 : index
    %c0_186 = arith.constant 0 : index
    %223 = tpu.strided_load %arg17[%c26, %c0_186] {strides = array<i32: 2, 1>} : memref<36x32xf32, #tpu.memory_space<vmem>>, vector<2x32xf32>
    tpu.strided_store %arg17[%c26, %c0_186], %222 {strides = array<i32: 2, 1>} : memref<36x32xf32, #tpu.memory_space<vmem>>, vector<2x32xf32>
    %c0_187 = arith.constant 0 : index
    %c0_188 = arith.constant 0 : index
    %224 = vector.load %arg17[%c0_187, %c0_188] : memref<36x32xf32, #tpu.memory_space<vmem>>, vector<29x32xf32>
    %c0_189 = arith.constant 0 : index
    %c0_190 = arith.constant 0 : index
    %225 = vector.load %arg10[%c0_189, %c0_190] : memref<128x64xf32, #tpu.memory_space<vmem>>, vector<32x64xf32>
    %cst_191 = arith.constant dense<0.000000e+00> : vector<29x64xf32>
    %226 = tpu.matmul %224, %225, %cst_191 {dimension_numbers = #tpu.dot_dimension_numbers<[1], [0], [0], [1], [0, 0, 1, 1], [], []>} : vector<29x32xf32>, vector<32x64xf32>, vector<29x64xf32> -> vector<29x64xf32>
    %c1_192 = arith.constant 1 : index
    %c0_193 = arith.constant 0 : index
    %227 = vector.load %arg17[%c1_192, %c0_193] : memref<36x32xf32, #tpu.memory_space<vmem>>, vector<29x32xf32>
    %c32_194 = arith.constant 32 : index
    %c0_195 = arith.constant 0 : index
    %228 = vector.load %arg10[%c32_194, %c0_195] : memref<128x64xf32, #tpu.memory_space<vmem>>, vector<32x64xf32>
    %cst_196 = arith.constant dense<0.000000e+00> : vector<29x64xf32>
    %229 = tpu.matmul %227, %228, %cst_196 {dimension_numbers = #tpu.dot_dimension_numbers<[1], [0], [0], [1], [0, 0, 1, 1], [], []>} : vector<29x32xf32>, vector<32x64xf32>, vector<29x64xf32> -> vector<29x64xf32>
    %230 = arith.addf %226, %229 : vector<29x64xf32>
    %c6_197 = arith.constant 6 : index
    %c0_198 = arith.constant 0 : index
    %231 = vector.load %arg17[%c6_197, %c0_198] : memref<36x32xf32, #tpu.memory_space<vmem>>, vector<29x32xf32>
    %c64_199 = arith.constant 64 : index
    %c0_200 = arith.constant 0 : index
    %232 = vector.load %arg10[%c64_199, %c0_200] : memref<128x64xf32, #tpu.memory_space<vmem>>, vector<32x64xf32>
    %cst_201 = arith.constant dense<0.000000e+00> : vector<29x64xf32>
    %233 = tpu.matmul %231, %232, %cst_201 {dimension_numbers = #tpu.dot_dimension_numbers<[1], [0], [0], [1], [0, 0, 1, 1], [], []>} : vector<29x32xf32>, vector<32x64xf32>, vector<29x64xf32> -> vector<29x64xf32>
    %234 = arith.addf %230, %233 : vector<29x64xf32>
    %c7_202 = arith.constant 7 : index
    %c0_203 = arith.constant 0 : index
    %235 = vector.load %arg17[%c7_202, %c0_203] : memref<36x32xf32, #tpu.memory_space<vmem>>, vector<29x32xf32>
    %c96_204 = arith.constant 96 : index
    %c0_205 = arith.constant 0 : index
    %236 = vector.load %arg10[%c96_204, %c0_205] : memref<128x64xf32, #tpu.memory_space<vmem>>, vector<32x64xf32>
    %cst_206 = arith.constant dense<0.000000e+00> : vector<29x64xf32>
    %237 = tpu.matmul %235, %236, %cst_206 {dimension_numbers = #tpu.dot_dimension_numbers<[1], [0], [0], [1], [0, 0, 1, 1], [], []>} : vector<29x32xf32>, vector<32x64xf32>, vector<29x64xf32> -> vector<29x64xf32>
    %238 = arith.addf %234, %237 : vector<29x64xf32>
    %c0_207 = arith.constant 0 : index
    %c0_208 = arith.constant 0 : index
    %239 = vector.load %arg11[%c0_207, %c0_208] : memref<1x64xf32, #tpu.memory_space<vmem>>, vector<1x64xf32>
    %240 = vector.broadcast %239 : vector<1x64xf32> to vector<29x64xf32>
    %241 = arith.addf %238, %240 : vector<29x64xf32>
    %cst_209 = arith.constant 0.000000e+00 : f32
    %242 = vector.broadcast %cst_209 : f32 to vector<29x64xf32>
    %243 = arith.maximumf %241, %242 : vector<29x64xf32>
    %c0_210 = arith.constant 0 : index
    %c0_211 = arith.constant 0 : index
    %244 = vector.load %arg12[%c0_210, %c0_211] : memref<64x16xf32, #tpu.memory_space<vmem>>, vector<64x16xf32>
    %cst_212 = arith.constant dense<0.000000e+00> : vector<29x16xf32>
    %245 = tpu.matmul %243, %244, %cst_212 {dimension_numbers = #tpu.dot_dimension_numbers<[1], [0], [0], [1], [0, 0, 1, 1], [], []>} : vector<29x64xf32>, vector<64x16xf32>, vector<29x16xf32> -> vector<29x16xf32>
    %c0_213 = arith.constant 0 : index
    %c0_214 = arith.constant 0 : index
    %246 = vector.load %arg13[%c0_213, %c0_214] : memref<1x16xf32, #tpu.memory_space<vmem>>, vector<1x16xf32>
    %247 = vector.broadcast %246 : vector<1x16xf32> to vector<29x16xf32>
    %248 = arith.addf %245, %247 : vector<29x16xf32>
    %cst_215 = arith.constant 0.000000e+00 : f32
    %249 = vector.broadcast %cst_215 : f32 to vector<29x16xf32>
    %250 = arith.maximumf %248, %249 : vector<29x16xf32>
    %c0_216 = arith.constant 0 : index
    %c0_217 = arith.constant 0 : index
    %c0_218 = arith.constant 0 : index
    %251 = vector.load %arg14[%c0_216, %c0_217, %c0_218] : memref<1x29x16xf32, #tpu.memory_space<vmem>>, vector<1x29x16xf32>
    %252 = vector.shape_cast %251 : vector<1x29x16xf32> to vector<29x16xf32>
    %253 = vector.shape_cast %250 : vector<29x16xf32> to vector<1x29x16xf32>
    tpu.vector_store %arg14[%c0_216, %c0_217, %c0_218], %253 {strides = array<i32>} : memref<1x29x16xf32, #tpu.memory_space<vmem>>, vector<1x29x16xf32>,
    return
  }
  func.func @transform_0(%arg0: i32) -> (i32, i32, i32) {
    %c0_i32 = arith.constant 0 : i32
    %c0_i32_0 = arith.constant 0 : i32
    %c0_i32_1 = arith.constant 0 : i32
    return %arg0, %c0_i32, %c0_i32_0 : i32, i32, i32
  }
  func.func @transform_1(%arg0: i32) -> (i32, i32) {
    %c0_i32 = arith.constant 0 : i32
    %c0_i32_0 = arith.constant 0 : i32
    %c0_i32_1 = arith.constant 0 : i32
    return %c0_i32, %c0_i32_0 : i32, i32
  }
  func.func @transform_2(%arg0: i32) -> (i32, i32) {
    %c0_i32 = arith.constant 0 : i32
    %c0_i32_0 = arith.constant 0 : i32
    %c0_i32_1 = arith.constant 0 : i32
    return %c0_i32, %c0_i32_0 : i32, i32
  }
  func.func @transform_3(%arg0: i32) -> (i32, i32) {
    %c0_i32 = arith.constant 0 : i32
    %c0_i32_0 = arith.constant 0 : i32
    %c0_i32_1 = arith.constant 0 : i32
    return %c0_i32, %c0_i32_0 : i32, i32
  }
  func.func @transform_4(%arg0: i32) -> (i32, i32) {
    %c0_i32 = arith.constant 0 : i32
    %c0_i32_0 = arith.constant 0 : i32
    %c0_i32_1 = arith.constant 0 : i32
    return %c0_i32, %c0_i32_0 : i32, i32
  }
  func.func @transform_5(%arg0: i32) -> (i32, i32) {
    %c0_i32 = arith.constant 0 : i32
    %c0_i32_0 = arith.constant 0 : i32
    %c0_i32_1 = arith.constant 0 : i32
    return %c0_i32, %c0_i32_0 : i32, i32
  }
  func.func @transform_6(%arg0: i32) -> (i32, i32) {
    %c0_i32 = arith.constant 0 : i32
    %c0_i32_0 = arith.constant 0 : i32
    %c0_i32_1 = arith.constant 0 : i32
    return %c0_i32, %c0_i32_0 : i32, i32
  }
  func.func @transform_7(%arg0: i32) -> (i32, i32) {
    %c0_i32 = arith.constant 0 : i32
    %c0_i32_0 = arith.constant 0 : i32
    %c0_i32_1 = arith.constant 0 : i32
    return %c0_i32, %c0_i32_0 : i32, i32
  }
  func.func @transform_8(%arg0: i32) -> (i32, i32) {
    %c0_i32 = arith.constant 0 : i32
    %c0_i32_0 = arith.constant 0 : i32
    %c0_i32_1 = arith.constant 0 : i32
    return %c0_i32, %c0_i32_0 : i32, i32
  }
  func.func @transform_9(%arg0: i32) -> (i32, i32) {
    %c0_i32 = arith.constant 0 : i32
    %c0_i32_0 = arith.constant 0 : i32
    %c0_i32_1 = arith.constant 0 : i32
    return %c0_i32, %c0_i32_0 : i32, i32
  }
  func.func @transform_10(%arg0: i32) -> (i32, i32) {
    %c0_i32 = arith.constant 0 : i32
    %c0_i32_0 = arith.constant 0 : i32
    %c0_i32_1 = arith.constant 0 : i32
    return %c0_i32, %c0_i32_0 : i32, i32
  }
  func.func @transform_11(%arg0: i32) -> (i32, i32) {
    %c0_i32 = arith.constant 0 : i32
    %c0_i32_0 = arith.constant 0 : i32
    %c0_i32_1 = arith.constant 0 : i32
    return %c0_i32, %c0_i32_0 : i32, i32
  }
  func.func @transform_12(%arg0: i32) -> (i32, i32) {
    %c0_i32 = arith.constant 0 : i32
    %c0_i32_0 = arith.constant 0 : i32
    %c0_i32_1 = arith.constant 0 : i32
    return %c0_i32, %c0_i32_0 : i32, i32
  }
  func.func @transform_13(%arg0: i32) -> (i32, i32, i32) {
    %c0_i32 = arith.constant 0 : i32
    %c0_i32_0 = arith.constant 0 : i32
    %c0_i32_1 = arith.constant 0 : i32
    return %arg0, %c0_i32, %c0_i32_0 : i32, i32, i32
  }
}

</mosaic_0001>

<llo_original>
// kernel: fwd.1
$region0: #{fwd.1}
  #allocation0 [shape = 'u32[]', space=smem, size = 0x4, offset = 0x4, fixed_abs, tag = 'smem constant byte address 0x4 - core index']
  #allocation1 [shape = 'u32[144,128]{1,0:T(1,128)}', space=vmem, size = 0x12000, scoped, tag = 'internal scratch']
  #allocation2 [shape = 'f32[100,16]{1,0:T(8,128)}', space=vmem, size = 0xd000, scoped, tag = 'scratch operand']
  #allocation3 [shape = 'f32[36,32]{1,0:T(8,128)}', space=vmem, size = 0x5000, scoped, tag = 'scratch operand']
  #allocation4 [shape = 'f32[36,32]{1,0:T(8,128)}', space=vmem, size = 0x5000, scoped, tag = 'scratch operand']
  #allocation5 [shape = 'f32[4,64]{1,0:T(4,128)}', space=vmem, size = 0x800, scoped, tag = 'scratch operand']
  #allocation6 [shape = 'f32[267,16]{1,0:T(8,128)}', space=vmem, size = 0x22000, scoped, tag = 'scratch operand']
  #allocation7 [shape = 'f32[67,32]{1,0:T(8,128)}', space=vmem, size = 0x9000, scoped, tag = 'scratch operand']
  #allocation8 [shape = 'f32[15,64]{1,0:T(8,128)}', space=vmem, size = 0x2000, scoped, tag = 'scratch operand']
  %s0 = inlined_call_operand.vmem [shape: f32[2,324,1], index: 0, kind: input, shape index: {}]
  %s1 = inlined_call_operand.vmem [shape: f32[9,16], index: 1, kind: input, shape index: {}]
  %s2 = inlined_call_operand.vmem [shape: f32[1,16], index: 2, kind: input, shape index: {}]
  %s3 = inlined_call_operand.vmem [shape: f32[144,32], index: 3, kind: input, shape index: {}]
  %s4 = inlined_call_operand.vmem [shape: f32[1,32], index: 4, kind: input, shape index: {}]
  %s5 = inlined_call_operand.vmem [shape: f32[288,64], index: 5, kind: input, shape index: {}]
  %s6 = inlined_call_operand.vmem [shape: f32[1,64], index: 6, kind: input, shape index: {}]
  %s7 = inlined_call_operand.vmem [shape: f32[64,128], index: 7, kind: input, shape index: {}]
  %s8 = inlined_call_operand.vmem [shape: f32[1,128], index: 8, kind: input, shape index: {}]
  %s9 = inlined_call_operand.vmem [shape: f32[128,64], index: 9, kind: input, shape index: {}]
  %s10 = inlined_call_operand.vmem [shape: f32[1,64], index: 10, kind: input, shape index: {}]
  %s11 = inlined_call_operand.vmem [shape: f32[64,16], index: 11, kind: input, shape index: {}]
  %s12 = inlined_call_operand.vmem [shape: f32[1,16], index: 12, kind: input, shape index: {}]
  %s13 = inlined_call_operand.vmem [shape: f32[2,29,16], index: 13, kind: output, shape index: {}]
  %s14 = sld [smem:[#allocation0]]
  $region85: #{fwd.1} parent=0
    _
  %s16 = ssub.s32 1, %s14
  %s17 = scalar_select 0, %s16, %s14
  loop: start=0, step=1, limit=4
  $region2: #{fwd.1} parent=0 // loop_pre_header
    _
  $region3: #{fwd.1} parent=0 // loop_header
    %s19 = sphi 0, %s23
    %p20 = scmp.ge.s32.totalorder %s19, 4
    %s29 = sphi 0, %s31
    %s32 = sphi 0, %s29
    %s33 = sphi 0, %s32
    %s49 = sphi 0, %s33
    %s53 = sphi 0, %s53
    %s55 = sphi 0, %s53
    %s56 = sphi 0, %s55
    %s70 = sphi 0, %s56
    %s74 = sphi 0, %s74
    %s76 = sphi 0, %s74
    %s77 = sphi 0, %s76
    %s91 = sphi 0, %s77
    %s95 = sphi 0, %s95
    %s97 = sphi 0, %s95
    %s98 = sphi 0, %s97
    %s112 = sphi 0, %s98
    %s116 = sphi 0, %s116
    %s118 = sphi 0, %s116
    %s119 = sphi 0, %s118
    %s133 = sphi 0, %s119
    %s137 = sphi 0, %s137
    %s139 = sphi 0, %s137
    %s140 = sphi 0, %s139
    %s154 = sphi 0, %s140
    %s158 = sphi 0, %s158
    %s160 = sphi 0, %s158
    %s161 = sphi 0, %s160
    %s175 = sphi 0, %s161
    %s179 = sphi 0, %s179
    %s181 = sphi 0, %s179
    %s182 = sphi 0, %s181
    %s196 = sphi 0, %s182
    %s200 = sphi 0, %s200
    %s202 = sphi 0, %s200
    %s203 = sphi 0, %s202
    %s217 = sphi 0, %s203
    %s221 = sphi 0, %s221
    %s223 = sphi 0, %s221
    %s224 = sphi 0, %s223
    %s238 = sphi 0, %s224
    %s242 = sphi 0, %s242
    %s244 = sphi 0, %s242
    %s245 = sphi 0, %s244
    %s259 = sphi 0, %s245
    %s263 = sphi 0, %s263
    %s265 = sphi 0, %s263
    %s266 = sphi 0, %s265
    %s280 = sphi 0, %s266
    %s284 = sphi 0, %s284
    %s286 = sphi 0, %s284
    %s287 = sphi 0, %s286
    %s301 = sphi 0, %s287
    %s307 = sphi 0, %s309
    %s310 = sphi 0, %s307
    %s311 = sphi 0, %s310
    %s327 = sphi 0, %s311
  $region4: #{fwd.1} parent=0 // loop_header_branch
    %22 = sbr.rel (%p20) target = $region8
  $region5: #{fwd.1} parent=0 // loop_body
    %s24 = ssub.s32 %s19, 1
    %s25 = ssub.s32 %s19, 2
    %s26 = sadd.s32 %s19, 1
    %s27 = ssub.s32 %s19, %s26
    %p28 = scmp.eq.s32.totalorder %s27, 0
    %s30 = sadd.s32 %s29, 1
    %s31 = scalar_select %p28, %s29, %s30
    %p34 = pneg %p28
    %p35 = scmp.eq.s32.totalorder %s19, 1
    %p36 = por %p34, %p35
    %p37 = scmp.ne.s32.totalorder %s29, %s32
    %p38 = scmp.eq.s32.totalorder %s19, 0
    %p39 = por %p37, %p38
    %p40 = scmp.ne.s32.totalorder %s29, %s32
    %p41 = scmp.eq.s32.totalorder %s24, 1
    %p42 = por %p40, %p41
    %p43 = scmp.ne.s32.totalorder %s32, %s33
    %p44 = scmp.eq.s32.totalorder %s24, 0
    %p45 = por %p43, %p44
    %p46 = scmp.ne.s32.totalorder %s32, %s33
    %p47 = scmp.eq.s32.totalorder %s25, 1
    %p48 = por %p46, %p47
    %p50 = scmp.ne.s32.totalorder %s33, %s49
    %p51 = scmp.eq.s32.totalorder %s25, 0
    %p52 = por %p50, %p51
    %s54 = sadd.s32 %s53, 1
    %p57 = scmp.eq.s32.totalorder %s19, 1
    %p58 = scmp.ne.s32.totalorder %s53, %s55
    %p59 = scmp.eq.s32.totalorder %s19, 0
    %p60 = por %p58, %p59
    %p61 = scmp.ne.s32.totalorder %s53, %s55
    %p62 = scmp.eq.s32.totalorder %s24, 1
    %p63 = por %p61, %p62
    %p64 = scmp.ne.s32.totalorder %s55, %s56
    %p65 = scmp.eq.s32.totalorder %s24, 0
    %p66 = por %p64, %p65
    %p67 = scmp.ne.s32.totalorder %s55, %s56
    %p68 = scmp.eq.s32.totalorder %s25, 1
    %p69 = por %p67, %p68
    %p71 = scmp.ne.s32.totalorder %s56, %s70
    %p72 = scmp.eq.s32.totalorder %s25, 0
    %p73 = por %p71, %p72
    %s75 = sadd.s32 %s74, 1
    %p78 = scmp.eq.s32.totalorder %s19, 1
    %p79 = scmp.ne.s32.totalorder %s74, %s76
    %p80 = scmp.eq.s32.totalorder %s19, 0
    %p81 = por %p79, %p80
    %p82 = scmp.ne.s32.totalorder %s74, %s76
    %p83 = scmp.eq.s32.totalorder %s24, 1
    %p84 = por %p82, %p83
    %p85 = scmp.ne.s32.totalorder %s76, %s77
    %p86 = scmp.eq.s32.totalorder %s24, 0
    %p87 = por %p85, %p86
    %p88 = scmp.ne.s32.totalorder %s76, %s77
    %p89 = scmp.eq.s32.totalorder %s25, 1
    %p90 = por %p88, %p89
    %p92 = scmp.ne.s32.totalorder %s77, %s91
    %p93 = scmp.eq.s32.totalorder %s25, 0
    %p94 = por %p92, %p93
    %s96 = sadd.s32 %s95, 1
    %p99 = scmp.eq.s32.totalorder %s19, 1
    %p100 = scmp.ne.s32.totalorder %s95, %s97
    %p101 = scmp.eq.s32.totalorder %s19, 0
    %p102 = por %p100, %p101
    %p103 = scmp.ne.s32.totalorder %s95, %s97
    %p104 = scmp.eq.s32.totalorder %s24, 1
    %p105 = por %p103, %p104
    %p106 = scmp.ne.s32.totalorder %s97, %s98
    %p107 = scmp.eq.s32.totalorder %s24, 0
    %p108 = por %p106, %p107
    %p109 = scmp.ne.s32.totalorder %s97, %s98
    %p110 = scmp.eq.s32.totalorder %s25, 1
    %p111 = por %p109, %p110
    %p113 = scmp.ne.s32.totalorder %s98, %s112
    %p114 = scmp.eq.s32.totalorder %s25, 0
    %p115 = por %p113, %p114
    %s117 = sadd.s32 %s116, 1
    %p120 = scmp.eq.s32.totalorder %s19, 1
    %p121 = scmp.ne.s32.totalorder %s116, %s118
    %p122 = scmp.eq.s32.totalorder %s19, 0
    %p123 = por %p121, %p122
    %p124 = scmp.ne.s32.totalorder %s116, %s118
    %p125 = scmp.eq.s32.totalorder %s24, 1
    %p126 = por %p124, %p125
    %p127 = scmp.ne.s32.totalorder %s118, %s119
    %p128 = scmp.eq.s32.totalorder %s24, 0
    %p129 = por %p127, %p128
    %p130 = scmp.ne.s32.totalorder %s118, %s119
    %p131 = scmp.eq.s32.totalorder %s25, 1
    %p132 = por %p130, %p131
    %p134 = scmp.ne.s32.totalorder %s119, %s133
    %p135 = scmp.eq.s32.totalorder %s25, 0
    %p136 = por %p134, %p135
    %s138 = sadd.s32 %s137, 1
    %p141 = scmp.eq.s32.totalorder %s19, 1
    %p142 = scmp.ne.s32.totalorder %s137, %s139
    %p143 = scmp.eq.s32.totalorder %s19, 0
    %p144 = por %p142, %p143
    %p145 = scmp.ne.s32.totalorder %s137, %s139
    %p146 = scmp.eq.s32.totalorder %s24, 1
    %p147 = por %p145, %p146
    %p148 = scmp.ne.s32.totalorder %s139, %s140
    %p149 = scmp.eq.s32.totalorder %s24, 0
    %p150 = por %p148, %p149
    %p151 = scmp.ne.s32.totalorder %s139, %s140
    %p152 = scmp.eq.s32.totalorder %s25, 1
    %p153 = por %p151, %p152
    %p155 = scmp.ne.s32.totalorder %s140, %s154
    %p156 = scmp.eq.s32.totalorder %s25, 0
    %p157 = por %p155, %p156
    %s159 = sadd.s32 %s158, 1
    %p162 = scmp.eq.s32.totalorder %s19, 1
    %p163 = scmp.ne.s32.totalorder %s158, %s160
    %p164 = scmp.eq.s32.totalorder %s19, 0
    %p165 = por %p163, %p164
    %p166 = scmp.ne.s32.totalorder %s158, %s160
    %p167 = scmp.eq.s32.totalorder %s24, 1
    %p168 = por %p166, %p167
    %p169 = scmp.ne.s32.totalorder %s160, %s161
    %p170 = scmp.eq.s32.totalorder %s24, 0
    %p171 = por %p169, %p170
    %p172 = scmp.ne.s32.totalorder %s160, %s161
    %p173 = scmp.eq.s32.totalorder %s25, 1
    %p174 = por %p172, %p173
    %p176 = scmp.ne.s32.totalorder %s161, %s175
    %p177 = scmp.eq.s32.totalorder %s25, 0
    %p178 = por %p176, %p177
    %s180 = sadd.s32 %s179, 1
    %p183 = scmp.eq.s32.totalorder %s19, 1
    %p184 = scmp.ne.s32.totalorder %s179, %s181
    %p185 = scmp.eq.s32.totalorder %s19, 0
    %p186 = por %p184, %p185
    %p187 = scmp.ne.s32.totalorder %s179, %s181
    %p188 = scmp.eq.s32.totalorder %s24, 1
    %p189 = por %p187, %p188
    %p190 = scmp.ne.s32.totalorder %s181, %s182
    %p191 = scmp.eq.s32.totalorder %s24, 0
    %p192 = por %p190, %p191
    %p193 = scmp.ne.s32.totalorder %s181, %s182
    %p194 = scmp.eq.s32.totalorder %s25, 1
    %p195 = por %p193, %p194
    %p197 = scmp.ne.s32.totalorder %s182, %s196
    %p198 = scmp.eq.s32.totalorder %s25, 0
    %p199 = por %p197, %p198
    %s201 = sadd.s32 %s200, 1
    %p204 = scmp.eq.s32.totalorder %s19, 1
    %p205 = scmp.ne.s32.totalorder %s200, %s202
    %p206 = scmp.eq.s32.totalorder %s19, 0
    %p207 = por %p205, %p206
    %p208 = scmp.ne.s32.totalorder %s200, %s202
    %p209 = scmp.eq.s32.totalorder %s24, 1
    %p210 = por %p208, %p209
    %p211 = scmp.ne.s32.totalorder %s202, %s203
    %p212 = scmp.eq.s32.totalorder %s24, 0
    %p213 = por %p211, %p212
    %p214 = scmp.ne.s32.totalorder %s202, %s203
    %p215 = scmp.eq.s32.totalorder %s25, 1
    %p216 = por %p214, %p215
    %p218 = scmp.ne.s32.totalorder %s203, %s217
    %p219 = scmp.eq.s32.totalorder %s25, 0
    %p220 = por %p218, %p219
    %s222 = sadd.s32 %s221, 1
    %p225 = scmp.eq.s32.totalorder %s19, 1
    %p226 = scmp.ne.s32.totalorder %s221, %s223
    %p227 = scmp.eq.s32.totalorder %s19, 0
    %p228 = por %p226, %p227
    %p229 = scmp.ne.s32.totalorder %s221, %s223
    %p230 = scmp.eq.s32.totalorder %s24, 1
    %p231 = por %p229, %p230
    %p232 = scmp.ne.s32.totalorder %s223, %s224
    %p233 = scmp.eq.s32.totalorder %s24, 0
    %p234 = por %p232, %p233
    %p235 = scmp.ne.s32.totalorder %s223, %s224
    %p236 = scmp.eq.s32.totalorder %s25, 1
    %p237 = por %p235, %p236
    %p239 = scmp.ne.s32.totalorder %s224, %s238
    %p240 = scmp.eq.s32.totalorder %s25, 0
    %p241 = por %p239, %p240
    %s243 = sadd.s32 %s242, 1
    %p246 = scmp.eq.s32.totalorder %s19, 1
    %p247 = scmp.ne.s32.totalorder %s242, %s244
    %p248 = scmp.eq.s32.totalorder %s19, 0
    %p249 = por %p247, %p248
    %p250 = scmp.ne.s32.totalorder %s242, %s244
    %p251 = scmp.eq.s32.totalorder %s24, 1
    %p252 = por %p250, %p251
    %p253 = scmp.ne.s32.totalorder %s244, %s245
    %p254 = scmp.eq.s32.totalorder %s24, 0
    %p255 = por %p253, %p254
    %p256 = scmp.ne.s32.totalorder %s244, %s245
    %p257 = scmp.eq.s32.totalorder %s25, 1
    %p258 = por %p256, %p257
    %p260 = scmp.ne.s32.totalorder %s245, %s259
    %p261 = scmp.eq.s32.totalorder %s25, 0
    %p262 = por %p260, %p261
    %s264 = sadd.s32 %s263, 1
    %p267 = scmp.eq.s32.totalorder %s19, 1
    %p268 = scmp.ne.s32.totalorder %s263, %s265
    %p269 = scmp.eq.s32.totalorder %s19, 0
    %p270 = por %p268, %p269
    %p271 = scmp.ne.s32.totalorder %s263, %s265
    %p272 = scmp.eq.s32.totalorder %s24, 1
    %p273 = por %p271, %p272
    %p274 = scmp.ne.s32.totalorder %s265, %s266
    %p275 = scmp.eq.s32.totalorder %s24, 0
    %p276 = por %p274, %p275
    %p277 = scmp.ne.s32.totalorder %s265, %s266
    %p278 = scmp.eq.s32.totalorder %s25, 1
    %p279 = por %p277, %p278
    %p281 = scmp.ne.s32.totalorder %s266, %s280
    %p282 = scmp.eq.s32.totalorder %s25, 0
    %p283 = por %p281, %p282
    %s285 = sadd.s32 %s284, 1
    %p288 = scmp.eq.s32.totalorder %s19, 1
    %p289 = scmp.ne.s32.totalorder %s284, %s286
    %p290 = scmp.eq.s32.totalorder %s19, 0
    %p291 = por %p289, %p290
    %p292 = scmp.ne.s32.totalorder %s284, %s286
    %p293 = scmp.eq.s32.totalorder %s24, 1
    %p294 = por %p292, %p293
    %p295 = scmp.ne.s32.totalorder %s286, %s287
    %p296 = scmp.eq.s32.totalorder %s24, 0
    %p297 = por %p295, %p296
    %p298 = scmp.ne.s32.totalorder %s286, %s287
    %p299 = scmp.eq.s32.totalorder %s25, 1
    %p300 = por %p298, %p299
    %p302 = scmp.ne.s32.totalorder %s287, %s301
    %p303 = scmp.eq.s32.totalorder %s25, 0
    %p304 = por %p302, %p303
    %s305 = ssub.s32 %s19, %s26
    %p306 = scmp.eq.s32.totalorder %s305, 0
    %s308 = sadd.s32 %s307, 1
    %s309 = scalar_select %p306, %s307, %s308
    %p312 = pneg %p306
    %p313 = scmp.eq.s32.totalorder %s19, 1
    %p314 = por %p312, %p313
    %p315 = scmp.ne.s32.totalorder %s307, %s310
    %p316 = scmp.eq.s32.totalorder %s19, 0
    %p317 = por %p315, %p316
    %p318 = scmp.ne.s32.totalorder %s307, %s310
    %p319 = scmp.eq.s32.totalorder %s24, 1
    %p320 = por %p318, %p319
    %p321 = scmp.ne.s32.totalorder %s310, %s311
    %p322 = scmp.eq.s32.totalorder %s24, 0
    %p323 = por %p321, %p322
    %p324 = scmp.ne.s32.totalorder %s310, %s311
    %p325 = scmp.eq.s32.totalorder %s25, 1
    %p326 = por %p324, %p325
    %p328 = scmp.ne.s32.totalorder %s311, %s327
    %p329 = scmp.eq.s32.totalorder %s25, 0
    %p330 = por %p328, %p329
    %p331 = scmp.le.s32.totalorder 1, %s19
    %p332 = scmp.lt.s32.totalorder %s19, 3
    %p333 = pnand %p331, %p332
    %p334 = pneg %p333
    // Predicated region
    $region9: #{fwd.1} parent=5 // pred_check
      _
    $region10: #{fwd.1} parent=5 // pred_check_branch
      %336 = sbr.rel (%p333) target = $region12
    $region11: #{fwd.1} parent=5 // pred_region
      %s337 = ssub.s32 %s19, 1
      // Predicated region
      $region13: #{fwd.1} parent=11 // pred_check
        %p338 = pneg %p66
      $region14: #{fwd.1} parent=11 // pred_check_branch
        %340 = sbr.rel (%p338) target = $region16
      $region15: #{fwd.1} parent=11 // pred_region
        _
      $region16: #{fwd.1} parent=11 // pred_fallthru
        _
      // Predicated region
      $region17: #{fwd.1} parent=11 // pred_check
        %p341 = pneg %p87
      $region18: #{fwd.1} parent=11 // pred_check_branch
        %343 = sbr.rel (%p341) target = $region20
      $region19: #{fwd.1} parent=11 // pred_region
        _
      $region20: #{fwd.1} parent=11 // pred_fallthru
        _
      // Predicated region
      $region21: #{fwd.1} parent=11 // pred_check
        %p344 = pneg %p108
      $region22: #{fwd.1} parent=11 // pred_check_branch
        %346 = sbr.rel (%p344) target = $region24
      $region23: #{fwd.1} parent=11 // pred_region
        _
      $region24: #{fwd.1} parent=11 // pred_fallthru
        _
      // Predicated region
      $region25: #{fwd.1} parent=11 // pred_check
        %p347 = pneg %p129
      $region26: #{fwd.1} parent=11 // pred_check_branch
        %349 = sbr.rel (%p347) target = $region28
      $region27: #{fwd.1} parent=11 // pred_region
        _
      $region28: #{fwd.1} parent=11 // pred_fallthru
        _
      // Predicated region
      $region29: #{fwd.1} parent=11 // pred_check
        %p350 = pneg %p150
      $region30: #{fwd.1} parent=11 // pred_check_branch
        %352 = sbr.rel (%p350) target = $region32
      $region31: #{fwd.1} parent=11 // pred_region
        _
      $region32: #{fwd.1} parent=11 // pred_fallthru
        _
      // Predicated region
      $region33: #{fwd.1} parent=11 // pred_check
        %p353 = pneg %p171
      $region34: #{fwd.1} parent=11 // pred_check_branch
        %355 = sbr.rel (%p353) target = $region36
      $region35: #{fwd.1} parent=11 // pred_region
        _
      $region36: #{fwd.1} parent=11 // pred_fallthru
        _
      // Predicated region
      $region37: #{fwd.1} parent=11 // pred_check
        %p356 = pneg %p192
      $region38: #{fwd.1} parent=11 // pred_check_branch
        %358 = sbr.rel (%p356) target = $region40
      $region39: #{fwd.1} parent=11 // pred_region
        _
      $region40: #{fwd.1} parent=11 // pred_fallthru
        _
      // Predicated region
      $region41: #{fwd.1} parent=11 // pred_check
        %p359 = pneg %p213
      $region42: #{fwd.1} parent=11 // pred_check_branch
        %361 = sbr.rel (%p359) target = $region44
      $region43: #{fwd.1} parent=11 // pred_region
        _
      $region44: #{fwd.1} parent=11 // pred_fallthru
        _
      // Predicated region
      $region45: #{fwd.1} parent=11 // pred_check
        %p362 = pneg %p234
      $region46: #{fwd.1} parent=11 // pred_check_branch
        %364 = sbr.rel (%p362) target = $region48
      $region47: #{fwd.1} parent=11 // pred_region
        _
      $region48: #{fwd.1} parent=11 // pred_fallthru
        _
      // Predicated region
      $region49: #{fwd.1} parent=11 // pred_check
        %p365 = pneg %p255
      $region50: #{fwd.1} parent=11 // pred_check_branch
        %367 = sbr.rel (%p365) target = $region52
      $region51: #{fwd.1} parent=11 // pred_region
        _
      $region52: #{fwd.1} parent=11 // pred_fallthru
        _
      // Predicated region
      $region53: #{fwd.1} parent=11 // pred_check
        %p368 = pneg %p276
      $region54: #{fwd.1} parent=11 // pred_check_branch
        %370 = sbr.rel (%p368) target = $region56
      $region55: #{fwd.1} parent=11 // pred_region
        _
      $region56: #{fwd.1} parent=11 // pred_fallthru
        _
      // Predicated region
      $region57: #{fwd.1} parent=11 // pred_check
        %p371 = pneg %p297
      $region58: #{fwd.1} parent=11 // pred_check_branch
        %373 = sbr.rel (%p371) target = $region60
      $region59: #{fwd.1} parent=11 // pred_region
        _
      $region60: #{fwd.1} parent=11 // pred_fallthru
        _
    $region12: #{fwd.1} parent=5 // pred_fallthru
      _
    %p374 = scmp.lt.s32.totalorder %s19, 2
    // Predicated region
    $region61: #{fwd.1} parent=5 // pred_check
      %p375 = pneg %p374
    $region62: #{fwd.1} parent=5 // pred_check_branch
      %377 = sbr.rel (%p375) target = $region64
    $region63: #{fwd.1} parent=5 // pred_region
      // Predicated region
      $region65: #{fwd.1} parent=63 // pred_check
        %p378 = pneg %p39
      $region66: #{fwd.1} parent=63 // pred_check_branch
        %380 = sbr.rel (%p378) target = $region68
      $region67: #{fwd.1} parent=63 // pred_region
        %p381 = scmp.lt.s32.totalorder %s19, 1
        %s382 = scalar_select %p381, %s19, 1
        %s383 = smul.addr %s382, 41
        %s384 = smul.addr %s383, 8
        %s385 = scalar_lea.vmem %s0, %s384
      $region68: #{fwd.1} parent=63 // pred_fallthru
        _
    $region64: #{fwd.1} parent=5 // pred_fallthru
      _
    %p386 = scmp.le.s32.totalorder 1, %s19
    %p387 = scmp.lt.s32.totalorder %s19, 3
    %p388 = pnand %p386, %p387
    %p389 = pneg %p388
    // Predicated region
    $region69: #{fwd.1} parent=5 // pred_check
      _
    $region70: #{fwd.1} parent=5 // pred_check_branch
      %391 = sbr.rel (%p388) target = $region72
    $region71: #{fwd.1} parent=5 // pred_region
      %s392 = ssub.s32 %s19, 1
      %p393 = scmp.lt.s32.totalorder %s24, 1
      %s394 = scalar_select %p393, %s24, 1
      %s395 = smul.addr %s394, 41
      %s396 = smul.addr %s395, 8
      %s397 = scalar_lea.vmem %s0, %s396
      %p398 = pneg %p45
      %p399 = pneg %p42
      %p400 = pneg %p66
      %p401 = pneg %p63
      %p402 = pneg %p87
      %p403 = pneg %p84
      %p404 = pneg %p108
      %p405 = pneg %p105
      %p406 = pneg %p129
      %p407 = pneg %p126
      %p408 = pneg %p150
      %p409 = pneg %p147
      %p410 = pneg %p171
      %p411 = pneg %p168
      %p412 = pneg %p192
      %p413 = pneg %p189
      %p414 = pneg %p213
      %p415 = pneg %p210
      %p416 = pneg %p234
      %p417 = pneg %p231
      %p418 = pneg %p255
      %p419 = pneg %p252
      %p420 = pneg %p276
      %p421 = pneg %p273
      %p422 = pneg %p297
      %p423 = pneg %p294
      %p424 = pneg %p323
      %p425 = pneg %p320
      %p426 = scmp.lt.s32.totalorder %s24, 1
      %s427 = scalar_select %p426, %s24, 1
      %s428 = smul.addr %s427, 4
      %s429 = smul.addr %s428, 8
      %s430 = scalar_lea.vmem %s13, %s429
      %p431 = scmp.lt.s32.totalorder %s24, 1
      %s432 = scalar_select %p431, %s24, 1
      %s433 = smul.addr %s432, 41
      %s434 = smul.addr %s433, 8
      %s435 = scalar_lea.vmem %s0, %s434
      %p436 = scmp.lt.s32.totalorder %s24, 1
      %s437 = scalar_select %p436, %s24, 1
      %s438 = smul.addr %s437, 4
      %s439 = smul.addr %s438, 8
      %s440 = scalar_lea.vmem %s13, %s439
      %vm441 = vcmask 130048
      %442 = vst.msk [vmem:[#allocation2] sm:$0xff] %vm441, 0.0
      %443 = vst.msk [vmem:[#allocation2 + $0x8] sm:$0xff] %vm441, 0.0
      %444 = vst.msk [vmem:[#allocation2 + $0x10] sm:$0xff] %vm441, 0.0
      %445 = vst.msk [vmem:[#allocation2 + $0x18] sm:$0xff] %vm441, 0.0
      %446 = vst.msk [vmem:[#allocation2 + $0x20] sm:$0xff] %vm441, 0.0
      %447 = vst.msk [vmem:[#allocation2 + $0x28] sm:$0xff] %vm441, 0.0
      %448 = vst.msk [vmem:[#allocation2 + $0x30] sm:$0xff] %vm441, 0.0
      %449 = vst.msk [vmem:[#allocation2 + $0x38] sm:$0xff] %vm441, 0.0
      %450 = vst.msk [vmem:[#allocation2 + $0x40] sm:$0xff] %vm441, 0.0
      %451 = vst.msk [vmem:[#allocation2 + $0x48] sm:$0xff] %vm441, 0.0
      %452 = vst.msk [vmem:[#allocation2 + $0x50] sm:$0xff] %vm441, 0.0
      %453 = vst.msk [vmem:[#allocation2 + $0x58] sm:$0xff] %vm441, 0.0
      %vm454 = vcmask 125952
      %455 = vst.msk [vmem:[#allocation2 + $0x60] sm:$0xf] %vm454, 0.0
      %vm456 = vcmask 261120
      %457 = vst.msk [vmem:[#allocation3] sm:$0xff] %vm456, 0.0
      %458 = vst.msk [vmem:[#allocation3 + $0x8] sm:$0xff] %vm456, 0.0
      %459 = vst.msk [vmem:[#allocation3 + $0x10] sm:$0xff] %vm456, 0.0
      %460 = vst.msk [vmem:[#allocation3 + $0x18] sm:$0xff] %vm456, 0.0
      %vm461 = vcmask 257024
      %462 = vst.msk [vmem:[#allocation3 + $0x20] sm:$0xf] %vm461, 0.0
      %463 = vst.msk [vmem:[#allocation4] sm:$0xff] %vm456, 0.0
      %464 = vst.msk [vmem:[#allocation4 + $0x8] sm:$0xff] %vm456, 0.0
      %465 = vst.msk [vmem:[#allocation4 + $0x10] sm:$0xff] %vm456, 0.0
      %466 = vst.msk [vmem:[#allocation4 + $0x18] sm:$0xff] %vm456, 0.0
      %467 = vst.msk [vmem:[#allocation4 + $0x20] sm:$0xf] %vm461, 0.0
      %v468 = vld [vmem:[%s435] sm:$0xff]
      %v469 = vld [vmem:[%s435 + $0x8] sm:$0xff]
      %v470 = vld [vmem:[%s435 + $0x10] sm:$0xff]
      %v471 = vld [vmem:[%s435 + $0x18] sm:$0xff]
      %v472 = vld [vmem:[%s435 + $0x20] sm:$0xff]
      %v473 = vld [vmem:[%s435 + $0x28] sm:$0xff]
      %v474 = vld [vmem:[%s435 + $0x30] sm:$0xff]
      %v475 = vld [vmem:[%s435 + $0x38] sm:$0xff]
      %v476 = vld [vmem:[%s435 + $0x40] sm:$0xff]
      %v477 = vld [vmem:[%s435 + $0x48] sm:$0xff]
      %v478 = vld [vmem:[%s435 + $0x50] sm:$0xff]
      %v479 = vld [vmem:[%s435 + $0x58] sm:$0xff]
      %v480 = vld [vmem:[%s435 + $0x60] sm:$0xff]
      %v481 = vld [vmem:[%s435 + $0x68] sm:$0xff]
      %v482 = vld [vmem:[%s435 + $0x70] sm:$0xff]
      %v483 = vld [vmem:[%s435 + $0x78] sm:$0xff]
      %v484 = vld [vmem:[%s435 + $0x80] sm:$0xff]
      %v485 = vld [vmem:[%s435 + $0x88] sm:$0xff]
      %v486 = vld [vmem:[%s435 + $0x90] sm:$0xff]
      %v487 = vld [vmem:[%s435 + $0x98] sm:$0xff]
      %v488 = vld [vmem:[%s435 + $0xa0] sm:$0xff]
      %v489 = vld [vmem:[%s435 + $0xa8] sm:$0xff]
      %v490 = vld [vmem:[%s435 + $0xb0] sm:$0xff]
      %v491 = vld [vmem:[%s435 + $0xb8] sm:$0xff]
      %v492 = vld [vmem:[%s435 + $0xc0] sm:$0xff]
      %v493 = vld [vmem:[%s435 + $0xc8] sm:$0xff]
      %v494 = vld [vmem:[%s435 + $0xd0] sm:$0xff]
      %v495 = vld [vmem:[%s435 + $0xd8] sm:$0xff]
      %v496 = vld [vmem:[%s435 + $0xe0] sm:$0xff]
      %v497 = vld [vmem:[%s435 + $0xe8] sm:$0xff]
      %v498 = vld [vmem:[%s435 + $0xf0] sm:$0xff]
      %v499 = vld [vmem:[%s435 + $0xf8] sm:$0xff]
      %v500 = vld [vmem:[%s435 + $0x100] sm:$0xff]
      %v501 = vld [vmem:[%s435 + $0x108] sm:$0xff]
      %v502 = vld [vmem:[%s435 + $0x110] sm:$0xff]
      %v503 = vld [vmem:[%s435 + $0x118] sm:$0x3f]
      %v504 = vld [vmem:[%s1] sm:$0x1]
      %506 = vset.pattern.permute.xlu0 0
      %507 = vperm.xlu0 %506, %v468
      %v508 = vpop.permute.xlu0 %507
      %511 = vset.pattern.permute.xlu0 0
      %512 = vperm.xlu0 %511, %v469
      %v513 = vpop.permute.xlu0 %512
      %516 = vset.pattern.permute.xlu0 0
      %517 = vperm.xlu0 %516, %v470
      %v518 = vpop.permute.xlu0 %517
      %521 = vset.pattern.permute.xlu0 0
      %522 = vperm.xlu0 %521, %v471
      %v523 = vpop.permute.xlu0 %522
      %526 = vset.pattern.permute.xlu0 0
      %527 = vperm.xlu0 %526, %v472
      %v528 = vpop.permute.xlu0 %527
      %531 = vset.pattern.permute.xlu0 0
      %532 = vperm.xlu0 %531, %v473
      %v533 = vpop.permute.xlu0 %532
      %536 = vset.pattern.permute.xlu0 0
      %537 = vperm.xlu0 %536, %v474
      %v538 = vpop.permute.xlu0 %537
      %541 = vset.pattern.permute.xlu0 0
      %542 = vperm.xlu0 %541, %v475
      %v543 = vpop.permute.xlu0 %542
      %546 = vset.pattern.permute.xlu0 0
      %547 = vperm.xlu0 %546, %v476
      %v548 = vpop.permute.xlu0 %547
      %551 = vset.pattern.permute.xlu0 0
      %552 = vperm.xlu0 %551, %v477
      %v553 = vpop.permute.xlu0 %552
      %556 = vset.pattern.permute.xlu0 0
      %557 = vperm.xlu0 %556, %v478
      %v558 = vpop.permute.xlu0 %557
      %561 = vset.pattern.permute.xlu0 0
      %562 = vperm.xlu0 %561, %v479
      %v563 = vpop.permute.xlu0 %562
      %566 = vset.pattern.permute.xlu0 0
      %567 = vperm.xlu0 %566, %v480
      %v568 = vpop.permute.xlu0 %567
      %571 = vset.pattern.permute.xlu0 0
      %572 = vperm.xlu0 %571, %v481
      %v573 = vpop.permute.xlu0 %572
      %576 = vset.pattern.permute.xlu0 0
      %577 = vperm.xlu0 %576, %v482
      %v578 = vpop.permute.xlu0 %577
      %581 = vset.pattern.permute.xlu0 0
      %582 = vperm.xlu0 %581, %v483
      %v583 = vpop.permute.xlu0 %582
      %586 = vset.pattern.permute.xlu0 0
      %587 = vperm.xlu0 %586, %v484
      %v588 = vpop.permute.xlu0 %587
      %591 = vset.pattern.permute.xlu0 0
      %592 = vperm.xlu0 %591, %v485
      %v593 = vpop.permute.xlu0 %592
      %596 = vset.pattern.permute.xlu0 0
      %597 = vperm.xlu0 %596, %v486
      %v598 = vpop.permute.xlu0 %597
      %601 = vset.pattern.permute.xlu0 0
      %602 = vperm.xlu0 %601, %v487
      %v603 = vpop.permute.xlu0 %602
      %606 = vset.pattern.permute.xlu0 0
      %607 = vperm.xlu0 %606, %v488
      %v608 = vpop.permute.xlu0 %607
      %611 = vset.pattern.permute.xlu0 0
      %612 = vperm.xlu0 %611, %v489
      %v613 = vpop.permute.xlu0 %612
      %616 = vset.pattern.permute.xlu0 0
      %617 = vperm.xlu0 %616, %v490
      %v618 = vpop.permute.xlu0 %617
      %621 = vset.pattern.permute.xlu0 0
      %622 = vperm.xlu0 %621, %v491
      %v623 = vpop.permute.xlu0 %622
      %626 = vset.pattern.permute.xlu0 0
      %627 = vperm.xlu0 %626, %v492
      %v628 = vpop.permute.xlu0 %627
      %631 = vset.pattern.permute.xlu0 0
      %632 = vperm.xlu0 %631, %v493
      %v633 = vpop.permute.xlu0 %632
      %636 = vset.pattern.permute.xlu0 0
      %637 = vperm.xlu0 %636, %v494
      %v638 = vpop.permute.xlu0 %637
      %641 = vset.pattern.permute.xlu0 0
      %642 = vperm.xlu0 %641, %v495
      %v643 = vpop.permute.xlu0 %642
      %646 = vset.pattern.permute.xlu0 0
      %647 = vperm.xlu0 %646, %v496
      %v648 = vpop.permute.xlu0 %647
      %651 = vset.pattern.permute.xlu0 0
      %652 = vperm.xlu0 %651, %v497
      %v653 = vpop.permute.xlu0 %652
      %656 = vset.pattern.permute.xlu0 0
      %657 = vperm.xlu0 %656, %v498
      %v658 = vpop.permute.xlu0 %657
      %661 = vset.pattern.permute.xlu0 0
      %662 = vperm.xlu0 %661, %v499
      %v663 = vpop.permute.xlu0 %662
      %666 = vset.pattern.permute.xlu0 0
      %667 = vperm.xlu0 %666, %v500
      %v668 = vpop.permute.xlu0 %667
      %671 = vset.pattern.permute.xlu0 0
      %672 = vperm.xlu0 %671, %v501
      %v673 = vpop.permute.xlu0 %672
      %676 = vset.pattern.permute.xlu0 0
      %677 = vperm.xlu0 %676, %v502
      %v678 = vpop.permute.xlu0 %677
      %681 = vset.pattern.permute.xlu0 0
      %682 = vperm.xlu0 %681, %v503
      %v683 = vpop.permute.xlu0 %682
      %v685 = vlaneseq
      %v686 = vshrl.u32 %v685, 7
      %v687 = vsub.s32 0, %v686
      %v688 = vrot.slane %v504, %v687
      %v689 = vmul.f32 %v508, %v688
      %v690 = vmul.f32 %v513, %v688
      %v691 = vmul.f32 %v518, %v688
      %v692 = vmul.f32 %v523, %v688
      %v693 = vmul.f32 %v528, %v688
      %v694 = vmul.f32 %v533, %v688
      %v695 = vmul.f32 %v538, %v688
      %v696 = vmul.f32 %v543, %v688
      %v697 = vmul.f32 %v548, %v688
      %v698 = vmul.f32 %v553, %v688
      %v699 = vmul.f32 %v558, %v688
      %v700 = vmul.f32 %v563, %v688
      %v701 = vmul.f32 %v568, %v688
      %v702 = vmul.f32 %v573, %v688
      %v703 = vmul.f32 %v578, %v688
      %v704 = vmul.f32 %v583, %v688
      %v705 = vmul.f32 %v588, %v688
      %v706 = vmul.f32 %v593, %v688
      %v707 = vmul.f32 %v598, %v688
      %v708 = vmul.f32 %v603, %v688
      %v709 = vmul.f32 %v608, %v688
      %v710 = vmul.f32 %v613, %v688
      %v711 = vmul.f32 %v618, %v688
      %v712 = vmul.f32 %v623, %v688
      %v713 = vmul.f32 %v628, %v688
      %v714 = vmul.f32 %v633, %v688
      %v715 = vmul.f32 %v638, %v688
      %v716 = vmul.f32 %v643, %v688
      %v717 = vmul.f32 %v648, %v688
      %v718 = vmul.f32 %v653, %v688
      %v719 = vmul.f32 %v658, %v688
      %v720 = vmul.f32 %v663, %v688
      %v721 = vmul.f32 %v668, %v688
      %v722 = vmul.f32 %v673, %v688
      %v723 = vmul.f32 %v678, %v688
      %v724 = vmul.f32 %v683, %v688
      %v725 = vld [vmem:[%s435 + $0x1] sm:$0xff]
      %v726 = vld [vmem:[%s435 + $0x9] sm:$0xff]
      %v727 = vld [vmem:[%s435 + $0x11] sm:$0xff]
      %v728 = vld [vmem:[%s435 + $0x19] sm:$0xff]
      %v729 = vld [vmem:[%s435 + $0x21] sm:$0xff]
      %v730 = vld [vmem:[%s435 + $0x29] sm:$0xff]
      %v731 = vld [vmem:[%s435 + $0x31] sm:$0xff]
      %v732 = vld [vmem:[%s435 + $0x39] sm:$0xff]
      %v733 = vld [vmem:[%s435 + $0x41] sm:$0xff]
      %v734 = vld [vmem:[%s435 + $0x49] sm:$0xff]
      %v735 = vld [vmem:[%s435 + $0x51] sm:$0xff]
      %v736 = vld [vmem:[%s435 + $0x59] sm:$0xff]
      %v737 = vld [vmem:[%s435 + $0x61] sm:$0xff]
      %v738 = vld [vmem:[%s435 + $0x69] sm:$0xff]
      %v739 = vld [vmem:[%s435 + $0x71] sm:$0xff]
      %v740 = vld [vmem:[%s435 + $0x79] sm:$0xff]
      %v741 = vld [vmem:[%s435 + $0x81] sm:$0xff]
      %v742 = vld [vmem:[%s435 + $0x89] sm:$0xff]
      %v743 = vld [vmem:[%s435 + $0x91] sm:$0xff]
      %v744 = vld [vmem:[%s435 + $0x99] sm:$0xff]
      %v745 = vld [vmem:[%s435 + $0xa1] sm:$0xff]
      %v746 = vld [vmem:[%s435 + $0xa9] sm:$0xff]
      %v747 = vld [vmem:[%s435 + $0xb1] sm:$0xff]
      %v748 = vld [vmem:[%s435 + $0xb9] sm:$0xff]
      %v749 = vld [vmem:[%s435 + $0xc1] sm:$0xff]
      %v750 = vld [vmem:[%s435 + $0xc9] sm:$0xff]
      %v751 = vld [vmem:[%s435 + $0xd1] sm:$0xff]
      %v752 = vld [vmem:[%s435 + $0xd9] sm:$0xff]
      %v753 = vld [vmem:[%s435 + $0xe1] sm:$0xff]
      %v754 = vld [vmem:[%s435 + $0xe9] sm:$0xff]
      %v755 = vld [vmem:[%s435 + $0xf1] sm:$0xff]
      %v756 = vld [vmem:[%s435 + $0xf9] sm:$0xff]
      %v757 = vld [vmem:[%s435 + $0x101] sm:$0xff]
      %v758 = vld [vmem:[%s435 + $0x109] sm:$0xff]
      %v759 = vld [vmem:[%s435 + $0x111] sm:$0xff]
      %v760 = vld [vmem:[%s435 + $0x119] sm:$0x3f]
      %v761 = vld [vmem:[%s1 + $0x1] sm:$0x1]
      %763 = vset.pattern.permute.xlu0 0
      %764 = vperm.xlu0 %763, %v725
      %v765 = vpop.permute.xlu0 %764
      %768 = vset.pattern.permute.xlu0 0
      %769 = vperm.xlu0 %768, %v726
      %v770 = vpop.permute.xlu0 %769
      %773 = vset.pattern.permute.xlu0 0
      %774 = vperm.xlu0 %773, %v727
      %v775 = vpop.permute.xlu0 %774
      %778 = vset.pattern.permute.xlu0 0
      %779 = vperm.xlu0 %778, %v728
      %v780 = vpop.permute.xlu0 %779
      %783 = vset.pattern.permute.xlu0 0
      %784 = vperm.xlu0 %783, %v729
      %v785 = vpop.permute.xlu0 %784
      %788 = vset.pattern.permute.xlu0 0
      %789 = vperm.xlu0 %788, %v730
      %v790 = vpop.permute.xlu0 %789
      %793 = vset.pattern.permute.xlu0 0
      %794 = vperm.xlu0 %793, %v731
      %v795 = vpop.permute.xlu0 %794
      %798 = vset.pattern.permute.xlu0 0
      %799 = vperm.xlu0 %798, %v732
      %v800 = vpop.permute.xlu0 %799
      %803 = vset.pattern.permute.xlu0 0
      %804 = vperm.xlu0 %803, %v733
      %v805 = vpop.permute.xlu0 %804
      %808 = vset.pattern.permute.xlu0 0
      %809 = vperm.xlu0 %808, %v734
      %v810 = vpop.permute.xlu0 %809
      %813 = vset.pattern.permute.xlu0 0
      %814 = vperm.xlu0 %813, %v735
      %v815 = vpop.permute.xlu0 %814
      %818 = vset.pattern.permute.xlu0 0
      %819 = vperm.xlu0 %818, %v736
      %v820 = vpop.permute.xlu0 %819
      %823 = vset.pattern.permute.xlu0 0
      %824 = vperm.xlu0 %823, %v737
      %v825 = vpop.permute.xlu0 %824
      %828 = vset.pattern.permute.xlu0 0
      %829 = vperm.xlu0 %828, %v738
      %v830 = vpop.permute.xlu0 %829
      %833 = vset.pattern.permute.xlu0 0
      %834 = vperm.xlu0 %833, %v739
      %v835 = vpop.permute.xlu0 %834
      %838 = vset.pattern.permute.xlu0 0
      %839 = vperm.xlu0 %838, %v740
      %v840 = vpop.permute.xlu0 %839
      %843 = vset.pattern.permute.xlu0 0
      %844 = vperm.xlu0 %843, %v741
      %v845 = vpop.permute.xlu0 %844
      %848 = vset.pattern.permute.xlu0 0
      %849 = vperm.xlu0 %848, %v742
      %v850 = vpop.permute.xlu0 %849
      %853 = vset.pattern.permute.xlu0 0
      %854 = vperm.xlu0 %853, %v743
      %v855 = vpop.permute.xlu0 %854
      %858 = vset.pattern.permute.xlu0 0
      %859 = vperm.xlu0 %858, %v744
      %v860 = vpop.permute.xlu0 %859
      %863 = vset.pattern.permute.xlu0 0
      %864 = vperm.xlu0 %863, %v745
      %v865 = vpop.permute.xlu0 %864
      %868 = vset.pattern.permute.xlu0 0
      %869 = vperm.xlu0 %868, %v746
      %v870 = vpop.permute.xlu0 %869
      %873 = vset.pattern.permute.xlu0 0
      %874 = vperm.xlu0 %873, %v747
      %v875 = vpop.permute.xlu0 %874
      %878 = vset.pattern.permute.xlu0 0
      %879 = vperm.xlu0 %878, %v748
      %v880 = vpop.permute.xlu0 %879
      %883 = vset.pattern.permute.xlu0 0
      %884 = vperm.xlu0 %883, %v749
      %v885 = vpop.permute.xlu0 %884
      %888 = vset.pattern.permute.xlu0 0
      %889 = vperm.xlu0 %888, %v750
      %v890 = vpop.permute.xlu0 %889
      %893 = vset.pattern.permute.xlu0 0
      %894 = vperm.xlu0 %893, %v751
      %v895 = vpop.permute.xlu0 %894
      %898 = vset.pattern.permute.xlu0 0
      %899 = vperm.xlu0 %898, %v752
      %v900 = vpop.permute.xlu0 %899
      %903 = vset.pattern.permute.xlu0 0
      %904 = vperm.xlu0 %903, %v753
      %v905 = vpop.permute.xlu0 %904
      %908 = vset.pattern.permute.xlu0 0
      %909 = vperm.xlu0 %908, %v754
      %v910 = vpop.permute.xlu0 %909
      %913 = vset.pattern.permute.xlu0 0
      %914 = vperm.xlu0 %913, %v755
      %v915 = vpop.permute.xlu0 %914
      %918 = vset.pattern.permute.xlu0 0
      %919 = vperm.xlu0 %918, %v756
      %v920 = vpop.permute.xlu0 %919
      %923 = vset.pattern.permute.xlu0 0
      %924 = vperm.xlu0 %923, %v757
      %v925 = vpop.permute.xlu0 %924
      %928 = vset.pattern.permute.xlu0 0
      %929 = vperm.xlu0 %928, %v758
      %v930 = vpop.permute.xlu0 %929
      %933 = vset.pattern.permute.xlu0 0
      %934 = vperm.xlu0 %933, %v759
      %v935 = vpop.permute.xlu0 %934
      %938 = vset.pattern.permute.xlu0 0
      %939 = vperm.xlu0 %938, %v760
      %v940 = vpop.permute.xlu0 %939
      %v942 = vlaneseq
      %v943 = vshrl.u32 %v942, 7
      %v944 = vsub.s32 0, %v943
      %v945 = vrot.slane %v761, %v944
      %v946 = vmul.f32 %v765, %v945
      %v947 = vmul.f32 %v770, %v945
      %v948 = vmul.f32 %v775, %v945
      %v949 = vmul.f32 %v780, %v945
      %v950 = vmul.f32 %v785, %v945
      %v951 = vmul.f32 %v790, %v945
      %v952 = vmul.f32 %v795, %v945
      %v953 = vmul.f32 %v800, %v945
      %v954 = vmul.f32 %v805, %v945
      %v955 = vmul.f32 %v810, %v945
      %v956 = vmul.f32 %v815, %v945
      %v957 = vmul.f32 %v820, %v945
      %v958 = vmul.f32 %v825, %v945
      %v959 = vmul.f32 %v830, %v945
      %v960 = vmul.f32 %v835, %v945
      %v961 = vmul.f32 %v840, %v945
      %v962 = vmul.f32 %v845, %v945
      %v963 = vmul.f32 %v850, %v945
      %v964 = vmul.f32 %v855, %v945
      %v965 = vmul.f32 %v860, %v945
      %v966 = vmul.f32 %v865, %v945
      %v967 = vmul.f32 %v870, %v945
      %v968 = vmul.f32 %v875, %v945
      %v969 = vmul.f32 %v880, %v945
      %v970 = vmul.f32 %v885, %v945
      %v971 = vmul.f32 %v890, %v945
      %v972 = vmul.f32 %v895, %v945
      %v973 = vmul.f32 %v900, %v945
      %v974 = vmul.f32 %v905, %v945
      %v975 = vmul.f32 %v910, %v945
      %v976 = vmul.f32 %v915, %v945
      %v977 = vmul.f32 %v920, %v945
      %v978 = vmul.f32 %v925, %v945
      %v979 = vmul.f32 %v930, %v945
      %v980 = vmul.f32 %v935, %v945
      %v981 = vmul.f32 %v940, %v945
      %v982 = vadd.f32 %v689, %v946
      %v983 = vadd.f32 %v690, %v947
      %v984 = vadd.f32 %v691, %v948
      %v985 = vadd.f32 %v692, %v949
      %v986 = vadd.f32 %v693, %v950
      %v987 = vadd.f32 %v694, %v951
      %v988 = vadd.f32 %v695, %v952
      %v989 = vadd.f32 %v696, %v953
      %v990 = vadd.f32 %v697, %v954
      %v991 = vadd.f32 %v698, %v955
      %v992 = vadd.f32 %v699, %v956
      %v993 = vadd.f32 %v700, %v957
      %v994 = vadd.f32 %v701, %v958
      %v995 = vadd.f32 %v702, %v959
      %v996 = vadd.f32 %v703, %v960
      %v997 = vadd.f32 %v704, %v961
      %v998 = vadd.f32 %v705, %v962
      %v999 = vadd.f32 %v706, %v963
      %v1000 = vadd.f32 %v707, %v964
      %v1001 = vadd.f32 %v708, %v965
      %v1002 = vadd.f32 %v709, %v966
      %v1003 = vadd.f32 %v710, %v967
      %v1004 = vadd.f32 %v711, %v968
      %v1005 = vadd.f32 %v712, %v969
      %v1006 = vadd.f32 %v713, %v970
      %v1007 = vadd.f32 %v714, %v971
      %v1008 = vadd.f32 %v715, %v972
      %v1009 = vadd.f32 %v716, %v973
      %v1010 = vadd.f32 %v717, %v974
      %v1011 = vadd.f32 %v718, %v975
      %v1012 = vadd.f32 %v719, %v976
      %v1013 = vadd.f32 %v720, %v977
      %v1014 = vadd.f32 %v721, %v978
      %v1015 = vadd.f32 %v722, %v979
      %v1016 = vadd.f32 %v723, %v980
      %v1017 = vadd.f32 %v724, %v981
      %v1018 = vld [vmem:[%s435 + $0x2] sm:$0xff]
      %v1019 = vld [vmem:[%s435 + $0xa] sm:$0xff]
      %v1020 = vld [vmem:[%s435 + $0x12] sm:$0xff]
      %v1021 = vld [vmem:[%s435 + $0x1a] sm:$0xff]
      %v1022 = vld [vmem:[%s435 + $0x22] sm:$0xff]
      %v1023 = vld [vmem:[%s435 + $0x2a] sm:$0xff]
      %v1024 = vld [vmem:[%s435 + $0x32] sm:$0xff]
      %v1025 = vld [vmem:[%s435 + $0x3a] sm:$0xff]
      %v1026 = vld [vmem:[%s435 + $0x42] sm:$0xff]
      %v1027 = vld [vmem:[%s435 + $0x4a] sm:$0xff]
      %v1028 = vld [vmem:[%s435 + $0x52] sm:$0xff]
      %v1029 = vld [vmem:[%s435 + $0x5a] sm:$0xff]
      %v1030 = vld [vmem:[%s435 + $0x62] sm:$0xff]
      %v1031 = vld [vmem:[%s435 + $0x6a] sm:$0xff]
      %v1032 = vld [vmem:[%s435 + $0x72] sm:$0xff]
      %v1033 = vld [vmem:[%s435 + $0x7a] sm:$0xff]
      %v1034 = vld [vmem:[%s435 + $0x82] sm:$0xff]
      %v1035 = vld [vmem:[%s435 + $0x8a] sm:$0xff]
      %v1036 = vld [vmem:[%s435 + $0x92] sm:$0xff]
      %v1037 = vld [vmem:[%s435 + $0x9a] sm:$0xff]
      %v1038 = vld [vmem:[%s435 + $0xa2] sm:$0xff]
      %v1039 = vld [vmem:[%s435 + $0xaa] sm:$0xff]
      %v1040 = vld [vmem:[%s435 + $0xb2] sm:$0xff]
      %v1041 = vld [vmem:[%s435 + $0xba] sm:$0xff]
      %v1042 = vld [vmem:[%s435 + $0xc2] sm:$0xff]
      %v1043 = vld [vmem:[%s435 + $0xca] sm:$0xff]
      %v1044 = vld [vmem:[%s435 + $0xd2] sm:$0xff]
      %v1045 = vld [vmem:[%s435 + $0xda] sm:$0xff]
      %v1046 = vld [vmem:[%s435 + $0xe2] sm:$0xff]
      %v1047 = vld [vmem:[%s435 + $0xea] sm:$0xff]
      %v1048 = vld [vmem:[%s435 + $0xf2] sm:$0xff]
      %v1049 = vld [vmem:[%s435 + $0xfa] sm:$0xff]
      %v1050 = vld [vmem:[%s435 + $0x102] sm:$0xff]
      %v1051 = vld [vmem:[%s435 + $0x10a] sm:$0xff]
      %v1052 = vld [vmem:[%s435 + $0x112] sm:$0xff]
      %v1053 = vld [vmem:[%s435 + $0x11a] sm:$0x3f]
      %v1054 = vld [vmem:[%s1 + $0x2] sm:$0x1]
      %1056 = vset.pattern.permute.xlu0 0
      %1057 = vperm.xlu0 %1056, %v1018
      %v1058 = vpop.permute.xlu0 %1057
      %1061 = vset.pattern.permute.xlu0 0
      %1062 = vperm.xlu0 %1061, %v1019
      %v1063 = vpop.permute.xlu0 %1062
      %1066 = vset.pattern.permute.xlu0 0
      %1067 = vperm.xlu0 %1066, %v1020
      %v1068 = vpop.permute.xlu0 %1067
      %1071 = vset.pattern.permute.xlu0 0
      %1072 = vperm.xlu0 %1071, %v1021
      %v1073 = vpop.permute.xlu0 %1072
      %1076 = vset.pattern.permute.xlu0 0
      %1077 = vperm.xlu0 %1076, %v1022
      %v1078 = vpop.permute.xlu0 %1077
      %1081 = vset.pattern.permute.xlu0 0
      %1082 = vperm.xlu0 %1081, %v1023
      %v1083 = vpop.permute.xlu0 %1082
      %1086 = vset.pattern.permute.xlu0 0
      %1087 = vperm.xlu0 %1086, %v1024
      %v1088 = vpop.permute.xlu0 %1087
      %1091 = vset.pattern.permute.xlu0 0
      %1092 = vperm.xlu0 %1091, %v1025
      %v1093 = vpop.permute.xlu0 %1092
      %1096 = vset.pattern.permute.xlu0 0
      %1097 = vperm.xlu0 %1096, %v1026
      %v1098 = vpop.permute.xlu0 %1097
      %1101 = vset.pattern.permute.xlu0 0
      %1102 = vperm.xlu0 %1101, %v1027
      %v1103 = vpop.permute.xlu0 %1102
      %1106 = vset.pattern.permute.xlu0 0
      %1107 = vperm.xlu0 %1106, %v1028
      %v1108 = vpop.permute.xlu0 %1107
      %1111 = vset.pattern.permute.xlu0 0
      %1112 = vperm.xlu0 %1111, %v1029
      %v1113 = vpop.permute.xlu0 %1112
      %1116 = vset.pattern.permute.xlu0 0
      %1117 = vperm.xlu0 %1116, %v1030
      %v1118 = vpop.permute.xlu0 %1117
      %1121 = vset.pattern.permute.xlu0 0
      %1122 = vperm.xlu0 %1121, %v1031
      %v1123 = vpop.permute.xlu0 %1122
      %1126 = vset.pattern.permute.xlu0 0
      %1127 = vperm.xlu0 %1126, %v1032
      %v1128 = vpop.permute.xlu0 %1127
      %1131 = vset.pattern.permute.xlu0 0
      %1132 = vperm.xlu0 %1131, %v1033
      %v1133 = vpop.permute.xlu0 %1132
      %1136 = vset.pattern.permute.xlu0 0
      %1137 = vperm.xlu0 %1136, %v1034
      %v1138 = vpop.permute.xlu0 %1137
      %1141 = vset.pattern.permute.xlu0 0
      %1142 = vperm.xlu0 %1141, %v1035
      %v1143 = vpop.permute.xlu0 %1142
      %1146 = vset.pattern.permute.xlu0 0
      %1147 = vperm.xlu0 %1146, %v1036
      %v1148 = vpop.permute.xlu0 %1147
      %1151 = vset.pattern.permute.xlu0 0
      %1152 = vperm.xlu0 %1151, %v1037
      %v1153 = vpop.permute.xlu0 %1152
      %1156 = vset.pattern.permute.xlu0 0
      %1157 = vperm.xlu0 %1156, %v1038
      %v1158 = vpop.permute.xlu0 %1157
      %1161 = vset.pattern.permute.xlu0 0
      %1162 = vperm.xlu0 %1161, %v1039
      %v1163 = vpop.permute.xlu0 %1162
      %1166 = vset.pattern.permute.xlu0 0
      %1167 = vperm.xlu0 %1166, %v1040
      %v1168 = vpop.permute.xlu0 %1167
      %1171 = vset.pattern.permute.xlu0 0
      %1172 = vperm.xlu0 %1171, %v1041
      %v1173 = vpop.permute.xlu0 %1172
      %1176 = vset.pattern.permute.xlu0 0
      %1177 = vperm.xlu0 %1176, %v1042
      %v1178 = vpop.permute.xlu0 %1177
      %1181 = vset.pattern.permute.xlu0 0
      %1182 = vperm.xlu0 %1181, %v1043
      %v1183 = vpop.permute.xlu0 %1182
      %1186 = vset.pattern.permute.xlu0 0
      %1187 = vperm.xlu0 %1186, %v1044
      %v1188 = vpop.permute.xlu0 %1187
      %1191 = vset.pattern.permute.xlu0 0
      %1192 = vperm.xlu0 %1191, %v1045
      %v1193 = vpop.permute.xlu0 %1192
      %1196 = vset.pattern.permute.xlu0 0
      %1197 = vperm.xlu0 %1196, %v1046
      %v1198 = vpop.permute.xlu0 %1197
      %1201 = vset.pattern.permute.xlu0 0
      %1202 = vperm.xlu0 %1201, %v1047
      %v1203 = vpop.permute.xlu0 %1202
      %1206 = vset.pattern.permute.xlu0 0
      %1207 = vperm.xlu0 %1206, %v1048
      %v1208 = vpop.permute.xlu0 %1207
      %1211 = vset.pattern.permute.xlu0 0
      %1212 = vperm.xlu0 %1211, %v1049
      %v1213 = vpop.permute.xlu0 %1212
      %1216 = vset.pattern.permute.xlu0 0
      %1217 = vperm.xlu0 %1216, %v1050
      %v1218 = vpop.permute.xlu0 %1217
      %1221 = vset.pattern.permute.xlu0 0
      %1222 = vperm.xlu0 %1221, %v1051
      %v1223 = vpop.permute.xlu0 %1222
      %1226 = vset.pattern.permute.xlu0 0
      %1227 = vperm.xlu0 %1226, %v1052
      %v1228 = vpop.permute.xlu0 %1227
      %1231 = vset.pattern.permute.xlu0 0
      %1232 = vperm.xlu0 %1231, %v1053
      %v1233 = vpop.permute.xlu0 %1232
      %v1235 = vlaneseq
      %v1236 = vshrl.u32 %v1235, 7
      %v1237 = vsub.s32 0, %v1236
      %v1238 = vrot.slane %v1054, %v1237
      %v1239 = vmul.f32 %v1058, %v1238
      %v1240 = vmul.f32 %v1063, %v1238
      %v1241 = vmul.f32 %v1068, %v1238
      %v1242 = vmul.f32 %v1073, %v1238
      %v1243 = vmul.f32 %v1078, %v1238
      %v1244 = vmul.f32 %v1083, %v1238
      %v1245 = vmul.f32 %v1088, %v1238
      %v1246 = vmul.f32 %v1093, %v1238
      %v1247 = vmul.f32 %v1098, %v1238
      %v1248 = vmul.f32 %v1103, %v1238
      %v1249 = vmul.f32 %v1108, %v1238
      %v1250 = vmul.f32 %v1113, %v1238
      %v1251 = vmul.f32 %v1118, %v1238
      %v1252 = vmul.f32 %v1123, %v1238
      %v1253 = vmul.f32 %v1128, %v1238
      %v1254 = vmul.f32 %v1133, %v1238
      %v1255 = vmul.f32 %v1138, %v1238
      %v1256 = vmul.f32 %v1143, %v1238
      %v1257 = vmul.f32 %v1148, %v1238
      %v1258 = vmul.f32 %v1153, %v1238
      %v1259 = vmul.f32 %v1158, %v1238
      %v1260 = vmul.f32 %v1163, %v1238
      %v1261 = vmul.f32 %v1168, %v1238
      %v1262 = vmul.f32 %v1173, %v1238
      %v1263 = vmul.f32 %v1178, %v1238
      %v1264 = vmul.f32 %v1183, %v1238
      %v1265 = vmul.f32 %v1188, %v1238
      %v1266 = vmul.f32 %v1193, %v1238
      %v1267 = vmul.f32 %v1198, %v1238
      %v1268 = vmul.f32 %v1203, %v1238
      %v1269 = vmul.f32 %v1208, %v1238
      %v1270 = vmul.f32 %v1213, %v1238
      %v1271 = vmul.f32 %v1218, %v1238
      %v1272 = vmul.f32 %v1223, %v1238
      %v1273 = vmul.f32 %v1228, %v1238
      %v1274 = vmul.f32 %v1233, %v1238
      %v1275 = vadd.f32 %v982, %v1239
      %v1276 = vadd.f32 %v983, %v1240
      %v1277 = vadd.f32 %v984, %v1241
      %v1278 = vadd.f32 %v985, %v1242
      %v1279 = vadd.f32 %v986, %v1243
      %v1280 = vadd.f32 %v987, %v1244
      %v1281 = vadd.f32 %v988, %v1245
      %v1282 = vadd.f32 %v989, %v1246
      %v1283 = vadd.f32 %v990, %v1247
      %v1284 = vadd.f32 %v991, %v1248
      %v1285 = vadd.f32 %v992, %v1249
      %v1286 = vadd.f32 %v993, %v1250
      %v1287 = vadd.f32 %v994, %v1251
      %v1288 = vadd.f32 %v995, %v1252
      %v1289 = vadd.f32 %v996, %v1253
      %v1290 = vadd.f32 %v997, %v1254
      %v1291 = vadd.f32 %v998, %v1255
      %v1292 = vadd.f32 %v999, %v1256
      %v1293 = vadd.f32 %v1000, %v1257
      %v1294 = vadd.f32 %v1001, %v1258
      %v1295 = vadd.f32 %v1002, %v1259
      %v1296 = vadd.f32 %v1003, %v1260
      %v1297 = vadd.f32 %v1004, %v1261
      %v1298 = vadd.f32 %v1005, %v1262
      %v1299 = vadd.f32 %v1006, %v1263
      %v1300 = vadd.f32 %v1007, %v1264
      %v1301 = vadd.f32 %v1008, %v1265
      %v1302 = vadd.f32 %v1009, %v1266
      %v1303 = vadd.f32 %v1010, %v1267
      %v1304 = vadd.f32 %v1011, %v1268
      %v1305 = vadd.f32 %v1012, %v1269
      %v1306 = vadd.f32 %v1013, %v1270
      %v1307 = vadd.f32 %v1014, %v1271
      %v1308 = vadd.f32 %v1015, %v1272
      %v1309 = vadd.f32 %v1016, %v1273
      %v1310 = vadd.f32 %v1017, %v1274
      %v1311 = vld [vmem:[%s435 + $0x12] sm:$0xff]
      %v1312 = vld [vmem:[%s435 + $0x1a] sm:$0xff]
      %v1313 = vld [vmem:[%s435 + $0x22] sm:$0xff]
      %v1314 = vld [vmem:[%s435 + $0x2a] sm:$0xff]
      %v1315 = vld [vmem:[%s435 + $0x32] sm:$0xff]
      %v1316 = vld [vmem:[%s435 + $0x3a] sm:$0xff]
      %v1317 = vld [vmem:[%s435 + $0x42] sm:$0xff]
      %v1318 = vld [vmem:[%s435 + $0x4a] sm:$0xff]
      %v1319 = vld [vmem:[%s435 + $0x52] sm:$0xff]
      %v1320 = vld [vmem:[%s435 + $0x5a] sm:$0xff]
      %v1321 = vld [vmem:[%s435 + $0x62] sm:$0xff]
      %v1322 = vld [vmem:[%s435 + $0x6a] sm:$0xff]
      %v1323 = vld [vmem:[%s435 + $0x72] sm:$0xff]
      %v1324 = vld [vmem:[%s435 + $0x7a] sm:$0xff]
      %v1325 = vld [vmem:[%s435 + $0x82] sm:$0xff]
      %v1326 = vld [vmem:[%s435 + $0x8a] sm:$0xff]
      %v1327 = vld [vmem:[%s435 + $0x92] sm:$0xff]
      %v1328 = vld [vmem:[%s435 + $0x9a] sm:$0xff]
      %v1329 = vld [vmem:[%s435 + $0xa2] sm:$0xff]
      %v1330 = vld [vmem:[%s435 + $0xaa] sm:$0xff]
      %v1331 = vld [vmem:[%s435 + $0xb2] sm:$0xff]
      %v1332 = vld [vmem:[%s435 + $0xba] sm:$0xff]
      %v1333 = vld [vmem:[%s435 + $0xc2] sm:$0xff]
      %v1334 = vld [vmem:[%s435 + $0xca] sm:$0xff]
      %v1335 = vld [vmem:[%s435 + $0xd2] sm:$0xff]
      %v1336 = vld [vmem:[%s435 + $0xda] sm:$0xff]
      %v1337 = vld [vmem:[%s435 + $0xe2] sm:$0xff]
      %v1338 = vld [vmem:[%s435 + $0xea] sm:$0xff]
      %v1339 = vld [vmem:[%s435 + $0xf2] sm:$0xff]
      %v1340 = vld [vmem:[%s435 + $0xfa] sm:$0xff]
      %v1341 = vld [vmem:[%s435 + $0x102] sm:$0xff]
      %v1342 = vld [vmem:[%s435 + $0x10a] sm:$0xff]
      %v1343 = vld [vmem:[%s435 + $0x112] sm:$0xff]
      %v1344 = vld [vmem:[%s435 + $0x11a] sm:$0xff]
      %v1345 = vld [vmem:[%s435 + $0x122] sm:$0xff]
      %v1346 = vld [vmem:[%s435 + $0x12a] sm:$0x3f]
      %v1347 = vld [vmem:[%s1 + $0x3] sm:$0x1]
      %1349 = vset.pattern.permute.xlu0 0
      %1350 = vperm.xlu0 %1349, %v1311
      %v1351 = vpop.permute.xlu0 %1350
      %1354 = vset.pattern.permute.xlu0 0
      %1355 = vperm.xlu0 %1354, %v1312
      %v1356 = vpop.permute.xlu0 %1355
      %1359 = vset.pattern.permute.xlu0 0
      %1360 = vperm.xlu0 %1359, %v1313
      %v1361 = vpop.permute.xlu0 %1360
      %1364 = vset.pattern.permute.xlu0 0
      %1365 = vperm.xlu0 %1364, %v1314
      %v1366 = vpop.permute.xlu0 %1365
      %1369 = vset.pattern.permute.xlu0 0
      %1370 = vperm.xlu0 %1369, %v1315
      %v1371 = vpop.permute.xlu0 %1370
      %1374 = vset.pattern.permute.xlu0 0
      %1375 = vperm.xlu0 %1374, %v1316
      %v1376 = vpop.permute.xlu0 %1375
      %1379 = vset.pattern.permute.xlu0 0
      %1380 = vperm.xlu0 %1379, %v1317
      %v1381 = vpop.permute.xlu0 %1380
      %1384 = vset.pattern.permute.xlu0 0
      %1385 = vperm.xlu0 %1384, %v1318
      %v1386 = vpop.permute.xlu0 %1385
      %1389 = vset.pattern.permute.xlu0 0
      %1390 = vperm.xlu0 %1389, %v1319
      %v1391 = vpop.permute.xlu0 %1390
      %1394 = vset.pattern.permute.xlu0 0
      %1395 = vperm.xlu0 %1394, %v1320
      %v1396 = vpop.permute.xlu0 %1395
      %1399 = vset.pattern.permute.xlu0 0
      %1400 = vperm.xlu0 %1399, %v1321
      %v1401 = vpop.permute.xlu0 %1400
      %1404 = vset.pattern.permute.xlu0 0
      %1405 = vperm.xlu0 %1404, %v1322
      %v1406 = vpop.permute.xlu0 %1405
      %1409 = vset.pattern.permute.xlu0 0
      %1410 = vperm.xlu0 %1409, %v1323
      %v1411 = vpop.permute.xlu0 %1410
      %1414 = vset.pattern.permute.xlu0 0
      %1415 = vperm.xlu0 %1414, %v1324
      %v1416 = vpop.permute.xlu0 %1415
      %1419 = vset.pattern.permute.xlu0 0
      %1420 = vperm.xlu0 %1419, %v1325
      %v1421 = vpop.permute.xlu0 %1420
      %1424 = vset.pattern.permute.xlu0 0
      %1425 = vperm.xlu0 %1424, %v1326
      %v1426 = vpop.permute.xlu0 %1425
      %1429 = vset.pattern.permute.xlu0 0
      %1430 = vperm.xlu0 %1429, %v1327
      %v1431 = vpop.permute.xlu0 %1430
      %1434 = vset.pattern.permute.xlu0 0
      %1435 = vperm.xlu0 %1434, %v1328
      %v1436 = vpop.permute.xlu0 %1435
      %1439 = vset.pattern.permute.xlu0 0
      %1440 = vperm.xlu0 %1439, %v1329
      %v1441 = vpop.permute.xlu0 %1440
      %1444 = vset.pattern.permute.xlu0 0
      %1445 = vperm.xlu0 %1444, %v1330
      %v1446 = vpop.permute.xlu0 %1445
      %1449 = vset.pattern.permute.xlu0 0
      %1450 = vperm.xlu0 %1449, %v1331
      %v1451 = vpop.permute.xlu0 %1450
      %1454 = vset.pattern.permute.xlu0 0
      %1455 = vperm.xlu0 %1454, %v1332
      %v1456 = vpop.permute.xlu0 %1455
      %1459 = vset.pattern.permute.xlu0 0
      %1460 = vperm.xlu0 %1459, %v1333
      %v1461 = vpop.permute.xlu0 %1460
      %1464 = vset.pattern.permute.xlu0 0
      %1465 = vperm.xlu0 %1464, %v1334
      %v1466 = vpop.permute.xlu0 %1465
      %1469 = vset.pattern.permute.xlu0 0
      %1470 = vperm.xlu0 %1469, %v1335
      %v1471 = vpop.permute.xlu0 %1470
      %1474 = vset.pattern.permute.xlu0 0
      %1475 = vperm.xlu0 %1474, %v1336
      %v1476 = vpop.permute.xlu0 %1475
      %1479 = vset.pattern.permute.xlu0 0
      %1480 = vperm.xlu0 %1479, %v1337
      %v1481 = vpop.permute.xlu0 %1480
      %1484 = vset.pattern.permute.xlu0 0
      %1485 = vperm.xlu0 %1484, %v1338
      %v1486 = vpop.permute.xlu0 %1485
      %1489 = vset.pattern.permute.xlu0 0
      %1490 = vperm.xlu0 %1489, %v1339
      %v1491 = vpop.permute.xlu0 %1490
      %1494 = vset.pattern.permute.xlu0 0
      %1495 = vperm.xlu0 %1494, %v1340
      %v1496 = vpop.permute.xlu0 %1495
      %1499 = vset.pattern.permute.xlu0 0
      %1500 = vperm.xlu0 %1499, %v1341
      %v1501 = vpop.permute.xlu0 %1500
      %1504 = vset.pattern.permute.xlu0 0
      %1505 = vperm.xlu0 %1504, %v1342
      %v1506 = vpop.permute.xlu0 %1505
      %1509 = vset.pattern.permute.xlu0 0
      %1510 = vperm.xlu0 %1509, %v1343
      %v1511 = vpop.permute.xlu0 %1510
      %1514 = vset.pattern.permute.xlu0 0
      %1515 = vperm.xlu0 %1514, %v1344
      %v1516 = vpop.permute.xlu0 %1515
      %1519 = vset.pattern.permute.xlu0 0
      %1520 = vperm.xlu0 %1519, %v1345
      %v1521 = vpop.permute.xlu0 %1520
      %1524 = vset.pattern.permute.xlu0 0
      %1525 = vperm.xlu0 %1524, %v1346
      %v1526 = vpop.permute.xlu0 %1525
      %v1528 = vlaneseq
      %v1529 = vshrl.u32 %v1528, 7
      %v1530 = vsub.s32 0, %v1529
      %v1531 = vrot.slane %v1347, %v1530
      %v1532 = vmul.f32 %v1351, %v1531
      %v1533 = vmul.f32 %v1356, %v1531
      %v1534 = vmul.f32 %v1361, %v1531
      %v1535 = vmul.f32 %v1366, %v1531
      %v1536 = vmul.f32 %v1371, %v1531
      %v1537 = vmul.f32 %v1376, %v1531
      %v1538 = vmul.f32 %v1381, %v1531
      %v1539 = vmul.f32 %v1386, %v1531
      %v1540 = vmul.f32 %v1391, %v1531
      %v1541 = vmul.f32 %v1396, %v1531
      %v1542 = vmul.f32 %v1401, %v1531
      %v1543 = vmul.f32 %v1406, %v1531
      %v1544 = vmul.f32 %v1411, %v1531
      %v1545 = vmul.f32 %v1416, %v1531
      %v1546 = vmul.f32 %v1421, %v1531
      %v1547 = vmul.f32 %v1426, %v1531
      %v1548 = vmul.f32 %v1431, %v1531
      %v1549 = vmul.f32 %v1436, %v1531
      %v1550 = vmul.f32 %v1441, %v1531
      %v1551 = vmul.f32 %v1446, %v1531
      %v1552 = vmul.f32 %v1451, %v1531
      %v1553 = vmul.f32 %v1456, %v1531
      %v1554 = vmul.f32 %v1461, %v1531
      %v1555 = vmul.f32 %v1466, %v1531
      %v1556 = vmul.f32 %v1471, %v1531
      %v1557 = vmul.f32 %v1476, %v1531
      %v1558 = vmul.f32 %v1481, %v1531
      %v1559 = vmul.f32 %v1486, %v1531
      %v1560 = vmul.f32 %v1491, %v1531
      %v1561 = vmul.f32 %v1496, %v1531
      %v1562 = vmul.f32 %v1501, %v1531
      %v1563 = vmul.f32 %v1506, %v1531
      %v1564 = vmul.f32 %v1511, %v1531
      %v1565 = vmul.f32 %v1516, %v1531
      %v1566 = vmul.f32 %v1521, %v1531
      %v1567 = vmul.f32 %v1526, %v1531
      %v1568 = vadd.f32 %v1275, %v1532
      %v1569 = vadd.f32 %v1276, %v1533
      %v1570 = vadd.f32 %v1277, %v1534
      %v1571 = vadd.f32 %v1278, %v1535
      %v1572 = vadd.f32 %v1279, %v1536
      %v1573 = vadd.f32 %v1280, %v1537
      %v1574 = vadd.f32 %v1281, %v1538
      %v1575 = vadd.f32 %v1282, %v1539
      %v1576 = vadd.f32 %v1283, %v1540
      %v1577 = vadd.f32 %v1284, %v1541
      %v1578 = vadd.f32 %v1285, %v1542
      %v1579 = vadd.f32 %v1286, %v1543
      %v1580 = vadd.f32 %v1287, %v1544
      %v1581 = vadd.f32 %v1288, %v1545
      %v1582 = vadd.f32 %v1289, %v1546
      %v1583 = vadd.f32 %v1290, %v1547
      %v1584 = vadd.f32 %v1291, %v1548
      %v1585 = vadd.f32 %v1292, %v1549
      %v1586 = vadd.f32 %v1293, %v1550
      %v1587 = vadd.f32 %v1294, %v1551
      %v1588 = vadd.f32 %v1295, %v1552
      %v1589 = vadd.f32 %v1296, %v1553
      %v1590 = vadd.f32 %v1297, %v1554
      %v1591 = vadd.f32 %v1298, %v1555
      %v1592 = vadd.f32 %v1299, %v1556
      %v1593 = vadd.f32 %v1300, %v1557
      %v1594 = vadd.f32 %v1301, %v1558
      %v1595 = vadd.f32 %v1302, %v1559
      %v1596 = vadd.f32 %v1303, %v1560
      %v1597 = vadd.f32 %v1304, %v1561
      %v1598 = vadd.f32 %v1305, %v1562
      %v1599 = vadd.f32 %v1306, %v1563
      %v1600 = vadd.f32 %v1307, %v1564
      %v1601 = vadd.f32 %v1308, %v1565
      %v1602 = vadd.f32 %v1309, %v1566
      %v1603 = vadd.f32 %v1310, %v1567
      %v1604 = vld [vmem:[%s435 + $0x13] sm:$0xff]
      %v1605 = vld [vmem:[%s435 + $0x1b] sm:$0xff]
      %v1606 = vld [vmem:[%s435 + $0x23] sm:$0xff]
      %v1607 = vld [vmem:[%s435 + $0x2b] sm:$0xff]
      %v1608 = vld [vmem:[%s435 + $0x33] sm:$0xff]
      %v1609 = vld [vmem:[%s435 + $0x3b] sm:$0xff]
      %v1610 = vld [vmem:[%s435 + $0x43] sm:$0xff]
      %v1611 = vld [vmem:[%s435 + $0x4b] sm:$0xff]
      %v1612 = vld [vmem:[%s435 + $0x53] sm:$0xff]
      %v1613 = vld [vmem:[%s435 + $0x5b] sm:$0xff]
      %v1614 = vld [vmem:[%s435 + $0x63] sm:$0xff]
      %v1615 = vld [vmem:[%s435 + $0x6b] sm:$0xff]
      %v1616 = vld [vmem:[%s435 + $0x73] sm:$0xff]
      %v1617 = vld [vmem:[%s435 + $0x7b] sm:$0xff]
      %v1618 = vld [vmem:[%s435 + $0x83] sm:$0xff]
      %v1619 = vld [vmem:[%s435 + $0x8b] sm:$0xff]
      %v1620 = vld [vmem:[%s435 + $0x93] sm:$0xff]
      %v1621 = vld [vmem:[%s435 + $0x9b] sm:$0xff]
      %v1622 = vld [vmem:[%s435 + $0xa3] sm:$0xff]
      %v1623 = vld [vmem:[%s435 + $0xab] sm:$0xff]
      %v1624 = vld [vmem:[%s435 + $0xb3] sm:$0xff]
      %v1625 = vld [vmem:[%s435 + $0xbb] sm:$0xff]
      %v1626 = vld [vmem:[%s435 + $0xc3] sm:$0xff]
      %v1627 = vld [vmem:[%s435 + $0xcb] sm:$0xff]
      %v1628 = vld [vmem:[%s435 + $0xd3] sm:$0xff]
      %v1629 = vld [vmem:[%s435 + $0xdb] sm:$0xff]
      %v1630 = vld [vmem:[%s435 + $0xe3] sm:$0xff]
      %v1631 = vld [vmem:[%s435 + $0xeb] sm:$0xff]
      %v1632 = vld [vmem:[%s435 + $0xf3] sm:$0xff]
      %v1633 = vld [vmem:[%s435 + $0xfb] sm:$0xff]
      %v1634 = vld [vmem:[%s435 + $0x103] sm:$0xff]
      %v1635 = vld [vmem:[%s435 + $0x10b] sm:$0xff]
      %v1636 = vld [vmem:[%s435 + $0x113] sm:$0xff]
      %v1637 = vld [vmem:[%s435 + $0x11b] sm:$0xff]
      %v1638 = vld [vmem:[%s435 + $0x123] sm:$0xff]
      %v1639 = vld [vmem:[%s435 + $0x12b] sm:$0x3f]
      %v1640 = vld [vmem:[%s1 + $0x4] sm:$0x1]
      %1642 = vset.pattern.permute.xlu0 0
      %1643 = vperm.xlu0 %1642, %v1604
      %v1644 = vpop.permute.xlu0 %1643
      %1647 = vset.pattern.permute.xlu0 0
      %1648 = vperm.xlu0 %1647, %v1605
      %v1649 = vpop.permute.xlu0 %1648
      %1652 = vset.pattern.permute.xlu0 0
      %1653 = vperm.xlu0 %1652, %v1606
      %v1654 = vpop.permute.xlu0 %1653
      %1657 = vset.pattern.permute.xlu0 0
      %1658 = vperm.xlu0 %1657, %v1607
      %v1659 = vpop.permute.xlu0 %1658
      %1662 = vset.pattern.permute.xlu0 0
      %1663 = vperm.xlu0 %1662, %v1608
      %v1664 = vpop.permute.xlu0 %1663
      %1667 = vset.pattern.permute.xlu0 0
      %1668 = vperm.xlu0 %1667, %v1609
      %v1669 = vpop.permute.xlu0 %1668
      %1672 = vset.pattern.permute.xlu0 0
      %1673 = vperm.xlu0 %1672, %v1610
      %v1674 = vpop.permute.xlu0 %1673
      %1677 = vset.pattern.permute.xlu0 0
      %1678 = vperm.xlu0 %1677, %v1611
      %v1679 = vpop.permute.xlu0 %1678
      %1682 = vset.pattern.permute.xlu0 0
      %1683 = vperm.xlu0 %1682, %v1612
      %v1684 = vpop.permute.xlu0 %1683
      %1687 = vset.pattern.permute.xlu0 0
      %1688 = vperm.xlu0 %1687, %v1613
      %v1689 = vpop.permute.xlu0 %1688
      %1692 = vset.pattern.permute.xlu0 0
      %1693 = vperm.xlu0 %1692, %v1614
      %v1694 = vpop.permute.xlu0 %1693
      %1697 = vset.pattern.permute.xlu0 0
      %1698 = vperm.xlu0 %1697, %v1615
      %v1699 = vpop.permute.xlu0 %1698
      %1702 = vset.pattern.permute.xlu0 0
      %1703 = vperm.xlu0 %1702, %v1616
      %v1704 = vpop.permute.xlu0 %1703
      %1707 = vset.pattern.permute.xlu0 0
      %1708 = vperm.xlu0 %1707, %v1617
      %v1709 = vpop.permute.xlu0 %1708
      %1712 = vset.pattern.permute.xlu0 0
      %1713 = vperm.xlu0 %1712, %v1618
      %v1714 = vpop.permute.xlu0 %1713
      %1717 = vset.pattern.permute.xlu0 0
      %1718 = vperm.xlu0 %1717, %v1619
      %v1719 = vpop.permute.xlu0 %1718
      %1722 = vset.pattern.permute.xlu0 0
      %1723 = vperm.xlu0 %1722, %v1620
      %v1724 = vpop.permute.xlu0 %1723
      %1727 = vset.pattern.permute.xlu0 0
      %1728 = vperm.xlu0 %1727, %v1621
      %v1729 = vpop.permute.xlu0 %1728
      %1732 = vset.pattern.permute.xlu0 0
      %1733 = vperm.xlu0 %1732, %v1622
      %v1734 = vpop.permute.xlu0 %1733
      %1737 = vset.pattern.permute.xlu0 0
      %1738 = vperm.xlu0 %1737, %v1623
      %v1739 = vpop.permute.xlu0 %1738
      %1742 = vset.pattern.permute.xlu0 0
      %1743 = vperm.xlu0 %1742, %v1624
      %v1744 = vpop.permute.xlu0 %1743
      %1747 = vset.pattern.permute.xlu0 0
      %1748 = vperm.xlu0 %1747, %v1625
      %v1749 = vpop.permute.xlu0 %1748
      %1752 = vset.pattern.permute.xlu0 0
      %1753 = vperm.xlu0 %1752, %v1626
      %v1754 = vpop.permute.xlu0 %1753
      %1757 = vset.pattern.permute.xlu0 0
      %1758 = vperm.xlu0 %1757, %v1627
      %v1759 = vpop.permute.xlu0 %1758
      %1762 = vset.pattern.permute.xlu0 0
      %1763 = vperm.xlu0 %1762, %v1628
      %v1764 = vpop.permute.xlu0 %1763
      %1767 = vset.pattern.permute.xlu0 0
      %1768 = vperm.xlu0 %1767, %v1629
      %v1769 = vpop.permute.xlu0 %1768
      %1772 = vset.pattern.permute.xlu0 0
      %1773 = vperm.xlu0 %1772, %v1630
      %v1774 = vpop.permute.xlu0 %1773
      %1777 = vset.pattern.permute.xlu0 0
      %1778 = vperm.xlu0 %1777, %v1631
      %v1779 = vpop.permute.xlu0 %1778
      %1782 = vset.pattern.permute.xlu0 0
      %1783 = vperm.xlu0 %1782, %v1632
      %v1784 = vpop.permute.xlu0 %1783
      %1787 = vset.pattern.permute.xlu0 0
      %1788 = vperm.xlu0 %1787, %v1633
      %v1789 = vpop.permute.xlu0 %1788
      %1792 = vset.pattern.permute.xlu0 0
      %1793 = vperm.xlu0 %1792, %v1634
      %v1794 = vpop.permute.xlu0 %1793
      %1797 = vset.pattern.permute.xlu0 0
      %1798 = vperm.xlu0 %1797, %v1635
      %v1799 = vpop.permute.xlu0 %1798
      %1802 = vset.pattern.permute.xlu0 0
      %1803 = vperm.xlu0 %1802, %v1636
      %v1804 = vpop.permute.xlu0 %1803
      %1807 = vset.pattern.permute.xlu0 0
      %1808 = vperm.xlu0 %1807, %v1637
      %v1809 = vpop.permute.xlu0 %1808
      %1812 = vset.pattern.permute.xlu0 0
      %1813 = vperm.xlu0 %1812, %v1638
      %v1814 = vpop.permute.xlu0 %1813
      %1817 = vset.pattern.permute.xlu0 0
      %1818 = vperm.xlu0 %1817, %v1639
      %v1819 = vpop.permute.xlu0 %1818
      %v1821 = vlaneseq
      %v1822 = vshrl.u32 %v1821, 7
      %v1823 = vsub.s32 0, %v1822
      %v1824 = vrot.slane %v1640, %v1823
      %v1825 = vmul.f32 %v1644, %v1824
      %v1826 = vmul.f32 %v1649, %v1824
      %v1827 = vmul.f32 %v1654, %v1824
      %v1828 = vmul.f32 %v1659, %v1824
      %v1829 = vmul.f32 %v1664, %v1824
      %v1830 = vmul.f32 %v1669, %v1824
      %v1831 = vmul.f32 %v1674, %v1824
      %v1832 = vmul.f32 %v1679, %v1824
      %v1833 = vmul.f32 %v1684, %v1824
      %v1834 = vmul.f32 %v1689, %v1824
      %v1835 = vmul.f32 %v1694, %v1824
      %v1836 = vmul.f32 %v1699, %v1824
      %v1837 = vmul.f32 %v1704, %v1824
      %v1838 = vmul.f32 %v1709, %v1824
      %v1839 = vmul.f32 %v1714, %v1824
      %v1840 = vmul.f32 %v1719, %v1824
      %v1841 = vmul.f32 %v1724, %v1824
      %v1842 = vmul.f32 %v1729, %v1824
      %v1843 = vmul.f32 %v1734, %v1824
      %v1844 = vmul.f32 %v1739, %v1824
      %v1845 = vmul.f32 %v1744, %v1824
      %v1846 = vmul.f32 %v1749, %v1824
      %v1847 = vmul.f32 %v1754, %v1824
      %v1848 = vmul.f32 %v1759, %v1824
      %v1849 = vmul.f32 %v1764, %v1824
      %v1850 = vmul.f32 %v1769, %v1824
      %v1851 = vmul.f32 %v1774, %v1824
      %v1852 = vmul.f32 %v1779, %v1824
      %v1853 = vmul.f32 %v1784, %v1824
      %v1854 = vmul.f32 %v1789, %v1824
      %v1855 = vmul.f32 %v1794, %v1824
      %v1856 = vmul.f32 %v1799, %v1824
      %v1857 = vmul.f32 %v1804, %v1824
      %v1858 = vmul.f32 %v1809, %v1824
      %v1859 = vmul.f32 %v1814, %v1824
      %v1860 = vmul.f32 %v1819, %v1824
      %v1861 = vadd.f32 %v1568, %v1825
      %v1862 = vadd.f32 %v1569, %v1826
      %v1863 = vadd.f32 %v1570, %v1827
      %v1864 = vadd.f32 %v1571, %v1828
      %v1865 = vadd.f32 %v1572, %v1829
      %v1866 = vadd.f32 %v1573, %v1830
      %v1867 = vadd.f32 %v1574, %v1831
      %v1868 = vadd.f32 %v1575, %v1832
      %v1869 = vadd.f32 %v1576, %v1833
      %v1870 = vadd.f32 %v1577, %v1834
      %v1871 = vadd.f32 %v1578, %v1835
      %v1872 = vadd.f32 %v1579, %v1836
      %v1873 = vadd.f32 %v1580, %v1837
      %v1874 = vadd.f32 %v1581, %v1838
      %v1875 = vadd.f32 %v1582, %v1839
      %v1876 = vadd.f32 %v1583, %v1840
      %v1877 = vadd.f32 %v1584, %v1841
      %v1878 = vadd.f32 %v1585, %v1842
      %v1879 = vadd.f32 %v1586, %v1843
      %v1880 = vadd.f32 %v1587, %v1844
      %v1881 = vadd.f32 %v1588, %v1845
      %v1882 = vadd.f32 %v1589, %v1846
      %v1883 = vadd.f32 %v1590, %v1847
      %v1884 = vadd.f32 %v1591, %v1848
      %v1885 = vadd.f32 %v1592, %v1849
      %v1886 = vadd.f32 %v1593, %v1850
      %v1887 = vadd.f32 %v1594, %v1851
      %v1888 = vadd.f32 %v1595, %v1852
      %v1889 = vadd.f32 %v1596, %v1853
      %v1890 = vadd.f32 %v1597, %v1854
      %v1891 = vadd.f32 %v1598, %v1855
      %v1892 = vadd.f32 %v1599, %v1856
      %v1893 = vadd.f32 %v1600, %v1857
      %v1894 = vadd.f32 %v1601, %v1858
      %v1895 = vadd.f32 %v1602, %v1859
      %v1896 = vadd.f32 %v1603, %v1860
      %v1897 = vld [vmem:[%s435 + $0x14] sm:$0xff]
      %v1898 = vld [vmem:[%s435 + $0x1c] sm:$0xff]
      %v1899 = vld [vmem:[%s435 + $0x24] sm:$0xff]
      %v1900 = vld [vmem:[%s435 + $0x2c] sm:$0xff]
      %v1901 = vld [vmem:[%s435 + $0x34] sm:$0xff]
      %v1902 = vld [vmem:[%s435 + $0x3c] sm:$0xff]
      %v1903 = vld [vmem:[%s435 + $0x44] sm:$0xff]
      %v1904 = vld [vmem:[%s435 + $0x4c] sm:$0xff]
      %v1905 = vld [vmem:[%s435 + $0x54] sm:$0xff]
      %v1906 = vld [vmem:[%s435 + $0x5c] sm:$0xff]
      %v1907 = vld [vmem:[%s435 + $0x64] sm:$0xff]
      %v1908 = vld [vmem:[%s435 + $0x6c] sm:$0xff]
      %v1909 = vld [vmem:[%s435 + $0x74] sm:$0xff]
      %v1910 = vld [vmem:[%s435 + $0x7c] sm:$0xff]
      %v1911 = vld [vmem:[%s435 + $0x84] sm:$0xff]
      %v1912 = vld [vmem:[%s435 + $0x8c] sm:$0xff]
      %v1913 = vld [vmem:[%s435 + $0x94] sm:$0xff]
      %v1914 = vld [vmem:[%s435 + $0x9c] sm:$0xff]
      %v1915 = vld [vmem:[%s435 + $0xa4] sm:$0xff]
      %v1916 = vld [vmem:[%s435 + $0xac] sm:$0xff]
      %v1917 = vld [vmem:[%s435 + $0xb4] sm:$0xff]
      %v1918 = vld [vmem:[%s435 + $0xbc] sm:$0xff]
      %v1919 = vld [vmem:[%s435 + $0xc4] sm:$0xff]
      %v1920 = vld [vmem:[%s435 + $0xcc] sm:$0xff]
      %v1921 = vld [vmem:[%s435 + $0xd4] sm:$0xff]
      %v1922 = vld [vmem:[%s435 + $0xdc] sm:$0xff]
      %v1923 = vld [vmem:[%s435 + $0xe4] sm:$0xff]
      %v1924 = vld [vmem:[%s435 + $0xec] sm:$0xff]
      %v1925 = vld [vmem:[%s435 + $0xf4] sm:$0xff]
      %v1926 = vld [vmem:[%s435 + $0xfc] sm:$0xff]
      %v1927 = vld [vmem:[%s435 + $0x104] sm:$0xff]
      %v1928 = vld [vmem:[%s435 + $0x10c] sm:$0xff]
      %v1929 = vld [vmem:[%s435 + $0x114] sm:$0xff]
      %v1930 = vld [vmem:[%s435 + $0x11c] sm:$0xff]
      %v1931 = vld [vmem:[%s435 + $0x124] sm:$0xff]
      %v1932 = vld [vmem:[%s435 + $0x12c] sm:$0x3f]
      %v1933 = vld [vmem:[%s1 + $0x5] sm:$0x1]
      %1935 = vset.pattern.permute.xlu0 0
      %1936 = vperm.xlu0 %1935, %v1897
      %v1937 = vpop.permute.xlu0 %1936
      %1940 = vset.pattern.permute.xlu0 0
      %1941 = vperm.xlu0 %1940, %v1898
      %v1942 = vpop.permute.xlu0 %1941
      %1945 = vset.pattern.permute.xlu0 0
      %1946 = vperm.xlu0 %1945, %v1899
      %v1947 = vpop.permute.xlu0 %1946
      %1950 = vset.pattern.permute.xlu0 0
      %1951 = vperm.xlu0 %1950, %v1900
      %v1952 = vpop.permute.xlu0 %1951
      %1955 = vset.pattern.permute.xlu0 0
      %1956 = vperm.xlu0 %1955, %v1901
      %v1957 = vpop.permute.xlu0 %1956
      %1960 = vset.pattern.permute.xlu0 0
      %1961 = vperm.xlu0 %1960, %v1902
      %v1962 = vpop.permute.xlu0 %1961
      %1965 = vset.pattern.permute.xlu0 0
      %1966 = vperm.xlu0 %1965, %v1903
      %v1967 = vpop.permute.xlu0 %1966
      %1970 = vset.pattern.permute.xlu0 0
      %1971 = vperm.xlu0 %1970, %v1904
      %v1972 = vpop.permute.xlu0 %1971
      %1975 = vset.pattern.permute.xlu0 0
      %1976 = vperm.xlu0 %1975, %v1905
      %v1977 = vpop.permute.xlu0 %1976
      %1980 = vset.pattern.permute.xlu0 0
      %1981 = vperm.xlu0 %1980, %v1906
      %v1982 = vpop.permute.xlu0 %1981
      %1985 = vset.pattern.permute.xlu0 0
      %1986 = vperm.xlu0 %1985, %v1907
      %v1987 = vpop.permute.xlu0 %1986
      %1990 = vset.pattern.permute.xlu0 0
      %1991 = vperm.xlu0 %1990, %v1908
      %v1992 = vpop.permute.xlu0 %1991
      %1995 = vset.pattern.permute.xlu0 0
      %1996 = vperm.xlu0 %1995, %v1909
      %v1997 = vpop.permute.xlu0 %1996
      %2000 = vset.pattern.permute.xlu0 0
      %2001 = vperm.xlu0 %2000, %v1910
      %v2002 = vpop.permute.xlu0 %2001
      %2005 = vset.pattern.permute.xlu0 0
      %2006 = vperm.xlu0 %2005, %v1911
      %v2007 = vpop.permute.xlu0 %2006
      %2010 = vset.pattern.permute.xlu0 0
      %2011 = vperm.xlu0 %2010, %v1912
      %v2012 = vpop.permute.xlu0 %2011
      %2015 = vset.pattern.permute.xlu0 0
      %2016 = vperm.xlu0 %2015, %v1913
      %v2017 = vpop.permute.xlu0 %2016
      %2020 = vset.pattern.permute.xlu0 0
      %2021 = vperm.xlu0 %2020, %v1914
      %v2022 = vpop.permute.xlu0 %2021
      %2025 = vset.pattern.permute.xlu0 0
      %2026 = vperm.xlu0 %2025, %v1915
      %v2027 = vpop.permute.xlu0 %2026
      %2030 = vset.pattern.permute.xlu0 0
      %2031 = vperm.xlu0 %2030, %v1916
      %v2032 = vpop.permute.xlu0 %2031
      %2035 = vset.pattern.permute.xlu0 0
      %2036 = vperm.xlu0 %2035, %v1917
      %v2037 = vpop.permute.xlu0 %2036
      %2040 = vset.pattern.permute.xlu0 0
      %2041 = vperm.xlu0 %2040, %v1918
      %v2042 = vpop.permute.xlu0 %2041
      %2045 = vset.pattern.permute.xlu0 0
      %2046 = vperm.xlu0 %2045, %v1919
      %v2047 = vpop.permute.xlu0 %2046
      %2050 = vset.pattern.permute.xlu0 0
      %2051 = vperm.xlu0 %2050, %v1920
      %v2052 = vpop.permute.xlu0 %2051
      %2055 = vset.pattern.permute.xlu0 0
      %2056 = vperm.xlu0 %2055, %v1921
      %v2057 = vpop.permute.xlu0 %2056
      %2060 = vset.pattern.permute.xlu0 0
      %2061 = vperm.xlu0 %2060, %v1922
      %v2062 = vpop.permute.xlu0 %2061
      %2065 = vset.pattern.permute.xlu0 0
      %2066 = vperm.xlu0 %2065, %v1923
      %v2067 = vpop.permute.xlu0 %2066
      %2070 = vset.pattern.permute.xlu0 0
      %2071 = vperm.xlu0 %2070, %v1924
      %v2072 = vpop.permute.xlu0 %2071
      %2075 = vset.pattern.permute.xlu0 0
      %2076 = vperm.xlu0 %2075, %v1925
      %v2077 = vpop.permute.xlu0 %2076
      %2080 = vset.pattern.permute.xlu0 0
      %2081 = vperm.xlu0 %2080, %v1926
      %v2082 = vpop.permute.xlu0 %2081
      %2085 = vset.pattern.permute.xlu0 0
      %2086 = vperm.xlu0 %2085, %v1927
      %v2087 = vpop.permute.xlu0 %2086
      %2090 = vset.pattern.permute.xlu0 0
      %2091 = vperm.xlu0 %2090, %v1928
      %v2092 = vpop.permute.xlu0 %2091
      %2095 = vset.pattern.permute.xlu0 0
      %2096 = vperm.xlu0 %2095, %v1929
      %v2097 = vpop.permute.xlu0 %2096
      %2100 = vset.pattern.permute.xlu0 0
      %2101 = vperm.xlu0 %2100, %v1930
      %v2102 = vpop.permute.xlu0 %2101
      %2105 = vset.pattern.permute.xlu0 0
      %2106 = vperm.xlu0 %2105, %v1931
      %v2107 = vpop.permute.xlu0 %2106
      %2110 = vset.pattern.permute.xlu0 0
      %2111 = vperm.xlu0 %2110, %v1932
      %v2112 = vpop.permute.xlu0 %2111
      %v2114 = vlaneseq
      %v2115 = vshrl.u32 %v2114, 7
      %v2116 = vsub.s32 0, %v2115
      %v2117 = vrot.slane %v1933, %v2116
      %v2118 = vmul.f32 %v1937, %v2117
      %v2119 = vmul.f32 %v1942, %v2117
      %v2120 = vmul.f32 %v1947, %v2117
      %v2121 = vmul.f32 %v1952, %v2117
      %v2122 = vmul.f32 %v1957, %v2117
      %v2123 = vmul.f32 %v1962, %v2117
      %v2124 = vmul.f32 %v1967, %v2117
      %v2125 = vmul.f32 %v1972, %v2117
      %v2126 = vmul.f32 %v1977, %v2117
      %v2127 = vmul.f32 %v1982, %v2117
      %v2128 = vmul.f32 %v1987, %v2117
      %v2129 = vmul.f32 %v1992, %v2117
      %v2130 = vmul.f32 %v1997, %v2117
      %v2131 = vmul.f32 %v2002, %v2117
      %v2132 = vmul.f32 %v2007, %v2117
      %v2133 = vmul.f32 %v2012, %v2117
      %v2134 = vmul.f32 %v2017, %v2117
      %v2135 = vmul.f32 %v2022, %v2117
      %v2136 = vmul.f32 %v2027, %v2117
      %v2137 = vmul.f32 %v2032, %v2117
      %v2138 = vmul.f32 %v2037, %v2117
      %v2139 = vmul.f32 %v2042, %v2117
      %v2140 = vmul.f32 %v2047, %v2117
      %v2141 = vmul.f32 %v2052, %v2117
      %v2142 = vmul.f32 %v2057, %v2117
      %v2143 = vmul.f32 %v2062, %v2117
      %v2144 = vmul.f32 %v2067, %v2117
      %v2145 = vmul.f32 %v2072, %v2117
      %v2146 = vmul.f32 %v2077, %v2117
      %v2147 = vmul.f32 %v2082, %v2117
      %v2148 = vmul.f32 %v2087, %v2117
      %v2149 = vmul.f32 %v2092, %v2117
      %v2150 = vmul.f32 %v2097, %v2117
      %v2151 = vmul.f32 %v2102, %v2117
      %v2152 = vmul.f32 %v2107, %v2117
      %v2153 = vmul.f32 %v2112, %v2117
      %v2154 = vadd.f32 %v1861, %v2118
      %v2155 = vadd.f32 %v1862, %v2119
      %v2156 = vadd.f32 %v1863, %v2120
      %v2157 = vadd.f32 %v1864, %v2121
      %v2158 = vadd.f32 %v1865, %v2122
      %v2159 = vadd.f32 %v1866, %v2123
      %v2160 = vadd.f32 %v1867, %v2124
      %v2161 = vadd.f32 %v1868, %v2125
      %v2162 = vadd.f32 %v1869, %v2126
      %v2163 = vadd.f32 %v1870, %v2127
      %v2164 = vadd.f32 %v1871, %v2128
      %v2165 = vadd.f32 %v1872, %v2129
      %v2166 = vadd.f32 %v1873, %v2130
      %v2167 = vadd.f32 %v1874, %v2131
      %v2168 = vadd.f32 %v1875, %v2132
      %v2169 = vadd.f32 %v1876, %v2133
      %v2170 = vadd.f32 %v1877, %v2134
      %v2171 = vadd.f32 %v1878, %v2135
      %v2172 = vadd.f32 %v1879, %v2136
      %v2173 = vadd.f32 %v1880, %v2137
      %v2174 = vadd.f32 %v1881, %v2138
      %v2175 = vadd.f32 %v1882, %v2139
      %v2176 = vadd.f32 %v1883, %v2140
      %v2177 = vadd.f32 %v1884, %v2141
      %v2178 = vadd.f32 %v1885, %v2142
      %v2179 = vadd.f32 %v1886, %v2143
      %v2180 = vadd.f32 %v1887, %v2144
      %v2181 = vadd.f32 %v1888, %v2145
      %v2182 = vadd.f32 %v1889, %v2146
      %v2183 = vadd.f32 %v1890, %v2147
      %v2184 = vadd.f32 %v1891, %v2148
      %v2185 = vadd.f32 %v1892, %v2149
      %v2186 = vadd.f32 %v1893, %v2150
      %v2187 = vadd.f32 %v1894, %v2151
      %v2188 = vadd.f32 %v1895, %v2152
      %v2189 = vadd.f32 %v1896, %v2153
      %v2190 = vld [vmem:[%s435 + $0x24] sm:$0xff]
      %v2191 = vld [vmem:[%s435 + $0x2c] sm:$0xff]
      %v2192 = vld [vmem:[%s435 + $0x34] sm:$0xff]
      %v2193 = vld [vmem:[%s435 + $0x3c] sm:$0xff]
      %v2194 = vld [vmem:[%s435 + $0x44] sm:$0xff]
      %v2195 = vld [vmem:[%s435 + $0x4c] sm:$0xff]
      %v2196 = vld [vmem:[%s435 + $0x54] sm:$0xff]
      %v2197 = vld [vmem:[%s435 + $0x5c] sm:$0xff]
      %v2198 = vld [vmem:[%s435 + $0x64] sm:$0xff]
      %v2199 = vld [vmem:[%s435 + $0x6c] sm:$0xff]
      %v2200 = vld [vmem:[%s435 + $0x74] sm:$0xff]
      %v2201 = vld [vmem:[%s435 + $0x7c] sm:$0xff]
      %v2202 = vld [vmem:[%s435 + $0x84] sm:$0xff]
      %v2203 = vld [vmem:[%s435 + $0x8c] sm:$0xff]
      %v2204 = vld [vmem:[%s435 + $0x94] sm:$0xff]
      %v2205 = vld [vmem:[%s435 + $0x9c] sm:$0xff]
      %v2206 = vld [vmem:[%s435 + $0xa4] sm:$0xff]
      %v2207 = vld [vmem:[%s435 + $0xac] sm:$0xff]
      %v2208 = vld [vmem:[%s435 + $0xb4] sm:$0xff]
      %v2209 = vld [vmem:[%s435 + $0xbc] sm:$0xff]
      %v2210 = vld [vmem:[%s435 + $0xc4] sm:$0xff]
      %v2211 = vld [vmem:[%s435 + $0xcc] sm:$0xff]
      %v2212 = vld [vmem:[%s435 + $0xd4] sm:$0xff]
      %v2213 = vld [vmem:[%s435 + $0xdc] sm:$0xff]
      %v2214 = vld [vmem:[%s435 + $0xe4] sm:$0xff]
      %v2215 = vld [vmem:[%s435 + $0xec] sm:$0xff]
      %v2216 = vld [vmem:[%s435 + $0xf4] sm:$0xff]
      %v2217 = vld [vmem:[%s435 + $0xfc] sm:$0xff]
      %v2218 = vld [vmem:[%s435 + $0x104] sm:$0xff]
      %v2219 = vld [vmem:[%s435 + $0x10c] sm:$0xff]
      %v2220 = vld [vmem:[%s435 + $0x114] sm:$0xff]
      %v2221 = vld [vmem:[%s435 + $0x11c] sm:$0xff]
      %v2222 = vld [vmem:[%s435 + $0x124] sm:$0xff]
      %v2223 = vld [vmem:[%s435 + $0x12c] sm:$0xff]
      %v2224 = vld [vmem:[%s435 + $0x134] sm:$0xff]
      %v2225 = vld [vmem:[%s435 + $0x13c] sm:$0x3f]
      %v2226 = vld [vmem:[%s1 + $0x6] sm:$0x1]
      %2228 = vset.pattern.permute.xlu0 0
      %2229 = vperm.xlu0 %2228, %v2190
      %v2230 = vpop.permute.xlu0 %2229
      %2233 = vset.pattern.permute.xlu0 0
      %2234 = vperm.xlu0 %2233, %v2191
      %v2235 = vpop.permute.xlu0 %2234
      %2238 = vset.pattern.permute.xlu0 0
      %2239 = vperm.xlu0 %2238, %v2192
      %v2240 = vpop.permute.xlu0 %2239
      %2243 = vset.pattern.permute.xlu0 0
      %2244 = vperm.xlu0 %2243, %v2193
      %v2245 = vpop.permute.xlu0 %2244
      %2248 = vset.pattern.permute.xlu0 0
      %2249 = vperm.xlu0 %2248, %v2194
      %v2250 = vpop.permute.xlu0 %2249
      %2253 = vset.pattern.permute.xlu0 0
      %2254 = vperm.xlu0 %2253, %v2195
      %v2255 = vpop.permute.xlu0 %2254
      %2258 = vset.pattern.permute.xlu0 0
      %2259 = vperm.xlu0 %2258, %v2196
      %v2260 = vpop.permute.xlu0 %2259
      %2263 = vset.pattern.permute.xlu0 0
      %2264 = vperm.xlu0 %2263, %v2197
      %v2265 = vpop.permute.xlu0 %2264
      %2268 = vset.pattern.permute.xlu0 0
      %2269 = vperm.xlu0 %2268, %v2198
      %v2270 = vpop.permute.xlu0 %2269
      %2273 = vset.pattern.permute.xlu0 0
      %2274 = vperm.xlu0 %2273, %v2199
      %v2275 = vpop.permute.xlu0 %2274
      %2278 = vset.pattern.permute.xlu0 0
      %2279 = vperm.xlu0 %2278, %v2200
      %v2280 = vpop.permute.xlu0 %2279
      %2283 = vset.pattern.permute.xlu0 0
      %2284 = vperm.xlu0 %2283, %v2201
      %v2285 = vpop.permute.xlu0 %2284
      %2288 = vset.pattern.permute.xlu0 0
      %2289 = vperm.xlu0 %2288, %v2202
      %v2290 = vpop.permute.xlu0 %2289
      %2293 = vset.pattern.permute.xlu0 0
      %2294 = vperm.xlu0 %2293, %v2203
      %v2295 = vpop.permute.xlu0 %2294
      %2298 = vset.pattern.permute.xlu0 0
      %2299 = vperm.xlu0 %2298, %v2204
      %v2300 = vpop.permute.xlu0 %2299
      %2303 = vset.pattern.permute.xlu0 0
      %2304 = vperm.xlu0 %2303, %v2205
      %v2305 = vpop.permute.xlu0 %2304
      %2308 = vset.pattern.permute.xlu0 0
      %2309 = vperm.xlu0 %2308, %v2206
      %v2310 = vpop.permute.xlu0 %2309
      %2313 = vset.pattern.permute.xlu0 0
      %2314 = vperm.xlu0 %2313, %v2207
      %v2315 = vpop.permute.xlu0 %2314
      %2318 = vset.pattern.permute.xlu0 0
      %2319 = vperm.xlu0 %2318, %v2208
      %v2320 = vpop.permute.xlu0 %2319
      %2323 = vset.pattern.permute.xlu0 0
      %2324 = vperm.xlu0 %2323, %v2209
      %v2325 = vpop.permute.xlu0 %2324
      %2328 = vset.pattern.permute.xlu0 0
      %2329 = vperm.xlu0 %2328, %v2210
      %v2330 = vpop.permute.xlu0 %2329
      %2333 = vset.pattern.permute.xlu0 0
      %2334 = vperm.xlu0 %2333, %v2211
      %v2335 = vpop.permute.xlu0 %2334
      %2338 = vset.pattern.permute.xlu0 0
      %2339 = vperm.xlu0 %2338, %v2212
      %v2340 = vpop.permute.xlu0 %2339
      %2343 = vset.pattern.permute.xlu0 0
      %2344 = vperm.xlu0 %2343, %v2213
      %v2345 = vpop.permute.xlu0 %2344
      %2348 = vset.pattern.permute.xlu0 0
      %2349 = vperm.xlu0 %2348, %v2214
      %v2350 = vpop.permute.xlu0 %2349
      %2353 = vset.pattern.permute.xlu0 0
      %2354 = vperm.xlu0 %2353, %v2215
      %v2355 = vpop.permute.xlu0 %2354
      %2358 = vset.pattern.permute.xlu0 0
      %2359 = vperm.xlu0 %2358, %v2216
      %v2360 = vpop.permute.xlu0 %2359
      %2363 = vset.pattern.permute.xlu0 0
      %2364 = vperm.xlu0 %2363, %v2217
      %v2365 = vpop.permute.xlu0 %2364
      %2368 = vset.pattern.permute.xlu0 0
      %2369 = vperm.xlu0 %2368, %v2218
      %v2370 = vpop.permute.xlu0 %2369
      %2373 = vset.pattern.permute.xlu0 0
      %2374 = vperm.xlu0 %2373, %v2219
      %v2375 = vpop.permute.xlu0 %2374
      %2378 = vset.pattern.permute.xlu0 0
      %2379 = vperm.xlu0 %2378, %v2220
      %v2380 = vpop.permute.xlu0 %2379
      %2383 = vset.pattern.permute.xlu0 0
      %2384 = vperm.xlu0 %2383, %v2221
      %v2385 = vpop.permute.xlu0 %2384
      %2388 = vset.pattern.permute.xlu0 0
      %2389 = vperm.xlu0 %2388, %v2222
      %v2390 = vpop.permute.xlu0 %2389
      %2393 = vset.pattern.permute.xlu0 0
      %2394 = vperm.xlu0 %2393, %v2223
      %v2395 = vpop.permute.xlu0 %2394
      %2398 = vset.pattern.permute.xlu0 0
      %2399 = vperm.xlu0 %2398, %v2224
      %v2400 = vpop.permute.xlu0 %2399
      %2403 = vset.pattern.permute.xlu0 0
      %2404 = vperm.xlu0 %2403, %v2225
      %v2405 = vpop.permute.xlu0 %2404
      %v2407 = vlaneseq
      %v2408 = vshrl.u32 %v2407, 7
      %v2409 = vsub.s32 0, %v2408
      %v2410 = vrot.slane %v2226, %v2409
      %v2411 = vmul.f32 %v2230, %v2410
      %v2412 = vmul.f32 %v2235, %v2410
      %v2413 = vmul.f32 %v2240, %v2410
      %v2414 = vmul.f32 %v2245, %v2410
      %v2415 = vmul.f32 %v2250, %v2410
      %v2416 = vmul.f32 %v2255, %v2410
      %v2417 = vmul.f32 %v2260, %v2410
      %v2418 = vmul.f32 %v2265, %v2410
      %v2419 = vmul.f32 %v2270, %v2410
      %v2420 = vmul.f32 %v2275, %v2410
      %v2421 = vmul.f32 %v2280, %v2410
      %v2422 = vmul.f32 %v2285, %v2410
      %v2423 = vmul.f32 %v2290, %v2410
      %v2424 = vmul.f32 %v2295, %v2410
      %v2425 = vmul.f32 %v2300, %v2410
      %v2426 = vmul.f32 %v2305, %v2410
      %v2427 = vmul.f32 %v2310, %v2410
      %v2428 = vmul.f32 %v2315, %v2410
      %v2429 = vmul.f32 %v2320, %v2410
      %v2430 = vmul.f32 %v2325, %v2410
      %v2431 = vmul.f32 %v2330, %v2410
      %v2432 = vmul.f32 %v2335, %v2410
      %v2433 = vmul.f32 %v2340, %v2410
      %v2434 = vmul.f32 %v2345, %v2410
      %v2435 = vmul.f32 %v2350, %v2410
      %v2436 = vmul.f32 %v2355, %v2410
      %v2437 = vmul.f32 %v2360, %v2410
      %v2438 = vmul.f32 %v2365, %v2410
      %v2439 = vmul.f32 %v2370, %v2410
      %v2440 = vmul.f32 %v2375, %v2410
      %v2441 = vmul.f32 %v2380, %v2410
      %v2442 = vmul.f32 %v2385, %v2410
      %v2443 = vmul.f32 %v2390, %v2410
      %v2444 = vmul.f32 %v2395, %v2410
      %v2445 = vmul.f32 %v2400, %v2410
      %v2446 = vmul.f32 %v2405, %v2410
      %v2447 = vadd.f32 %v2154, %v2411
      %v2448 = vadd.f32 %v2155, %v2412
      %v2449 = vadd.f32 %v2156, %v2413
      %v2450 = vadd.f32 %v2157, %v2414
      %v2451 = vadd.f32 %v2158, %v2415
      %v2452 = vadd.f32 %v2159, %v2416
      %v2453 = vadd.f32 %v2160, %v2417
      %v2454 = vadd.f32 %v2161, %v2418
      %v2455 = vadd.f32 %v2162, %v2419
      %v2456 = vadd.f32 %v2163, %v2420
      %v2457 = vadd.f32 %v2164, %v2421
      %v2458 = vadd.f32 %v2165, %v2422
      %v2459 = vadd.f32 %v2166, %v2423
      %v2460 = vadd.f32 %v2167, %v2424
      %v2461 = vadd.f32 %v2168, %v2425
      %v2462 = vadd.f32 %v2169, %v2426
      %v2463 = vadd.f32 %v2170, %v2427
      %v2464 = vadd.f32 %v2171, %v2428
      %v2465 = vadd.f32 %v2172, %v2429
      %v2466 = vadd.f32 %v2173, %v2430
      %v2467 = vadd.f32 %v2174, %v2431
      %v2468 = vadd.f32 %v2175, %v2432
      %v2469 = vadd.f32 %v2176, %v2433
      %v2470 = vadd.f32 %v2177, %v2434
      %v2471 = vadd.f32 %v2178, %v2435
      %v2472 = vadd.f32 %v2179, %v2436
      %v2473 = vadd.f32 %v2180, %v2437
      %v2474 = vadd.f32 %v2181, %v2438
      %v2475 = vadd.f32 %v2182, %v2439
      %v2476 = vadd.f32 %v2183, %v2440
      %v2477 = vadd.f32 %v2184, %v2441
      %v2478 = vadd.f32 %v2185, %v2442
      %v2479 = vadd.f32 %v2186, %v2443
      %v2480 = vadd.f32 %v2187, %v2444
      %v2481 = vadd.f32 %v2188, %v2445
      %v2482 = vadd.f32 %v2189, %v2446
      %v2483 = vld [vmem:[%s435 + $0x25] sm:$0xff]
      %v2484 = vld [vmem:[%s435 + $0x2d] sm:$0xff]
      %v2485 = vld [vmem:[%s435 + $0x35] sm:$0xff]
      %v2486 = vld [vmem:[%s435 + $0x3d] sm:$0xff]
      %v2487 = vld [vmem:[%s435 + $0x45] sm:$0xff]
      %v2488 = vld [vmem:[%s435 + $0x4d] sm:$0xff]
      %v2489 = vld [vmem:[%s435 + $0x55] sm:$0xff]
      %v2490 = vld [vmem:[%s435 + $0x5d] sm:$0xff]
      %v2491 = vld [vmem:[%s435 + $0x65] sm:$0xff]
      %v2492 = vld [vmem:[%s435 + $0x6d] sm:$0xff]
      %v2493 = vld [vmem:[%s435 + $0x75] sm:$0xff]
      %v2494 = vld [vmem:[%s435 + $0x7d] sm:$0xff]
      %v2495 = vld [vmem:[%s435 + $0x85] sm:$0xff]
      %v2496 = vld [vmem:[%s435 + $0x8d] sm:$0xff]
      %v2497 = vld [vmem:[%s435 + $0x95] sm:$0xff]
      %v2498 = vld [vmem:[%s435 + $0x9d] sm:$0xff]
      %v2499 = vld [vmem:[%s435 + $0xa5] sm:$0xff]
      %v2500 = vld [vmem:[%s435 + $0xad] sm:$0xff]
      %v2501 = vld [vmem:[%s435 + $0xb5] sm:$0xff]
      %v2502 = vld [vmem:[%s435 + $0xbd] sm:$0xff]
      %v2503 = vld [vmem:[%s435 + $0xc5] sm:$0xff]
      %v2504 = vld [vmem:[%s435 + $0xcd] sm:$0xff]
      %v2505 = vld [vmem:[%s435 + $0xd5] sm:$0xff]
      %v2506 = vld [vmem:[%s435 + $0xdd] sm:$0xff]
      %v2507 = vld [vmem:[%s435 + $0xe5] sm:$0xff]
      %v2508 = vld [vmem:[%s435 + $0xed] sm:$0xff]
      %v2509 = vld [vmem:[%s435 + $0xf5] sm:$0xff]
      %v2510 = vld [vmem:[%s435 + $0xfd] sm:$0xff]
      %v2511 = vld [vmem:[%s435 + $0x105] sm:$0xff]
      %v2512 = vld [vmem:[%s435 + $0x10d] sm:$0xff]
      %v2513 = vld [vmem:[%s435 + $0x115] sm:$0xff]
      %v2514 = vld [vmem:[%s435 + $0x11d] sm:$0xff]
      %v2515 = vld [vmem:[%s435 + $0x125] sm:$0xff]
      %v2516 = vld [vmem:[%s435 + $0x12d] sm:$0xff]
      %v2517 = vld [vmem:[%s435 + $0x135] sm:$0xff]
      %v2518 = vld [vmem:[%s435 + $0x13d] sm:$0x3f]
      %v2519 = vld [vmem:[%s1 + $0x7] sm:$0x1]
      %2521 = vset.pattern.permute.xlu0 0
      %2522 = vperm.xlu0 %2521, %v2483
      %v2523 = vpop.permute.xlu0 %2522
      %2526 = vset.pattern.permute.xlu0 0
      %2527 = vperm.xlu0 %2526, %v2484
      %v2528 = vpop.permute.xlu0 %2527
      %2531 = vset.pattern.permute.xlu0 0
      %2532 = vperm.xlu0 %2531, %v2485
      %v2533 = vpop.permute.xlu0 %2532
      %2536 = vset.pattern.permute.xlu0 0
      %2537 = vperm.xlu0 %2536, %v2486
      %v2538 = vpop.permute.xlu0 %2537
      %2541 = vset.pattern.permute.xlu0 0
      %2542 = vperm.xlu0 %2541, %v2487
      %v2543 = vpop.permute.xlu0 %2542
      %2546 = vset.pattern.permute.xlu0 0
      %2547 = vperm.xlu0 %2546, %v2488
      %v2548 = vpop.permute.xlu0 %2547
      %2551 = vset.pattern.permute.xlu0 0
      %2552 = vperm.xlu0 %2551, %v2489
      %v2553 = vpop.permute.xlu0 %2552
      %2556 = vset.pattern.permute.xlu0 0
      %2557 = vperm.xlu0 %2556, %v2490
      %v2558 = vpop.permute.xlu0 %2557
      %2561 = vset.pattern.permute.xlu0 0
      %2562 = vperm.xlu0 %2561, %v2491
      %v2563 = vpop.permute.xlu0 %2562
      %2566 = vset.pattern.permute.xlu0 0
      %2567 = vperm.xlu0 %2566, %v2492
      %v2568 = vpop.permute.xlu0 %2567
      %2571 = vset.pattern.permute.xlu0 0
      %2572 = vperm.xlu0 %2571, %v2493
      %v2573 = vpop.permute.xlu0 %2572
      %2576 = vset.pattern.permute.xlu0 0
      %2577 = vperm.xlu0 %2576, %v2494
      %v2578 = vpop.permute.xlu0 %2577
      %2581 = vset.pattern.permute.xlu0 0
      %2582 = vperm.xlu0 %2581, %v2495
      %v2583 = vpop.permute.xlu0 %2582
      %2586 = vset.pattern.permute.xlu0 0
      %2587 = vperm.xlu0 %2586, %v2496
      %v2588 = vpop.permute.xlu0 %2587
      %2591 = vset.pattern.permute.xlu0 0
      %2592 = vperm.xlu0 %2591, %v2497
      %v2593 = vpop.permute.xlu0 %2592
      %2596 = vset.pattern.permute.xlu0 0
      %2597 = vperm.xlu0 %2596, %v2498
      %v2598 = vpop.permute.xlu0 %2597
      %2601 = vset.pattern.permute.xlu0 0
      %2602 = vperm.xlu0 %2601, %v2499
      %v2603 = vpop.permute.xlu0 %2602
      %2606 = vset.pattern.permute.xlu0 0
      %2607 = vperm.xlu0 %2606, %v2500
      %v2608 = vpop.permute.xlu0 %2607
      %2611 = vset.pattern.permute.xlu0 0
      %2612 = vperm.xlu0 %2611, %v2501
      %v2613 = vpop.permute.xlu0 %2612
      %2616 = vset.pattern.permute.xlu0 0
      %2617 = vperm.xlu0 %2616, %v2502
      %v2618 = vpop.permute.xlu0 %2617
      %2621 = vset.pattern.permute.xlu0 0
      %2622 = vperm.xlu0 %2621, %v2503
      %v2623 = vpop.permute.xlu0 %2622
      %2626 = vset.pattern.permute.xlu0 0
      %2627 = vperm.xlu0 %2626, %v2504
      %v2628 = vpop.permute.xlu0 %2627
      %2631 = vset.pattern.permute.xlu0 0
      %2632 = vperm.xlu0 %2631, %v2505
      %v2633 = vpop.permute.xlu0 %2632
      %2636 = vset.pattern.permute.xlu0 0
      %2637 = vperm.xlu0 %2636, %v2506
      %v2638 = vpop.permute.xlu0 %2637
      %2641 = vset.pattern.permute.xlu0 0
      %2642 = vperm.xlu0 %2641, %v2507
      %v2643 = vpop.permute.xlu0 %2642
      %2646 = vset.pattern.permute.xlu0 0
      %2647 = vperm.xlu0 %2646, %v2508
      %v2648 = vpop.permute.xlu0 %2647
      %2651 = vset.pattern.permute.xlu0 0
      %2652 = vperm.xlu0 %2651, %v2509
      %v2653 = vpop.permute.xlu0 %2652
      %2656 = vset.pattern.permute.xlu0 0
      %2657 = vperm.xlu0 %2656, %v2510
      %v2658 = vpop.permute.xlu0 %2657
      %2661 = vset.pattern.permute.xlu0 0
      %2662 = vperm.xlu0 %2661, %v2511
      %v2663 = vpop.permute.xlu0 %2662
      %2666 = vset.pattern.permute.xlu0 0
      %2667 = vperm.xlu0 %2666, %v2512
      %v2668 = vpop.permute.xlu0 %2667
      %2671 = vset.pattern.permute.xlu0 0
      %2672 = vperm.xlu0 %2671, %v2513
      %v2673 = vpop.permute.xlu0 %2672
      %2676 = vset.pattern.permute.xlu0 0
      %2677 = vperm.xlu0 %2676, %v2514
      %v2678 = vpop.permute.xlu0 %2677
      %2681 = vset.pattern.permute.xlu0 0
      %2682 = vperm.xlu0 %2681, %v2515
      %v2683 = vpop.permute.xlu0 %2682
      %2686 = vset.pattern.permute.xlu0 0
      %2687 = vperm.xlu0 %2686, %v2516
      %v2688 = vpop.permute.xlu0 %2687
      %2691 = vset.pattern.permute.xlu0 0
      %2692 = vperm.xlu0 %2691, %v2517
      %v2693 = vpop.permute.xlu0 %2692
      %2696 = vset.pattern.permute.xlu0 0
      %2697 = vperm.xlu0 %2696, %v2518
      %v2698 = vpop.permute.xlu0 %2697
      %v2700 = vlaneseq
      %v2701 = vshrl.u32 %v2700, 7
      %v2702 = vsub.s32 0, %v2701
      %v2703 = vrot.slane %v2519, %v2702
      %v2704 = vmul.f32 %v2523, %v2703
      %v2705 = vmul.f32 %v2528, %v2703
      %v2706 = vmul.f32 %v2533, %v2703
      %v2707 = vmul.f32 %v2538, %v2703
      %v2708 = vmul.f32 %v2543, %v2703
      %v2709 = vmul.f32 %v2548, %v2703
      %v2710 = vmul.f32 %v2553, %v2703
      %v2711 = vmul.f32 %v2558, %v2703
      %v2712 = vmul.f32 %v2563, %v2703
      %v2713 = vmul.f32 %v2568, %v2703
      %v2714 = vmul.f32 %v2573, %v2703
      %v2715 = vmul.f32 %v2578, %v2703
      %v2716 = vmul.f32 %v2583, %v2703
      %v2717 = vmul.f32 %v2588, %v2703
      %v2718 = vmul.f32 %v2593, %v2703
      %v2719 = vmul.f32 %v2598, %v2703
      %v2720 = vmul.f32 %v2603, %v2703
      %v2721 = vmul.f32 %v2608, %v2703
      %v2722 = vmul.f32 %v2613, %v2703
      %v2723 = vmul.f32 %v2618, %v2703
      %v2724 = vmul.f32 %v2623, %v2703
      %v2725 = vmul.f32 %v2628, %v2703
      %v2726 = vmul.f32 %v2633, %v2703
      %v2727 = vmul.f32 %v2638, %v2703
      %v2728 = vmul.f32 %v2643, %v2703
      %v2729 = vmul.f32 %v2648, %v2703
      %v2730 = vmul.f32 %v2653, %v2703
      %v2731 = vmul.f32 %v2658, %v2703
      %v2732 = vmul.f32 %v2663, %v2703
      %v2733 = vmul.f32 %v2668, %v2703
      %v2734 = vmul.f32 %v2673, %v2703
      %v2735 = vmul.f32 %v2678, %v2703
      %v2736 = vmul.f32 %v2683, %v2703
      %v2737 = vmul.f32 %v2688, %v2703
      %v2738 = vmul.f32 %v2693, %v2703
      %v2739 = vmul.f32 %v2698, %v2703
      %v2740 = vadd.f32 %v2447, %v2704
      %v2741 = vadd.f32 %v2448, %v2705
      %v2742 = vadd.f32 %v2449, %v2706
      %v2743 = vadd.f32 %v2450, %v2707
      %v2744 = vadd.f32 %v2451, %v2708
      %v2745 = vadd.f32 %v2452, %v2709
      %v2746 = vadd.f32 %v2453, %v2710
      %v2747 = vadd.f32 %v2454, %v2711
      %v2748 = vadd.f32 %v2455, %v2712
      %v2749 = vadd.f32 %v2456, %v2713
      %v2750 = vadd.f32 %v2457, %v2714
      %v2751 = vadd.f32 %v2458, %v2715
      %v2752 = vadd.f32 %v2459, %v2716
      %v2753 = vadd.f32 %v2460, %v2717
      %v2754 = vadd.f32 %v2461, %v2718
      %v2755 = vadd.f32 %v2462, %v2719
      %v2756 = vadd.f32 %v2463, %v2720
      %v2757 = vadd.f32 %v2464, %v2721
      %v2758 = vadd.f32 %v2465, %v2722
      %v2759 = vadd.f32 %v2466, %v2723
      %v2760 = vadd.f32 %v2467, %v2724
      %v2761 = vadd.f32 %v2468, %v2725
      %v2762 = vadd.f32 %v2469, %v2726
      %v2763 = vadd.f32 %v2470, %v2727
      %v2764 = vadd.f32 %v2471, %v2728
      %v2765 = vadd.f32 %v2472, %v2729
      %v2766 = vadd.f32 %v2473, %v2730
      %v2767 = vadd.f32 %v2474, %v2731
      %v2768 = vadd.f32 %v2475, %v2732
      %v2769 = vadd.f32 %v2476, %v2733
      %v2770 = vadd.f32 %v2477, %v2734
      %v2771 = vadd.f32 %v2478, %v2735
      %v2772 = vadd.f32 %v2479, %v2736
      %v2773 = vadd.f32 %v2480, %v2737
      %v2774 = vadd.f32 %v2481, %v2738
      %v2775 = vadd.f32 %v2482, %v2739
      %v2776 = vld [vmem:[%s435 + $0x26] sm:$0xff]
      %v2777 = vld [vmem:[%s435 + $0x2e] sm:$0xff]
      %v2778 = vld [vmem:[%s435 + $0x36] sm:$0xff]
      %v2779 = vld [vmem:[%s435 + $0x3e] sm:$0xff]
      %v2780 = vld [vmem:[%s435 + $0x46] sm:$0xff]
      %v2781 = vld [vmem:[%s435 + $0x4e] sm:$0xff]
      %v2782 = vld [vmem:[%s435 + $0x56] sm:$0xff]
      %v2783 = vld [vmem:[%s435 + $0x5e] sm:$0xff]
      %v2784 = vld [vmem:[%s435 + $0x66] sm:$0xff]
      %v2785 = vld [vmem:[%s435 + $0x6e] sm:$0xff]
      %v2786 = vld [vmem:[%s435 + $0x76] sm:$0xff]
      %v2787 = vld [vmem:[%s435 + $0x7e] sm:$0xff]
      %v2788 = vld [vmem:[%s435 + $0x86] sm:$0xff]
      %v2789 = vld [vmem:[%s435 + $0x8e] sm:$0xff]
      %v2790 = vld [vmem:[%s435 + $0x96] sm:$0xff]
      %v2791 = vld [vmem:[%s435 + $0x9e] sm:$0xff]
      %v2792 = vld [vmem:[%s435 + $0xa6] sm:$0xff]
      %v2793 = vld [vmem:[%s435 + $0xae] sm:$0xff]
      %v2794 = vld [vmem:[%s435 + $0xb6] sm:$0xff]
      %v2795 = vld [vmem:[%s435 + $0xbe] sm:$0xff]
      %v2796 = vld [vmem:[%s435 + $0xc6] sm:$0xff]
      %v2797 = vld [vmem:[%s435 + $0xce] sm:$0xff]
      %v2798 = vld [vmem:[%s435 + $0xd6] sm:$0xff]
      %v2799 = vld [vmem:[%s435 + $0xde] sm:$0xff]
      %v2800 = vld [vmem:[%s435 + $0xe6] sm:$0xff]
      %v2801 = vld [vmem:[%s435 + $0xee] sm:$0xff]
      %v2802 = vld [vmem:[%s435 + $0xf6] sm:$0xff]
      %v2803 = vld [vmem:[%s435 + $0xfe] sm:$0xff]
      %v2804 = vld [vmem:[%s435 + $0x106] sm:$0xff]
      %v2805 = vld [vmem:[%s435 + $0x10e] sm:$0xff]
      %v2806 = vld [vmem:[%s435 + $0x116] sm:$0xff]
      %v2807 = vld [vmem:[%s435 + $0x11e] sm:$0xff]
      %v2808 = vld [vmem:[%s435 + $0x126] sm:$0xff]
      %v2809 = vld [vmem:[%s435 + $0x12e] sm:$0xff]
      %v2810 = vld [vmem:[%s435 + $0x136] sm:$0xff]
      %v2811 = vld [vmem:[%s435 + $0x13e] sm:$0x3f]
      %v2812 = vld [vmem:[%s1 + $0x8] sm:$0x1]
      %2814 = vset.pattern.permute.xlu0 0
      %2815 = vperm.xlu0 %2814, %v2776
      %v2816 = vpop.permute.xlu0 %2815
      %2819 = vset.pattern.permute.xlu0 0
      %2820 = vperm.xlu0 %2819, %v2777
      %v2821 = vpop.permute.xlu0 %2820
      %2824 = vset.pattern.permute.xlu0 0
      %2825 = vperm.xlu0 %2824, %v2778
      %v2826 = vpop.permute.xlu0 %2825
      %2829 = vset.pattern.permute.xlu0 0
      %2830 = vperm.xlu0 %2829, %v2779
      %v2831 = vpop.permute.xlu0 %2830
      %2834 = vset.pattern.permute.xlu0 0
      %2835 = vperm.xlu0 %2834, %v2780
      %v2836 = vpop.permute.xlu0 %2835
      %2839 = vset.pattern.permute.xlu0 0
      %2840 = vperm.xlu0 %2839, %v2781
      %v2841 = vpop.permute.xlu0 %2840
      %2844 = vset.pattern.permute.xlu0 0
      %2845 = vperm.xlu0 %2844, %v2782
      %v2846 = vpop.permute.xlu0 %2845
      %2849 = vset.pattern.permute.xlu0 0
      %2850 = vperm.xlu0 %2849, %v2783
      %v2851 = vpop.permute.xlu0 %2850
      %2854 = vset.pattern.permute.xlu0 0
      %2855 = vperm.xlu0 %2854, %v2784
      %v2856 = vpop.permute.xlu0 %2855
      %2859 = vset.pattern.permute.xlu0 0
      %2860 = vperm.xlu0 %2859, %v2785
      %v2861 = vpop.permute.xlu0 %2860
      %2864 = vset.pattern.permute.xlu0 0
      %2865 = vperm.xlu0 %2864, %v2786
      %v2866 = vpop.permute.xlu0 %2865
      %2869 = vset.pattern.permute.xlu0 0
      %2870 = vperm.xlu0 %2869, %v2787
      %v2871 = vpop.permute.xlu0 %2870
      %2874 = vset.pattern.permute.xlu0 0
      %2875 = vperm.xlu0 %2874, %v2788
      %v2876 = vpop.permute.xlu0 %2875
      %2879 = vset.pattern.permute.xlu0 0
      %2880 = vperm.xlu0 %2879, %v2789
      %v2881 = vpop.permute.xlu0 %2880
      %2884 = vset.pattern.permute.xlu0 0
      %2885 = vperm.xlu0 %2884, %v2790
      %v2886 = vpop.permute.xlu0 %2885
      %2889 = vset.pattern.permute.xlu0 0
      %2890 = vperm.xlu0 %2889, %v2791
      %v2891 = vpop.permute.xlu0 %2890
      %2894 = vset.pattern.permute.xlu0 0
      %2895 = vperm.xlu0 %2894, %v2792
      %v2896 = vpop.permute.xlu0 %2895
      %2899 = vset.pattern.permute.xlu0 0
      %2900 = vperm.xlu0 %2899, %v2793
      %v2901 = vpop.permute.xlu0 %2900
      %2904 = vset.pattern.permute.xlu0 0
      %2905 = vperm.xlu0 %2904, %v2794
      %v2906 = vpop.permute.xlu0 %2905
      %2909 = vset.pattern.permute.xlu0 0
      %2910 = vperm.xlu0 %2909, %v2795
      %v2911 = vpop.permute.xlu0 %2910
      %2914 = vset.pattern.permute.xlu0 0
      %2915 = vperm.xlu0 %2914, %v2796
      %v2916 = vpop.permute.xlu0 %2915
      %2919 = vset.pattern.permute.xlu0 0
      %2920 = vperm.xlu0 %2919, %v2797
      %v2921 = vpop.permute.xlu0 %2920
      %2924 = vset.pattern.permute.xlu0 0
      %2925 = vperm.xlu0 %2924, %v2798
      %v2926 = vpop.permute.xlu0 %2925
      %2929 = vset.pattern.permute.xlu0 0
      %2930 = vperm.xlu0 %2929, %v2799
      %v2931 = vpop.permute.xlu0 %2930
      %2934 = vset.pattern.permute.xlu0 0
      %2935 = vperm.xlu0 %2934, %v2800
      %v2936 = vpop.permute.xlu0 %2935
      %2939 = vset.pattern.permute.xlu0 0
      %2940 = vperm.xlu0 %2939, %v2801
      %v2941 = vpop.permute.xlu0 %2940
      %2944 = vset.pattern.permute.xlu0 0
      %2945 = vperm.xlu0 %2944, %v2802
      %v2946 = vpop.permute.xlu0 %2945
      %2949 = vset.pattern.permute.xlu0 0
      %2950 = vperm.xlu0 %2949, %v2803
      %v2951 = vpop.permute.xlu0 %2950
      %2954 = vset.pattern.permute.xlu0 0
      %2955 = vperm.xlu0 %2954, %v2804
      %v2956 = vpop.permute.xlu0 %2955
      %2959 = vset.pattern.permute.xlu0 0
      %2960 = vperm.xlu0 %2959, %v2805
      %v2961 = vpop.permute.xlu0 %2960
      %2964 = vset.pattern.permute.xlu0 0
      %2965 = vperm.xlu0 %2964, %v2806
      %v2966 = vpop.permute.xlu0 %2965
      %2969 = vset.pattern.permute.xlu0 0
      %2970 = vperm.xlu0 %2969, %v2807
      %v2971 = vpop.permute.xlu0 %2970
      %2974 = vset.pattern.permute.xlu0 0
      %2975 = vperm.xlu0 %2974, %v2808
      %v2976 = vpop.permute.xlu0 %2975
      %2979 = vset.pattern.permute.xlu0 0
      %2980 = vperm.xlu0 %2979, %v2809
      %v2981 = vpop.permute.xlu0 %2980
      %2984 = vset.pattern.permute.xlu0 0
      %2985 = vperm.xlu0 %2984, %v2810
      %v2986 = vpop.permute.xlu0 %2985
      %2989 = vset.pattern.permute.xlu0 0
      %2990 = vperm.xlu0 %2989, %v2811
      %v2991 = vpop.permute.xlu0 %2990
      %v2993 = vlaneseq
      %v2994 = vshrl.u32 %v2993, 7
      %v2995 = vsub.s32 0, %v2994
      %v2996 = vrot.slane %v2812, %v2995
      %v2997 = vmul.f32 %v2816, %v2996
      %v2998 = vmul.f32 %v2821, %v2996
      %v2999 = vmul.f32 %v2826, %v2996
      %v3000 = vmul.f32 %v2831, %v2996
      %v3001 = vmul.f32 %v2836, %v2996
      %v3002 = vmul.f32 %v2841, %v2996
      %v3003 = vmul.f32 %v2846, %v2996
      %v3004 = vmul.f32 %v2851, %v2996
      %v3005 = vmul.f32 %v2856, %v2996
      %v3006 = vmul.f32 %v2861, %v2996
      %v3007 = vmul.f32 %v2866, %v2996
      %v3008 = vmul.f32 %v2871, %v2996
      %v3009 = vmul.f32 %v2876, %v2996
      %v3010 = vmul.f32 %v2881, %v2996
      %v3011 = vmul.f32 %v2886, %v2996
      %v3012 = vmul.f32 %v2891, %v2996
      %v3013 = vmul.f32 %v2896, %v2996
      %v3014 = vmul.f32 %v2901, %v2996
      %v3015 = vmul.f32 %v2906, %v2996
      %v3016 = vmul.f32 %v2911, %v2996
      %v3017 = vmul.f32 %v2916, %v2996
      %v3018 = vmul.f32 %v2921, %v2996
      %v3019 = vmul.f32 %v2926, %v2996
      %v3020 = vmul.f32 %v2931, %v2996
      %v3021 = vmul.f32 %v2936, %v2996
      %v3022 = vmul.f32 %v2941, %v2996
      %v3023 = vmul.f32 %v2946, %v2996
      %v3024 = vmul.f32 %v2951, %v2996
      %v3025 = vmul.f32 %v2956, %v2996
      %v3026 = vmul.f32 %v2961, %v2996
      %v3027 = vmul.f32 %v2966, %v2996
      %v3028 = vmul.f32 %v2971, %v2996
      %v3029 = vmul.f32 %v2976, %v2996
      %v3030 = vmul.f32 %v2981, %v2996
      %v3031 = vmul.f32 %v2986, %v2996
      %v3032 = vmul.f32 %v2991, %v2996
      %v3033 = vadd.f32 %v2740, %v2997
      %v3034 = vadd.f32 %v2741, %v2998
      %v3035 = vadd.f32 %v2742, %v2999
      %v3036 = vadd.f32 %v2743, %v3000
      %v3037 = vadd.f32 %v2744, %v3001
      %v3038 = vadd.f32 %v2745, %v3002
      %v3039 = vadd.f32 %v2746, %v3003
      %v3040 = vadd.f32 %v2747, %v3004
      %v3041 = vadd.f32 %v2748, %v3005
      %v3042 = vadd.f32 %v2749, %v3006
      %v3043 = vadd.f32 %v2750, %v3007
      %v3044 = vadd.f32 %v2751, %v3008
      %v3045 = vadd.f32 %v2752, %v3009
      %v3046 = vadd.f32 %v2753, %v3010
      %v3047 = vadd.f32 %v2754, %v3011
      %v3048 = vadd.f32 %v2755, %v3012
      %v3049 = vadd.f32 %v2756, %v3013
      %v3050 = vadd.f32 %v2757, %v3014
      %v3051 = vadd.f32 %v2758, %v3015
      %v3052 = vadd.f32 %v2759, %v3016
      %v3053 = vadd.f32 %v2760, %v3017
      %v3054 = vadd.f32 %v2761, %v3018
      %v3055 = vadd.f32 %v2762, %v3019
      %v3056 = vadd.f32 %v2763, %v3020
      %v3057 = vadd.f32 %v2764, %v3021
      %v3058 = vadd.f32 %v2765, %v3022
      %v3059 = vadd.f32 %v2766, %v3023
      %v3060 = vadd.f32 %v2767, %v3024
      %v3061 = vadd.f32 %v2768, %v3025
      %v3062 = vadd.f32 %v2769, %v3026
      %v3063 = vadd.f32 %v2770, %v3027
      %v3064 = vadd.f32 %v2771, %v3028
      %v3065 = vadd.f32 %v2772, %v3029
      %v3066 = vadd.f32 %v2773, %v3030
      %v3067 = vadd.f32 %v2774, %v3031
      %v3068 = vadd.f32 %v2775, %v3032
      %v3069 = vld [vmem:[%s2] sm:$0x1]
      %v3071 = vlaneseq
      %v3072 = vshrl.u32 %v3071, 7
      %v3073 = vsub.s32 0, %v3072
      %v3074 = vrot.slane %v3069, %v3073
      %v3076 = vadd.f32 %v3033, %v3074
      %v3077 = vadd.f32 %v3034, %v3074
      %v3078 = vadd.f32 %v3035, %v3074
      %v3079 = vadd.f32 %v3036, %v3074
      %v3080 = vadd.f32 %v3037, %v3074
      %v3081 = vadd.f32 %v3038, %v3074
      %v3082 = vadd.f32 %v3039, %v3074
      %v3083 = vadd.f32 %v3040, %v3074
      %v3084 = vadd.f32 %v3041, %v3074
      %v3085 = vadd.f32 %v3042, %v3074
      %v3086 = vadd.f32 %v3043, %v3074
      %v3087 = vadd.f32 %v3044, %v3074
      %v3088 = vadd.f32 %v3045, %v3074
      %v3089 = vadd.f32 %v3046, %v3074
      %v3090 = vadd.f32 %v3047, %v3074
      %v3091 = vadd.f32 %v3048, %v3074
      %v3092 = vadd.f32 %v3049, %v3074
      %v3093 = vadd.f32 %v3050, %v3074
      %v3094 = vadd.f32 %v3051, %v3074
      %v3095 = vadd.f32 %v3052, %v3074
      %v3096 = vadd.f32 %v3053, %v3074
      %v3097 = vadd.f32 %v3054, %v3074
      %v3098 = vadd.f32 %v3055, %v3074
      %v3099 = vadd.f32 %v3056, %v3074
      %v3100 = vadd.f32 %v3057, %v3074
      %v3101 = vadd.f32 %v3058, %v3074
      %v3102 = vadd.f32 %v3059, %v3074
      %v3103 = vadd.f32 %v3060, %v3074
      %v3104 = vadd.f32 %v3061, %v3074
      %v3105 = vadd.f32 %v3062, %v3074
      %v3106 = vadd.f32 %v3063, %v3074
      %v3107 = vadd.f32 %v3064, %v3074
      %v3108 = vadd.f32 %v3065, %v3074
      %v3109 = vadd.f32 %v3066, %v3074
      %v3110 = vadd.f32 %v3067, %v3074
      %v3111 = vadd.f32 %v3068, %v3074
      %vm3146 = vcmask 1045504
      %v3147 = vrot.slane %v3078, 2
      %v3148 = vrot.slane %v3079, 2
      %v3149 = vsel %vm3146, %v3147, %v3148
      %v3150 = vrot.slane %v3080, 2
      %v3151 = vsel %vm3146, %v3148, %v3150
      %v3152 = vrot.slane %v3081, 2
      %v3153 = vsel %vm3146, %v3150, %v3152
      %v3154 = vrot.slane %v3082, 2
      %v3155 = vsel %vm3146, %v3152, %v3154
      %v3156 = vrot.slane %v3083, 2
      %v3157 = vsel %vm3146, %v3154, %v3156
      %v3158 = vrot.slane %v3084, 2
      %v3159 = vsel %vm3146, %v3156, %v3158
      %v3160 = vrot.slane %v3085, 2
      %v3161 = vsel %vm3146, %v3158, %v3160
      %v3162 = vrot.slane %v3086, 2
      %v3163 = vsel %vm3146, %v3160, %v3162
      %v3164 = vrot.slane %v3087, 2
      %v3165 = vsel %vm3146, %v3162, %v3164
      %v3166 = vrot.slane %v3088, 2
      %v3167 = vsel %vm3146, %v3164, %v3166
      %v3168 = vrot.slane %v3089, 2
      %v3169 = vsel %vm3146, %v3166, %v3168
      %v3170 = vrot.slane %v3090, 2
      %v3171 = vsel %vm3146, %v3168, %v3170
      %v3172 = vrot.slane %v3091, 2
      %v3173 = vsel %vm3146, %v3170, %v3172
      %v3174 = vrot.slane %v3092, 2
      %v3175 = vsel %vm3146, %v3172, %v3174
      %v3176 = vrot.slane %v3093, 2
      %v3177 = vsel %vm3146, %v3174, %v3176
      %v3178 = vrot.slane %v3094, 2
      %v3179 = vsel %vm3146, %v3176, %v3178
      %v3180 = vrot.slane %v3095, 2
      %v3181 = vsel %vm3146, %v3178, %v3180
      %v3182 = vrot.slane %v3096, 2
      %v3183 = vsel %vm3146, %v3180, %v3182
      %v3184 = vrot.slane %v3097, 2
      %v3185 = vsel %vm3146, %v3182, %v3184
      %v3186 = vrot.slane %v3098, 2
      %v3187 = vsel %vm3146, %v3184, %v3186
      %v3188 = vrot.slane %v3099, 2
      %v3189 = vsel %vm3146, %v3186, %v3188
      %v3190 = vrot.slane %v3100, 2
      %v3191 = vsel %vm3146, %v3188, %v3190
      %v3192 = vrot.slane %v3101, 2
      %v3193 = vsel %vm3146, %v3190, %v3192
      %v3194 = vrot.slane %v3102, 2
      %v3195 = vsel %vm3146, %v3192, %v3194
      %v3196 = vrot.slane %v3103, 2
      %v3197 = vsel %vm3146, %v3194, %v3196
      %v3198 = vrot.slane %v3104, 2
      %v3199 = vsel %vm3146, %v3196, %v3198
      %v3200 = vrot.slane %v3105, 2
      %v3201 = vsel %vm3146, %v3198, %v3200
      %v3202 = vrot.slane %v3106, 2
      %v3203 = vsel %vm3146, %v3200, %v3202
      %v3204 = vrot.slane %v3107, 2
      %v3205 = vsel %vm3146, %v3202, %v3204
      %v3206 = vrot.slane %v3108, 2
      %v3207 = vsel %vm3146, %v3204, %v3206
      %v3208 = vrot.slane %v3109, 2
      %v3209 = vsel %vm3146, %v3206, %v3208
      %v3210 = vrot.slane %v3110, 2
      %v3211 = vsel %vm3146, %v3208, %v3210
      %v3212 = vrot.slane %v3111, 2
      %v3213 = vsel %vm3146, %v3210, %v3212
      %v3248 = vmax.f32 %v3076, %v3149
      %v3249 = vmax.f32 %v3077, %v3151
      %v3250 = vmax.f32 %v3078, %v3153
      %v3251 = vmax.f32 %v3079, %v3155
      %v3252 = vmax.f32 %v3080, %v3157
      %v3253 = vmax.f32 %v3081, %v3159
      %v3254 = vmax.f32 %v3082, %v3161
      %v3255 = vmax.f32 %v3083, %v3163
      %v3256 = vmax.f32 %v3084, %v3165
      %v3257 = vmax.f32 %v3085, %v3167
      %v3258 = vmax.f32 %v3086, %v3169
      %v3259 = vmax.f32 %v3087, %v3171
      %v3260 = vmax.f32 %v3088, %v3173
      %v3261 = vmax.f32 %v3089, %v3175
      %v3262 = vmax.f32 %v3090, %v3177
      %v3263 = vmax.f32 %v3091, %v3179
      %v3264 = vmax.f32 %v3092, %v3181
      %v3265 = vmax.f32 %v3093, %v3183
      %v3266 = vmax.f32 %v3094, %v3185
      %v3267 = vmax.f32 %v3095, %v3187
      %v3268 = vmax.f32 %v3096, %v3189
      %v3269 = vmax.f32 %v3097, %v3191
      %v3270 = vmax.f32 %v3098, %v3193
      %v3271 = vmax.f32 %v3099, %v3195
      %v3272 = vmax.f32 %v3100, %v3197
      %v3273 = vmax.f32 %v3101, %v3199
      %v3274 = vmax.f32 %v3102, %v3201
      %v3275 = vmax.f32 %v3103, %v3203
      %v3276 = vmax.f32 %v3104, %v3205
      %v3277 = vmax.f32 %v3105, %v3207
      %v3278 = vmax.f32 %v3106, %v3209
      %v3279 = vmax.f32 %v3107, %v3211
      %v3280 = vmax.f32 %v3108, %v3213
      %v3281 = vmax.f32 %v3109, %v3212
      %vm3316 = vcmask 1046528
      %v3317 = vrot.slane %v3248, 1
      %v3318 = vrot.slane %v3249, 1
      %v3319 = vsel %vm3316, %v3317, %v3318
      %v3320 = vrot.slane %v3250, 1
      %v3321 = vsel %vm3316, %v3318, %v3320
      %v3322 = vrot.slane %v3251, 1
      %v3323 = vsel %vm3316, %v3320, %v3322
      %v3324 = vrot.slane %v3252, 1
      %v3325 = vsel %vm3316, %v3322, %v3324
      %v3326 = vrot.slane %v3253, 1
      %v3327 = vsel %vm3316, %v3324, %v3326
      %v3328 = vrot.slane %v3254, 1
      %v3329 = vsel %vm3316, %v3326, %v3328
      %v3330 = vrot.slane %v3255, 1
      %v3331 = vsel %vm3316, %v3328, %v3330
      %v3332 = vrot.slane %v3256, 1
      %v3333 = vsel %vm3316, %v3330, %v3332
      %v3334 = vrot.slane %v3257, 1
      %v3335 = vsel %vm3316, %v3332, %v3334
      %v3336 = vrot.slane %v3258, 1
      %v3337 = vsel %vm3316, %v3334, %v3336
      %v3338 = vrot.slane %v3259, 1
      %v3339 = vsel %vm3316, %v3336, %v3338
      %v3340 = vrot.slane %v3260, 1
      %v3341 = vsel %vm3316, %v3338, %v3340
      %v3342 = vrot.slane %v3261, 1
      %v3343 = vsel %vm3316, %v3340, %v3342
      %v3344 = vrot.slane %v3262, 1
      %v3345 = vsel %vm3316, %v3342, %v3344
      %v3346 = vrot.slane %v3263, 1
      %v3347 = vsel %vm3316, %v3344, %v3346
      %v3348 = vrot.slane %v3264, 1
      %v3349 = vsel %vm3316, %v3346, %v3348
      %v3350 = vrot.slane %v3265, 1
      %v3351 = vsel %vm3316, %v3348, %v3350
      %v3352 = vrot.slane %v3266, 1
      %v3353 = vsel %vm3316, %v3350, %v3352
      %v3354 = vrot.slane %v3267, 1
      %v3355 = vsel %vm3316, %v3352, %v3354
      %v3356 = vrot.slane %v3268, 1
      %v3357 = vsel %vm3316, %v3354, %v3356
      %v3358 = vrot.slane %v3269, 1
      %v3359 = vsel %vm3316, %v3356, %v3358
      %v3360 = vrot.slane %v3270, 1
      %v3361 = vsel %vm3316, %v3358, %v3360
      %v3362 = vrot.slane %v3271, 1
      %v3363 = vsel %vm3316, %v3360, %v3362
      %v3364 = vrot.slane %v3272, 1
      %v3365 = vsel %vm3316, %v3362, %v3364
      %v3366 = vrot.slane %v3273, 1
      %v3367 = vsel %vm3316, %v3364, %v3366
      %v3368 = vrot.slane %v3274, 1
      %v3369 = vsel %vm3316, %v3366, %v3368
      %v3370 = vrot.slane %v3275, 1
      %v3371 = vsel %vm3316, %v3368, %v3370
      %v3372 = vrot.slane %v3276, 1
      %v3373 = vsel %vm3316, %v3370, %v3372
      %v3374 = vrot.slane %v3277, 1
      %v3375 = vsel %vm3316, %v3372, %v3374
      %v3376 = vrot.slane %v3278, 1
      %v3377 = vsel %vm3316, %v3374, %v3376
      %v3378 = vrot.slane %v3279, 1
      %v3379 = vsel %vm3316, %v3376, %v3378
      %v3380 = vrot.slane %v3280, 1
      %v3381 = vsel %vm3316, %v3378, %v3380
      %v3382 = vrot.slane %v3281, 1
      %v3383 = vsel %vm3316, %v3380, %v3382
      %v3418 = vmax.f32 %v3248, %v3319
      %v3419 = vmax.f32 %v3249, %v3321
      %v3420 = vmax.f32 %v3250, %v3323
      %v3421 = vmax.f32 %v3251, %v3325
      %v3422 = vmax.f32 %v3252, %v3327
      %v3423 = vmax.f32 %v3253, %v3329
      %v3424 = vmax.f32 %v3254, %v3331
      %v3425 = vmax.f32 %v3255, %v3333
      %v3426 = vmax.f32 %v3256, %v3335
      %v3427 = vmax.f32 %v3257, %v3337
      %v3428 = vmax.f32 %v3258, %v3339
      %v3429 = vmax.f32 %v3259, %v3341
      %v3430 = vmax.f32 %v3260, %v3343
      %v3431 = vmax.f32 %v3261, %v3345
      %v3432 = vmax.f32 %v3262, %v3347
      %v3433 = vmax.f32 %v3263, %v3349
      %v3434 = vmax.f32 %v3264, %v3351
      %v3435 = vmax.f32 %v3265, %v3353
      %v3436 = vmax.f32 %v3266, %v3355
      %v3437 = vmax.f32 %v3267, %v3357
      %v3438 = vmax.f32 %v3268, %v3359
      %v3439 = vmax.f32 %v3269, %v3361
      %v3440 = vmax.f32 %v3270, %v3363
      %v3441 = vmax.f32 %v3271, %v3365
      %v3442 = vmax.f32 %v3272, %v3367
      %v3443 = vmax.f32 %v3273, %v3369
      %v3444 = vmax.f32 %v3274, %v3371
      %v3445 = vmax.f32 %v3275, %v3373
      %v3446 = vmax.f32 %v3276, %v3375
      %v3447 = vmax.f32 %v3277, %v3377
      %v3448 = vmax.f32 %v3278, %v3379
      %v3449 = vmax.f32 %v3279, %v3381
      %v3450 = vmax.f32 %v3280, %v3383
      %v3451 = vmax.f32 %v3281, %v3382
      %v3452 = vmax.f32 %v3418, 0.0
      %v3453 = vmax.f32 %v3419, 0.0
      %v3454 = vmax.f32 %v3420, 0.0
      %v3455 = vmax.f32 %v3421, 0.0
      %v3456 = vmax.f32 %v3422, 0.0
      %v3457 = vmax.f32 %v3423, 0.0
      %v3458 = vmax.f32 %v3424, 0.0
      %v3459 = vmax.f32 %v3425, 0.0
      %v3460 = vmax.f32 %v3426, 0.0
      %v3461 = vmax.f32 %v3427, 0.0
      %v3462 = vmax.f32 %v3428, 0.0
      %v3463 = vmax.f32 %v3429, 0.0
      %v3464 = vmax.f32 %v3430, 0.0
      %v3465 = vmax.f32 %v3431, 0.0
      %v3466 = vmax.f32 %v3432, 0.0
      %v3467 = vmax.f32 %v3433, 0.0
      %v3468 = vmax.f32 %v3434, 0.0
      %v3469 = vmax.f32 %v3435, 0.0
      %v3470 = vmax.f32 %v3436, 0.0
      %v3471 = vmax.f32 %v3437, 0.0
      %v3472 = vmax.f32 %v3438, 0.0
      %v3473 = vmax.f32 %v3439, 0.0
      %v3474 = vmax.f32 %v3440, 0.0
      %v3475 = vmax.f32 %v3441, 0.0
      %v3476 = vmax.f32 %v3442, 0.0
      %v3477 = vmax.f32 %v3443, 0.0
      %v3478 = vmax.f32 %v3444, 0.0
      %v3479 = vmax.f32 %v3445, 0.0
      %v3480 = vmax.f32 %v3446, 0.0
      %v3481 = vmax.f32 %v3447, 0.0
      %v3482 = vmax.f32 %v3448, 0.0
      %v3483 = vmax.f32 %v3449, 0.0
      %v3484 = vmax.f32 %v3450, 0.0
      %v3485 = vmax.f32 %v3451, 0.0
      %3486 = vst.msk [vmem:[#allocation6] sm:$0xff] %vm441, %v3452
      %3487 = vst.msk [vmem:[#allocation6 + $0x8] sm:$0xff] %vm441, %v3453
      %3488 = vst.msk [vmem:[#allocation6 + $0x10] sm:$0xff] %vm441, %v3454
      %3489 = vst.msk [vmem:[#allocation6 + $0x18] sm:$0xff] %vm441, %v3455
      %3490 = vst.msk [vmem:[#allocation6 + $0x20] sm:$0xff] %vm441, %v3456
      %3491 = vst.msk [vmem:[#allocation6 + $0x28] sm:$0xff] %vm441, %v3457
      %3492 = vst.msk [vmem:[#allocation6 + $0x30] sm:$0xff] %vm441, %v3458
      %3493 = vst.msk [vmem:[#allocation6 + $0x38] sm:$0xff] %vm441, %v3459
      %3494 = vst.msk [vmem:[#allocation6 + $0x40] sm:$0xff] %vm441, %v3460
      %3495 = vst.msk [vmem:[#allocation6 + $0x48] sm:$0xff] %vm441, %v3461
      %3496 = vst.msk [vmem:[#allocation6 + $0x50] sm:$0xff] %vm441, %v3462
      %3497 = vst.msk [vmem:[#allocation6 + $0x58] sm:$0xff] %vm441, %v3463
      %3498 = vst.msk [vmem:[#allocation6 + $0x60] sm:$0xff] %vm441, %v3464
      %3499 = vst.msk [vmem:[#allocation6 + $0x68] sm:$0xff] %vm441, %v3465
      %3500 = vst.msk [vmem:[#allocation6 + $0x70] sm:$0xff] %vm441, %v3466
      %3501 = vst.msk [vmem:[#allocation6 + $0x78] sm:$0xff] %vm441, %v3467
      %3502 = vst.msk [vmem:[#allocation6 + $0x80] sm:$0xff] %vm441, %v3468
      %3503 = vst.msk [vmem:[#allocation6 + $0x88] sm:$0xff] %vm441, %v3469
      %3504 = vst.msk [vmem:[#allocation6 + $0x90] sm:$0xff] %vm441, %v3470
      %3505 = vst.msk [vmem:[#allocation6 + $0x98] sm:$0xff] %vm441, %v3471
      %3506 = vst.msk [vmem:[#allocation6 + $0xa0] sm:$0xff] %vm441, %v3472
      %3507 = vst.msk [vmem:[#allocation6 + $0xa8] sm:$0xff] %vm441, %v3473
      %3508 = vst.msk [vmem:[#allocation6 + $0xb0] sm:$0xff] %vm441, %v3474
      %3509 = vst.msk [vmem:[#allocation6 + $0xb8] sm:$0xff] %vm441, %v3475
      %3510 = vst.msk [vmem:[#allocation6 + $0xc0] sm:$0xff] %vm441, %v3476
      %3511 = vst.msk [vmem:[#allocation6 + $0xc8] sm:$0xff] %vm441, %v3477
      %3512 = vst.msk [vmem:[#allocation6 + $0xd0] sm:$0xff] %vm441, %v3478
      %3513 = vst.msk [vmem:[#allocation6 + $0xd8] sm:$0xff] %vm441, %v3479
      %3514 = vst.msk [vmem:[#allocation6 + $0xe0] sm:$0xff] %vm441, %v3480
      %3515 = vst.msk [vmem:[#allocation6 + $0xe8] sm:$0xff] %vm441, %v3481
      %3516 = vst.msk [vmem:[#allocation6 + $0xf0] sm:$0xff] %vm441, %v3482
      %3517 = vst.msk [vmem:[#allocation6 + $0xf8] sm:$0xff] %vm441, %v3483
      %3518 = vst.msk [vmem:[#allocation6 + $0x100] sm:$0xff] %vm441, %v3484
      %vm3519 = vcmask 124928
      %3520 = vst.msk [vmem:[#allocation6 + $0x108] sm:$0x7] %vm3519, %v3485
      %v3521 = vld [vmem:[#allocation6] ss:$2 sm:$0xff]
      %3522 = vst.msk [vmem:[#allocation2 + $0xb] sm:$0xff] %vm441, %v3521
      %s3523 = scalar_lea.vmem [#allocation6], 36
      %v3524 = vld [vmem:[%s3523] ss:$2 sm:$0xff]
      %3525 = vst.msk [vmem:[#allocation2 + $0x15] sm:$0xff] %vm441, %v3524
      %s3526 = scalar_lea.vmem [#allocation6], 72
      %v3527 = vld [vmem:[%s3526] ss:$2 sm:$0xff]
      %3528 = vst.msk [vmem:[#allocation2 + $0x1f] sm:$0xff] %vm441, %v3527
      %s3529 = scalar_lea.vmem [#allocation6], 108
      %v3530 = vld [vmem:[%s3529] ss:$2 sm:$0xff]
      %3531 = vst.msk [vmem:[#allocation2 + $0x29] sm:$0xff] %vm441, %v3530
      %s3532 = scalar_lea.vmem [#allocation6], 144
      %v3533 = vld [vmem:[%s3532] ss:$2 sm:$0xff]
      %3534 = vst.msk [vmem:[#allocation2 + $0x33] sm:$0xff] %vm441, %v3533
      %s3535 = scalar_lea.vmem [#allocation6], 180
      %v3536 = vld [vmem:[%s3535] ss:$2 sm:$0xff]
      %3537 = vst.msk [vmem:[#allocation2 + $0x3d] sm:$0xff] %vm441, %v3536
      %s3538 = scalar_lea.vmem [#allocation6], 216
      %v3539 = vld [vmem:[%s3538] ss:$2 sm:$0xff]
      %3540 = vst.msk [vmem:[#allocation2 + $0x47] sm:$0xff] %vm441, %v3539
      %s3541 = scalar_lea.vmem [#allocation6], 252
      %v3542 = vld [vmem:[%s3541] ss:$2 sm:$0xff]
      %3543 = vst.msk [vmem:[#allocation2 + $0x51] sm:$0xff] %vm441, %v3542
      %v3544 = vld [vmem:[#allocation2] sm:$0xff]
      %v3545 = vld [vmem:[#allocation2 + $0x8] sm:$0xff]
      %v3546 = vld [vmem:[#allocation2 + $0x10] sm:$0xff]
      %v3547 = vld [vmem:[#allocation2 + $0x18] sm:$0xff]
      %v3548 = vld [vmem:[#allocation2 + $0x20] sm:$0xff]
      %v3549 = vld [vmem:[#allocation2 + $0x28] sm:$0xff]
      %v3550 = vld [vmem:[#allocation2 + $0x30] sm:$0xff]
      %v3551 = vld [vmem:[#allocation2 + $0x38] sm:$0xff]
      %v3552 = vld [vmem:[#allocation2 + $0x40] sm:$0xff]
      %v3553 = vld [vmem:[#allocation2 + $0x48] sm:$0x3f]
      %v3554 = vld [vmem:[%s3] sm:$0xff]
      %v3555 = vld [vmem:[%s3 + $0x8] sm:$0xff]
      %v3556 = vld [vmem:[#allocation2 + $0x1] sm:$0xff]
      %v3557 = vld [vmem:[#allocation2 + $0x9] sm:$0xff]
      %v3558 = vld [vmem:[#allocation2 + $0x11] sm:$0xff]
      %v3559 = vld [vmem:[#allocation2 + $0x19] sm:$0xff]
      %v3560 = vld [vmem:[#allocation2 + $0x21] sm:$0xff]
      %v3561 = vld [vmem:[#allocation2 + $0x29] sm:$0xff]
      %v3562 = vld [vmem:[#allocation2 + $0x31] sm:$0xff]
      %v3563 = vld [vmem:[#allocation2 + $0x39] sm:$0xff]
      %v3564 = vld [vmem:[#allocation2 + $0x41] sm:$0xff]
      %v3565 = vld [vmem:[#allocation2 + $0x49] sm:$0x3f]
      %v3566 = vld [vmem:[%s3 + $0x10] sm:$0xff]
      %v3567 = vld [vmem:[%s3 + $0x18] sm:$0xff]
      %v3569 = vsel %vm441, %v3556, 0
      %v3572 = vsel %vm441, %v3557, 0
      %v3575 = vsel %vm441, %v3558, 0
      %v3578 = vsel %vm441, %v3559, 0
      %v3581 = vsel %vm441, %v3560, 0
      %v3584 = vsel %vm441, %v3561, 0
      %v3587 = vsel %vm441, %v3562, 0
      %v3590 = vsel %vm441, %v3563, 0
      %v3593 = vsel %vm441, %v3564, 0
      %v3596 = vsel %vm441, %v3565, 0
      %3598 = vmatprep.subr.mxu0 0.0
      %3599 = vmatpush1.msra.mxu0 %v3566
      %3600 = vmatprep.subr.mxu0 0.0
      %3601 = vmatpush1.msra.mxu0 %v3567
      %3602 = vmatprep.subr.mxu0 0.0
      %3603 = vmatpush1.msra.mxu0 0.0
      %3604 = vmatprep.subr.mxu0 0.0
      %3605 = vmatpush1.msra.mxu0 0.0
      %3606 = vmatprep.subr.mxu0 0.0
      %3607 = vmatpush1.msra.mxu0 0.0
      %3608 = vmatprep.subr.mxu0 0.0
      %3609 = vmatpush1.msra.mxu0 0.0
      %3610 = vmatprep.subr.mxu0 0.0
      %3611 = vmatpush1.msra.mxu0 0.0
      %3612 = vmatprep.subr.mxu0 0.0
      %3613 = vmatpush1.msra.mxu0 0.0
      %3614 = vmatprep.subr.mxu0 0.0
      %3615 = vmatpush1.msra.mxu0 0.0
      %3616 = vmatprep.subr.mxu0 0.0
      %3617 = vmatpush1.msra.mxu0 0.0
      %3618 = vmatprep.subr.mxu0 0.0
      %3619 = vmatpush1.msra.mxu0 0.0
      %3620 = vmatprep.subr.mxu0 0.0
      %3621 = vmatpush1.msra.mxu0 0.0
      %3622 = vmatprep.subr.mxu0 0.0
      %3623 = vmatpush1.msra.mxu0 0.0
      %3624 = vmatprep.subr.mxu0 0.0
      %3625 = vmatpush1.msra.mxu0 0.0
      %3626 = vmatprep.subr.mxu0 0.0
      %3627 = vmatpush1.msra.mxu0 0.0
      %3628 = vmatprep.subr.mxu0 0.0
      %3629 = vmatpush1.msra.mxu0 0.0
      %3630 = vmatprep.subr.mxu0 0.0
      %3631 = vmatpush1.msra.mxu0 0.0
      %3632 = vmatprep.subr.mxu0 0.0
      %3633 = vmatpush1.msra.mxu0 0.0
      %3634 = vmatprep.subr.mxu0 0.0
      %3635 = vmatpush1.msra.mxu0 0.0
      %3636 = vmatprep.subr.mxu0 0.0
      %3637 = vmatpush1.msra.mxu0 0.0
      %3638 = vmatprep.subr.mxu0 0.0
      %3639 = vmatpush1.msra.mxu0 0.0
      %3640 = vmatprep.subr.mxu0 0.0
      %3641 = vmatpush1.msra.mxu0 0.0
      %3642 = vmatprep.subr.mxu0 0.0
      %3643 = vmatpush1.msra.mxu0 0.0
      %3644 = vmatprep.subr.mxu0 0.0
      %3645 = vmatpush1.msra.mxu0 0.0
      %3646 = vmatprep.subr.mxu0 0.0
      %3647 = vmatpush1.msra.mxu0 0.0
      %3648 = vmatprep.subr.mxu0 0.0
      %3649 = vmatpush1.msra.mxu0 0.0
      %3650 = vmatprep.subr.mxu0 0.0
      %3651 = vmatpush1.msra.mxu0 0.0
      %3652 = vmatprep.subr.mxu0 0.0
      %3653 = vmatpush1.msra.mxu0 0.0
      %3654 = vmatprep.subr.mxu0 0.0
      %3655 = vmatpush1.msra.mxu0 0.0
      %3656 = vmatprep.subr.mxu0 0.0
      %3657 = vmatpush1.msra.mxu0 0.0
      %3658 = vmatprep.subr.mxu0 0.0
      %3659 = vmatpush1.msra.mxu0 0.0
      %3660 = vmatprep.subr.mxu0 0.0
      %3661 = vmatpush1.msra.mxu0 0.0
      %3662 = vmatprep.mubr.f32.mxu0 0.0
      %3663 = vmatmul.mubr.f32.gmra.mrb[0].mxu0 %v3569
      %v3664 = vpop.f32.mrb[0].mxu0
      %v3665 = vadd.f32 0.0, %v3664
      %v3666 = vpop.f32.mrb[0].mxu0
      %3667 = vmatprep.mubr.f32.mxu0 0.0
      %3668 = vmatmul.mubr.f32.gmra.mrb[0].mxu0 %v3572
      %v3669 = vpop.f32.mrb[0].mxu0
      %v3670 = vadd.f32 0.0, %v3669
      %v3671 = vpop.f32.mrb[0].mxu0
      %3672 = vmatprep.mubr.f32.mxu0 0.0
      %3673 = vmatmul.mubr.f32.gmra.mrb[0].mxu0 %v3575
      %v3674 = vpop.f32.mrb[0].mxu0
      %v3675 = vadd.f32 0.0, %v3674
      %v3676 = vpop.f32.mrb[0].mxu0
      %3677 = vmatprep.mubr.f32.mxu0 0.0
      %3678 = vmatmul.mubr.f32.gmra.mrb[0].mxu0 %v3578
      %v3679 = vpop.f32.mrb[0].mxu0
      %v3680 = vadd.f32 0.0, %v3679
      %v3681 = vpop.f32.mrb[0].mxu0
      %3682 = vmatprep.mubr.f32.mxu0 0.0
      %3683 = vmatmul.mubr.f32.gmra.mrb[0].mxu0 %v3581
      %v3684 = vpop.f32.mrb[0].mxu0
      %v3685 = vadd.f32 0.0, %v3684
      %v3686 = vpop.f32.mrb[0].mxu0
      %3687 = vmatprep.mubr.f32.mxu0 0.0
      %3688 = vmatmul.mubr.f32.gmra.mrb[0].mxu0 %v3584
      %v3689 = vpop.f32.mrb[0].mxu0
      %v3690 = vadd.f32 0.0, %v3689
      %v3691 = vpop.f32.mrb[0].mxu0
      %3692 = vmatprep.mubr.f32.mxu0 0.0
      %3693 = vmatmul.mubr.f32.gmra.mrb[0].mxu0 %v3587
      %v3694 = vpop.f32.mrb[0].mxu0
      %v3695 = vadd.f32 0.0, %v3694
      %v3696 = vpop.f32.mrb[0].mxu0
      %3697 = vmatprep.mubr.f32.mxu0 0.0
      %3698 = vmatmul.mubr.f32.gmra.mrb[0].mxu0 %v3590
      %v3699 = vpop.f32.mrb[0].mxu0
      %v3700 = vadd.f32 0.0, %v3699
      %v3701 = vpop.f32.mrb[0].mxu0
      %3702 = vmatprep.mubr.f32.mxu0 0.0
      %3703 = vmatmul.mubr.f32.gmra.mrb[0].mxu0 %v3593
      %v3704 = vpop.f32.mrb[0].mxu0
      %v3705 = vadd.f32 0.0, %v3704
      %v3706 = vpop.f32.mrb[0].mxu0
      %3707 = vmatprep.mubr.f32.mxu0 0.0
      %3708 = vmatmul.mubr.f32.gmra.mrb[0].mxu0 %v3596
      %v3709 = vpop.f32.mrb[0].mxu0
      %v3710 = vadd.f32 0.0, %v3709
      %v3711 = vpop.f32.mrb[0].mxu0
      %3712 = vdwg.mxu0
      %v3714 = vsel %vm441, %v3544, 0
      %v3717 = vsel %vm441, %v3545, 0
      %v3720 = vsel %vm441, %v3546, 0
      %v3723 = vsel %vm441, %v3547, 0
      %v3726 = vsel %vm441, %v3548, 0
      %v3729 = vsel %vm441, %v3549, 0
      %v3732 = vsel %vm441, %v3550, 0
      %v3735 = vsel %vm441, %v3551, 0
      %v3738 = vsel %vm441, %v3552, 0
      %v3741 = vsel %vm441, %v3553, 0
      %3743 = vmatprep.subr.mxu0 0.0
      %3744 = vmatpush1.msra.mxu0 %v3554
      %3745 = vmatprep.subr.mxu0 0.0
      %3746 = vmatpush1.msra.mxu0 %v3555
      %3747 = vmatprep.subr.mxu0 0.0
      %3748 = vmatpush1.msra.mxu0 0.0
      %3749 = vmatprep.subr.mxu0 0.0
      %3750 = vmatpush1.msra.mxu0 0.0
      %3751 = vmatprep.subr.mxu0 0.0
      %3752 = vmatpush1.msra.mxu0 0.0
      %3753 = vmatprep.subr.mxu0 0.0
      %3754 = vmatpush1.msra.mxu0 0.0
      %3755 = vmatprep.subr.mxu0 0.0
      %3756 = vmatpush1.msra.mxu0 0.0
      %3757 = vmatprep.subr.mxu0 0.0
      %3758 = vmatpush1.msra.mxu0 0.0
      %3759 = vmatprep.subr.mxu0 0.0
      %3760 = vmatpush1.msra.mxu0 0.0
      %3761 = vmatprep.subr.mxu0 0.0
      %3762 = vmatpush1.msra.mxu0 0.0
      %3763 = vmatprep.subr.mxu0 0.0
      %3764 = vmatpush1.msra.mxu0 0.0
      %3765 = vmatprep.subr.mxu0 0.0
      %3766 = vmatpush1.msra.mxu0 0.0
      %3767 = vmatprep.subr.mxu0 0.0
      %3768 = vmatpush1.msra.mxu0 0.0
      %3769 = vmatprep.subr.mxu0 0.0
      %3770 = vmatpush1.msra.mxu0 0.0
      %3771 = vmatprep.subr.mxu0 0.0
      %3772 = vmatpush1.msra.mxu0 0.0
      %3773 = vmatprep.subr.mxu0 0.0
      %3774 = vmatpush1.msra.mxu0 0.0
      %3775 = vmatprep.subr.mxu0 0.0
      %3776 = vmatpush1.msra.mxu0 0.0
      %3777 = vmatprep.subr.mxu0 0.0
      %3778 = vmatpush1.msra.mxu0 0.0
      %3779 = vmatprep.subr.mxu0 0.0
      %3780 = vmatpush1.msra.mxu0 0.0
      %3781 = vmatprep.subr.mxu0 0.0
      %3782 = vmatpush1.msra.mxu0 0.0
      %3783 = vmatprep.subr.mxu0 0.0
      %3784 = vmatpush1.msra.mxu0 0.0
      %3785 = vmatprep.subr.mxu0 0.0
      %3786 = vmatpush1.msra.mxu0 0.0
      %3787 = vmatprep.subr.mxu0 0.0
      %3788 = vmatpush1.msra.mxu0 0.0
      %3789 = vmatprep.subr.mxu0 0.0
      %3790 = vmatpush1.msra.mxu0 0.0
      %3791 = vmatprep.subr.mxu0 0.0
      %3792 = vmatpush1.msra.mxu0 0.0
      %3793 = vmatprep.subr.mxu0 0.0
      %3794 = vmatpush1.msra.mxu0 0.0
      %3795 = vmatprep.subr.mxu0 0.0
      %3796 = vmatpush1.msra.mxu0 0.0
      %3797 = vmatprep.subr.mxu0 0.0
      %3798 = vmatpush1.msra.mxu0 0.0
      %3799 = vmatprep.subr.mxu0 0.0
      %3800 = vmatpush1.msra.mxu0 0.0
      %3801 = vmatprep.subr.mxu0 0.0
      %3802 = vmatpush1.msra.mxu0 0.0
      %3803 = vmatprep.subr.mxu0 0.0
      %3804 = vmatpush1.msra.mxu0 0.0
      %3805 = vmatprep.subr.mxu0 0.0
      %3806 = vmatpush1.msra.mxu0 0.0
      %3807 = vmatprep.mubr.f32.mxu0 0.0
      %3808 = vmatmul.mubr.f32.gmra.mrb[0].mxu0 %v3714
      %v3809 = vpop.f32.mrb[0].mxu0
      %v3810 = vadd.f32 %v3665, %v3809
      %v3811 = vpop.f32.mrb[0].mxu0
      %3812 = vmatprep.mubr.f32.mxu0 0.0
      %3813 = vmatmul.mubr.f32.gmra.mrb[0].mxu0 %v3717
      %v3814 = vpop.f32.mrb[0].mxu0
      %v3815 = vadd.f32 %v3670, %v3814
      %v3816 = vpop.f32.mrb[0].mxu0
      %3817 = vmatprep.mubr.f32.mxu0 0.0
      %3818 = vmatmul.mubr.f32.gmra.mrb[0].mxu0 %v3720
      %v3819 = vpop.f32.mrb[0].mxu0
      %v3820 = vadd.f32 %v3675, %v3819
      %v3821 = vpop.f32.mrb[0].mxu0
      %3822 = vmatprep.mubr.f32.mxu0 0.0
      %3823 = vmatmul.mubr.f32.gmra.mrb[0].mxu0 %v3723
      %v3824 = vpop.f32.mrb[0].mxu0
      %v3825 = vadd.f32 %v3680, %v3824
      %v3826 = vpop.f32.mrb[0].mxu0
      %3827 = vmatprep.mubr.f32.mxu0 0.0
      %3828 = vmatmul.mubr.f32.gmra.mrb[0].mxu0 %v3726
      %v3829 = vpop.f32.mrb[0].mxu0
      %v3830 = vadd.f32 %v3685, %v3829
      %v3831 = vpop.f32.mrb[0].mxu0
      %3832 = vmatprep.mubr.f32.mxu0 0.0
      %3833 = vmatmul.mubr.f32.gmra.mrb[0].mxu0 %v3729
      %v3834 = vpop.f32.mrb[0].mxu0
      %v3835 = vadd.f32 %v3690, %v3834
      %v3836 = vpop.f32.mrb[0].mxu0
      %3837 = vmatprep.mubr.f32.mxu0 0.0
      %3838 = vmatmul.mubr.f32.gmra.mrb[0].mxu0 %v3732
      %v3839 = vpop.f32.mrb[0].mxu0
      %v3840 = vadd.f32 %v3695, %v3839
      %v3841 = vpop.f32.mrb[0].mxu0
      %3842 = vmatprep.mubr.f32.mxu0 0.0
      %3843 = vmatmul.mubr.f32.gmra.mrb[0].mxu0 %v3735
      %v3844 = vpop.f32.mrb[0].mxu0
      %v3845 = vadd.f32 %v3700, %v3844
      %v3846 = vpop.f32.mrb[0].mxu0
      %3847 = vmatprep.mubr.f32.mxu0 0.0
      %3848 = vmatmul.mubr.f32.gmra.mrb[0].mxu0 %v3738
      %v3849 = vpop.f32.mrb[0].mxu0
      %v3850 = vadd.f32 %v3705, %v3849
      %v3851 = vpop.f32.mrb[0].mxu0
      %3852 = vmatprep.mubr.f32.mxu0 0.0
      %3853 = vmatmul.mubr.f32.gmra.mrb[0].mxu0 %v3741
      %v3854 = vpop.f32.mrb[0].mxu0
      %v3855 = vadd.f32 %v3710, %v3854
      %v3856 = vpop.f32.mrb[0].mxu0
      %3857 = vdwg.mxu0
      %v3858 = vld [vmem:[#allocation2 + $0x2] sm:$0xff]
      %v3859 = vld [vmem:[#allocation2 + $0xa] sm:$0xff]
      %v3860 = vld [vmem:[#allocation2 + $0x12] sm:$0xff]
      %v3861 = vld [vmem:[#allocation2 + $0x1a] sm:$0xff]
      %v3862 = vld [vmem:[#allocation2 + $0x22] sm:$0xff]
      %v3863 = vld [vmem:[#allocation2 + $0x2a] sm:$0xff]
      %v3864 = vld [vmem:[#allocation2 + $0x32] sm:$0xff]
      %v3865 = vld [vmem:[#allocation2 + $0x3a] sm:$0xff]
      %v3866 = vld [vmem:[#allocation2 + $0x42] sm:$0xff]
      %v3867 = vld [vmem:[#allocation2 + $0x4a] sm:$0x3f]
      %v3868 = vld [vmem:[%s3 + $0x20] sm:$0xff]
      %v3869 = vld [vmem:[%s3 + $0x28] sm:$0xff]
      %v3871 = vsel %vm441, %v3858, 0
      %v3874 = vsel %vm441, %v3859, 0
      %v3877 = vsel %vm441, %v3860, 0
      %v3880 = vsel %vm441, %v3861, 0
      %v3883 = vsel %vm441, %v3862, 0
      %v3886 = vsel %vm441, %v3863, 0
      %v3889 = vsel %vm441, %v3864, 0
      %v3892 = vsel %vm441, %v3865, 0
      %v3895 = vsel %vm441, %v3866, 0
      %v3898 = vsel %vm441, %v3867, 0
      %3900 = vmatprep.subr.mxu0 0.0
      %3901 = vmatpush1.msra.mxu0 %v3868
      %3902 = vmatprep.subr.mxu0 0.0
      %3903 = vmatpush1.msra.mxu0 %v3869
      %3904 = vmatprep.subr.mxu0 0.0
      %3905 = vmatpush1.msra.mxu0 0.0
      %3906 = vmatprep.subr.mxu0 0.0
      %3907 = vmatpush1.msra.mxu0 0.0
      %3908 = vmatprep.subr.mxu0 0.0
      %3909 = vmatpush1.msra.mxu0 0.0
      %3910 = vmatprep.subr.mxu0 0.0
      %3911 = vmatpush1.msra.mxu0 0.0
      %3912 = vmatprep.subr.mxu0 0.0
      %3913 = vmatpush1.msra.mxu0 0.0
      %3914 = vmatprep.subr.mxu0 0.0
      %3915 = vmatpush1.msra.mxu0 0.0
      %3916 = vmatprep.subr.mxu0 0.0
      %3917 = vmatpush1.msra.mxu0 0.0
      %3918 = vmatprep.subr.mxu0 0.0
      %3919 = vmatpush1.msra.mxu0 0.0
      %3920 = vmatprep.subr.mxu0 0.0
      %3921 = vmatpush1.msra.mxu0 0.0
      %3922 = vmatprep.subr.mxu0 0.0
      %3923 = vmatpush1.msra.mxu0 0.0
      %3924 = vmatprep.subr.mxu0 0.0
      %3925 = vmatpush1.msra.mxu0 0.0
      %3926 = vmatprep.subr.mxu0 0.0
      %3927 = vmatpush1.msra.mxu0 0.0
      %3928 = vmatprep.subr.mxu0 0.0
      %3929 = vmatpush1.msra.mxu0 0.0
      %3930 = vmatprep.subr.mxu0 0.0
      %3931 = vmatpush1.msra.mxu0 0.0
      %3932 = vmatprep.subr.mxu0 0.0
      %3933 = vmatpush1.msra.mxu0 0.0
      %3934 = vmatprep.subr.mxu0 0.0
      %3935 = vmatpush1.msra.mxu0 0.0
      %3936 = vmatprep.subr.mxu0 0.0
      %3937 = vmatpush1.msra.mxu0 0.0
      %3938 = vmatprep.subr.mxu0 0.0
      %3939 = vmatpush1.msra.mxu0 0.0
      %3940 = vmatprep.subr.mxu0 0.0
      %3941 = vmatpush1.msra.mxu0 0.0
      %3942 = vmatprep.subr.mxu0 0.0
      %3943 = vmatpush1.msra.mxu0 0.0
      %3944 = vmatprep.subr.mxu0 0.0
      %3945 = vmatpush1.msra.mxu0 0.0
      %3946 = vmatprep.subr.mxu0 0.0
      %3947 = vmatpush1.msra.mxu0 0.0
      %3948 = vmatprep.subr.mxu0 0.0
      %3949 = vmatpush1.msra.mxu0 0.0
      %3950 = vmatprep.subr.mxu0 0.0
      %3951 = vmatpush1.msra.mxu0 0.0
      %3952 = vmatprep.subr.mxu0 0.0
      %3953 = vmatpush1.msra.mxu0 0.0
      %3954 = vmatprep.subr.mxu0 0.0
      %3955 = vmatpush1.msra.mxu0 0.0
      %3956 = vmatprep.subr.mxu0 0.0
      %3957 = vmatpush1.msra.mxu0 0.0
      %3958 = vmatprep.subr.mxu0 0.0
      %3959 = vmatpush1.msra.mxu0 0.0
      %3960 = vmatprep.subr.mxu0 0.0
      %3961 = vmatpush1.msra.mxu0 0.0
      %3962 = vmatprep.subr.mxu0 0.0
      %3963 = vmatpush1.msra.mxu0 0.0
      %3964 = vmatprep.mubr.f32.mxu0 0.0
      %3965 = vmatmul.mubr.f32.gmra.mrb[0].mxu0 %v3871
      %v3966 = vpop.f32.mrb[0].mxu0
      %v3967 = vadd.f32 0.0, %v3966
      %v3968 = vpop.f32.mrb[0].mxu0
      %3969 = vmatprep.mubr.f32.mxu0 0.0
      %3970 = vmatmul.mubr.f32.gmra.mrb[0].mxu0 %v3874
      %v3971 = vpop.f32.mrb[0].mxu0
      %v3972 = vadd.f32 0.0, %v3971
      %v3973 = vpop.f32.mrb[0].mxu0
      %3974 = vmatprep.mubr.f32.mxu0 0.0
      %3975 = vmatmul.mubr.f32.gmra.mrb[0].mxu0 %v3877
      %v3976 = vpop.f32.mrb[0].mxu0
      %v3977 = vadd.f32 0.0, %v3976
      %v3978 = vpop.f32.mrb[0].mxu0
      %3979 = vmatprep.mubr.f32.mxu0 0.0
      %3980 = vmatmul.mubr.f32.gmra.mrb[0].mxu0 %v3880
      %v3981 = vpop.f32.mrb[0].mxu0
      %v3982 = vadd.f32 0.0, %v3981
      %v3983 = vpop.f32.mrb[0].mxu0
      %3984 = vmatprep.mubr.f32.mxu0 0.0
      %3985 = vmatmul.mubr.f32.gmra.mrb[0].mxu0 %v3883
      %v3986 = vpop.f32.mrb[0].mxu0
      %v3987 = vadd.f32 0.0, %v3986
      %v3988 = vpop.f32.mrb[0].mxu0
      %3989 = vmatprep.mubr.f32.mxu0 0.0
      %3990 = vmatmul.mubr.f32.gmra.mrb[0].mxu0 %v3886
      %v3991 = vpop.f32.mrb[0].mxu0
      %v3992 = vadd.f32 0.0, %v3991
      %v3993 = vpop.f32.mrb[0].mxu0
      %3994 = vmatprep.mubr.f32.mxu0 0.0
      %3995 = vmatmul.mubr.f32.gmra.mrb[0].mxu0 %v3889
      %v3996 = vpop.f32.mrb[0].mxu0
      %v3997 = vadd.f32 0.0, %v3996
      %v3998 = vpop.f32.mrb[0].mxu0
      %3999 = vmatprep.mubr.f32.mxu0 0.0
      %4000 = vmatmul.mubr.f32.gmra.mrb[0].mxu0 %v3892
      %v4001 = vpop.f32.mrb[0].mxu0
      %v4002 = vadd.f32 0.0, %v4001
      %v4003 = vpop.f32.mrb[0].mxu0
      %4004 = vmatprep.mubr.f32.mxu0 0.0
      %4005 = vmatmul.mubr.f32.gmra.mrb[0].mxu0 %v3895
      %v4006 = vpop.f32.mrb[0].mxu0
      %v4007 = vadd.f32 0.0, %v4006
      %v4008 = vpop.f32.mrb[0].mxu0
      %4009 = vmatprep.mubr.f32.mxu0 0.0
      %4010 = vmatmul.mubr.f32.gmra.mrb[0].mxu0 %v3898
      %v4011 = vpop.f32.mrb[0].mxu0
      %v4012 = vadd.f32 0.0, %v4011
      %v4013 = vpop.f32.mrb[0].mxu0
      %4014 = vdwg.mxu0
      %v4015 = vadd.f32 %v3810, %v3967
      %v4016 = vadd.f32 %v3815, %v3972
      %v4017 = vadd.f32 %v3820, %v3977
      %v4018 = vadd.f32 %v3825, %v3982
      %v4019 = vadd.f32 %v3830, %v3987
      %v4020 = vadd.f32 %v3835, %v3992
      %v4021 = vadd.f32 %v3840, %v3997
      %v4022 = vadd.f32 %v3845, %v4002
      %v4023 = vadd.f32 %v3850, %v4007
      %v4024 = vadd.f32 %v3855, %v4012
      %v4025 = vld [vmem:[#allocation2 + $0xa] sm:$0xff]
      %v4026 = vld [vmem:[#allocation2 + $0x12] sm:$0xff]
      %v4027 = vld [vmem:[#allocation2 + $0x1a] sm:$0xff]
      %v4028 = vld [vmem:[#allocation2 + $0x22] sm:$0xff]
      %v4029 = vld [vmem:[#allocation2 + $0x2a] sm:$0xff]
      %v4030 = vld [vmem:[#allocation2 + $0x32] sm:$0xff]
      %v4031 = vld [vmem:[#allocation2 + $0x3a] sm:$0xff]
      %v4032 = vld [vmem:[#allocation2 + $0x42] sm:$0xff]
      %v4033 = vld [vmem:[#allocation2 + $0x4a] sm:$0xff]
      %v4034 = vld [vmem:[#allocation2 + $0x52] sm:$0x3f]
      %v4035 = vld [vmem:[%s3 + $0x30] sm:$0xff]
      %v4036 = vld [vmem:[%s3 + $0x38] sm:$0xff]
      %v4038 = vsel %vm441, %v4025, 0
      %v4041 = vsel %vm441, %v4026, 0
      %v4044 = vsel %vm441, %v4027, 0
      %v4047 = vsel %vm441, %v4028, 0
      %v4050 = vsel %vm441, %v4029, 0
      %v4053 = vsel %vm441, %v4030, 0
      %v4056 = vsel %vm441, %v4031, 0
      %v4059 = vsel %vm441, %v4032, 0
      %v4062 = vsel %vm441, %v4033, 0
      %v4065 = vsel %vm441, %v4034, 0
      %4067 = vmatprep.subr.mxu0 0.0
      %4068 = vmatpush1.msra.mxu0 %v4035
      %4069 = vmatprep.subr.mxu0 0.0
      %4070 = vmatpush1.msra.mxu0 %v4036
      %4071 = vmatprep.subr.mxu0 0.0
      %4072 = vmatpush1.msra.mxu0 0.0
      %4073 = vmatprep.subr.mxu0 0.0
      %4074 = vmatpush1.msra.mxu0 0.0
      %4075 = vmatprep.subr.mxu0 0.0
      %4076 = vmatpush1.msra.mxu0 0.0
      %4077 = vmatprep.subr.mxu0 0.0
      %4078 = vmatpush1.msra.mxu0 0.0
      %4079 = vmatprep.subr.mxu0 0.0
      %4080 = vmatpush1.msra.mxu0 0.0
      %4081 = vmatprep.subr.mxu0 0.0
      %4082 = vmatpush1.msra.mxu0 0.0
      %4083 = vmatprep.subr.mxu0 0.0
      %4084 = vmatpush1.msra.mxu0 0.0
      %4085 = vmatprep.subr.mxu0 0.0
      %4086 = vmatpush1.msra.mxu0 0.0
      %4087 = vmatprep.subr.mxu0 0.0
      %4088 = vmatpush1.msra.mxu0 0.0
      %4089 = vmatprep.subr.mxu0 0.0
      %4090 = vmatpush1.msra.mxu0 0.0
      %4091 = vmatprep.subr.mxu0 0.0
      %4092 = vmatpush1.msra.mxu0 0.0
      %4093 = vmatprep.subr.mxu0 0.0
      %4094 = vmatpush1.msra.mxu0 0.0
      %4095 = vmatprep.subr.mxu0 0.0
      %4096 = vmatpush1.msra.mxu0 0.0
      %4097 = vmatprep.subr.mxu0 0.0
      %4098 = vmatpush1.msra.mxu0 0.0
      %4099 = vmatprep.subr.mxu0 0.0
      %4100 = vmatpush1.msra.mxu0 0.0
      %4101 = vmatprep.subr.mxu0 0.0
      %4102 = vmatpush1.msra.mxu0 0.0
      %4103 = vmatprep.subr.mxu0 0.0
      %4104 = vmatpush1.msra.mxu0 0.0
      %4105 = vmatprep.subr.mxu0 0.0
      %4106 = vmatpush1.msra.mxu0 0.0
      %4107 = vmatprep.subr.mxu0 0.0
      %4108 = vmatpush1.msra.mxu0 0.0
      %4109 = vmatprep.subr.mxu0 0.0
      %4110 = vmatpush1.msra.mxu0 0.0
      %4111 = vmatprep.subr.mxu0 0.0
      %4112 = vmatpush1.msra.mxu0 0.0
      %4113 = vmatprep.subr.mxu0 0.0
      %4114 = vmatpush1.msra.mxu0 0.0
      %4115 = vmatprep.subr.mxu0 0.0
      %4116 = vmatpush1.msra.mxu0 0.0
      %4117 = vmatprep.subr.mxu0 0.0
      %4118 = vmatpush1.msra.mxu0 0.0
      %4119 = vmatprep.subr.mxu0 0.0
      %4120 = vmatpush1.msra.mxu0 0.0
      %4121 = vmatprep.subr.mxu0 0.0
      %4122 = vmatpush1.msra.mxu0 0.0
      %4123 = vmatprep.subr.mxu0 0.0
      %4124 = vmatpush1.msra.mxu0 0.0
      %4125 = vmatprep.subr.mxu0 0.0
      %4126 = vmatpush1.msra.mxu0 0.0
      %4127 = vmatprep.subr.mxu0 0.0
      %4128 = vmatpush1.msra.mxu0 0.0
      %4129 = vmatprep.subr.mxu0 0.0
      %4130 = vmatpush1.msra.mxu0 0.0
      %4131 = vmatprep.mubr.f32.mxu0 0.0
      %4132 = vmatmul.mubr.f32.gmra.mrb[0].mxu0 %v4038
      %v4133 = vpop.f32.mrb[0].mxu0
      %v4134 = vadd.f32 0.0, %v4133
      %v4135 = vpop.f32.mrb[0].mxu0
      %4136 = vmatprep.mubr.f32.mxu0 0.0
      %4137 = vmatmul.mubr.f32.gmra.mrb[0].mxu0 %v4041
      %v4138 = vpop.f32.mrb[0].mxu0
      %v4139 = vadd.f32 0.0, %v4138
      %v4140 = vpop.f32.mrb[0].mxu0
      %4141 = vmatprep.mubr.f32.mxu0 0.0
      %4142 = vmatmul.mubr.f32.gmra.mrb[0].mxu0 %v4044
      %v4143 = vpop.f32.mrb[0].mxu0
      %v4144 = vadd.f32 0.0, %v4143
      %v4145 = vpop.f32.mrb[0].mxu0
      %4146 = vmatprep.mubr.f32.mxu0 0.0
      %4147 = vmatmul.mubr.f32.gmra.mrb[0].mxu0 %v4047
      %v4148 = vpop.f32.mrb[0].mxu0
      %v4149 = vadd.f32 0.0, %v4148
      %v4150 = vpop.f32.mrb[0].mxu0
      %4151 = vmatprep.mubr.f32.mxu0 0.0
      %4152 = vmatmul.mubr.f32.gmra.mrb[0].mxu0 %v4050
      %v4153 = vpop.f32.mrb[0].mxu0
      %v4154 = vadd.f32 0.0, %v4153
      %v4155 = vpop.f32.mrb[0].mxu0
      %4156 = vmatprep.mubr.f32.mxu0 0.0
      %4157 = vmatmul.mubr.f32.gmra.mrb[0].mxu0 %v4053
      %v4158 = vpop.f32.mrb[0].mxu0
      %v4159 = vadd.f32 0.0, %v4158
      %v4160 = vpop.f32.mrb[0].mxu0
      %4161 = vmatprep.mubr.f32.mxu0 0.0
      %4162 = vmatmul.mubr.f32.gmra.mrb[0].mxu0 %v4056
      %v4163 = vpop.f32.mrb[0].mxu0
      %v4164 = vadd.f32 0.0, %v4163
      %v4165 = vpop.f32.mrb[0].mxu0
      %4166 = vmatprep.mubr.f32.mxu0 0.0
      %4167 = vmatmul.mubr.f32.gmra.mrb[0].mxu0 %v4059
      %v4168 = vpop.f32.mrb[0].mxu0
      %v4169 = vadd.f32 0.0, %v4168
      %v4170 = vpop.f32.mrb[0].mxu0
      %4171 = vmatprep.mubr.f32.mxu0 0.0
      %4172 = vmatmul.mubr.f32.gmra.mrb[0].mxu0 %v4062
      %v4173 = vpop.f32.mrb[0].mxu0
      %v4174 = vadd.f32 0.0, %v4173
      %v4175 = vpop.f32.mrb[0].mxu0
      %4176 = vmatprep.mubr.f32.mxu0 0.0
      %4177 = vmatmul.mubr.f32.gmra.mrb[0].mxu0 %v4065
      %v4178 = vpop.f32.mrb[0].mxu0
      %v4179 = vadd.f32 0.0, %v4178
      %v4180 = vpop.f32.mrb[0].mxu0
      %4181 = vdwg.mxu0
      %v4182 = vadd.f32 %v4015, %v4134
      %v4183 = vadd.f32 %v4016, %v4139
      %v4184 = vadd.f32 %v4017, %v4144
      %v4185 = vadd.f32 %v4018, %v4149
      %v4186 = vadd.f32 %v4019, %v4154
      %v4187 = vadd.f32 %v4020, %v4159
      %v4188 = vadd.f32 %v4021, %v4164
      %v4189 = vadd.f32 %v4022, %v4169
      %v4190 = vadd.f32 %v4023, %v4174
      %v4191 = vadd.f32 %v4024, %v4179
      %v4192 = vld [vmem:[#allocation2 + $0xb] sm:$0xff]
      %v4193 = vld [vmem:[#allocation2 + $0x13] sm:$0xff]
      %v4194 = vld [vmem:[#allocation2 + $0x1b] sm:$0xff]
      %v4195 = vld [vmem:[#allocation2 + $0x23] sm:$0xff]
      %v4196 = vld [vmem:[#allocation2 + $0x2b] sm:$0xff]
      %v4197 = vld [vmem:[#allocation2 + $0x33] sm:$0xff]
      %v4198 = vld [vmem:[#allocation2 + $0x3b] sm:$0xff]
      %v4199 = vld [vmem:[#allocation2 + $0x43] sm:$0xff]
      %v4200 = vld [vmem:[#allocation2 + $0x4b] sm:$0xff]
      %v4201 = vld [vmem:[#allocation2 + $0x53] sm:$0x3f]
      %v4202 = vld [vmem:[%s3 + $0x40] sm:$0xff]
      %v4203 = vld [vmem:[%s3 + $0x48] sm:$0xff]
      %v4205 = vsel %vm441, %v4192, 0
      %v4208 = vsel %vm441, %v4193, 0
      %v4211 = vsel %vm441, %v4194, 0
      %v4214 = vsel %vm441, %v4195, 0
      %v4217 = vsel %vm441, %v4196, 0
      %v4220 = vsel %vm441, %v4197, 0
      %v4223 = vsel %vm441, %v4198, 0
      %v4226 = vsel %vm441, %v4199, 0
      %v4229 = vsel %vm441, %v4200, 0
      %v4232 = vsel %vm441, %v4201, 0
      %4234 = vmatprep.subr.mxu0 0.0
      %4235 = vmatpush1.msra.mxu0 %v4202
      %4236 = vmatprep.subr.mxu0 0.0
      %4237 = vmatpush1.msra.mxu0 %v4203
      %4238 = vmatprep.subr.mxu0 0.0
      %4239 = vmatpush1.msra.mxu0 0.0
      %4240 = vmatprep.subr.mxu0 0.0
      %4241 = vmatpush1.msra.mxu0 0.0
      %4242 = vmatprep.subr.mxu0 0.0
      %4243 = vmatpush1.msra.mxu0 0.0
      %4244 = vmatprep.subr.mxu0 0.0
      %4245 = vmatpush1.msra.mxu0 0.0
      %4246 = vmatprep.subr.mxu0 0.0
      %4247 = vmatpush1.msra.mxu0 0.0
      %4248 = vmatprep.subr.mxu0 0.0
      %4249 = vmatpush1.msra.mxu0 0.0
      %4250 = vmatprep.subr.mxu0 0.0
      %4251 = vmatpush1.msra.mxu0 0.0
      %4252 = vmatprep.subr.mxu0 0.0
      %4253 = vmatpush1.msra.mxu0 0.0
      %4254 = vmatprep.subr.mxu0 0.0
      %4255 = vmatpush1.msra.mxu0 0.0
      %4256 = vmatprep.subr.mxu0 0.0
      %4257 = vmatpush1.msra.mxu0 0.0
      %4258 = vmatprep.subr.mxu0 0.0
      %4259 = vmatpush1.msra.mxu0 0.0
      %4260 = vmatprep.subr.mxu0 0.0
      %4261 = vmatpush1.msra.mxu0 0.0
      %4262 = vmatprep.subr.mxu0 0.0
      %4263 = vmatpush1.msra.mxu0 0.0
      %4264 = vmatprep.subr.mxu0 0.0
      %4265 = vmatpush1.msra.mxu0 0.0
      %4266 = vmatprep.subr.mxu0 0.0
      %4267 = vmatpush1.msra.mxu0 0.0
      %4268 = vmatprep.subr.mxu0 0.0
      %4269 = vmatpush1.msra.mxu0 0.0
      %4270 = vmatprep.subr.mxu0 0.0
      %4271 = vmatpush1.msra.mxu0 0.0
      %4272 = vmatprep.subr.mxu0 0.0
      %4273 = vmatpush1.msra.mxu0 0.0
      %4274 = vmatprep.subr.mxu0 0.0
      %4275 = vmatpush1.msra.mxu0 0.0
      %4276 = vmatprep.subr.mxu0 0.0
      %4277 = vmatpush1.msra.mxu0 0.0
      %4278 = vmatprep.subr.mxu0 0.0
      %4279 = vmatpush1.msra.mxu0 0.0
      %4280 = vmatprep.subr.mxu0 0.0
      %4281 = vmatpush1.msra.mxu0 0.0
      %4282 = vmatprep.subr.mxu0 0.0
      %4283 = vmatpush1.msra.mxu0 0.0
      %4284 = vmatprep.subr.mxu0 0.0
      %4285 = vmatpush1.msra.mxu0 0.0
      %4286 = vmatprep.subr.mxu0 0.0
      %4287 = vmatpush1.msra.mxu0 0.0
      %4288 = vmatprep.subr.mxu0 0.0
      %4289 = vmatpush1.msra.mxu0 0.0
      %4290 = vmatprep.subr.mxu0 0.0
      %4291 = vmatpush1.msra.mxu0 0.0
      %4292 = vmatprep.subr.mxu0 0.0
      %4293 = vmatpush1.msra.mxu0 0.0
      %4294 = vmatprep.subr.mxu0 0.0
      %4295 = vmatpush1.msra.mxu0 0.0
      %4296 = vmatprep.subr.mxu0 0.0
      %4297 = vmatpush1.msra.mxu0 0.0
      %4298 = vmatprep.mubr.f32.mxu0 0.0
      %4299 = vmatmul.mubr.f32.gmra.mrb[0].mxu0 %v4205
      %v4300 = vpop.f32.mrb[0].mxu0
      %v4301 = vadd.f32 0.0, %v4300
      %v4302 = vpop.f32.mrb[0].mxu0
      %4303 = vmatprep.mubr.f32.mxu0 0.0
      %4304 = vmatmul.mubr.f32.gmra.mrb[0].mxu0 %v4208
      %v4305 = vpop.f32.mrb[0].mxu0
      %v4306 = vadd.f32 0.0, %v4305
      %v4307 = vpop.f32.mrb[0].mxu0
      %4308 = vmatprep.mubr.f32.mxu0 0.0
      %4309 = vmatmul.mubr.f32.gmra.mrb[0].mxu0 %v4211
      %v4310 = vpop.f32.mrb[0].mxu0
      %v4311 = vadd.f32 0.0, %v4310
      %v4312 = vpop.f32.mrb[0].mxu0
      %4313 = vmatprep.mubr.f32.mxu0 0.0
      %4314 = vmatmul.mubr.f32.gmra.mrb[0].mxu0 %v4214
      %v4315 = vpop.f32.mrb[0].mxu0
      %v4316 = vadd.f32 0.0, %v4315
      %v4317 = vpop.f32.mrb[0].mxu0
      %4318 = vmatprep.mubr.f32.mxu0 0.0
      %4319 = vmatmul.mubr.f32.gmra.mrb[0].mxu0 %v4217
      %v4320 = vpop.f32.mrb[0].mxu0
      %v4321 = vadd.f32 0.0, %v4320
      %v4322 = vpop.f32.mrb[0].mxu0
      %4323 = vmatprep.mubr.f32.mxu0 0.0
      %4324 = vmatmul.mubr.f32.gmra.mrb[0].mxu0 %v4220
      %v4325 = vpop.f32.mrb[0].mxu0
      %v4326 = vadd.f32 0.0, %v4325
      %v4327 = vpop.f32.mrb[0].mxu0
      %4328 = vmatprep.mubr.f32.mxu0 0.0
      %4329 = vmatmul.mubr.f32.gmra.mrb[0].mxu0 %v4223
      %v4330 = vpop.f32.mrb[0].mxu0
      %v4331 = vadd.f32 0.0, %v4330
      %v4332 = vpop.f32.mrb[0].mxu0
      %4333 = vmatprep.mubr.f32.mxu0 0.0
      %4334 = vmatmul.mubr.f32.gmra.mrb[0].mxu0 %v4226
      %v4335 = vpop.f32.mrb[0].mxu0
      %v4336 = vadd.f32 0.0, %v4335
      %v4337 = vpop.f32.mrb[0].mxu0
      %4338 = vmatprep.mubr.f32.mxu0 0.0
      %4339 = vmatmul.mubr.f32.gmra.mrb[0].mxu0 %v4229
      %v4340 = vpop.f32.mrb[0].mxu0
      %v4341 = vadd.f32 0.0, %v4340
      %v4342 = vpop.f32.mrb[0].mxu0
      %4343 = vmatprep.mubr.f32.mxu0 0.0
      %4344 = vmatmul.mubr.f32.gmra.mrb[0].mxu0 %v4232
      %v4345 = vpop.f32.mrb[0].mxu0
      %v4346 = vadd.f32 0.0, %v4345
      %v4347 = vpop.f32.mrb[0].mxu0
      %4348 = vdwg.mxu0
      %v4349 = vadd.f32 %v4182, %v4301
      %v4350 = vadd.f32 %v4183, %v4306
      %v4351 = vadd.f32 %v4184, %v4311
      %v4352 = vadd.f32 %v4185, %v4316
      %v4353 = vadd.f32 %v4186, %v4321
      %v4354 = vadd.f32 %v4187, %v4326
      %v4355 = vadd.f32 %v4188, %v4331
      %v4356 = vadd.f32 %v4189, %v4336
      %v4357 = vadd.f32 %v4190, %v4341
      %v4358 = vadd.f32 %v4191, %v4346
      %v4359 = vld [vmem:[#allocation2 + $0xc] sm:$0xff]
      %v4360 = vld [vmem:[#allocation2 + $0x14] sm:$0xff]
      %v4361 = vld [vmem:[#allocation2 + $0x1c] sm:$0xff]
      %v4362 = vld [vmem:[#allocation2 + $0x24] sm:$0xff]
      %v4363 = vld [vmem:[#allocation2 + $0x2c] sm:$0xff]
      %v4364 = vld [vmem:[#allocation2 + $0x34] sm:$0xff]
      %v4365 = vld [vmem:[#allocation2 + $0x3c] sm:$0xff]
      %v4366 = vld [vmem:[#allocation2 + $0x44] sm:$0xff]
      %v4367 = vld [vmem:[#allocation2 + $0x4c] sm:$0xff]
      %v4368 = vld [vmem:[#allocation2 + $0x54] sm:$0x3f]
      %v4369 = vld [vmem:[%s3 + $0x50] sm:$0xff]
      %v4370 = vld [vmem:[%s3 + $0x58] sm:$0xff]
      %v4372 = vsel %vm441, %v4359, 0
      %v4375 = vsel %vm441, %v4360, 0
      %v4378 = vsel %vm441, %v4361, 0
      %v4381 = vsel %vm441, %v4362, 0
      %v4384 = vsel %vm441, %v4363, 0
      %v4387 = vsel %vm441, %v4364, 0
      %v4390 = vsel %vm441, %v4365, 0
      %v4393 = vsel %vm441, %v4366, 0
      %v4396 = vsel %vm441, %v4367, 0
      %v4399 = vsel %vm441, %v4368, 0
      %4401 = vmatprep.subr.mxu0 0.0
      %4402 = vmatpush1.msra.mxu0 %v4369
      %4403 = vmatprep.subr.mxu0 0.0
      %4404 = vmatpush1.msra.mxu0 %v4370
      %4405 = vmatprep.subr.mxu0 0.0
      %4406 = vmatpush1.msra.mxu0 0.0
      %4407 = vmatprep.subr.mxu0 0.0
      %4408 = vmatpush1.msra.mxu0 0.0
      %4409 = vmatprep.subr.mxu0 0.0
      %4410 = vmatpush1.msra.mxu0 0.0
      %4411 = vmatprep.subr.mxu0 0.0
      %4412 = vmatpush1.msra.mxu0 0.0
      %4413 = vmatprep.subr.mxu0 0.0
      %4414 = vmatpush1.msra.mxu0 0.0
      %4415 = vmatprep.subr.mxu0 0.0
      %4416 = vmatpush1.msra.mxu0 0.0
      %4417 = vmatprep.subr.mxu0 0.0
      %4418 = vmatpush1.msra.mxu0 0.0
      %4419 = vmatprep.subr.mxu0 0.0
      %4420 = vmatpush1.msra.mxu0 0.0
      %4421 = vmatprep.subr.mxu0 0.0
      %4422 = vmatpush1.msra.mxu0 0.0
      %4423 = vmatprep.subr.mxu0 0.0
      %4424 = vmatpush1.msra.mxu0 0.0
      %4425 = vmatprep.subr.mxu0 0.0
      %4426 = vmatpush1.msra.mxu0 0.0
      %4427 = vmatprep.subr.mxu0 0.0
      %4428 = vmatpush1.msra.mxu0 0.0
      %4429 = vmatprep.subr.mxu0 0.0
      %4430 = vmatpush1.msra.mxu0 0.0
      %4431 = vmatprep.subr.mxu0 0.0
      %4432 = vmatpush1.msra.mxu0 0.0
      %4433 = vmatprep.subr.mxu0 0.0
      %4434 = vmatpush1.msra.mxu0 0.0
      %4435 = vmatprep.subr.mxu0 0.0
      %4436 = vmatpush1.msra.mxu0 0.0
      %4437 = vmatprep.subr.mxu0 0.0
      %4438 = vmatpush1.msra.mxu0 0.0
      %4439 = vmatprep.subr.mxu0 0.0
      %4440 = vmatpush1.msra.mxu0 0.0
      %4441 = vmatprep.subr.mxu0 0.0
      %4442 = vmatpush1.msra.mxu0 0.0
      %4443 = vmatprep.subr.mxu0 0.0
      %4444 = vmatpush1.msra.mxu0 0.0
      %4445 = vmatprep.subr.mxu0 0.0
      %4446 = vmatpush1.msra.mxu0 0.0
      %4447 = vmatprep.subr.mxu0 0.0
      %4448 = vmatpush1.msra.mxu0 0.0
      %4449 = vmatprep.subr.mxu0 0.0
      %4450 = vmatpush1.msra.mxu0 0.0
      %4451 = vmatprep.subr.mxu0 0.0
      %4452 = vmatpush1.msra.mxu0 0.0
      %4453 = vmatprep.subr.mxu0 0.0
      %4454 = vmatpush1.msra.mxu0 0.0
      %4455 = vmatprep.subr.mxu0 0.0
      %4456 = vmatpush1.msra.mxu0 0.0
      %4457 = vmatprep.subr.mxu0 0.0
      %4458 = vmatpush1.msra.mxu0 0.0
      %4459 = vmatprep.subr.mxu0 0.0
      %4460 = vmatpush1.msra.mxu0 0.0
      %4461 = vmatprep.subr.mxu0 0.0
      %4462 = vmatpush1.msra.mxu0 0.0
      %4463 = vmatprep.subr.mxu0 0.0
      %4464 = vmatpush1.msra.mxu0 0.0
      %4465 = vmatprep.mubr.f32.mxu0 0.0
      %4466 = vmatmul.mubr.f32.gmra.mrb[0].mxu0 %v4372
      %v4467 = vpop.f32.mrb[0].mxu0
      %v4468 = vadd.f32 0.0, %v4467
      %v4469 = vpop.f32.mrb[0].mxu0
      %4470 = vmatprep.mubr.f32.mxu0 0.0
      %4471 = vmatmul.mubr.f32.gmra.mrb[0].mxu0 %v4375
      %v4472 = vpop.f32.mrb[0].mxu0
      %v4473 = vadd.f32 0.0, %v4472
      %v4474 = vpop.f32.mrb[0].mxu0
      %4475 = vmatprep.mubr.f32.mxu0 0.0
      %4476 = vmatmul.mubr.f32.gmra.mrb[0].mxu0 %v4378
      %v4477 = vpop.f32.mrb[0].mxu0
      %v4478 = vadd.f32 0.0, %v4477
      %v4479 = vpop.f32.mrb[0].mxu0
      %4480 = vmatprep.mubr.f32.mxu0 0.0
      %4481 = vmatmul.mubr.f32.gmra.mrb[0].mxu0 %v4381
      %v4482 = vpop.f32.mrb[0].mxu0
      %v4483 = vadd.f32 0.0, %v4482
      %v4484 = vpop.f32.mrb[0].mxu0
      %4485 = vmatprep.mubr.f32.mxu0 0.0
      %4486 = vmatmul.mubr.f32.gmra.mrb[0].mxu0 %v4384
      %v4487 = vpop.f32.mrb[0].mxu0
      %v4488 = vadd.f32 0.0, %v4487
      %v4489 = vpop.f32.mrb[0].mxu0
      %4490 = vmatprep.mubr.f32.mxu0 0.0
      %4491 = vmatmul.mubr.f32.gmra.mrb[0].mxu0 %v4387
      %v4492 = vpop.f32.mrb[0].mxu0
      %v4493 = vadd.f32 0.0, %v4492
      %v4494 = vpop.f32.mrb[0].mxu0
      %4495 = vmatprep.mubr.f32.mxu0 0.0
      %4496 = vmatmul.mubr.f32.gmra.mrb[0].mxu0 %v4390
      %v4497 = vpop.f32.mrb[0].mxu0
      %v4498 = vadd.f32 0.0, %v4497
      %v4499 = vpop.f32.mrb[0].mxu0
      %4500 = vmatprep.mubr.f32.mxu0 0.0
      %4501 = vmatmul.mubr.f32.gmra.mrb[0].mxu0 %v4393
      %v4502 = vpop.f32.mrb[0].mxu0
      %v4503 = vadd.f32 0.0, %v4502
      %v4504 = vpop.f32.mrb[0].mxu0
      %4505 = vmatprep.mubr.f32.mxu0 0.0
      %4506 = vmatmul.mubr.f32.gmra.mrb[0].mxu0 %v4396
      %v4507 = vpop.f32.mrb[0].mxu0
      %v4508 = vadd.f32 0.0, %v4507
      %v4509 = vpop.f32.mrb[0].mxu0
      %4510 = vmatprep.mubr.f32.mxu0 0.0
      %4511 = vmatmul.mubr.f32.gmra.mrb[0].mxu0 %v4399
      %v4512 = vpop.f32.mrb[0].mxu0
      %v4513 = vadd.f32 0.0, %v4512
      %v4514 = vpop.f32.mrb[0].mxu0
      %4515 = vdwg.mxu0
      %v4516 = vadd.f32 %v4349, %v4468
      %v4517 = vadd.f32 %v4350, %v4473
      %v4518 = vadd.f32 %v4351, %v4478
      %v4519 = vadd.f32 %v4352, %v4483
      %v4520 = vadd.f32 %v4353, %v4488
      %v4521 = vadd.f32 %v4354, %v4493
      %v4522 = vadd.f32 %v4355, %v4498
      %v4523 = vadd.f32 %v4356, %v4503
      %v4524 = vadd.f32 %v4357, %v4508
      %v4525 = vadd.f32 %v4358, %v4513
      %v4526 = vld [vmem:[#allocation2 + $0x14] sm:$0xff]
      %v4527 = vld [vmem:[#allocation2 + $0x1c] sm:$0xff]
      %v4528 = vld [vmem:[#allocation2 + $0x24] sm:$0xff]
      %v4529 = vld [vmem:[#allocation2 + $0x2c] sm:$0xff]
      %v4530 = vld [vmem:[#allocation2 + $0x34] sm:$0xff]
      %v4531 = vld [vmem:[#allocation2 + $0x3c] sm:$0xff]
      %v4532 = vld [vmem:[#allocation2 + $0x44] sm:$0xff]
      %v4533 = vld [vmem:[#allocation2 + $0x4c] sm:$0xff]
      %v4534 = vld [vmem:[#allocation2 + $0x54] sm:$0xff]
      %v4535 = vld [vmem:[#allocation2 + $0x5c] sm:$0x3f]
      %v4536 = vld [vmem:[%s3 + $0x60] sm:$0xff]
      %v4537 = vld [vmem:[%s3 + $0x68] sm:$0xff]
      %v4539 = vsel %vm441, %v4526, 0
      %v4542 = vsel %vm441, %v4527, 0
      %v4545 = vsel %vm441, %v4528, 0
      %v4548 = vsel %vm441, %v4529, 0
      %v4551 = vsel %vm441, %v4530, 0
      %v4554 = vsel %vm441, %v4531, 0
      %v4557 = vsel %vm441, %v4532, 0
      %v4560 = vsel %vm441, %v4533, 0
      %v4563 = vsel %vm441, %v4534, 0
      %v4566 = vsel %vm441, %v4535, 0
      %4568 = vmatprep.subr.mxu0 0.0
      %4569 = vmatpush1.msra.mxu0 %v4536
      %4570 = vmatprep.subr.mxu0 0.0
      %4571 = vmatpush1.msra.mxu0 %v4537
      %4572 = vmatprep.subr.mxu0 0.0
      %4573 = vmatpush1.msra.mxu0 0.0
      %4574 = vmatprep.subr.mxu0 0.0
      %4575 = vmatpush1.msra.mxu0 0.0
      %4576 = vmatprep.subr.mxu0 0.0
      %4577 = vmatpush1.msra.mxu0 0.0
      %4578 = vmatprep.subr.mxu0 0.0
      %4579 = vmatpush1.msra.mxu0 0.0
      %4580 = vmatprep.subr.mxu0 0.0
      %4581 = vmatpush1.msra.mxu0 0.0
      %4582 = vmatprep.subr.mxu0 0.0
      %4583 = vmatpush1.msra.mxu0 0.0
      %4584 = vmatprep.subr.mxu0 0.0
      %4585 = vmatpush1.msra.mxu0 0.0
      %4586 = vmatprep.subr.mxu0 0.0
      %4587 = vmatpush1.msra.mxu0 0.0
      %4588 = vmatprep.subr.mxu0 0.0
      %4589 = vmatpush1.msra.mxu0 0.0
      %4590 = vmatprep.subr.mxu0 0.0
      %4591 = vmatpush1.msra.mxu0 0.0
      %4592 = vmatprep.subr.mxu0 0.0
      %4593 = vmatpush1.msra.mxu0 0.0
      %4594 = vmatprep.subr.mxu0 0.0
      %4595 = vmatpush1.msra.mxu0 0.0
      %4596 = vmatprep.subr.mxu0 0.0
      %4597 = vmatpush1.msra.mxu0 0.0
      %4598 = vmatprep.subr.mxu0 0.0
      %4599 = vmatpush1.msra.mxu0 0.0
      %4600 = vmatprep.subr.mxu0 0.0
      %4601 = vmatpush1.msra.mxu0 0.0
      %4602 = vmatprep.subr.mxu0 0.0
      %4603 = vmatpush1.msra.mxu0 0.0
      %4604 = vmatprep.subr.mxu0 0.0
      %4605 = vmatpush1.msra.mxu0 0.0
      %4606 = vmatprep.subr.mxu0 0.0
      %4607 = vmatpush1.msra.mxu0 0.0
      %4608 = vmatprep.subr.mxu0 0.0
      %4609 = vmatpush1.msra.mxu0 0.0
      %4610 = vmatprep.subr.mxu0 0.0
      %4611 = vmatpush1.msra.mxu0 0.0
      %4612 = vmatprep.subr.mxu0 0.0
      %4613 = vmatpush1.msra.mxu0 0.0
      %4614 = vmatprep.subr.mxu0 0.0
      %4615 = vmatpush1.msra.mxu0 0.0
      %4616 = vmatprep.subr.mxu0 0.0
      %4617 = vmatpush1.msra.mxu0 0.0
      %4618 = vmatprep.subr.mxu0 0.0
      %4619 = vmatpush1.msra.mxu0 0.0
      %4620 = vmatprep.subr.mxu0 0.0
      %4621 = vmatpush1.msra.mxu0 0.0
      %4622 = vmatprep.subr.mxu0 0.0
      %4623 = vmatpush1.msra.mxu0 0.0
      %4624 = vmatprep.subr.mxu0 0.0
      %4625 = vmatpush1.msra.mxu0 0.0
      %4626 = vmatprep.subr.mxu0 0.0
      %4627 = vmatpush1.msra.mxu0 0.0
      %4628 = vmatprep.subr.mxu0 0.0
      %4629 = vmatpush1.msra.mxu0 0.0
      %4630 = vmatprep.subr.mxu0 0.0
      %4631 = vmatpush1.msra.mxu0 0.0
      %4632 = vmatprep.mubr.f32.mxu0 0.0
      %4633 = vmatmul.mubr.f32.gmra.mrb[0].mxu0 %v4539
      %v4634 = vpop.f32.mrb[0].mxu0
      %v4635 = vadd.f32 0.0, %v4634
      %v4636 = vpop.f32.mrb[0].mxu0
      %4637 = vmatprep.mubr.f32.mxu0 0.0
      %4638 = vmatmul.mubr.f32.gmra.mrb[0].mxu0 %v4542
      %v4639 = vpop.f32.mrb[0].mxu0
      %v4640 = vadd.f32 0.0, %v4639
      %v4641 = vpop.f32.mrb[0].mxu0
      %4642 = vmatprep.mubr.f32.mxu0 0.0
      %4643 = vmatmul.mubr.f32.gmra.mrb[0].mxu0 %v4545
      %v4644 = vpop.f32.mrb[0].mxu0
      %v4645 = vadd.f32 0.0, %v4644
      %v4646 = vpop.f32.mrb[0].mxu0
      %4647 = vmatprep.mubr.f32.mxu0 0.0
      %4648 = vmatmul.mubr.f32.gmra.mrb[0].mxu0 %v4548
      %v4649 = vpop.f32.mrb[0].mxu0
      %v4650 = vadd.f32 0.0, %v4649
      %v4651 = vpop.f32.mrb[0].mxu0
      %4652 = vmatprep.mubr.f32.mxu0 0.0
      %4653 = vmatmul.mubr.f32.gmra.mrb[0].mxu0 %v4551
      %v4654 = vpop.f32.mrb[0].mxu0
      %v4655 = vadd.f32 0.0, %v4654
      %v4656 = vpop.f32.mrb[0].mxu0
      %4657 = vmatprep.mubr.f32.mxu0 0.0
      %4658 = vmatmul.mubr.f32.gmra.mrb[0].mxu0 %v4554
      %v4659 = vpop.f32.mrb[0].mxu0
      %v4660 = vadd.f32 0.0, %v4659
      %v4661 = vpop.f32.mrb[0].mxu0
      %4662 = vmatprep.mubr.f32.mxu0 0.0
      %4663 = vmatmul.mubr.f32.gmra.mrb[0].mxu0 %v4557
      %v4664 = vpop.f32.mrb[0].mxu0
      %v4665 = vadd.f32 0.0, %v4664
      %v4666 = vpop.f32.mrb[0].mxu0
      %4667 = vmatprep.mubr.f32.mxu0 0.0
      %4668 = vmatmul.mubr.f32.gmra.mrb[0].mxu0 %v4560
      %v4669 = vpop.f32.mrb[0].mxu0
      %v4670 = vadd.f32 0.0, %v4669
      %v4671 = vpop.f32.mrb[0].mxu0
      %4672 = vmatprep.mubr.f32.mxu0 0.0
      %4673 = vmatmul.mubr.f32.gmra.mrb[0].mxu0 %v4563
      %v4674 = vpop.f32.mrb[0].mxu0
      %v4675 = vadd.f32 0.0, %v4674
      %v4676 = vpop.f32.mrb[0].mxu0
      %4677 = vmatprep.mubr.f32.mxu0 0.0
      %4678 = vmatmul.mubr.f32.gmra.mrb[0].mxu0 %v4566
      %v4679 = vpop.f32.mrb[0].mxu0
      %v4680 = vadd.f32 0.0, %v4679
      %v4681 = vpop.f32.mrb[0].mxu0
      %4682 = vdwg.mxu0
      %v4683 = vadd.f32 %v4516, %v4635
      %v4684 = vadd.f32 %v4517, %v4640
      %v4685 = vadd.f32 %v4518, %v4645
      %v4686 = vadd.f32 %v4519, %v4650
      %v4687 = vadd.f32 %v4520, %v4655
      %v4688 = vadd.f32 %v4521, %v4660
      %v4689 = vadd.f32 %v4522, %v4665
      %v4690 = vadd.f32 %v4523, %v4670
      %v4691 = vadd.f32 %v4524, %v4675
      %v4692 = vadd.f32 %v4525, %v4680
      %v4693 = vld [vmem:[#allocation2 + $0x15] sm:$0xff]
      %v4694 = vld [vmem:[#allocation2 + $0x1d] sm:$0xff]
      %v4695 = vld [vmem:[#allocation2 + $0x25] sm:$0xff]
      %v4696 = vld [vmem:[#allocation2 + $0x2d] sm:$0xff]
      %v4697 = vld [vmem:[#allocation2 + $0x35] sm:$0xff]
      %v4698 = vld [vmem:[#allocation2 + $0x3d] sm:$0xff]
      %v4699 = vld [vmem:[#allocation2 + $0x45] sm:$0xff]
      %v4700 = vld [vmem:[#allocation2 + $0x4d] sm:$0xff]
      %v4701 = vld [vmem:[#allocation2 + $0x55] sm:$0xff]
      %v4702 = vld [vmem:[#allocation2 + $0x5d] sm:$0x3f]
      %v4703 = vld [vmem:[%s3 + $0x70] sm:$0xff]
      %v4704 = vld [vmem:[%s3 + $0x78] sm:$0xff]
      %v4706 = vsel %vm441, %v4693, 0
      %v4709 = vsel %vm441, %v4694, 0
      %v4712 = vsel %vm441, %v4695, 0
      %v4715 = vsel %vm441, %v4696, 0
      %v4718 = vsel %vm441, %v4697, 0
      %v4721 = vsel %vm441, %v4698, 0
      %v4724 = vsel %vm441, %v4699, 0
      %v4727 = vsel %vm441, %v4700, 0
      %v4730 = vsel %vm441, %v4701, 0
      %v4733 = vsel %vm441, %v4702, 0
      %4735 = vmatprep.subr.mxu0 0.0
      %4736 = vmatpush1.msra.mxu0 %v4703
      %4737 = vmatprep.subr.mxu0 0.0
      %4738 = vmatpush1.msra.mxu0 %v4704
      %4739 = vmatprep.subr.mxu0 0.0
      %4740 = vmatpush1.msra.mxu0 0.0
      %4741 = vmatprep.subr.mxu0 0.0
      %4742 = vmatpush1.msra.mxu0 0.0
      %4743 = vmatprep.subr.mxu0 0.0
      %4744 = vmatpush1.msra.mxu0 0.0
      %4745 = vmatprep.subr.mxu0 0.0
      %4746 = vmatpush1.msra.mxu0 0.0
      %4747 = vmatprep.subr.mxu0 0.0
      %4748 = vmatpush1.msra.mxu0 0.0
      %4749 = vmatprep.subr.mxu0 0.0
      %4750 = vmatpush1.msra.mxu0 0.0
      %4751 = vmatprep.subr.mxu0 0.0
      %4752 = vmatpush1.msra.mxu0 0.0
      %4753 = vmatprep.subr.mxu0 0.0
      %4754 = vmatpush1.msra.mxu0 0.0
      %4755 = vmatprep.subr.mxu0 0.0
      %4756 = vmatpush1.msra.mxu0 0.0
      %4757 = vmatprep.subr.mxu0 0.0
      %4758 = vmatpush1.msra.mxu0 0.0
      %4759 = vmatprep.subr.mxu0 0.0
      %4760 = vmatpush1.msra.mxu0 0.0
      %4761 = vmatprep.subr.mxu0 0.0
      %4762 = vmatpush1.msra.mxu0 0.0
      %4763 = vmatprep.subr.mxu0 0.0
      %4764 = vmatpush1.msra.mxu0 0.0
      %4765 = vmatprep.subr.mxu0 0.0
      %4766 = vmatpush1.msra.mxu0 0.0
      %4767 = vmatprep.subr.mxu0 0.0
      %4768 = vmatpush1.msra.mxu0 0.0
      %4769 = vmatprep.subr.mxu0 0.0
      %4770 = vmatpush1.msra.mxu0 0.0
      %4771 = vmatprep.subr.mxu0 0.0
      %4772 = vmatpush1.msra.mxu0 0.0
      %4773 = vmatprep.subr.mxu0 0.0
      %4774 = vmatpush1.msra.mxu0 0.0
      %4775 = vmatprep.subr.mxu0 0.0
      %4776 = vmatpush1.msra.mxu0 0.0
      %4777 = vmatprep.subr.mxu0 0.0
      %4778 = vmatpush1.msra.mxu0 0.0
      %4779 = vmatprep.subr.mxu0 0.0
      %4780 = vmatpush1.msra.mxu0 0.0
      %4781 = vmatprep.subr.mxu0 0.0
      %4782 = vmatpush1.msra.mxu0 0.0
      %4783 = vmatprep.subr.mxu0 0.0
      %4784 = vmatpush1.msra.mxu0 0.0
      %4785 = vmatprep.subr.mxu0 0.0
      %4786 = vmatpush1.msra.mxu0 0.0
      %4787 = vmatprep.subr.mxu0 0.0
      %4788 = vmatpush1.msra.mxu0 0.0
      %4789 = vmatprep.subr.mxu0 0.0
      %4790 = vmatpush1.msra.mxu0 0.0
      %4791 = vmatprep.subr.mxu0 0.0
      %4792 = vmatpush1.msra.mxu0 0.0
      %4793 = vmatprep.subr.mxu0 0.0
      %4794 = vmatpush1.msra.mxu0 0.0
      %4795 = vmatprep.subr.mxu0 0.0
      %4796 = vmatpush1.msra.mxu0 0.0
      %4797 = vmatprep.subr.mxu0 0.0
      %4798 = vmatpush1.msra.mxu0 0.0
      %4799 = vmatprep.mubr.f32.mxu0 0.0
      %4800 = vmatmul.mubr.f32.gmra.mrb[0].mxu0 %v4706
      %v4801 = vpop.f32.mrb[0].mxu0
      %v4802 = vadd.f32 0.0, %v4801
      %v4803 = vpop.f32.mrb[0].mxu0
      %4804 = vmatprep.mubr.f32.mxu0 0.0
      %4805 = vmatmul.mubr.f32.gmra.mrb[0].mxu0 %v4709
      %v4806 = vpop.f32.mrb[0].mxu0
      %v4807 = vadd.f32 0.0, %v4806
      %v4808 = vpop.f32.mrb[0].mxu0
      %4809 = vmatprep.mubr.f32.mxu0 0.0
      %4810 = vmatmul.mubr.f32.gmra.mrb[0].mxu0 %v4712
      %v4811 = vpop.f32.mrb[0].mxu0
      %v4812 = vadd.f32 0.0, %v4811
      %v4813 = vpop.f32.mrb[0].mxu0
      %4814 = vmatprep.mubr.f32.mxu0 0.0
      %4815 = vmatmul.mubr.f32.gmra.mrb[0].mxu0 %v4715
      %v4816 = vpop.f32.mrb[0].mxu0
      %v4817 = vadd.f32 0.0, %v4816
      %v4818 = vpop.f32.mrb[0].mxu0
      %4819 = vmatprep.mubr.f32.mxu0 0.0
      %4820 = vmatmul.mubr.f32.gmra.mrb[0].mxu0 %v4718
      %v4821 = vpop.f32.mrb[0].mxu0
      %v4822 = vadd.f32 0.0, %v4821
      %v4823 = vpop.f32.mrb[0].mxu0
      %4824 = vmatprep.mubr.f32.mxu0 0.0
      %4825 = vmatmul.mubr.f32.gmra.mrb[0].mxu0 %v4721
      %v4826 = vpop.f32.mrb[0].mxu0
      %v4827 = vadd.f32 0.0, %v4826
      %v4828 = vpop.f32.mrb[0].mxu0
      %4829 = vmatprep.mubr.f32.mxu0 0.0
      %4830 = vmatmul.mubr.f32.gmra.mrb[0].mxu0 %v4724
      %v4831 = vpop.f32.mrb[0].mxu0
      %v4832 = vadd.f32 0.0, %v4831
      %v4833 = vpop.f32.mrb[0].mxu0
      %4834 = vmatprep.mubr.f32.mxu0 0.0
      %4835 = vmatmul.mubr.f32.gmra.mrb[0].mxu0 %v4727
      %v4836 = vpop.f32.mrb[0].mxu0
      %v4837 = vadd.f32 0.0, %v4836
      %v4838 = vpop.f32.mrb[0].mxu0
      %4839 = vmatprep.mubr.f32.mxu0 0.0
      %4840 = vmatmul.mubr.f32.gmra.mrb[0].mxu0 %v4730
      %v4841 = vpop.f32.mrb[0].mxu0
      %v4842 = vadd.f32 0.0, %v4841
      %v4843 = vpop.f32.mrb[0].mxu0
      %4844 = vmatprep.mubr.f32.mxu0 0.0
      %4845 = vmatmul.mubr.f32.gmra.mrb[0].mxu0 %v4733
      %v4846 = vpop.f32.mrb[0].mxu0
      %v4847 = vadd.f32 0.0, %v4846
      %v4848 = vpop.f32.mrb[0].mxu0
      %4849 = vdwg.mxu0
      %v4850 = vadd.f32 %v4683, %v4802
      %v4851 = vadd.f32 %v4684, %v4807
      %v4852 = vadd.f32 %v4685, %v4812
      %v4853 = vadd.f32 %v4686, %v4817
      %v4854 = vadd.f32 %v4687, %v4822
      %v4855 = vadd.f32 %v4688, %v4827
      %v4856 = vadd.f32 %v4689, %v4832
      %v4857 = vadd.f32 %v4690, %v4837
      %v4858 = vadd.f32 %v4691, %v4842
      %v4859 = vadd.f32 %v4692, %v4847
      %v4860 = vld [vmem:[#allocation2 + $0x16] sm:$0xff]
      %v4861 = vld [vmem:[#allocation2 + $0x1e] sm:$0xff]
      %v4862 = vld [vmem:[#allocation2 + $0x26] sm:$0xff]
      %v4863 = vld [vmem:[#allocation2 + $0x2e] sm:$0xff]
      %v4864 = vld [vmem:[#allocation2 + $0x36] sm:$0xff]
      %v4865 = vld [vmem:[#allocation2 + $0x3e] sm:$0xff]
      %v4866 = vld [vmem:[#allocation2 + $0x46] sm:$0xff]
      %v4867 = vld [vmem:[#allocation2 + $0x4e] sm:$0xff]
      %v4868 = vld [vmem:[#allocation2 + $0x56] sm:$0xff]
      %v4869 = vld [vmem:[#allocation2 + $0x5e] sm:$0x3f]
      %v4870 = vld [vmem:[%s3 + $0x80] sm:$0xff]
      %v4871 = vld [vmem:[%s3 + $0x88] sm:$0xff]
      %v4873 = vsel %vm441, %v4860, 0
      %v4876 = vsel %vm441, %v4861, 0
      %v4879 = vsel %vm441, %v4862, 0
      %v4882 = vsel %vm441, %v4863, 0
      %v4885 = vsel %vm441, %v4864, 0
      %v4888 = vsel %vm441, %v4865, 0
      %v4891 = vsel %vm441, %v4866, 0
      %v4894 = vsel %vm441, %v4867, 0
      %v4897 = vsel %vm441, %v4868, 0
      %v4900 = vsel %vm441, %v4869, 0
      %4902 = vmatprep.subr.mxu0 0.0
      %4903 = vmatpush1.msra.mxu0 %v4870
      %4904 = vmatprep.subr.mxu0 0.0
      %4905 = vmatpush1.msra.mxu0 %v4871
      %4906 = vmatprep.subr.mxu0 0.0
      %4907 = vmatpush1.msra.mxu0 0.0
      %4908 = vmatprep.subr.mxu0 0.0
      %4909 = vmatpush1.msra.mxu0 0.0
      %4910 = vmatprep.subr.mxu0 0.0
      %4911 = vmatpush1.msra.mxu0 0.0
      %4912 = vmatprep.subr.mxu0 0.0
      %4913 = vmatpush1.msra.mxu0 0.0
      %4914 = vmatprep.subr.mxu0 0.0
      %4915 = vmatpush1.msra.mxu0 0.0
      %4916 = vmatprep.subr.mxu0 0.0
      %4917 = vmatpush1.msra.mxu0 0.0
      %4918 = vmatprep.subr.mxu0 0.0
      %4919 = vmatpush1.msra.mxu0 0.0
      %4920 = vmatprep.subr.mxu0 0.0
      %4921 = vmatpush1.msra.mxu0 0.0
      %4922 = vmatprep.subr.mxu0 0.0
      %4923 = vmatpush1.msra.mxu0 0.0
      %4924 = vmatprep.subr.mxu0 0.0
      %4925 = vmatpush1.msra.mxu0 0.0
      %4926 = vmatprep.subr.mxu0 0.0
      %4927 = vmatpush1.msra.mxu0 0.0
      %4928 = vmatprep.subr.mxu0 0.0
      %4929 = vmatpush1.msra.mxu0 0.0
      %4930 = vmatprep.subr.mxu0 0.0
      %4931 = vmatpush1.msra.mxu0 0.0
      %4932 = vmatprep.subr.mxu0 0.0
      %4933 = vmatpush1.msra.mxu0 0.0
      %4934 = vmatprep.subr.mxu0 0.0
      %4935 = vmatpush1.msra.mxu0 0.0
      %4936 = vmatprep.subr.mxu0 0.0
      %4937 = vmatpush1.msra.mxu0 0.0
      %4938 = vmatprep.subr.mxu0 0.0
      %4939 = vmatpush1.msra.mxu0 0.0
      %4940 = vmatprep.subr.mxu0 0.0
      %4941 = vmatpush1.msra.mxu0 0.0
      %4942 = vmatprep.subr.mxu0 0.0
      %4943 = vmatpush1.msra.mxu0 0.0
      %4944 = vmatprep.subr.mxu0 0.0
      %4945 = vmatpush1.msra.mxu0 0.0
      %4946 = vmatprep.subr.mxu0 0.0
      %4947 = vmatpush1.msra.mxu0 0.0
      %4948 = vmatprep.subr.mxu0 0.0
      %4949 = vmatpush1.msra.mxu0 0.0
      %4950 = vmatprep.subr.mxu0 0.0
      %4951 = vmatpush1.msra.mxu0 0.0
      %4952 = vmatprep.subr.mxu0 0.0
      %4953 = vmatpush1.msra.mxu0 0.0
      %4954 = vmatprep.subr.mxu0 0.0
      %4955 = vmatpush1.msra.mxu0 0.0
      %4956 = vmatprep.subr.mxu0 0.0
      %4957 = vmatpush1.msra.mxu0 0.0
      %4958 = vmatprep.subr.mxu0 0.0
      %4959 = vmatpush1.msra.mxu0 0.0
      %4960 = vmatprep.subr.mxu0 0.0
      %4961 = vmatpush1.msra.mxu0 0.0
      %4962 = vmatprep.subr.mxu0 0.0
      %4963 = vmatpush1.msra.mxu0 0.0
      %4964 = vmatprep.subr.mxu0 0.0
      %4965 = vmatpush1.msra.mxu0 0.0
      %4966 = vmatprep.mubr.f32.mxu0 0.0
      %4967 = vmatmul.mubr.f32.gmra.mrb[0].mxu0 %v4873
      %v4968 = vpop.f32.mrb[0].mxu0
      %v4969 = vadd.f32 0.0, %v4968
      %v4970 = vpop.f32.mrb[0].mxu0
      %4971 = vmatprep.mubr.f32.mxu0 0.0
      %4972 = vmatmul.mubr.f32.gmra.mrb[0].mxu0 %v4876
      %v4973 = vpop.f32.mrb[0].mxu0
      %v4974 = vadd.f32 0.0, %v4973
      %v4975 = vpop.f32.mrb[0].mxu0
      %4976 = vmatprep.mubr.f32.mxu0 0.0
      %4977 = vmatmul.mubr.f32.gmra.mrb[0].mxu0 %v4879
      %v4978 = vpop.f32.mrb[0].mxu0
      %v4979 = vadd.f32 0.0, %v4978
      %v4980 = vpop.f32.mrb[0].mxu0
      %4981 = vmatprep.mubr.f32.mxu0 0.0
      %4982 = vmatmul.mubr.f32.gmra.mrb[0].mxu0 %v4882
      %v4983 = vpop.f32.mrb[0].mxu0
      %v4984 = vadd.f32 0.0, %v4983
      %v4985 = vpop.f32.mrb[0].mxu0
      %4986 = vmatprep.mubr.f32.mxu0 0.0
      %4987 = vmatmul.mubr.f32.gmra.mrb[0].mxu0 %v4885
      %v4988 = vpop.f32.mrb[0].mxu0
      %v4989 = vadd.f32 0.0, %v4988
      %v4990 = vpop.f32.mrb[0].mxu0
      %4991 = vmatprep.mubr.f32.mxu0 0.0
      %4992 = vmatmul.mubr.f32.gmra.mrb[0].mxu0 %v4888
      %v4993 = vpop.f32.mrb[0].mxu0
      %v4994 = vadd.f32 0.0, %v4993
      %v4995 = vpop.f32.mrb[0].mxu0
      %4996 = vmatprep.mubr.f32.mxu0 0.0
      %4997 = vmatmul.mubr.f32.gmra.mrb[0].mxu0 %v4891
      %v4998 = vpop.f32.mrb[0].mxu0
      %v4999 = vadd.f32 0.0, %v4998
      %v5000 = vpop.f32.mrb[0].mxu0
      %5001 = vmatprep.mubr.f32.mxu0 0.0
      %5002 = vmatmul.mubr.f32.gmra.mrb[0].mxu0 %v4894
      %v5003 = vpop.f32.mrb[0].mxu0
      %v5004 = vadd.f32 0.0, %v5003
      %v5005 = vpop.f32.mrb[0].mxu0
      %5006 = vmatprep.mubr.f32.mxu0 0.0
      %5007 = vmatmul.mubr.f32.gmra.mrb[0].mxu0 %v4897
      %v5008 = vpop.f32.mrb[0].mxu0
      %v5009 = vadd.f32 0.0, %v5008
      %v5010 = vpop.f32.mrb[0].mxu0
      %5011 = vmatprep.mubr.f32.mxu0 0.0
      %5012 = vmatmul.mubr.f32.gmra.mrb[0].mxu0 %v4900
      %v5013 = vpop.f32.mrb[0].mxu0
      %v5014 = vadd.f32 0.0, %v5013
      %v5015 = vpop.f32.mrb[0].mxu0
      %5016 = vdwg.mxu0
      %v5017 = vadd.f32 %v4850, %v4969
      %v5018 = vadd.f32 %v4851, %v4974
      %v5019 = vadd.f32 %v4852, %v4979
      %v5020 = vadd.f32 %v4853, %v4984
      %v5021 = vadd.f32 %v4854, %v4989
      %v5022 = vadd.f32 %v4855, %v4994
      %v5023 = vadd.f32 %v4856, %v4999
      %v5024 = vadd.f32 %v4857, %v5004
      %v5025 = vadd.f32 %v4858, %v5009
      %v5026 = vadd.f32 %v4859, %v5014
      %v5027 = vld [vmem:[%s4] sm:$0x1]
      %v5029 = vlaneseq
      %v5030 = vshrl.u32 %v5029, 7
      %v5031 = vsub.s32 0, %v5030
      %v5032 = vrot.slane %v5027, %v5031
      %v5034 = vadd.f32 %v5017, %v5032
      %v5035 = vadd.f32 %v5018, %v5032
      %v5036 = vadd.f32 %v5019, %v5032
      %v5037 = vadd.f32 %v5020, %v5032
      %v5038 = vadd.f32 %v5021, %v5032
      %v5039 = vadd.f32 %v5022, %v5032
      %v5040 = vadd.f32 %v5023, %v5032
      %v5041 = vadd.f32 %v5024, %v5032
      %v5042 = vadd.f32 %v5025, %v5032
      %v5043 = vadd.f32 %v5026, %v5032
      %v5053 = vrot.slane %v5035, 2
      %v5054 = vrot.slane %v5036, 2
      %v5055 = vsel %vm3146, %v5053, %v5054
      %v5056 = vrot.slane %v5037, 2
      %v5057 = vsel %vm3146, %v5054, %v5056
      %v5058 = vrot.slane %v5038, 2
      %v5059 = vsel %vm3146, %v5056, %v5058
      %v5060 = vrot.slane %v5039, 2
      %v5061 = vsel %vm3146, %v5058, %v5060
      %v5062 = vrot.slane %v5040, 2
      %v5063 = vsel %vm3146, %v5060, %v5062
      %v5064 = vrot.slane %v5041, 2
      %v5065 = vsel %vm3146, %v5062, %v5064
      %v5066 = vrot.slane %v5042, 2
      %v5067 = vsel %vm3146, %v5064, %v5066
      %v5068 = vrot.slane %v5043, 2
      %v5069 = vsel %vm3146, %v5066, %v5068
      %v5079 = vmax.f32 %v5034, %v5055
      %v5080 = vmax.f32 %v5035, %v5057
      %v5081 = vmax.f32 %v5036, %v5059
      %v5082 = vmax.f32 %v5037, %v5061
      %v5083 = vmax.f32 %v5038, %v5063
      %v5084 = vmax.f32 %v5039, %v5065
      %v5085 = vmax.f32 %v5040, %v5067
      %v5086 = vmax.f32 %v5041, %v5069
      %v5087 = vmax.f32 %v5042, %v5068
      %v5097 = vrot.slane %v5079, 1
      %v5098 = vrot.slane %v5080, 1
      %v5099 = vsel %vm3316, %v5097, %v5098
      %v5100 = vrot.slane %v5081, 1
      %v5101 = vsel %vm3316, %v5098, %v5100
      %v5102 = vrot.slane %v5082, 1
      %v5103 = vsel %vm3316, %v5100, %v5102
      %v5104 = vrot.slane %v5083, 1
      %v5105 = vsel %vm3316, %v5102, %v5104
      %v5106 = vrot.slane %v5084, 1
      %v5107 = vsel %vm3316, %v5104, %v5106
      %v5108 = vrot.slane %v5085, 1
      %v5109 = vsel %vm3316, %v5106, %v5108
      %v5110 = vrot.slane %v5086, 1
      %v5111 = vsel %vm3316, %v5108, %v5110
      %v5112 = vrot.slane %v5087, 1
      %v5113 = vsel %vm3316, %v5110, %v5112
      %v5123 = vmax.f32 %v5079, %v5099
      %v5124 = vmax.f32 %v5080, %v5101
      %v5125 = vmax.f32 %v5081, %v5103
      %v5126 = vmax.f32 %v5082, %v5105
      %v5127 = vmax.f32 %v5083, %v5107
      %v5128 = vmax.f32 %v5084, %v5109
      %v5129 = vmax.f32 %v5085, %v5111
      %v5130 = vmax.f32 %v5086, %v5113
      %v5131 = vmax.f32 %v5087, %v5112
      %v5132 = vmax.f32 %v5123, 0.0
      %v5133 = vmax.f32 %v5124, 0.0
      %v5134 = vmax.f32 %v5125, 0.0
      %v5135 = vmax.f32 %v5126, 0.0
      %v5136 = vmax.f32 %v5127, 0.0
      %v5137 = vmax.f32 %v5128, 0.0
      %v5138 = vmax.f32 %v5129, 0.0
      %v5139 = vmax.f32 %v5130, 0.0
      %v5140 = vmax.f32 %v5131, 0.0
      %5141 = vst.msk [vmem:[#allocation7] sm:$0xff] %vm456, %v5132
      %5142 = vst.msk [vmem:[#allocation7 + $0x8] sm:$0xff] %vm456, %v5133
      %5143 = vst.msk [vmem:[#allocation7 + $0x10] sm:$0xff] %vm456, %v5134
      %5144 = vst.msk [vmem:[#allocation7 + $0x18] sm:$0xff] %vm456, %v5135
      %5145 = vst.msk [vmem:[#allocation7 + $0x20] sm:$0xff] %vm456, %v5136
      %5146 = vst.msk [vmem:[#allocation7 + $0x28] sm:$0xff] %vm456, %v5137
      %5147 = vst.msk [vmem:[#allocation7 + $0x30] sm:$0xff] %vm456, %v5138
      %5148 = vst.msk [vmem:[#allocation7 + $0x38] sm:$0xff] %vm456, %v5139
      %vm5149 = vcmask 256000
      %5150 = vst.msk [vmem:[#allocation7 + $0x40] sm:$0x7] %vm5149, %v5140
      %v5151 = vld [vmem:[#allocation7] ss:$2 sm:$0xf]
      %5152 = vst.msk [vmem:[#allocation3 + $0x7] sm:$0xf] %vm461, %v5151
      %s5153 = scalar_lea.vmem [#allocation7], 20
      %v5154 = vld [vmem:[%s5153] ss:$2 sm:$0xf]
      %5155 = vst.msk [vmem:[#allocation3 + $0xd] sm:$0xf] %vm461, %v5154
      %s5156 = scalar_lea.vmem [#allocation7], 40
      %v5157 = vld [vmem:[%s5156] ss:$2 sm:$0xf]
      %5158 = vst.msk [vmem:[#allocation3 + $0x13] sm:$0xf] %vm461, %v5157
      %s5159 = scalar_lea.vmem [#allocation7], 60
      %v5160 = vld [vmem:[%s5159] ss:$2 sm:$0xf]
      %5161 = vst.msk [vmem:[#allocation3 + $0x19] sm:$0xf] %vm461, %v5160
      %v5162 = vld [vmem:[#allocation3] sm:$0xff]
      %v5163 = vld [vmem:[#allocation3 + $0x8] sm:$0xff]
      %v5164 = vld [vmem:[#allocation3 + $0x10] sm:$0x3f]
      %v5165 = vld [vmem:[%s5] sm:$0xff]
      %v5166 = vld [vmem:[%s5 + $0x8] sm:$0xff]
      %v5167 = vld [vmem:[%s5 + $0x10] sm:$0xff]
      %v5168 = vld [vmem:[%s5 + $0x18] sm:$0xff]
      %v5169 = vld [vmem:[#allocation3 + $0x1] sm:$0xff]
      %v5170 = vld [vmem:[#allocation3 + $0x9] sm:$0xff]
      %v5171 = vld [vmem:[#allocation3 + $0x11] sm:$0x3f]
      %v5172 = vld [vmem:[%s5 + $0x20] sm:$0xff]
      %v5173 = vld [vmem:[%s5 + $0x28] sm:$0xff]
      %v5174 = vld [vmem:[%s5 + $0x30] sm:$0xff]
      %v5175 = vld [vmem:[%s5 + $0x38] sm:$0xff]
      %v5177 = vsel %vm456, %v5169, 0
      %v5180 = vsel %vm456, %v5170, 0
      %v5183 = vsel %vm456, %v5171, 0
      %5185 = vmatprep.subr.mxu0 0.0
      %5186 = vmatpush1.msra.mxu0 %v5172
      %5187 = vmatprep.subr.mxu0 0.0
      %5188 = vmatpush1.msra.mxu0 %v5173
      %5189 = vmatprep.subr.mxu0 0.0
      %5190 = vmatpush1.msra.mxu0 %v5174
      %5191 = vmatprep.subr.mxu0 0.0
      %5192 = vmatpush1.msra.mxu0 %v5175
      %5193 = vmatprep.subr.mxu0 0.0
      %5194 = vmatpush1.msra.mxu0 0.0
      %5195 = vmatprep.subr.mxu0 0.0
      %5196 = vmatpush1.msra.mxu0 0.0
      %5197 = vmatprep.subr.mxu0 0.0
      %5198 = vmatpush1.msra.mxu0 0.0
      %5199 = vmatprep.subr.mxu0 0.0
      %5200 = vmatpush1.msra.mxu0 0.0
      %5201 = vmatprep.subr.mxu0 0.0
      %5202 = vmatpush1.msra.mxu0 0.0
      %5203 = vmatprep.subr.mxu0 0.0
      %5204 = vmatpush1.msra.mxu0 0.0
      %5205 = vmatprep.subr.mxu0 0.0
      %5206 = vmatpush1.msra.mxu0 0.0
      %5207 = vmatprep.subr.mxu0 0.0
      %5208 = vmatpush1.msra.mxu0 0.0
      %5209 = vmatprep.subr.mxu0 0.0
      %5210 = vmatpush1.msra.mxu0 0.0
      %5211 = vmatprep.subr.mxu0 0.0
      %5212 = vmatpush1.msra.mxu0 0.0
      %5213 = vmatprep.subr.mxu0 0.0
      %5214 = vmatpush1.msra.mxu0 0.0
      %5215 = vmatprep.subr.mxu0 0.0
      %5216 = vmatpush1.msra.mxu0 0.0
      %5217 = vmatprep.subr.mxu0 0.0
      %5218 = vmatpush1.msra.mxu0 0.0
      %5219 = vmatprep.subr.mxu0 0.0
      %5220 = vmatpush1.msra.mxu0 0.0
      %5221 = vmatprep.subr.mxu0 0.0
      %5222 = vmatpush1.msra.mxu0 0.0
      %5223 = vmatprep.subr.mxu0 0.0
      %5224 = vmatpush1.msra.mxu0 0.0
      %5225 = vmatprep.subr.mxu0 0.0
      %5226 = vmatpush1.msra.mxu0 0.0
      %5227 = vmatprep.subr.mxu0 0.0
      %5228 = vmatpush1.msra.mxu0 0.0
      %5229 = vmatprep.subr.mxu0 0.0
      %5230 = vmatpush1.msra.mxu0 0.0
      %5231 = vmatprep.subr.mxu0 0.0
      %5232 = vmatpush1.msra.mxu0 0.0
      %5233 = vmatprep.subr.mxu0 0.0
      %5234 = vmatpush1.msra.mxu0 0.0
      %5235 = vmatprep.subr.mxu0 0.0
      %5236 = vmatpush1.msra.mxu0 0.0
      %5237 = vmatprep.subr.mxu0 0.0
      %5238 = vmatpush1.msra.mxu0 0.0
      %5239 = vmatprep.subr.mxu0 0.0
      %5240 = vmatpush1.msra.mxu0 0.0
      %5241 = vmatprep.subr.mxu0 0.0
      %5242 = vmatpush1.msra.mxu0 0.0
      %5243 = vmatprep.subr.mxu0 0.0
      %5244 = vmatpush1.msra.mxu0 0.0
      %5245 = vmatprep.subr.mxu0 0.0
      %5246 = vmatpush1.msra.mxu0 0.0
      %5247 = vmatprep.subr.mxu0 0.0
      %5248 = vmatpush1.msra.mxu0 0.0
      %5249 = vmatprep.mubr.f32.mxu0 0.0
      %5250 = vmatmul.mubr.f32.gmra.mrb[0].mxu0 %v5177
      %v5251 = vpop.f32.mrb[0].mxu0
      %v5252 = vadd.f32 0.0, %v5251
      %v5253 = vpop.f32.mrb[0].mxu0
      %5254 = vmatprep.mubr.f32.mxu0 0.0
      %5255 = vmatmul.mubr.f32.gmra.mrb[0].mxu0 %v5180
      %v5256 = vpop.f32.mrb[0].mxu0
      %v5257 = vadd.f32 0.0, %v5256
      %v5258 = vpop.f32.mrb[0].mxu0
      %5259 = vmatprep.mubr.f32.mxu0 0.0
      %5260 = vmatmul.mubr.f32.gmra.mrb[0].mxu0 %v5183
      %v5261 = vpop.f32.mrb[0].mxu0
      %v5262 = vadd.f32 0.0, %v5261
      %v5263 = vpop.f32.mrb[0].mxu0
      %5264 = vdwg.mxu0
      %v5266 = vsel %vm456, %v5162, 0
      %v5269 = vsel %vm456, %v5163, 0
      %v5272 = vsel %vm456, %v5164, 0
      %5274 = vmatprep.subr.mxu0 0.0
      %5275 = vmatpush1.msra.mxu0 %v5165
      %5276 = vmatprep.subr.mxu0 0.0
      %5277 = vmatpush1.msra.mxu0 %v5166
      %5278 = vmatprep.subr.mxu0 0.0
      %5279 = vmatpush1.msra.mxu0 %v5167
      %5280 = vmatprep.subr.mxu0 0.0
      %5281 = vmatpush1.msra.mxu0 %v5168
      %5282 = vmatprep.subr.mxu0 0.0
      %5283 = vmatpush1.msra.mxu0 0.0
      %5284 = vmatprep.subr.mxu0 0.0
      %5285 = vmatpush1.msra.mxu0 0.0
      %5286 = vmatprep.subr.mxu0 0.0
      %5287 = vmatpush1.msra.mxu0 0.0
      %5288 = vmatprep.subr.mxu0 0.0
      %5289 = vmatpush1.msra.mxu0 0.0
      %5290 = vmatprep.subr.mxu0 0.0
      %5291 = vmatpush1.msra.mxu0 0.0
      %5292 = vmatprep.subr.mxu0 0.0
      %5293 = vmatpush1.msra.mxu0 0.0
      %5294 = vmatprep.subr.mxu0 0.0
      %5295 = vmatpush1.msra.mxu0 0.0
      %5296 = vmatprep.subr.mxu0 0.0
      %5297 = vmatpush1.msra.mxu0 0.0
      %5298 = vmatprep.subr.mxu0 0.0
      %5299 = vmatpush1.msra.mxu0 0.0
      %5300 = vmatprep.subr.mxu0 0.0
      %5301 = vmatpush1.msra.mxu0 0.0
      %5302 = vmatprep.subr.mxu0 0.0
      %5303 = vmatpush1.msra.mxu0 0.0
      %5304 = vmatprep.subr.mxu0 0.0
      %5305 = vmatpush1.msra.mxu0 0.0
      %5306 = vmatprep.subr.mxu0 0.0
      %5307 = vmatpush1.msra.mxu0 0.0
      %5308 = vmatprep.subr.mxu0 0.0
      %5309 = vmatpush1.msra.mxu0 0.0
      %5310 = vmatprep.subr.mxu0 0.0
      %5311 = vmatpush1.msra.mxu0 0.0
      %5312 = vmatprep.subr.mxu0 0.0
      %5313 = vmatpush1.msra.mxu0 0.0
      %5314 = vmatprep.subr.mxu0 0.0
      %5315 = vmatpush1.msra.mxu0 0.0
      %5316 = vmatprep.subr.mxu0 0.0
      %5317 = vmatpush1.msra.mxu0 0.0
      %5318 = vmatprep.subr.mxu0 0.0
      %5319 = vmatpush1.msra.mxu0 0.0
      %5320 = vmatprep.subr.mxu0 0.0
      %5321 = vmatpush1.msra.mxu0 0.0
      %5322 = vmatprep.subr.mxu0 0.0
      %5323 = vmatpush1.msra.mxu0 0.0
      %5324 = vmatprep.subr.mxu0 0.0
      %5325 = vmatpush1.msra.mxu0 0.0
      %5326 = vmatprep.subr.mxu0 0.0
      %5327 = vmatpush1.msra.mxu0 0.0
      %5328 = vmatprep.subr.mxu0 0.0
      %5329 = vmatpush1.msra.mxu0 0.0
      %5330 = vmatprep.subr.mxu0 0.0
      %5331 = vmatpush1.msra.mxu0 0.0
      %5332 = vmatprep.subr.mxu0 0.0
      %5333 = vmatpush1.msra.mxu0 0.0
      %5334 = vmatprep.subr.mxu0 0.0
      %5335 = vmatpush1.msra.mxu0 0.0
      %5336 = vmatprep.subr.mxu0 0.0
      %5337 = vmatpush1.msra.mxu0 0.0
      %5338 = vmatprep.mubr.f32.mxu0 0.0
      %5339 = vmatmul.mubr.f32.gmra.mrb[0].mxu0 %v5266
      %v5340 = vpop.f32.mrb[0].mxu0
      %v5341 = vadd.f32 %v5252, %v5340
      %v5342 = vpop.f32.mrb[0].mxu0
      %5343 = vmatprep.mubr.f32.mxu0 0.0
      %5344 = vmatmul.mubr.f32.gmra.mrb[0].mxu0 %v5269
      %v5345 = vpop.f32.mrb[0].mxu0
      %v5346 = vadd.f32 %v5257, %v5345
      %v5347 = vpop.f32.mrb[0].mxu0
      %5348 = vmatprep.mubr.f32.mxu0 0.0
      %5349 = vmatmul.mubr.f32.gmra.mrb[0].mxu0 %v5272
      %v5350 = vpop.f32.mrb[0].mxu0
      %v5351 = vadd.f32 %v5262, %v5350
      %v5352 = vpop.f32.mrb[0].mxu0
      %5353 = vdwg.mxu0
      %v5354 = vld [vmem:[#allocation3 + $0x2] sm:$0xff]
      %v5355 = vld [vmem:[#allocation3 + $0xa] sm:$0xff]
      %v5356 = vld [vmem:[#allocation3 + $0x12] sm:$0x3f]
      %v5357 = vld [vmem:[%s5 + $0x40] sm:$0xff]
      %v5358 = vld [vmem:[%s5 + $0x48] sm:$0xff]
      %v5359 = vld [vmem:[%s5 + $0x50] sm:$0xff]
      %v5360 = vld [vmem:[%s5 + $0x58] sm:$0xff]
      %v5362 = vsel %vm456, %v5354, 0
      %v5365 = vsel %vm456, %v5355, 0
      %v5368 = vsel %vm456, %v5356, 0
      %5370 = vmatprep.subr.mxu0 0.0
      %5371 = vmatpush1.msra.mxu0 %v5357
      %5372 = vmatprep.subr.mxu0 0.0
      %5373 = vmatpush1.msra.mxu0 %v5358
      %5374 = vmatprep.subr.mxu0 0.0
      %5375 = vmatpush1.msra.mxu0 %v5359
      %5376 = vmatprep.subr.mxu0 0.0
      %5377 = vmatpush1.msra.mxu0 %v5360
      %5378 = vmatprep.subr.mxu0 0.0
      %5379 = vmatpush1.msra.mxu0 0.0
      %5380 = vmatprep.subr.mxu0 0.0
      %5381 = vmatpush1.msra.mxu0 0.0
      %5382 = vmatprep.subr.mxu0 0.0
      %5383 = vmatpush1.msra.mxu0 0.0
      %5384 = vmatprep.subr.mxu0 0.0
      %5385 = vmatpush1.msra.mxu0 0.0
      %5386 = vmatprep.subr.mxu0 0.0
      %5387 = vmatpush1.msra.mxu0 0.0
      %5388 = vmatprep.subr.mxu0 0.0
      %5389 = vmatpush1.msra.mxu0 0.0
      %5390 = vmatprep.subr.mxu0 0.0
      %5391 = vmatpush1.msra.mxu0 0.0
      %5392 = vmatprep.subr.mxu0 0.0
      %5393 = vmatpush1.msra.mxu0 0.0
      %5394 = vmatprep.subr.mxu0 0.0
      %5395 = vmatpush1.msra.mxu0 0.0
      %5396 = vmatprep.subr.mxu0 0.0
      %5397 = vmatpush1.msra.mxu0 0.0
      %5398 = vmatprep.subr.mxu0 0.0
      %5399 = vmatpush1.msra.mxu0 0.0
      %5400 = vmatprep.subr.mxu0 0.0
      %5401 = vmatpush1.msra.mxu0 0.0
      %5402 = vmatprep.subr.mxu0 0.0
      %5403 = vmatpush1.msra.mxu0 0.0
      %5404 = vmatprep.subr.mxu0 0.0
      %5405 = vmatpush1.msra.mxu0 0.0
      %5406 = vmatprep.subr.mxu0 0.0
      %5407 = vmatpush1.msra.mxu0 0.0
      %5408 = vmatprep.subr.mxu0 0.0
      %5409 = vmatpush1.msra.mxu0 0.0
      %5410 = vmatprep.subr.mxu0 0.0
      %5411 = vmatpush1.msra.mxu0 0.0
      %5412 = vmatprep.subr.mxu0 0.0
      %5413 = vmatpush1.msra.mxu0 0.0
      %5414 = vmatprep.subr.mxu0 0.0
      %5415 = vmatpush1.msra.mxu0 0.0
      %5416 = vmatprep.subr.mxu0 0.0
      %5417 = vmatpush1.msra.mxu0 0.0
      %5418 = vmatprep.subr.mxu0 0.0
      %5419 = vmatpush1.msra.mxu0 0.0
      %5420 = vmatprep.subr.mxu0 0.0
      %5421 = vmatpush1.msra.mxu0 0.0
      %5422 = vmatprep.subr.mxu0 0.0
      %5423 = vmatpush1.msra.mxu0 0.0
      %5424 = vmatprep.subr.mxu0 0.0
      %5425 = vmatpush1.msra.mxu0 0.0
      %5426 = vmatprep.subr.mxu0 0.0
      %5427 = vmatpush1.msra.mxu0 0.0
      %5428 = vmatprep.subr.mxu0 0.0
      %5429 = vmatpush1.msra.mxu0 0.0
      %5430 = vmatprep.subr.mxu0 0.0
      %5431 = vmatpush1.msra.mxu0 0.0
      %5432 = vmatprep.subr.mxu0 0.0
      %5433 = vmatpush1.msra.mxu0 0.0
      %5434 = vmatprep.mubr.f32.mxu0 0.0
      %5435 = vmatmul.mubr.f32.gmra.mrb[0].mxu0 %v5362
      %v5436 = vpop.f32.mrb[0].mxu0
      %v5437 = vadd.f32 0.0, %v5436
      %v5438 = vpop.f32.mrb[0].mxu0
      %5439 = vmatprep.mubr.f32.mxu0 0.0
      %5440 = vmatmul.mubr.f32.gmra.mrb[0].mxu0 %v5365
      %v5441 = vpop.f32.mrb[0].mxu0
      %v5442 = vadd.f32 0.0, %v5441
      %v5443 = vpop.f32.mrb[0].mxu0
      %5444 = vmatprep.mubr.f32.mxu0 0.0
      %5445 = vmatmul.mubr.f32.gmra.mrb[0].mxu0 %v5368
      %v5446 = vpop.f32.mrb[0].mxu0
      %v5447 = vadd.f32 0.0, %v5446
      %v5448 = vpop.f32.mrb[0].mxu0
      %5449 = vdwg.mxu0
      %v5450 = vadd.f32 %v5341, %v5437
      %v5451 = vadd.f32 %v5346, %v5442
      %v5452 = vadd.f32 %v5351, %v5447
      %v5453 = vld [vmem:[#allocation3 + $0x6] sm:$0xff]
      %v5454 = vld [vmem:[#allocation3 + $0xe] sm:$0xff]
      %v5455 = vld [vmem:[#allocation3 + $0x16] sm:$0x3f]
      %v5456 = vld [vmem:[%s5 + $0x60] sm:$0xff]
      %v5457 = vld [vmem:[%s5 + $0x68] sm:$0xff]
      %v5458 = vld [vmem:[%s5 + $0x70] sm:$0xff]
      %v5459 = vld [vmem:[%s5 + $0x78] sm:$0xff]
      %v5461 = vsel %vm456, %v5453, 0
      %v5464 = vsel %vm456, %v5454, 0
      %v5467 = vsel %vm456, %v5455, 0
      %5469 = vmatprep.subr.mxu0 0.0
      %5470 = vmatpush1.msra.mxu0 %v5456
      %5471 = vmatprep.subr.mxu0 0.0
      %5472 = vmatpush1.msra.mxu0 %v5457
      %5473 = vmatprep.subr.mxu0 0.0
      %5474 = vmatpush1.msra.mxu0 %v5458
      %5475 = vmatprep.subr.mxu0 0.0
      %5476 = vmatpush1.msra.mxu0 %v5459
      %5477 = vmatprep.subr.mxu0 0.0
      %5478 = vmatpush1.msra.mxu0 0.0
      %5479 = vmatprep.subr.mxu0 0.0
      %5480 = vmatpush1.msra.mxu0 0.0
      %5481 = vmatprep.subr.mxu0 0.0
      %5482 = vmatpush1.msra.mxu0 0.0
      %5483 = vmatprep.subr.mxu0 0.0
      %5484 = vmatpush1.msra.mxu0 0.0
      %5485 = vmatprep.subr.mxu0 0.0
      %5486 = vmatpush1.msra.mxu0 0.0
      %5487 = vmatprep.subr.mxu0 0.0
      %5488 = vmatpush1.msra.mxu0 0.0
      %5489 = vmatprep.subr.mxu0 0.0
      %5490 = vmatpush1.msra.mxu0 0.0
      %5491 = vmatprep.subr.mxu0 0.0
      %5492 = vmatpush1.msra.mxu0 0.0
      %5493 = vmatprep.subr.mxu0 0.0
      %5494 = vmatpush1.msra.mxu0 0.0
      %5495 = vmatprep.subr.mxu0 0.0
      %5496 = vmatpush1.msra.mxu0 0.0
      %5497 = vmatprep.subr.mxu0 0.0
      %5498 = vmatpush1.msra.mxu0 0.0
      %5499 = vmatprep.subr.mxu0 0.0
      %5500 = vmatpush1.msra.mxu0 0.0
      %5501 = vmatprep.subr.mxu0 0.0
      %5502 = vmatpush1.msra.mxu0 0.0
      %5503 = vmatprep.subr.mxu0 0.0
      %5504 = vmatpush1.msra.mxu0 0.0
      %5505 = vmatprep.subr.mxu0 0.0
      %5506 = vmatpush1.msra.mxu0 0.0
      %5507 = vmatprep.subr.mxu0 0.0
      %5508 = vmatpush1.msra.mxu0 0.0
      %5509 = vmatprep.subr.mxu0 0.0
      %5510 = vmatpush1.msra.mxu0 0.0
      %5511 = vmatprep.subr.mxu0 0.0
      %5512 = vmatpush1.msra.mxu0 0.0
      %5513 = vmatprep.subr.mxu0 0.0
      %5514 = vmatpush1.msra.mxu0 0.0
      %5515 = vmatprep.subr.mxu0 0.0
      %5516 = vmatpush1.msra.mxu0 0.0
      %5517 = vmatprep.subr.mxu0 0.0
      %5518 = vmatpush1.msra.mxu0 0.0
      %5519 = vmatprep.subr.mxu0 0.0
      %5520 = vmatpush1.msra.mxu0 0.0
      %5521 = vmatprep.subr.mxu0 0.0
      %5522 = vmatpush1.msra.mxu0 0.0
      %5523 = vmatprep.subr.mxu0 0.0
      %5524 = vmatpush1.msra.mxu0 0.0
      %5525 = vmatprep.subr.mxu0 0.0
      %5526 = vmatpush1.msra.mxu0 0.0
      %5527 = vmatprep.subr.mxu0 0.0
      %5528 = vmatpush1.msra.mxu0 0.0
      %5529 = vmatprep.subr.mxu0 0.0
      %5530 = vmatpush1.msra.mxu0 0.0
      %5531 = vmatprep.subr.mxu0 0.0
      %5532 = vmatpush1.msra.mxu0 0.0
      %5533 = vmatprep.mubr.f32.mxu0 0.0
      %5534 = vmatmul.mubr.f32.gmra.mrb[0].mxu0 %v5461
      %v5535 = vpop.f32.mrb[0].mxu0
      %v5536 = vadd.f32 0.0, %v5535
      %v5537 = vpop.f32.mrb[0].mxu0
      %5538 = vmatprep.mubr.f32.mxu0 0.0
      %5539 = vmatmul.mubr.f32.gmra.mrb[0].mxu0 %v5464
      %v5540 = vpop.f32.mrb[0].mxu0
      %v5541 = vadd.f32 0.0, %v5540
      %v5542 = vpop.f32.mrb[0].mxu0
      %5543 = vmatprep.mubr.f32.mxu0 0.0
      %5544 = vmatmul.mubr.f32.gmra.mrb[0].mxu0 %v5467
      %v5545 = vpop.f32.mrb[0].mxu0
      %v5546 = vadd.f32 0.0, %v5545
      %v5547 = vpop.f32.mrb[0].mxu0
      %5548 = vdwg.mxu0
      %v5549 = vadd.f32 %v5450, %v5536
      %v5550 = vadd.f32 %v5451, %v5541
      %v5551 = vadd.f32 %v5452, %v5546
      %v5552 = vld [vmem:[#allocation3 + $0x7] sm:$0xff]
      %v5553 = vld [vmem:[#allocation3 + $0xf] sm:$0xff]
      %v5554 = vld [vmem:[#allocation3 + $0x17] sm:$0x3f]
      %v5555 = vld [vmem:[%s5 + $0x80] sm:$0xff]
      %v5556 = vld [vmem:[%s5 + $0x88] sm:$0xff]
      %v5557 = vld [vmem:[%s5 + $0x90] sm:$0xff]
      %v5558 = vld [vmem:[%s5 + $0x98] sm:$0xff]
      %v5560 = vsel %vm456, %v5552, 0
      %v5563 = vsel %vm456, %v5553, 0
      %v5566 = vsel %vm456, %v5554, 0
      %5568 = vmatprep.subr.mxu0 0.0
      %5569 = vmatpush1.msra.mxu0 %v5555
      %5570 = vmatprep.subr.mxu0 0.0
      %5571 = vmatpush1.msra.mxu0 %v5556
      %5572 = vmatprep.subr.mxu0 0.0
      %5573 = vmatpush1.msra.mxu0 %v5557
      %5574 = vmatprep.subr.mxu0 0.0
      %5575 = vmatpush1.msra.mxu0 %v5558
      %5576 = vmatprep.subr.mxu0 0.0
      %5577 = vmatpush1.msra.mxu0 0.0
      %5578 = vmatprep.subr.mxu0 0.0
      %5579 = vmatpush1.msra.mxu0 0.0
      %5580 = vmatprep.subr.mxu0 0.0
      %5581 = vmatpush1.msra.mxu0 0.0
      %5582 = vmatprep.subr.mxu0 0.0
      %5583 = vmatpush1.msra.mxu0 0.0
      %5584 = vmatprep.subr.mxu0 0.0
      %5585 = vmatpush1.msra.mxu0 0.0
      %5586 = vmatprep.subr.mxu0 0.0
      %5587 = vmatpush1.msra.mxu0 0.0
      %5588 = vmatprep.subr.mxu0 0.0
      %5589 = vmatpush1.msra.mxu0 0.0
      %5590 = vmatprep.subr.mxu0 0.0
      %5591 = vmatpush1.msra.mxu0 0.0
      %5592 = vmatprep.subr.mxu0 0.0
      %5593 = vmatpush1.msra.mxu0 0.0
      %5594 = vmatprep.subr.mxu0 0.0
      %5595 = vmatpush1.msra.mxu0 0.0
      %5596 = vmatprep.subr.mxu0 0.0
      %5597 = vmatpush1.msra.mxu0 0.0
      %5598 = vmatprep.subr.mxu0 0.0
      %5599 = vmatpush1.msra.mxu0 0.0
      %5600 = vmatprep.subr.mxu0 0.0
      %5601 = vmatpush1.msra.mxu0 0.0
      %5602 = vmatprep.subr.mxu0 0.0
      %5603 = vmatpush1.msra.mxu0 0.0
      %5604 = vmatprep.subr.mxu0 0.0
      %5605 = vmatpush1.msra.mxu0 0.0
      %5606 = vmatprep.subr.mxu0 0.0
      %5607 = vmatpush1.msra.mxu0 0.0
      %5608 = vmatprep.subr.mxu0 0.0
      %5609 = vmatpush1.msra.mxu0 0.0
      %5610 = vmatprep.subr.mxu0 0.0
      %5611 = vmatpush1.msra.mxu0 0.0
      %5612 = vmatprep.subr.mxu0 0.0
      %5613 = vmatpush1.msra.mxu0 0.0
      %5614 = vmatprep.subr.mxu0 0.0
      %5615 = vmatpush1.msra.mxu0 0.0
      %5616 = vmatprep.subr.mxu0 0.0
      %5617 = vmatpush1.msra.mxu0 0.0
      %5618 = vmatprep.subr.mxu0 0.0
      %5619 = vmatpush1.msra.mxu0 0.0
      %5620 = vmatprep.subr.mxu0 0.0
      %5621 = vmatpush1.msra.mxu0 0.0
      %5622 = vmatprep.subr.mxu0 0.0
      %5623 = vmatpush1.msra.mxu0 0.0
      %5624 = vmatprep.subr.mxu0 0.0
      %5625 = vmatpush1.msra.mxu0 0.0
      %5626 = vmatprep.subr.mxu0 0.0
      %5627 = vmatpush1.msra.mxu0 0.0
      %5628 = vmatprep.subr.mxu0 0.0
      %5629 = vmatpush1.msra.mxu0 0.0
      %5630 = vmatprep.subr.mxu0 0.0
      %5631 = vmatpush1.msra.mxu0 0.0
      %5632 = vmatprep.mubr.f32.mxu0 0.0
      %5633 = vmatmul.mubr.f32.gmra.mrb[0].mxu0 %v5560
      %v5634 = vpop.f32.mrb[0].mxu0
      %v5635 = vadd.f32 0.0, %v5634
      %v5636 = vpop.f32.mrb[0].mxu0
      %5637 = vmatprep.mubr.f32.mxu0 0.0
      %5638 = vmatmul.mubr.f32.gmra.mrb[0].mxu0 %v5563
      %v5639 = vpop.f32.mrb[0].mxu0
      %v5640 = vadd.f32 0.0, %v5639
      %v5641 = vpop.f32.mrb[0].mxu0
      %5642 = vmatprep.mubr.f32.mxu0 0.0
      %5643 = vmatmul.mubr.f32.gmra.mrb[0].mxu0 %v5566
      %v5644 = vpop.f32.mrb[0].mxu0
      %v5645 = vadd.f32 0.0, %v5644
      %v5646 = vpop.f32.mrb[0].mxu0
      %5647 = vdwg.mxu0
      %v5648 = vadd.f32 %v5549, %v5635
      %v5649 = vadd.f32 %v5550, %v5640
      %v5650 = vadd.f32 %v5551, %v5645
      %v5651 = vld [vmem:[#allocation3 + $0x8] sm:$0xff]
      %v5652 = vld [vmem:[#allocation3 + $0x10] sm:$0xff]
      %v5653 = vld [vmem:[#allocation3 + $0x18] sm:$0x3f]
      %v5654 = vld [vmem:[%s5 + $0xa0] sm:$0xff]
      %v5655 = vld [vmem:[%s5 + $0xa8] sm:$0xff]
      %v5656 = vld [vmem:[%s5 + $0xb0] sm:$0xff]
      %v5657 = vld [vmem:[%s5 + $0xb8] sm:$0xff]
      %v5659 = vsel %vm456, %v5651, 0
      %v5662 = vsel %vm456, %v5652, 0
      %v5665 = vsel %vm456, %v5653, 0
      %5667 = vmatprep.subr.mxu0 0.0
      %5668 = vmatpush1.msra.mxu0 %v5654
      %5669 = vmatprep.subr.mxu0 0.0
      %5670 = vmatpush1.msra.mxu0 %v5655
      %5671 = vmatprep.subr.mxu0 0.0
      %5672 = vmatpush1.msra.mxu0 %v5656
      %5673 = vmatprep.subr.mxu0 0.0
      %5674 = vmatpush1.msra.mxu0 %v5657
      %5675 = vmatprep.subr.mxu0 0.0
      %5676 = vmatpush1.msra.mxu0 0.0
      %5677 = vmatprep.subr.mxu0 0.0
      %5678 = vmatpush1.msra.mxu0 0.0
      %5679 = vmatprep.subr.mxu0 0.0
      %5680 = vmatpush1.msra.mxu0 0.0
      %5681 = vmatprep.subr.mxu0 0.0
      %5682 = vmatpush1.msra.mxu0 0.0
      %5683 = vmatprep.subr.mxu0 0.0
      %5684 = vmatpush1.msra.mxu0 0.0
      %5685 = vmatprep.subr.mxu0 0.0
      %5686 = vmatpush1.msra.mxu0 0.0
      %5687 = vmatprep.subr.mxu0 0.0
      %5688 = vmatpush1.msra.mxu0 0.0
      %5689 = vmatprep.subr.mxu0 0.0
      %5690 = vmatpush1.msra.mxu0 0.0
      %5691 = vmatprep.subr.mxu0 0.0
      %5692 = vmatpush1.msra.mxu0 0.0
      %5693 = vmatprep.subr.mxu0 0.0
      %5694 = vmatpush1.msra.mxu0 0.0
      %5695 = vmatprep.subr.mxu0 0.0
      %5696 = vmatpush1.msra.mxu0 0.0
      %5697 = vmatprep.subr.mxu0 0.0
      %5698 = vmatpush1.msra.mxu0 0.0
      %5699 = vmatprep.subr.mxu0 0.0
      %5700 = vmatpush1.msra.mxu0 0.0
      %5701 = vmatprep.subr.mxu0 0.0
      %5702 = vmatpush1.msra.mxu0 0.0
      %5703 = vmatprep.subr.mxu0 0.0
      %5704 = vmatpush1.msra.mxu0 0.0
      %5705 = vmatprep.subr.mxu0 0.0
      %5706 = vmatpush1.msra.mxu0 0.0
      %5707 = vmatprep.subr.mxu0 0.0
      %5708 = vmatpush1.msra.mxu0 0.0
      %5709 = vmatprep.subr.mxu0 0.0
      %5710 = vmatpush1.msra.mxu0 0.0
      %5711 = vmatprep.subr.mxu0 0.0
      %5712 = vmatpush1.msra.mxu0 0.0
      %5713 = vmatprep.subr.mxu0 0.0
      %5714 = vmatpush1.msra.mxu0 0.0
      %5715 = vmatprep.subr.mxu0 0.0
      %5716 = vmatpush1.msra.mxu0 0.0
      %5717 = vmatprep.subr.mxu0 0.0
      %5718 = vmatpush1.msra.mxu0 0.0
      %5719 = vmatprep.subr.mxu0 0.0
      %5720 = vmatpush1.msra.mxu0 0.0
      %5721 = vmatprep.subr.mxu0 0.0
      %5722 = vmatpush1.msra.mxu0 0.0
      %5723 = vmatprep.subr.mxu0 0.0
      %5724 = vmatpush1.msra.mxu0 0.0
      %5725 = vmatprep.subr.mxu0 0.0
      %5726 = vmatpush1.msra.mxu0 0.0
      %5727 = vmatprep.subr.mxu0 0.0
      %5728 = vmatpush1.msra.mxu0 0.0
      %5729 = vmatprep.subr.mxu0 0.0
      %5730 = vmatpush1.msra.mxu0 0.0
      %5731 = vmatprep.mubr.f32.mxu0 0.0
      %5732 = vmatmul.mubr.f32.gmra.mrb[0].mxu0 %v5659
      %v5733 = vpop.f32.mrb[0].mxu0
      %v5734 = vadd.f32 0.0, %v5733
      %v5735 = vpop.f32.mrb[0].mxu0
      %5736 = vmatprep.mubr.f32.mxu0 0.0
      %5737 = vmatmul.mubr.f32.gmra.mrb[0].mxu0 %v5662
      %v5738 = vpop.f32.mrb[0].mxu0
      %v5739 = vadd.f32 0.0, %v5738
      %v5740 = vpop.f32.mrb[0].mxu0
      %5741 = vmatprep.mubr.f32.mxu0 0.0
      %5742 = vmatmul.mubr.f32.gmra.mrb[0].mxu0 %v5665
      %v5743 = vpop.f32.mrb[0].mxu0
      %v5744 = vadd.f32 0.0, %v5743
      %v5745 = vpop.f32.mrb[0].mxu0
      %5746 = vdwg.mxu0
      %v5747 = vadd.f32 %v5648, %v5734
      %v5748 = vadd.f32 %v5649, %v5739
      %v5749 = vadd.f32 %v5650, %v5744
      %v5750 = vld [vmem:[#allocation3 + $0xc] sm:$0xff]
      %v5751 = vld [vmem:[#allocation3 + $0x14] sm:$0xff]
      %v5752 = vld [vmem:[#allocation3 + $0x1c] sm:$0x3f]
      %v5753 = vld [vmem:[%s5 + $0xc0] sm:$0xff]
      %v5754 = vld [vmem:[%s5 + $0xc8] sm:$0xff]
      %v5755 = vld [vmem:[%s5 + $0xd0] sm:$0xff]
      %v5756 = vld [vmem:[%s5 + $0xd8] sm:$0xff]
      %v5758 = vsel %vm456, %v5750, 0
      %v5761 = vsel %vm456, %v5751, 0
      %v5764 = vsel %vm456, %v5752, 0
      %5766 = vmatprep.subr.mxu0 0.0
      %5767 = vmatpush1.msra.mxu0 %v5753
      %5768 = vmatprep.subr.mxu0 0.0
      %5769 = vmatpush1.msra.mxu0 %v5754
      %5770 = vmatprep.subr.mxu0 0.0
      %5771 = vmatpush1.msra.mxu0 %v5755
      %5772 = vmatprep.subr.mxu0 0.0
      %5773 = vmatpush1.msra.mxu0 %v5756
      %5774 = vmatprep.subr.mxu0 0.0
      %5775 = vmatpush1.msra.mxu0 0.0
      %5776 = vmatprep.subr.mxu0 0.0
      %5777 = vmatpush1.msra.mxu0 0.0
      %5778 = vmatprep.subr.mxu0 0.0
      %5779 = vmatpush1.msra.mxu0 0.0
      %5780 = vmatprep.subr.mxu0 0.0
      %5781 = vmatpush1.msra.mxu0 0.0
      %5782 = vmatprep.subr.mxu0 0.0
      %5783 = vmatpush1.msra.mxu0 0.0
      %5784 = vmatprep.subr.mxu0 0.0
      %5785 = vmatpush1.msra.mxu0 0.0
      %5786 = vmatprep.subr.mxu0 0.0
      %5787 = vmatpush1.msra.mxu0 0.0
      %5788 = vmatprep.subr.mxu0 0.0
      %5789 = vmatpush1.msra.mxu0 0.0
      %5790 = vmatprep.subr.mxu0 0.0
      %5791 = vmatpush1.msra.mxu0 0.0
      %5792 = vmatprep.subr.mxu0 0.0
      %5793 = vmatpush1.msra.mxu0 0.0
      %5794 = vmatprep.subr.mxu0 0.0
      %5795 = vmatpush1.msra.mxu0 0.0
      %5796 = vmatprep.subr.mxu0 0.0
      %5797 = vmatpush1.msra.mxu0 0.0
      %5798 = vmatprep.subr.mxu0 0.0
      %5799 = vmatpush1.msra.mxu0 0.0
      %5800 = vmatprep.subr.mxu0 0.0
      %5801 = vmatpush1.msra.mxu0 0.0
      %5802 = vmatprep.subr.mxu0 0.0
      %5803 = vmatpush1.msra.mxu0 0.0
      %5804 = vmatprep.subr.mxu0 0.0
      %5805 = vmatpush1.msra.mxu0 0.0
      %5806 = vmatprep.subr.mxu0 0.0
      %5807 = vmatpush1.msra.mxu0 0.0
      %5808 = vmatprep.subr.mxu0 0.0
      %5809 = vmatpush1.msra.mxu0 0.0
      %5810 = vmatprep.subr.mxu0 0.0
      %5811 = vmatpush1.msra.mxu0 0.0
      %5812 = vmatprep.subr.mxu0 0.0
      %5813 = vmatpush1.msra.mxu0 0.0
      %5814 = vmatprep.subr.mxu0 0.0
      %5815 = vmatpush1.msra.mxu0 0.0
      %5816 = vmatprep.subr.mxu0 0.0
      %5817 = vmatpush1.msra.mxu0 0.0
      %5818 = vmatprep.subr.mxu0 0.0
      %5819 = vmatpush1.msra.mxu0 0.0
      %5820 = vmatprep.subr.mxu0 0.0
      %5821 = vmatpush1.msra.mxu0 0.0
      %5822 = vmatprep.subr.mxu0 0.0
      %5823 = vmatpush1.msra.mxu0 0.0
      %5824 = vmatprep.subr.mxu0 0.0
      %5825 = vmatpush1.msra.mxu0 0.0
      %5826 = vmatprep.subr.mxu0 0.0
      %5827 = vmatpush1.msra.mxu0 0.0
      %5828 = vmatprep.subr.mxu0 0.0
      %5829 = vmatpush1.msra.mxu0 0.0
      %5830 = vmatprep.mubr.f32.mxu0 0.0
      %5831 = vmatmul.mubr.f32.gmra.mrb[0].mxu0 %v5758
      %v5832 = vpop.f32.mrb[0].mxu0
      %v5833 = vadd.f32 0.0, %v5832
      %v5834 = vpop.f32.mrb[0].mxu0
      %5835 = vmatprep.mubr.f32.mxu0 0.0
      %5836 = vmatmul.mubr.f32.gmra.mrb[0].mxu0 %v5761
      %v5837 = vpop.f32.mrb[0].mxu0
      %v5838 = vadd.f32 0.0, %v5837
      %v5839 = vpop.f32.mrb[0].mxu0
      %5840 = vmatprep.mubr.f32.mxu0 0.0
      %5841 = vmatmul.mubr.f32.gmra.mrb[0].mxu0 %v5764
      %v5842 = vpop.f32.mrb[0].mxu0
      %v5843 = vadd.f32 0.0, %v5842
      %v5844 = vpop.f32.mrb[0].mxu0
      %5845 = vdwg.mxu0
      %v5846 = vadd.f32 %v5747, %v5833
      %v5847 = vadd.f32 %v5748, %v5838
      %v5848 = vadd.f32 %v5749, %v5843
      %v5849 = vld [vmem:[#allocation3 + $0xd] sm:$0xff]
      %v5850 = vld [vmem:[#allocation3 + $0x15] sm:$0xff]
      %v5851 = vld [vmem:[#allocation3 + $0x1d] sm:$0x3f]
      %v5852 = vld [vmem:[%s5 + $0xe0] sm:$0xff]
      %v5853 = vld [vmem:[%s5 + $0xe8] sm:$0xff]
      %v5854 = vld [vmem:[%s5 + $0xf0] sm:$0xff]
      %v5855 = vld [vmem:[%s5 + $0xf8] sm:$0xff]
      %v5857 = vsel %vm456, %v5849, 0
      %v5860 = vsel %vm456, %v5850, 0
      %v5863 = vsel %vm456, %v5851, 0
      %5865 = vmatprep.subr.mxu0 0.0
      %5866 = vmatpush1.msra.mxu0 %v5852
      %5867 = vmatprep.subr.mxu0 0.0
      %5868 = vmatpush1.msra.mxu0 %v5853
      %5869 = vmatprep.subr.mxu0 0.0
      %5870 = vmatpush1.msra.mxu0 %v5854
      %5871 = vmatprep.subr.mxu0 0.0
      %5872 = vmatpush1.msra.mxu0 %v5855
      %5873 = vmatprep.subr.mxu0 0.0
      %5874 = vmatpush1.msra.mxu0 0.0
      %5875 = vmatprep.subr.mxu0 0.0
      %5876 = vmatpush1.msra.mxu0 0.0
      %5877 = vmatprep.subr.mxu0 0.0
      %5878 = vmatpush1.msra.mxu0 0.0
      %5879 = vmatprep.subr.mxu0 0.0
      %5880 = vmatpush1.msra.mxu0 0.0
      %5881 = vmatprep.subr.mxu0 0.0
      %5882 = vmatpush1.msra.mxu0 0.0
      %5883 = vmatprep.subr.mxu0 0.0
      %5884 = vmatpush1.msra.mxu0 0.0
      %5885 = vmatprep.subr.mxu0 0.0
      %5886 = vmatpush1.msra.mxu0 0.0
      %5887 = vmatprep.subr.mxu0 0.0
      %5888 = vmatpush1.msra.mxu0 0.0
      %5889 = vmatprep.subr.mxu0 0.0
      %5890 = vmatpush1.msra.mxu0 0.0
      %5891 = vmatprep.subr.mxu0 0.0
      %5892 = vmatpush1.msra.mxu0 0.0
      %5893 = vmatprep.subr.mxu0 0.0
      %5894 = vmatpush1.msra.mxu0 0.0
      %5895 = vmatprep.subr.mxu0 0.0
      %5896 = vmatpush1.msra.mxu0 0.0
      %5897 = vmatprep.subr.mxu0 0.0
      %5898 = vmatpush1.msra.mxu0 0.0
      %5899 = vmatprep.subr.mxu0 0.0
      %5900 = vmatpush1.msra.mxu0 0.0
      %5901 = vmatprep.subr.mxu0 0.0
      %5902 = vmatpush1.msra.mxu0 0.0
      %5903 = vmatprep.subr.mxu0 0.0
      %5904 = vmatpush1.msra.mxu0 0.0
      %5905 = vmatprep.subr.mxu0 0.0
      %5906 = vmatpush1.msra.mxu0 0.0
      %5907 = vmatprep.subr.mxu0 0.0
      %5908 = vmatpush1.msra.mxu0 0.0
      %5909 = vmatprep.subr.mxu0 0.0
      %5910 = vmatpush1.msra.mxu0 0.0
      %5911 = vmatprep.subr.mxu0 0.0
      %5912 = vmatpush1.msra.mxu0 0.0
      %5913 = vmatprep.subr.mxu0 0.0
      %5914 = vmatpush1.msra.mxu0 0.0
      %5915 = vmatprep.subr.mxu0 0.0
      %5916 = vmatpush1.msra.mxu0 0.0
      %5917 = vmatprep.subr.mxu0 0.0
      %5918 = vmatpush1.msra.mxu0 0.0
      %5919 = vmatprep.subr.mxu0 0.0
      %5920 = vmatpush1.msra.mxu0 0.0
      %5921 = vmatprep.subr.mxu0 0.0
      %5922 = vmatpush1.msra.mxu0 0.0
      %5923 = vmatprep.subr.mxu0 0.0
      %5924 = vmatpush1.msra.mxu0 0.0
      %5925 = vmatprep.subr.mxu0 0.0
      %5926 = vmatpush1.msra.mxu0 0.0
      %5927 = vmatprep.subr.mxu0 0.0
      %5928 = vmatpush1.msra.mxu0 0.0
      %5929 = vmatprep.mubr.f32.mxu0 0.0
      %5930 = vmatmul.mubr.f32.gmra.mrb[0].mxu0 %v5857
      %v5931 = vpop.f32.mrb[0].mxu0
      %v5932 = vadd.f32 0.0, %v5931
      %v5933 = vpop.f32.mrb[0].mxu0
      %5934 = vmatprep.mubr.f32.mxu0 0.0
      %5935 = vmatmul.mubr.f32.gmra.mrb[0].mxu0 %v5860
      %v5936 = vpop.f32.mrb[0].mxu0
      %v5937 = vadd.f32 0.0, %v5936
      %v5938 = vpop.f32.mrb[0].mxu0
      %5939 = vmatprep.mubr.f32.mxu0 0.0
      %5940 = vmatmul.mubr.f32.gmra.mrb[0].mxu0 %v5863
      %v5941 = vpop.f32.mrb[0].mxu0
      %v5942 = vadd.f32 0.0, %v5941
      %v5943 = vpop.f32.mrb[0].mxu0
      %5944 = vdwg.mxu0
      %v5945 = vadd.f32 %v5846, %v5932
      %v5946 = vadd.f32 %v5847, %v5937
      %v5947 = vadd.f32 %v5848, %v5942
      %v5948 = vld [vmem:[#allocation3 + $0xe] sm:$0xff]
      %v5949 = vld [vmem:[#allocation3 + $0x16] sm:$0xff]
      %v5950 = vld [vmem:[#allocation3 + $0x1e] sm:$0x3f]
      %v5951 = vld [vmem:[%s5 + $0x100] sm:$0xff]
      %v5952 = vld [vmem:[%s5 + $0x108] sm:$0xff]
      %v5953 = vld [vmem:[%s5 + $0x110] sm:$0xff]
      %v5954 = vld [vmem:[%s5 + $0x118] sm:$0xff]
      %v5956 = vsel %vm456, %v5948, 0
      %v5959 = vsel %vm456, %v5949, 0
      %v5962 = vsel %vm456, %v5950, 0
      %5964 = vmatprep.subr.mxu0 0.0
      %5965 = vmatpush1.msra.mxu0 %v5951
      %5966 = vmatprep.subr.mxu0 0.0
      %5967 = vmatpush1.msra.mxu0 %v5952
      %5968 = vmatprep.subr.mxu0 0.0
      %5969 = vmatpush1.msra.mxu0 %v5953
      %5970 = vmatprep.subr.mxu0 0.0
      %5971 = vmatpush1.msra.mxu0 %v5954
      %5972 = vmatprep.subr.mxu0 0.0
      %5973 = vmatpush1.msra.mxu0 0.0
      %5974 = vmatprep.subr.mxu0 0.0
      %5975 = vmatpush1.msra.mxu0 0.0
      %5976 = vmatprep.subr.mxu0 0.0
      %5977 = vmatpush1.msra.mxu0 0.0
      %5978 = vmatprep.subr.mxu0 0.0
      %5979 = vmatpush1.msra.mxu0 0.0
      %5980 = vmatprep.subr.mxu0 0.0
      %5981 = vmatpush1.msra.mxu0 0.0
      %5982 = vmatprep.subr.mxu0 0.0
      %5983 = vmatpush1.msra.mxu0 0.0
      %5984 = vmatprep.subr.mxu0 0.0
      %5985 = vmatpush1.msra.mxu0 0.0
      %5986 = vmatprep.subr.mxu0 0.0
      %5987 = vmatpush1.msra.mxu0 0.0
      %5988 = vmatprep.subr.mxu0 0.0
      %5989 = vmatpush1.msra.mxu0 0.0
      %5990 = vmatprep.subr.mxu0 0.0
      %5991 = vmatpush1.msra.mxu0 0.0
      %5992 = vmatprep.subr.mxu0 0.0
      %5993 = vmatpush1.msra.mxu0 0.0
      %5994 = vmatprep.subr.mxu0 0.0
      %5995 = vmatpush1.msra.mxu0 0.0
      %5996 = vmatprep.subr.mxu0 0.0
      %5997 = vmatpush1.msra.mxu0 0.0
      %5998 = vmatprep.subr.mxu0 0.0
      %5999 = vmatpush1.msra.mxu0 0.0
      %6000 = vmatprep.subr.mxu0 0.0
      %6001 = vmatpush1.msra.mxu0 0.0
      %6002 = vmatprep.subr.mxu0 0.0
      %6003 = vmatpush1.msra.mxu0 0.0
      %6004 = vmatprep.subr.mxu0 0.0
      %6005 = vmatpush1.msra.mxu0 0.0
      %6006 = vmatprep.subr.mxu0 0.0
      %6007 = vmatpush1.msra.mxu0 0.0
      %6008 = vmatprep.subr.mxu0 0.0
      %6009 = vmatpush1.msra.mxu0 0.0
      %6010 = vmatprep.subr.mxu0 0.0
      %6011 = vmatpush1.msra.mxu0 0.0
      %6012 = vmatprep.subr.mxu0 0.0
      %6013 = vmatpush1.msra.mxu0 0.0
      %6014 = vmatprep.subr.mxu0 0.0
      %6015 = vmatpush1.msra.mxu0 0.0
      %6016 = vmatprep.subr.mxu0 0.0
      %6017 = vmatpush1.msra.mxu0 0.0
      %6018 = vmatprep.subr.mxu0 0.0
      %6019 = vmatpush1.msra.mxu0 0.0
      %6020 = vmatprep.subr.mxu0 0.0
      %6021 = vmatpush1.msra.mxu0 0.0
      %6022 = vmatprep.subr.mxu0 0.0
      %6023 = vmatpush1.msra.mxu0 0.0
      %6024 = vmatprep.subr.mxu0 0.0
      %6025 = vmatpush1.msra.mxu0 0.0
      %6026 = vmatprep.subr.mxu0 0.0
      %6027 = vmatpush1.msra.mxu0 0.0
      %6028 = vmatprep.mubr.f32.mxu0 0.0
      %6029 = vmatmul.mubr.f32.gmra.mrb[0].mxu0 %v5956
      %v6030 = vpop.f32.mrb[0].mxu0
      %v6031 = vadd.f32 0.0, %v6030
      %v6032 = vpop.f32.mrb[0].mxu0
      %6033 = vmatprep.mubr.f32.mxu0 0.0
      %6034 = vmatmul.mubr.f32.gmra.mrb[0].mxu0 %v5959
      %v6035 = vpop.f32.mrb[0].mxu0
      %v6036 = vadd.f32 0.0, %v6035
      %v6037 = vpop.f32.mrb[0].mxu0
      %6038 = vmatprep.mubr.f32.mxu0 0.0
      %6039 = vmatmul.mubr.f32.gmra.mrb[0].mxu0 %v5962
      %v6040 = vpop.f32.mrb[0].mxu0
      %v6041 = vadd.f32 0.0, %v6040
      %v6042 = vpop.f32.mrb[0].mxu0
      %6043 = vdwg.mxu0
      %v6044 = vadd.f32 %v5945, %v6031
      %v6045 = vadd.f32 %v5946, %v6036
      %v6046 = vadd.f32 %v5947, %v6041
      %v6047 = vld [vmem:[%s6] sm:$0x1]
      %v6049 = vlaneseq
      %v6050 = vshrl.u32 %v6049, 7
      %v6051 = vsub.s32 0, %v6050
      %v6052 = vrot.slane %v6047, %v6051
      %v6054 = vadd.f32 %v6044, %v6052
      %v6055 = vadd.f32 %v6045, %v6052
      %v6056 = vadd.f32 %v6046, %v6052
      %vm6060 = vcmask 1041408
      %v6061 = vrot.slane %v6054, 6
      %v6062 = vrot.slane %v6055, 6
      %v6063 = vsel %vm6060, %v6061, %v6062
      %v6064 = vrot.slane %v6056, 6
      %v6065 = vsel %vm6060, %v6062, %v6064
      %v6068 = vmax.f32 %v6054, %v6063
      %v6069 = vmax.f32 %v6055, %v6065
      %v6072 = vrot.slane %v6068, 1
      %v6073 = vrot.slane %v6069, 1
      %v6074 = vsel %vm3316, %v6072, %v6073
      %v6077 = vmax.f32 %v6068, %v6074
      %v6078 = vmax.f32 %v6069, %v6073
      %vm6079 = vcmask 523264
      %6080 = vst.msk [vmem:[#allocation8] sm:$0xff] %vm6079, %v6077
      %vm6081 = vcmask 522240
      %6082 = vst.msk [vmem:[#allocation8 + $0x8] sm:$0x7f] %vm6081, %v6078
      %v6083 = vld [vmem:[#allocation8] ss:$2 sm:$0x3]
      %vm6084 = vcmask 517120
      %6085 = vst.msk [vmem:[#allocation5] sm:$0x3] %vm6084, %v6083
      %s6086 = scalar_lea.vmem [#allocation8], 12
      %v6087 = vld [vmem:[%s6086] ss:$2 sm:$0x3]
      %6088 = vst.msk [vmem:[#allocation5 + $0x2] sm:$0x3] %vm6084, %v6087
      %v6089 = vld [vmem:[#allocation5] sm:$0xf]
      %v6090 = vld [vmem:[%s7] sm:$0xff]
      %v6091 = vld [vmem:[%s7 + $0x8] sm:$0xff]
      %v6092 = vld [vmem:[%s7 + $0x10] sm:$0xff]
      %v6093 = vld [vmem:[%s7 + $0x18] sm:$0xff]
      %v6094 = vld [vmem:[%s7 + $0x20] sm:$0xff]
      %v6095 = vld [vmem:[%s7 + $0x28] sm:$0xff]
      %v6096 = vld [vmem:[%s7 + $0x30] sm:$0xff]
      %v6097 = vld [vmem:[%s7 + $0x38] sm:$0xff]
      %v6098 = vld [vmem:[%s8] sm:$0x1]
      %v6100 = vlaneseq
      %v6101 = vshrl.u32 %v6100, 7
      %v6102 = vsub.s32 0, %v6101
      %v6103 = vrot.slane %v6098, %v6102
      %v6106 = vsel %vm6079, %v6089, 0
      %6108 = vmatprep.subr.mxu0 0.0
      %6109 = vmatpush1.msra.mxu0 %v6090
      %6110 = vmatprep.subr.mxu0 0.0
      %6111 = vmatpush1.msra.mxu0 %v6091
      %6112 = vmatprep.subr.mxu0 0.0
      %6113 = vmatpush1.msra.mxu0 %v6092
      %6114 = vmatprep.subr.mxu0 0.0
      %6115 = vmatpush1.msra.mxu0 %v6093
      %6116 = vmatprep.subr.mxu0 0.0
      %6117 = vmatpush1.msra.mxu0 %v6094
      %6118 = vmatprep.subr.mxu0 0.0
      %6119 = vmatpush1.msra.mxu0 %v6095
      %6120 = vmatprep.subr.mxu0 0.0
      %6121 = vmatpush1.msra.mxu0 %v6096
      %6122 = vmatprep.subr.mxu0 0.0
      %6123 = vmatpush1.msra.mxu0 %v6097
      %6124 = vmatprep.subr.mxu0 0.0
      %6125 = vmatpush1.msra.mxu0 0.0
      %6126 = vmatprep.subr.mxu0 0.0
      %6127 = vmatpush1.msra.mxu0 0.0
      %6128 = vmatprep.subr.mxu0 0.0
      %6129 = vmatpush1.msra.mxu0 0.0
      %6130 = vmatprep.subr.mxu0 0.0
      %6131 = vmatpush1.msra.mxu0 0.0
      %6132 = vmatprep.subr.mxu0 0.0
      %6133 = vmatpush1.msra.mxu0 0.0
      %6134 = vmatprep.subr.mxu0 0.0
      %6135 = vmatpush1.msra.mxu0 0.0
      %6136 = vmatprep.subr.mxu0 0.0
      %6137 = vmatpush1.msra.mxu0 0.0
      %6138 = vmatprep.subr.mxu0 0.0
      %6139 = vmatpush1.msra.mxu0 0.0
      %6140 = vmatprep.subr.mxu0 0.0
      %6141 = vmatpush1.msra.mxu0 0.0
      %6142 = vmatprep.subr.mxu0 0.0
      %6143 = vmatpush1.msra.mxu0 0.0
      %6144 = vmatprep.subr.mxu0 0.0
      %6145 = vmatpush1.msra.mxu0 0.0
      %6146 = vmatprep.subr.mxu0 0.0
      %6147 = vmatpush1.msra.mxu0 0.0
      %6148 = vmatprep.subr.mxu0 0.0
      %6149 = vmatpush1.msra.mxu0 0.0
      %6150 = vmatprep.subr.mxu0 0.0
      %6151 = vmatpush1.msra.mxu0 0.0
      %6152 = vmatprep.subr.mxu0 0.0
      %6153 = vmatpush1.msra.mxu0 0.0
      %6154 = vmatprep.subr.mxu0 0.0
      %6155 = vmatpush1.msra.mxu0 0.0
      %6156 = vmatprep.subr.mxu0 0.0
      %6157 = vmatpush1.msra.mxu0 0.0
      %6158 = vmatprep.subr.mxu0 0.0
      %6159 = vmatpush1.msra.mxu0 0.0
      %6160 = vmatprep.subr.mxu0 0.0
      %6161 = vmatpush1.msra.mxu0 0.0
      %6162 = vmatprep.subr.mxu0 0.0
      %6163 = vmatpush1.msra.mxu0 0.0
      %6164 = vmatprep.subr.mxu0 0.0
      %6165 = vmatpush1.msra.mxu0 0.0
      %6166 = vmatprep.subr.mxu0 0.0
      %6167 = vmatpush1.msra.mxu0 0.0
      %6168 = vmatprep.subr.mxu0 0.0
      %6169 = vmatpush1.msra.mxu0 0.0
      %6170 = vmatprep.subr.mxu0 0.0
      %6171 = vmatpush1.msra.mxu0 0.0
      %6172 = vmatprep.mubr.f32.mxu0 0.0
      %6173 = vmatmul.mubr.f32.gmra.mrb[0].mxu0 %v6106
      %v6174 = vpop.f32.mrb[0].mxu0
      %v6175 = vadd.f32 %v6103, %v6174
      %v6176 = vpop.f32.mrb[0].mxu0
      %6177 = vdwg.mxu0
      %v6178 = vmax.f32 %v6175, 0.0
      %s6179 = scalar_lea.vmem [#allocation4], 7
      %6180 = vst [vmem:[%s6179] ss:$2 sm:$0x3] %v6178
      %6182 = vrot.lane.b32.xlu0 %v6178, 96
      %v6183 = vpop.permute.xlu0 %6182
      %s6185 = scalar_lea.vmem [#allocation4], 8
      %6186 = vst [vmem:[%s6185] ss:$2 sm:$0x3] %v6183
      %v6187 = vrot.slane %v6178, 2
      %s6189 = scalar_lea.vmem [#allocation4], 19
      %6190 = vst [vmem:[%s6189] ss:$2 sm:$0x3] %v6187
      %6191 = vrot.lane.b32.xlu0 %v6187, 96
      %v6192 = vpop.permute.xlu0 %6191
      %s6194 = scalar_lea.vmem [#allocation4], 20
      %6195 = vst [vmem:[%s6194] ss:$2 sm:$0x3] %v6192
      %6196 = vrot.lane.b32.xlu0 %v6178, 64
      %v6197 = vpop.permute.xlu0 %6196
      %s6199 = scalar_lea.vmem [#allocation4], 13
      %6200 = vst [vmem:[%s6199] ss:$2 sm:$0x3] %v6197
      %6201 = vrot.lane.b32.xlu0 %v6178, 32
      %v6202 = vpop.permute.xlu0 %6201
      %s6204 = scalar_lea.vmem [#allocation4], 14
      %6205 = vst [vmem:[%s6204] ss:$2 sm:$0x3] %v6202
      %6206 = vrot.lane.b32.xlu0 %v6187, 64
      %v6207 = vpop.permute.xlu0 %6206
      %s6209 = scalar_lea.vmem [#allocation4], 25
      %6210 = vst [vmem:[%s6209] ss:$2 sm:$0x3] %v6207
      %6211 = vrot.lane.b32.xlu0 %v6187, 32
      %v6212 = vpop.permute.xlu0 %6211
      %s6214 = scalar_lea.vmem [#allocation4], 26
      %6215 = vst [vmem:[%s6214] ss:$2 sm:$0x3] %v6212
      %v6216 = vld [vmem:[#allocation4] sm:$0xff]
      %v6217 = vld [vmem:[#allocation4 + $0x8] sm:$0xff]
      %v6218 = vld [vmem:[#allocation4 + $0x10] sm:$0xff]
      %v6219 = vld [vmem:[#allocation4 + $0x18] sm:$0x1f]
      %v6220 = vld [vmem:[%s9] sm:$0xff]
      %v6221 = vld [vmem:[%s9 + $0x8] sm:$0xff]
      %v6222 = vld [vmem:[%s9 + $0x10] sm:$0xff]
      %v6223 = vld [vmem:[%s9 + $0x18] sm:$0xff]
      %v6224 = vld [vmem:[#allocation4 + $0x1] sm:$0xff]
      %v6225 = vld [vmem:[#allocation4 + $0x9] sm:$0xff]
      %v6226 = vld [vmem:[#allocation4 + $0x11] sm:$0xff]
      %v6227 = vld [vmem:[#allocation4 + $0x19] sm:$0x1f]
      %v6228 = vld [vmem:[%s9 + $0x20] sm:$0xff]
      %v6229 = vld [vmem:[%s9 + $0x28] sm:$0xff]
      %v6230 = vld [vmem:[%s9 + $0x30] sm:$0xff]
      %v6231 = vld [vmem:[%s9 + $0x38] sm:$0xff]
      %v6233 = vsel %vm456, %v6224, 0
      %v6236 = vsel %vm456, %v6225, 0
      %v6239 = vsel %vm456, %v6226, 0
      %v6242 = vsel %vm456, %v6227, 0
      %6244 = vmatprep.subr.mxu0 0.0
      %6245 = vmatpush1.msra.mxu0 %v6228
      %6246 = vmatprep.subr.mxu0 0.0
      %6247 = vmatpush1.msra.mxu0 %v6229
      %6248 = vmatprep.subr.mxu0 0.0
      %6249 = vmatpush1.msra.mxu0 %v6230
      %6250 = vmatprep.subr.mxu0 0.0
      %6251 = vmatpush1.msra.mxu0 %v6231
      %6252 = vmatprep.subr.mxu0 0.0
      %6253 = vmatpush1.msra.mxu0 0.0
      %6254 = vmatprep.subr.mxu0 0.0
      %6255 = vmatpush1.msra.mxu0 0.0
      %6256 = vmatprep.subr.mxu0 0.0
      %6257 = vmatpush1.msra.mxu0 0.0
      %6258 = vmatprep.subr.mxu0 0.0
      %6259 = vmatpush1.msra.mxu0 0.0
      %6260 = vmatprep.subr.mxu0 0.0
      %6261 = vmatpush1.msra.mxu0 0.0
      %6262 = vmatprep.subr.mxu0 0.0
      %6263 = vmatpush1.msra.mxu0 0.0
      %6264 = vmatprep.subr.mxu0 0.0
      %6265 = vmatpush1.msra.mxu0 0.0
      %6266 = vmatprep.subr.mxu0 0.0
      %6267 = vmatpush1.msra.mxu0 0.0
      %6268 = vmatprep.subr.mxu0 0.0
      %6269 = vmatpush1.msra.mxu0 0.0
      %6270 = vmatprep.subr.mxu0 0.0
      %6271 = vmatpush1.msra.mxu0 0.0
      %6272 = vmatprep.subr.mxu0 0.0
      %6273 = vmatpush1.msra.mxu0 0.0
      %6274 = vmatprep.subr.mxu0 0.0
      %6275 = vmatpush1.msra.mxu0 0.0
      %6276 = vmatprep.subr.mxu0 0.0
      %6277 = vmatpush1.msra.mxu0 0.0
      %6278 = vmatprep.subr.mxu0 0.0
      %6279 = vmatpush1.msra.mxu0 0.0
      %6280 = vmatprep.subr.mxu0 0.0
      %6281 = vmatpush1.msra.mxu0 0.0
      %6282 = vmatprep.subr.mxu0 0.0
      %6283 = vmatpush1.msra.mxu0 0.0
      %6284 = vmatprep.subr.mxu0 0.0
      %6285 = vmatpush1.msra.mxu0 0.0
      %6286 = vmatprep.subr.mxu0 0.0
      %6287 = vmatpush1.msra.mxu0 0.0
      %6288 = vmatprep.subr.mxu0 0.0
      %6289 = vmatpush1.msra.mxu0 0.0
      %6290 = vmatprep.subr.mxu0 0.0
      %6291 = vmatpush1.msra.mxu0 0.0
      %6292 = vmatprep.subr.mxu0 0.0
      %6293 = vmatpush1.msra.mxu0 0.0
      %6294 = vmatprep.subr.mxu0 0.0
      %6295 = vmatpush1.msra.mxu0 0.0
      %6296 = vmatprep.subr.mxu0 0.0
      %6297 = vmatpush1.msra.mxu0 0.0
      %6298 = vmatprep.subr.mxu0 0.0
      %6299 = vmatpush1.msra.mxu0 0.0
      %6300 = vmatprep.subr.mxu0 0.0
      %6301 = vmatpush1.msra.mxu0 0.0
      %6302 = vmatprep.subr.mxu0 0.0
      %6303 = vmatpush1.msra.mxu0 0.0
      %6304 = vmatprep.subr.mxu0 0.0
      %6305 = vmatpush1.msra.mxu0 0.0
      %6306 = vmatprep.subr.mxu0 0.0
      %6307 = vmatpush1.msra.mxu0 0.0
      %6308 = vmatprep.mubr.f32.mxu0 0.0
      %6309 = vmatmul.mubr.f32.gmra.mrb[0].mxu0 %v6233
      %v6310 = vpop.f32.mrb[0].mxu0
      %v6311 = vadd.f32 0.0, %v6310
      %v6312 = vpop.f32.mrb[0].mxu0
      %6313 = vmatprep.mubr.f32.mxu0 0.0
      %6314 = vmatmul.mubr.f32.gmra.mrb[0].mxu0 %v6236
      %v6315 = vpop.f32.mrb[0].mxu0
      %v6316 = vadd.f32 0.0, %v6315
      %v6317 = vpop.f32.mrb[0].mxu0
      %6318 = vmatprep.mubr.f32.mxu0 0.0
      %6319 = vmatmul.mubr.f32.gmra.mrb[0].mxu0 %v6239
      %v6320 = vpop.f32.mrb[0].mxu0
      %v6321 = vadd.f32 0.0, %v6320
      %v6322 = vpop.f32.mrb[0].mxu0
      %6323 = vmatprep.mubr.f32.mxu0 0.0
      %6324 = vmatmul.mubr.f32.gmra.mrb[0].mxu0 %v6242
      %v6325 = vpop.f32.mrb[0].mxu0
      %v6326 = vadd.f32 0.0, %v6325
      %v6327 = vpop.f32.mrb[0].mxu0
      %6328 = vdwg.mxu0
      %v6330 = vsel %vm456, %v6216, 0
      %v6333 = vsel %vm456, %v6217, 0
      %v6336 = vsel %vm456, %v6218, 0
      %v6339 = vsel %vm456, %v6219, 0
      %6341 = vmatprep.subr.mxu0 0.0
      %6342 = vmatpush1.msra.mxu0 %v6220
      %6343 = vmatprep.subr.mxu0 0.0
      %6344 = vmatpush1.msra.mxu0 %v6221
      %6345 = vmatprep.subr.mxu0 0.0
      %6346 = vmatpush1.msra.mxu0 %v6222
      %6347 = vmatprep.subr.mxu0 0.0
      %6348 = vmatpush1.msra.mxu0 %v6223
      %6349 = vmatprep.subr.mxu0 0.0
      %6350 = vmatpush1.msra.mxu0 0.0
      %6351 = vmatprep.subr.mxu0 0.0
      %6352 = vmatpush1.msra.mxu0 0.0
      %6353 = vmatprep.subr.mxu0 0.0
      %6354 = vmatpush1.msra.mxu0 0.0
      %6355 = vmatprep.subr.mxu0 0.0
      %6356 = vmatpush1.msra.mxu0 0.0
      %6357 = vmatprep.subr.mxu0 0.0
      %6358 = vmatpush1.msra.mxu0 0.0
      %6359 = vmatprep.subr.mxu0 0.0
      %6360 = vmatpush1.msra.mxu0 0.0
      %6361 = vmatprep.subr.mxu0 0.0
      %6362 = vmatpush1.msra.mxu0 0.0
      %6363 = vmatprep.subr.mxu0 0.0
      %6364 = vmatpush1.msra.mxu0 0.0
      %6365 = vmatprep.subr.mxu0 0.0
      %6366 = vmatpush1.msra.mxu0 0.0
      %6367 = vmatprep.subr.mxu0 0.0
      %6368 = vmatpush1.msra.mxu0 0.0
      %6369 = vmatprep.subr.mxu0 0.0
      %6370 = vmatpush1.msra.mxu0 0.0
      %6371 = vmatprep.subr.mxu0 0.0
      %6372 = vmatpush1.msra.mxu0 0.0
      %6373 = vmatprep.subr.mxu0 0.0
      %6374 = vmatpush1.msra.mxu0 0.0
      %6375 = vmatprep.subr.mxu0 0.0
      %6376 = vmatpush1.msra.mxu0 0.0
      %6377 = vmatprep.subr.mxu0 0.0
      %6378 = vmatpush1.msra.mxu0 0.0
      %6379 = vmatprep.subr.mxu0 0.0
      %6380 = vmatpush1.msra.mxu0 0.0
      %6381 = vmatprep.subr.mxu0 0.0
      %6382 = vmatpush1.msra.mxu0 0.0
      %6383 = vmatprep.subr.mxu0 0.0
      %6384 = vmatpush1.msra.mxu0 0.0
      %6385 = vmatprep.subr.mxu0 0.0
      %6386 = vmatpush1.msra.mxu0 0.0
      %6387 = vmatprep.subr.mxu0 0.0
      %6388 = vmatpush1.msra.mxu0 0.0
      %6389 = vmatprep.subr.mxu0 0.0
      %6390 = vmatpush1.msra.mxu0 0.0
      %6391 = vmatprep.subr.mxu0 0.0
      %6392 = vmatpush1.msra.mxu0 0.0
      %6393 = vmatprep.subr.mxu0 0.0
      %6394 = vmatpush1.msra.mxu0 0.0
      %6395 = vmatprep.subr.mxu0 0.0
      %6396 = vmatpush1.msra.mxu0 0.0
      %6397 = vmatprep.subr.mxu0 0.0
      %6398 = vmatpush1.msra.mxu0 0.0
      %6399 = vmatprep.subr.mxu0 0.0
      %6400 = vmatpush1.msra.mxu0 0.0
      %6401 = vmatprep.subr.mxu0 0.0
      %6402 = vmatpush1.msra.mxu0 0.0
      %6403 = vmatprep.subr.mxu0 0.0
      %6404 = vmatpush1.msra.mxu0 0.0
      %6405 = vmatprep.mubr.f32.mxu0 0.0
      %6406 = vmatmul.mubr.f32.gmra.mrb[0].mxu0 %v6330
      %v6407 = vpop.f32.mrb[0].mxu0
      %v6408 = vadd.f32 %v6311, %v6407
      %v6409 = vpop.f32.mrb[0].mxu0
      %6410 = vmatprep.mubr.f32.mxu0 0.0
      %6411 = vmatmul.mubr.f32.gmra.mrb[0].mxu0 %v6333
      %v6412 = vpop.f32.mrb[0].mxu0
      %v6413 = vadd.f32 %v6316, %v6412
      %v6414 = vpop.f32.mrb[0].mxu0
      %6415 = vmatprep.mubr.f32.mxu0 0.0
      %6416 = vmatmul.mubr.f32.gmra.mrb[0].mxu0 %v6336
      %v6417 = vpop.f32.mrb[0].mxu0
      %v6418 = vadd.f32 %v6321, %v6417
      %v6419 = vpop.f32.mrb[0].mxu0
      %6420 = vmatprep.mubr.f32.mxu0 0.0
      %6421 = vmatmul.mubr.f32.gmra.mrb[0].mxu0 %v6339
      %v6422 = vpop.f32.mrb[0].mxu0
      %v6423 = vadd.f32 %v6326, %v6422
      %v6424 = vpop.f32.mrb[0].mxu0
      %6425 = vdwg.mxu0
      %v6426 = vld [vmem:[#allocation4 + $0x6] sm:$0xff]
      %v6427 = vld [vmem:[#allocation4 + $0xe] sm:$0xff]
      %v6428 = vld [vmem:[#allocation4 + $0x16] sm:$0xff]
      %v6429 = vld [vmem:[#allocation4 + $0x1e] sm:$0x1f]
      %v6430 = vld [vmem:[%s9 + $0x40] sm:$0xff]
      %v6431 = vld [vmem:[%s9 + $0x48] sm:$0xff]
      %v6432 = vld [vmem:[%s9 + $0x50] sm:$0xff]
      %v6433 = vld [vmem:[%s9 + $0x58] sm:$0xff]
      %v6435 = vsel %vm456, %v6426, 0
      %v6438 = vsel %vm456, %v6427, 0
      %v6441 = vsel %vm456, %v6428, 0
      %v6444 = vsel %vm456, %v6429, 0
      %6446 = vmatprep.subr.mxu0 0.0
      %6447 = vmatpush1.msra.mxu0 %v6430
      %6448 = vmatprep.subr.mxu0 0.0
      %6449 = vmatpush1.msra.mxu0 %v6431
      %6450 = vmatprep.subr.mxu0 0.0
      %6451 = vmatpush1.msra.mxu0 %v6432
      %6452 = vmatprep.subr.mxu0 0.0
      %6453 = vmatpush1.msra.mxu0 %v6433
      %6454 = vmatprep.subr.mxu0 0.0
      %6455 = vmatpush1.msra.mxu0 0.0
      %6456 = vmatprep.subr.mxu0 0.0
      %6457 = vmatpush1.msra.mxu0 0.0
      %6458 = vmatprep.subr.mxu0 0.0
      %6459 = vmatpush1.msra.mxu0 0.0
      %6460 = vmatprep.subr.mxu0 0.0
      %6461 = vmatpush1.msra.mxu0 0.0
      %6462 = vmatprep.subr.mxu0 0.0
      %6463 = vmatpush1.msra.mxu0 0.0
      %6464 = vmatprep.subr.mxu0 0.0
      %6465 = vmatpush1.msra.mxu0 0.0
      %6466 = vmatprep.subr.mxu0 0.0
      %6467 = vmatpush1.msra.mxu0 0.0
      %6468 = vmatprep.subr.mxu0 0.0
      %6469 = vmatpush1.msra.mxu0 0.0
      %6470 = vmatprep.subr.mxu0 0.0
      %6471 = vmatpush1.msra.mxu0 0.0
      %6472 = vmatprep.subr.mxu0 0.0
      %6473 = vmatpush1.msra.mxu0 0.0
      %6474 = vmatprep.subr.mxu0 0.0
      %6475 = vmatpush1.msra.mxu0 0.0
      %6476 = vmatprep.subr.mxu0 0.0
      %6477 = vmatpush1.msra.mxu0 0.0
      %6478 = vmatprep.subr.mxu0 0.0
      %6479 = vmatpush1.msra.mxu0 0.0
      %6480 = vmatprep.subr.mxu0 0.0
      %6481 = vmatpush1.msra.mxu0 0.0
      %6482 = vmatprep.subr.mxu0 0.0
      %6483 = vmatpush1.msra.mxu0 0.0
      %6484 = vmatprep.subr.mxu0 0.0
      %6485 = vmatpush1.msra.mxu0 0.0
      %6486 = vmatprep.subr.mxu0 0.0
      %6487 = vmatpush1.msra.mxu0 0.0
      %6488 = vmatprep.subr.mxu0 0.0
      %6489 = vmatpush1.msra.mxu0 0.0
      %6490 = vmatprep.subr.mxu0 0.0
      %6491 = vmatpush1.msra.mxu0 0.0
      %6492 = vmatprep.subr.mxu0 0.0
      %6493 = vmatpush1.msra.mxu0 0.0
      %6494 = vmatprep.subr.mxu0 0.0
      %6495 = vmatpush1.msra.mxu0 0.0
      %6496 = vmatprep.subr.mxu0 0.0
      %6497 = vmatpush1.msra.mxu0 0.0
      %6498 = vmatprep.subr.mxu0 0.0
      %6499 = vmatpush1.msra.mxu0 0.0
      %6500 = vmatprep.subr.mxu0 0.0
      %6501 = vmatpush1.msra.mxu0 0.0
      %6502 = vmatprep.subr.mxu0 0.0
      %6503 = vmatpush1.msra.mxu0 0.0
      %6504 = vmatprep.subr.mxu0 0.0
      %6505 = vmatpush1.msra.mxu0 0.0
      %6506 = vmatprep.subr.mxu0 0.0
      %6507 = vmatpush1.msra.mxu0 0.0
      %6508 = vmatprep.subr.mxu0 0.0
      %6509 = vmatpush1.msra.mxu0 0.0
      %6510 = vmatprep.mubr.f32.mxu0 0.0
      %6511 = vmatmul.mubr.f32.gmra.mrb[0].mxu0 %v6435
      %v6512 = vpop.f32.mrb[0].mxu0
      %v6513 = vadd.f32 0.0, %v6512
      %v6514 = vpop.f32.mrb[0].mxu0
      %6515 = vmatprep.mubr.f32.mxu0 0.0
      %6516 = vmatmul.mubr.f32.gmra.mrb[0].mxu0 %v6438
      %v6517 = vpop.f32.mrb[0].mxu0
      %v6518 = vadd.f32 0.0, %v6517
      %v6519 = vpop.f32.mrb[0].mxu0
      %6520 = vmatprep.mubr.f32.mxu0 0.0
      %6521 = vmatmul.mubr.f32.gmra.mrb[0].mxu0 %v6441
      %v6522 = vpop.f32.mrb[0].mxu0
      %v6523 = vadd.f32 0.0, %v6522
      %v6524 = vpop.f32.mrb[0].mxu0
      %6525 = vmatprep.mubr.f32.mxu0 0.0
      %6526 = vmatmul.mubr.f32.gmra.mrb[0].mxu0 %v6444
      %v6527 = vpop.f32.mrb[0].mxu0
      %v6528 = vadd.f32 0.0, %v6527
      %v6529 = vpop.f32.mrb[0].mxu0
      %6530 = vdwg.mxu0
      %v6531 = vadd.f32 %v6408, %v6513
      %v6532 = vadd.f32 %v6413, %v6518
      %v6533 = vadd.f32 %v6418, %v6523
      %v6534 = vadd.f32 %v6423, %v6528
      %v6535 = vld [vmem:[#allocation4 + $0x7] sm:$0xff]
      %v6536 = vld [vmem:[#allocation4 + $0xf] sm:$0xff]
      %v6537 = vld [vmem:[#allocation4 + $0x17] sm:$0xff]
      %v6538 = vld [vmem:[#allocation4 + $0x1f] sm:$0x1f]
      %v6539 = vld [vmem:[%s9 + $0x60] sm:$0xff]
      %v6540 = vld [vmem:[%s9 + $0x68] sm:$0xff]
      %v6541 = vld [vmem:[%s9 + $0x70] sm:$0xff]
      %v6542 = vld [vmem:[%s9 + $0x78] sm:$0xff]
      %v6544 = vsel %vm456, %v6535, 0
      %v6547 = vsel %vm456, %v6536, 0
      %v6550 = vsel %vm456, %v6537, 0
      %v6553 = vsel %vm456, %v6538, 0
      %6555 = vmatprep.subr.mxu0 0.0
      %6556 = vmatpush1.msra.mxu0 %v6539
      %6557 = vmatprep.subr.mxu0 0.0
      %6558 = vmatpush1.msra.mxu0 %v6540
      %6559 = vmatprep.subr.mxu0 0.0
      %6560 = vmatpush1.msra.mxu0 %v6541
      %6561 = vmatprep.subr.mxu0 0.0
      %6562 = vmatpush1.msra.mxu0 %v6542
      %6563 = vmatprep.subr.mxu0 0.0
      %6564 = vmatpush1.msra.mxu0 0.0
      %6565 = vmatprep.subr.mxu0 0.0
      %6566 = vmatpush1.msra.mxu0 0.0
      %6567 = vmatprep.subr.mxu0 0.0
      %6568 = vmatpush1.msra.mxu0 0.0
      %6569 = vmatprep.subr.mxu0 0.0
      %6570 = vmatpush1.msra.mxu0 0.0
      %6571 = vmatprep.subr.mxu0 0.0
      %6572 = vmatpush1.msra.mxu0 0.0
      %6573 = vmatprep.subr.mxu0 0.0
      %6574 = vmatpush1.msra.mxu0 0.0
      %6575 = vmatprep.subr.mxu0 0.0
      %6576 = vmatpush1.msra.mxu0 0.0
      %6577 = vmatprep.subr.mxu0 0.0
      %6578 = vmatpush1.msra.mxu0 0.0
      %6579 = vmatprep.subr.mxu0 0.0
      %6580 = vmatpush1.msra.mxu0 0.0
      %6581 = vmatprep.subr.mxu0 0.0
      %6582 = vmatpush1.msra.mxu0 0.0
      %6583 = vmatprep.subr.mxu0 0.0
      %6584 = vmatpush1.msra.mxu0 0.0
      %6585 = vmatprep.subr.mxu0 0.0
      %6586 = vmatpush1.msra.mxu0 0.0
      %6587 = vmatprep.subr.mxu0 0.0
      %6588 = vmatpush1.msra.mxu0 0.0
      %6589 = vmatprep.subr.mxu0 0.0
      %6590 = vmatpush1.msra.mxu0 0.0
      %6591 = vmatprep.subr.mxu0 0.0
      %6592 = vmatpush1.msra.mxu0 0.0
      %6593 = vmatprep.subr.mxu0 0.0
      %6594 = vmatpush1.msra.mxu0 0.0
      %6595 = vmatprep.subr.mxu0 0.0
      %6596 = vmatpush1.msra.mxu0 0.0
      %6597 = vmatprep.subr.mxu0 0.0
      %6598 = vmatpush1.msra.mxu0 0.0
      %6599 = vmatprep.subr.mxu0 0.0
      %6600 = vmatpush1.msra.mxu0 0.0
      %6601 = vmatprep.subr.mxu0 0.0
      %6602 = vmatpush1.msra.mxu0 0.0
      %6603 = vmatprep.subr.mxu0 0.0
      %6604 = vmatpush1.msra.mxu0 0.0
      %6605 = vmatprep.subr.mxu0 0.0
      %6606 = vmatpush1.msra.mxu0 0.0
      %6607 = vmatprep.subr.mxu0 0.0
      %6608 = vmatpush1.msra.mxu0 0.0
      %6609 = vmatprep.subr.mxu0 0.0
      %6610 = vmatpush1.msra.mxu0 0.0
      %6611 = vmatprep.subr.mxu0 0.0
      %6612 = vmatpush1.msra.mxu0 0.0
      %6613 = vmatprep.subr.mxu0 0.0
      %6614 = vmatpush1.msra.mxu0 0.0
      %6615 = vmatprep.subr.mxu0 0.0
      %6616 = vmatpush1.msra.mxu0 0.0
      %6617 = vmatprep.subr.mxu0 0.0
      %6618 = vmatpush1.msra.mxu0 0.0
      %6619 = vmatprep.mubr.f32.mxu0 0.0
      %6620 = vmatmul.mubr.f32.gmra.mrb[0].mxu0 %v6544
      %v6621 = vpop.f32.mrb[0].mxu0
      %v6622 = vadd.f32 0.0, %v6621
      %v6623 = vpop.f32.mrb[0].mxu0
      %6624 = vmatprep.mubr.f32.mxu0 0.0
      %6625 = vmatmul.mubr.f32.gmra.mrb[0].mxu0 %v6547
      %v6626 = vpop.f32.mrb[0].mxu0
      %v6627 = vadd.f32 0.0, %v6626
      %v6628 = vpop.f32.mrb[0].mxu0
      %6629 = vmatprep.mubr.f32.mxu0 0.0
      %6630 = vmatmul.mubr.f32.gmra.mrb[0].mxu0 %v6550
      %v6631 = vpop.f32.mrb[0].mxu0
      %v6632 = vadd.f32 0.0, %v6631
      %v6633 = vpop.f32.mrb[0].mxu0
      %6634 = vmatprep.mubr.f32.mxu0 0.0
      %6635 = vmatmul.mubr.f32.gmra.mrb[0].mxu0 %v6553
      %v6636 = vpop.f32.mrb[0].mxu0
      %v6637 = vadd.f32 0.0, %v6636
      %v6638 = vpop.f32.mrb[0].mxu0
      %6639 = vdwg.mxu0
      %v6640 = vadd.f32 %v6531, %v6622
      %v6641 = vadd.f32 %v6532, %v6627
      %v6642 = vadd.f32 %v6533, %v6632
      %v6643 = vadd.f32 %v6534, %v6637
      %v6644 = vld [vmem:[%s10] sm:$0x1]
      %v6646 = vlaneseq
      %v6647 = vshrl.u32 %v6646, 7
      %v6648 = vsub.s32 0, %v6647
      %v6649 = vrot.slane %v6644, %v6648
      %v6651 = vadd.f32 %v6640, %v6649
      %v6652 = vadd.f32 %v6641, %v6649
      %v6653 = vadd.f32 %v6642, %v6649
      %v6654 = vadd.f32 %v6643, %v6649
      %v6655 = vmax.f32 %v6651, 0.0
      %v6656 = vmax.f32 %v6652, 0.0
      %v6657 = vmax.f32 %v6653, 0.0
      %v6658 = vmax.f32 %v6654, 0.0
      %v6659 = vld [vmem:[%s11] sm:$0xff]
      %v6660 = vld [vmem:[%s11 + $0x8] sm:$0xff]
      %v6661 = vld [vmem:[%s11 + $0x10] sm:$0xff]
      %v6662 = vld [vmem:[%s11 + $0x18] sm:$0xff]
      %v6663 = vld [vmem:[%s11 + $0x20] sm:$0xff]
      %v6664 = vld [vmem:[%s11 + $0x28] sm:$0xff]
      %v6665 = vld [vmem:[%s11 + $0x30] sm:$0xff]
      %v6666 = vld [vmem:[%s11 + $0x38] sm:$0xff]
      %v6667 = vld [vmem:[%s12] sm:$0x1]
      %v6669 = vlaneseq
      %v6670 = vshrl.u32 %v6669, 7
      %v6671 = vsub.s32 0, %v6670
      %v6672 = vrot.slane %v6667, %v6671
      %v6675 = vsel %vm6079, %v6655, 0
      %v6678 = vsel %vm6079, %v6656, 0
      %v6681 = vsel %vm6079, %v6657, 0
      %v6684 = vsel %vm6079, %v6658, 0
      %6686 = vmatprep.subr.mxu0 0.0
      %6687 = vmatpush1.msra.mxu0 %v6659
      %6688 = vmatprep.subr.mxu0 0.0
      %6689 = vmatpush1.msra.mxu0 %v6660
      %6690 = vmatprep.subr.mxu0 0.0
      %6691 = vmatpush1.msra.mxu0 %v6661
      %6692 = vmatprep.subr.mxu0 0.0
      %6693 = vmatpush1.msra.mxu0 %v6662
      %6694 = vmatprep.subr.mxu0 0.0
      %6695 = vmatpush1.msra.mxu0 %v6663
      %6696 = vmatprep.subr.mxu0 0.0
      %6697 = vmatpush1.msra.mxu0 %v6664
      %6698 = vmatprep.subr.mxu0 0.0
      %6699 = vmatpush1.msra.mxu0 %v6665
      %6700 = vmatprep.subr.mxu0 0.0
      %6701 = vmatpush1.msra.mxu0 %v6666
      %6702 = vmatprep.subr.mxu0 0.0
      %6703 = vmatpush1.msra.mxu0 0.0
      %6704 = vmatprep.subr.mxu0 0.0
      %6705 = vmatpush1.msra.mxu0 0.0
      %6706 = vmatprep.subr.mxu0 0.0
      %6707 = vmatpush1.msra.mxu0 0.0
      %6708 = vmatprep.subr.mxu0 0.0
      %6709 = vmatpush1.msra.mxu0 0.0
      %6710 = vmatprep.subr.mxu0 0.0
      %6711 = vmatpush1.msra.mxu0 0.0
      %6712 = vmatprep.subr.mxu0 0.0
      %6713 = vmatpush1.msra.mxu0 0.0
      %6714 = vmatprep.subr.mxu0 0.0
      %6715 = vmatpush1.msra.mxu0 0.0
      %6716 = vmatprep.subr.mxu0 0.0
      %6717 = vmatpush1.msra.mxu0 0.0
      %6718 = vmatprep.subr.mxu0 0.0
      %6719 = vmatpush1.msra.mxu0 0.0
      %6720 = vmatprep.subr.mxu0 0.0
      %6721 = vmatpush1.msra.mxu0 0.0
      %6722 = vmatprep.subr.mxu0 0.0
      %6723 = vmatpush1.msra.mxu0 0.0
      %6724 = vmatprep.subr.mxu0 0.0
      %6725 = vmatpush1.msra.mxu0 0.0
      %6726 = vmatprep.subr.mxu0 0.0
      %6727 = vmatpush1.msra.mxu0 0.0
      %6728 = vmatprep.subr.mxu0 0.0
      %6729 = vmatpush1.msra.mxu0 0.0
      %6730 = vmatprep.subr.mxu0 0.0
      %6731 = vmatpush1.msra.mxu0 0.0
      %6732 = vmatprep.subr.mxu0 0.0
      %6733 = vmatpush1.msra.mxu0 0.0
      %6734 = vmatprep.subr.mxu0 0.0
      %6735 = vmatpush1.msra.mxu0 0.0
      %6736 = vmatprep.subr.mxu0 0.0
      %6737 = vmatpush1.msra.mxu0 0.0
      %6738 = vmatprep.subr.mxu0 0.0
      %6739 = vmatpush1.msra.mxu0 0.0
      %6740 = vmatprep.subr.mxu0 0.0
      %6741 = vmatpush1.msra.mxu0 0.0
      %6742 = vmatprep.subr.mxu0 0.0
      %6743 = vmatpush1.msra.mxu0 0.0
      %6744 = vmatprep.subr.mxu0 0.0
      %6745 = vmatpush1.msra.mxu0 0.0
      %6746 = vmatprep.subr.mxu0 0.0
      %6747 = vmatpush1.msra.mxu0 0.0
      %6748 = vmatprep.subr.mxu0 0.0
      %6749 = vmatpush1.msra.mxu0 0.0
      %6750 = vmatprep.mubr.f32.mxu0 0.0
      %6751 = vmatmul.mubr.f32.gmra.mrb[0].mxu0 %v6675
      %v6752 = vpop.f32.mrb[0].mxu0
      %v6753 = vadd.f32 %v6672, %v6752
      %v6754 = vpop.f32.mrb[0].mxu0
      %6755 = vmatprep.mubr.f32.mxu0 0.0
      %6756 = vmatmul.mubr.f32.gmra.mrb[0].mxu0 %v6678
      %v6757 = vpop.f32.mrb[0].mxu0
      %v6758 = vadd.f32 %v6672, %v6757
      %v6759 = vpop.f32.mrb[0].mxu0
      %6760 = vmatprep.mubr.f32.mxu0 0.0
      %6761 = vmatmul.mubr.f32.gmra.mrb[0].mxu0 %v6681
      %v6762 = vpop.f32.mrb[0].mxu0
      %v6763 = vadd.f32 %v6672, %v6762
      %v6764 = vpop.f32.mrb[0].mxu0
      %6765 = vmatprep.mubr.f32.mxu0 0.0
      %6766 = vmatmul.mubr.f32.gmra.mrb[0].mxu0 %v6684
      %v6767 = vpop.f32.mrb[0].mxu0
      %v6768 = vadd.f32 %v6672, %v6767
      %v6769 = vpop.f32.mrb[0].mxu0
      %6770 = vdwg.mxu0
      %v6771 = vmax.f32 %v6753, 0.0
      %v6772 = vmax.f32 %v6758, 0.0
      %v6773 = vmax.f32 %v6763, 0.0
      %v6774 = vmax.f32 %v6768, 0.0
      %6775 = vst.msk [vmem:[%s440] sm:$0xff] %vm441, %v6771
      %6776 = vst.msk [vmem:[%s440 + $0x8] sm:$0xff] %vm441, %v6772
      %6777 = vst.msk [vmem:[%s440 + $0x10] sm:$0xff] %vm441, %v6773
      %vm6778 = vcmask 126976
      %6779 = vst.msk [vmem:[%s440 + $0x18] sm:$0x1f] %vm6778, %v6774
      %p6780 = scmp.lt.s32.totalorder %s24, 1
      %s6781 = scalar_select %p6780, %s24, 1
      %s6782 = smul.addr %s6781, 4
      %s6783 = smul.addr %s6782, 8
      %s6784 = scalar_lea.vmem %s13, %s6783
      // Predicated region
      $region73: #{fwd.1} parent=71 // pred_check
        %p6785 = pneg %p320
      $region74: #{fwd.1} parent=71 // pred_check_branch
        %6787 = sbr.rel (%p6785) target = $region76
      $region75: #{fwd.1} parent=71 // pred_region
        _
      $region76: #{fwd.1} parent=71 // pred_fallthru
        _
    $region72: #{fwd.1} parent=5 // pred_fallthru
      _
    %p6788 = scmp.le.s32.totalorder 2, %s19
    // Predicated region
    $region77: #{fwd.1} parent=5 // pred_check
      %p6789 = pneg %p6788
    $region78: #{fwd.1} parent=5 // pred_check_branch
      %6791 = sbr.rel (%p6789) target = $region80
    $region79: #{fwd.1} parent=5 // pred_region
      %s6792 = ssub.s32 %s19, 2
      // Predicated region
      $region81: #{fwd.1} parent=79 // pred_check
        %p6793 = pneg %p326
      $region82: #{fwd.1} parent=79 // pred_check_branch
        %6795 = sbr.rel (%p6793) target = $region84
      $region83: #{fwd.1} parent=79 // pred_region
        %p6796 = scmp.lt.s32.totalorder %s25, 1
        %s6797 = scalar_select %p6796, %s25, 1
        %s6798 = smul.addr %s6797, 4
        %s6799 = smul.addr %s6798, 8
        %s6800 = scalar_lea.vmem %s13, %s6799
      $region84: #{fwd.1} parent=79 // pred_fallthru
        _
    $region80: #{fwd.1} parent=5 // pred_fallthru
      _
  $region6: #{fwd.1} parent=0 // loop_footer
    %s23 = sadd.s32 1, %s19
  $region7: #{fwd.1} parent=0 // loop_footer_branch
    %18 = sbr.rel target = $region3
  $region8: #{fwd.1} parent=0 // loop_exit
    _

</llo_original>
